<compile_context>
chip_gen: v7x
topology: tpu7x:2x2x1
jax: 0.10.0
libtpu: 0.0.40
codegen_flags: <defaults>
</compile_context>

<pallas_src>
import functools

import jax
import jax.numpy as jnp
from jax.experimental import pallas as pl
from jax.experimental.pallas import tpu as pltpu


# ----------------------------------------------------------------------------
# Fused Pallas kernel: conv1+ReLU -> conv2+ReLU -> output conv, per batch image
# ----------------------------------------------------------------------------
def _fused_regression_kernel(xpad_ref, w1_ref, b1_ref, w2_ref, b2_ref,
                             w3_ref, b3_ref, out_ref, s1_ref, s2_ref, *, H, W):
    """One batch element.

    xpad_ref : (H+2, W+2, Cin)   zero-padded NHWC input tile
    w*_ref   : (3, 3, Cin_l, Cout_l)  HWIO conv weights
    b*_ref   : (1, Cout_l)
    out_ref  : (H*W, A*2)        flattened channels-last output
    s1/s2    : (H+2, W+2, F)     VMEM scratch holding padded intermediates
    """

    def conv3x3(src_ref, w_ref, b_ref, relu):
        cin = src_ref.shape[-1]
        acc = None
        for dy in range(3):
            for dx in range(3):
                xs = src_ref[dy:dy + H, dx:dx + W, :].reshape(H * W, cin)
                d = jnp.dot(xs, w_ref[dy, dx],
                            preferred_element_type=jnp.float32)
                acc = d if acc is None else acc + d
        acc = acc + b_ref[...]              # (1, Cout) broadcast, applied once
        if relu:
            acc = jnp.maximum(acc, 0.0)
        return acc                          # (H*W, Cout) float32

    feat = w1_ref.shape[-1]

    # conv1 + ReLU -> padded VMEM scratch s1 (borders zero)
    a1 = conv3x3(xpad_ref, w1_ref, b1_ref, relu=True)
    s1_ref[...] = jnp.zeros_like(s1_ref)
    s1_ref[1:H + 1, 1:W + 1, :] = a1.reshape(H, W, feat)

    # conv2 + ReLU -> padded VMEM scratch s2
    a2 = conv3x3(s1_ref, w2_ref, b2_ref, relu=True)
    s2_ref[...] = jnp.zeros_like(s2_ref)
    s2_ref[1:H + 1, 1:W + 1, :] = a2.reshape(H, W, feat)

    # output conv (linear)
    a3 = conv3x3(s2_ref, w3_ref, b3_ref, relu=False)
    out_ref[...] = a3.astype(out_ref.dtype)


# ----------------------------------------------------------------------------
# Wrapper
# ----------------------------------------------------------------------------
def regression_model_forward(params, x_nchw):
    """x_nchw: (N, Cin, H, W) float32.  Returns (N, H*W*num_anchor_points, 2)."""
    N, Cin, H, W = x_nchw.shape
    w1, w2, w3 = params["w1"], params["w2"], params["w3"]
    feat = w1.shape[-1]
    cout = w3.shape[-1]                     # num_anchor_points * 2

    # NCHW -> NHWC once; the PyTorch permute(0,2,3,1) then becomes a no-op.
    x = jnp.transpose(x_nchw, (0, 2, 3, 1))
    xpad = jnp.pad(x, ((0, 0), (1, 1), (1, 1), (0, 0)))

    b1 = params["b1"].reshape(1, feat)
    b2 = params["b2"].reshape(1, feat)
    b3 = params["b3"].reshape(1, cout)

    kernel = functools.partial(_fused_regression_kernel, H=H, W=W)
    out = pl.pallas_call(
        kernel,
        out_shape=jax.ShapeDtypeStruct((N, H * W, cout), x.dtype),
        grid_spec=pltpu.PrefetchScalarGridSpec(
            num_scalar_prefetch=0,
            grid=(N,),
            in_specs=[
                pl.BlockSpec((pl.Squeezed(), H + 2, W + 2, Cin),
                             lambda n: (n, 0, 0, 0)),
                pl.BlockSpec((3, 3, Cin, feat), lambda n: (0, 0, 0, 0)),
                pl.BlockSpec((1, feat), lambda n: (0, 0)),
                pl.BlockSpec((3, 3, feat, feat), lambda n: (0, 0, 0, 0)),
                pl.BlockSpec((1, feat), lambda n: (0, 0)),
                pl.BlockSpec((3, 3, feat, cout), lambda n: (0, 0, 0, 0)),
                pl.BlockSpec((1, cout), lambda n: (0, 0)),
            ],
            out_specs=pl.BlockSpec((pl.Squeezed(), H * W, cout),
                                   lambda n: (n, 0, 0)),
            scratch_shapes=[
                pltpu.VMEM((H + 2, W + 2, feat), jnp.float32),
                pltpu.VMEM((H + 2, W + 2, feat), jnp.float32),
            ],
        ),
        compiler_params=pltpu.CompilerParams(
            dimension_semantics=("parallel",),
            vmem_limit_bytes=32 * 1024 * 1024,
        ),
    )(xpad, w1, b1, w2, b2, w3, b3)

    # NHWC is already the permute(0,2,3,1) order; view(N, -1, 2) is free.
    return out.reshape(N, -1, 2)


# ----------------------------------------------------------------------------
# Deterministic parameter construction (HWIO conv weights)
# ----------------------------------------------------------------------------
def make_params(key, num_features_in, feature_size=32, num_anchor_points=4):
    ks = jax.random.split(key, 6)
    s = 0.05
    return {
        "w1": jax.random.normal(ks[0], (3, 3, num_features_in, feature_size),
                                jnp.float32) * s,
        "b1": jax.random.normal(ks[1], (feature_size,), jnp.float32) * s,
        "w2": jax.random.normal(ks[2], (3, 3, feature_size, feature_size),
                                jnp.float32) * s,
        "b2": jax.random.normal(ks[3], (feature_size,), jnp.float32) * s,
        "w3": jax.random.normal(ks[4], (3, 3, feature_size,
                                        num_anchor_points * 2),
                                jnp.float32) * s,
        "b3": jax.random.normal(ks[5], (num_anchor_points * 2,),
                                jnp.float32) * s,
    }


# ----------------------------------------------------------------------------
# Pure-JAX reference (no Pallas) for correctness check
# ----------------------------------------------------------------------------
def _ref_conv3x3(x, w, b, relu):
    out = jax.lax.conv_general_dilated(
        x, w, window_strides=(1, 1), padding="SAME",
        dimension_numbers=("NHWC", "HWIO", "NHWC"))
    out = out + b[None, None, None, :]
    if relu:
        out = jnp.maximum(out, 0.0)
    return out


def regression_model_reference(params, x_nchw):
    N = x_nchw.shape[0]
    x = jnp.transpose(x_nchw, (0, 2, 3, 1))
    h = _ref_conv3x3(x, params["w1"], params["b1"], True)
    h = _ref_conv3x3(h, params["w2"], params["b2"], True)
    h = _ref_conv3x3(h, params["w3"], params["b3"], False)
    return h.reshape(N, -1, 2)


# ----------------------------------------------------------------------------
if __name__ == "__main__":
    key = jax.random.PRNGKey(0)
    k_x, k_p = jax.random.split(key)

    N, C, H, W = 2, 8, 16, 16
    FEATURE_SIZE = 32
    NUM_ANCHOR_POINTS = 4

    x = jax.random.normal(k_x, (N, C, H, W), jnp.float32)
    params = make_params(k_p, num_features_in=C, feature_size=FEATURE_SIZE,
                         num_anchor_points=NUM_ANCHOR_POINTS)

    out = regression_model_forward(params, x)
    out = jax.block_until_ready(out)

    ref = regression_model_reference(params, x)
    assert out.shape == (N, H * W * NUM_ANCHOR_POINTS, 2), out.shape
    max_err = float(jnp.max(jnp.abs(out - ref)))
    assert jnp.allclose(out, ref, atol=2e-4, rtol=2e-3), f"mismatch {max_err}"

    print("KERNEL_OK")
</pallas_src>

<mosaic_0001>
module attributes {stable_mosaic.version = 11 : i64} {
  func.func @_fused_regression_kernel(%arg0: i32, %arg1: memref<1x18x18x8xf32, #tpu.memory_space<vmem>>, %arg2: memref<3x3x8x32xf32, #tpu.memory_space<vmem>>, %arg3: memref<1x32xf32, #tpu.memory_space<vmem>>, %arg4: memref<3x3x32x32xf32, #tpu.memory_space<vmem>>, %arg5: memref<1x32xf32, #tpu.memory_space<vmem>>, %arg6: memref<3x3x32x8xf32, #tpu.memory_space<vmem>>, %arg7: memref<1x8xf32, #tpu.memory_space<vmem>>, %arg8: memref<1x256x8xf32, #tpu.memory_space<vmem>>, %arg9: memref<18x18x32xf32, #tpu.memory_space<vmem>>, %arg10: memref<18x18x32xf32, #tpu.memory_space<vmem>>) attributes {dimension_semantics = [#tpu.dimension_semantics<parallel>], iteration_bounds = array<i64: 2>, scalar_prefetch = 0 : i64, scratch_operands = 2 : i64, tpu.core_type = #tpu.core_type<tc>, window_params = [{transform_indices = @transform_0, window_bounds = array<i64: 1, 18, 18, 8>}, {pipeline_mode = #tpu.pipeline_mode<synchronous>, transform_indices = @transform_1, window_bounds = array<i64: 3, 3, 8, 32>}, {pipeline_mode = #tpu.pipeline_mode<synchronous>, transform_indices = @transform_2, window_bounds = array<i64: 1, 32>}, {pipeline_mode = #tpu.pipeline_mode<synchronous>, transform_indices = @transform_3, window_bounds = array<i64: 3, 3, 32, 32>}, {pipeline_mode = #tpu.pipeline_mode<synchronous>, transform_indices = @transform_4, window_bounds = array<i64: 1, 32>}, {pipeline_mode = #tpu.pipeline_mode<synchronous>, transform_indices = @transform_5, window_bounds = array<i64: 3, 3, 32, 8>}, {pipeline_mode = #tpu.pipeline_mode<synchronous>, transform_indices = @transform_6, window_bounds = array<i64: 1, 8>}, {transform_indices = @transform_7, window_bounds = array<i64: 1, 256, 8>}]} {
    %c0 = arith.constant 0 : index
    %c0_0 = arith.constant 0 : index
    %c0_1 = arith.constant 0 : index
    %c0_2 = arith.constant 0 : index
    %0 = vector.load %arg1[%c0, %c0_0, %c0_1, %c0_2] : memref<1x18x18x8xf32, #tpu.memory_space<vmem>>, vector<1x16x16x8xf32>
    %1 = vector.shape_cast %0 : vector<1x16x16x8xf32> to vector<16x16x8xf32>
    %2 = vector.shape_cast %1 : vector<16x16x8xf32> to vector<256x8xf32>
    %c0_3 = arith.constant 0 : index
    %c0_4 = arith.constant 0 : index
    %c0_5 = arith.constant 0 : index
    %c0_6 = arith.constant 0 : index
    %3 = vector.load %arg2[%c0_3, %c0_4, %c0_5, %c0_6] : memref<3x3x8x32xf32, #tpu.memory_space<vmem>>, vector<1x1x8x32xf32>
    %4 = vector.shape_cast %3 : vector<1x1x8x32xf32> to vector<8x32xf32>
    %cst = arith.constant dense<0.000000e+00> : vector<256x32xf32>
    %5 = tpu.matmul %2, %4, %cst {dimension_numbers = #tpu.dot_dimension_numbers<[1], [0], [0], [1], [0, 0, 1, 1], [], []>} : vector<256x8xf32>, vector<8x32xf32>, vector<256x32xf32> -> vector<256x32xf32>
    %c0_7 = arith.constant 0 : index
    %c0_8 = arith.constant 0 : index
    %c1 = arith.constant 1 : index
    %c0_9 = arith.constant 0 : index
    %6 = vector.load %arg1[%c0_7, %c0_8, %c1, %c0_9] : memref<1x18x18x8xf32, #tpu.memory_space<vmem>>, vector<1x16x16x8xf32>
    %7 = vector.shape_cast %6 : vector<1x16x16x8xf32> to vector<16x16x8xf32>
    %8 = vector.shape_cast %7 : vector<16x16x8xf32> to vector<256x8xf32>
    %c0_10 = arith.constant 0 : index
    %c1_11 = arith.constant 1 : index
    %c0_12 = arith.constant 0 : index
    %c0_13 = arith.constant 0 : index
    %9 = vector.load %arg2[%c0_10, %c1_11, %c0_12, %c0_13] : memref<3x3x8x32xf32, #tpu.memory_space<vmem>>, vector<1x1x8x32xf32>
    %10 = vector.shape_cast %9 : vector<1x1x8x32xf32> to vector<8x32xf32>
    %cst_14 = arith.constant dense<0.000000e+00> : vector<256x32xf32>
    %11 = tpu.matmul %8, %10, %cst_14 {dimension_numbers = #tpu.dot_dimension_numbers<[1], [0], [0], [1], [0, 0, 1, 1], [], []>} : vector<256x8xf32>, vector<8x32xf32>, vector<256x32xf32> -> vector<256x32xf32>
    %12 = arith.addf %5, %11 : vector<256x32xf32>
    %c0_15 = arith.constant 0 : index
    %c0_16 = arith.constant 0 : index
    %c2 = arith.constant 2 : index
    %c0_17 = arith.constant 0 : index
    %13 = vector.load %arg1[%c0_15, %c0_16, %c2, %c0_17] : memref<1x18x18x8xf32, #tpu.memory_space<vmem>>, vector<1x16x16x8xf32>
    %14 = vector.shape_cast %13 : vector<1x16x16x8xf32> to vector<16x16x8xf32>
    %15 = vector.shape_cast %14 : vector<16x16x8xf32> to vector<256x8xf32>
    %c0_18 = arith.constant 0 : index
    %c2_19 = arith.constant 2 : index
    %c0_20 = arith.constant 0 : index
    %c0_21 = arith.constant 0 : index
    %16 = vector.load %arg2[%c0_18, %c2_19, %c0_20, %c0_21] : memref<3x3x8x32xf32, #tpu.memory_space<vmem>>, vector<1x1x8x32xf32>
    %17 = vector.shape_cast %16 : vector<1x1x8x32xf32> to vector<8x32xf32>
    %cst_22 = arith.constant dense<0.000000e+00> : vector<256x32xf32>
    %18 = tpu.matmul %15, %17, %cst_22 {dimension_numbers = #tpu.dot_dimension_numbers<[1], [0], [0], [1], [0, 0, 1, 1], [], []>} : vector<256x8xf32>, vector<8x32xf32>, vector<256x32xf32> -> vector<256x32xf32>
    %19 = arith.addf %12, %18 : vector<256x32xf32>
    %c0_23 = arith.constant 0 : index
    %c1_24 = arith.constant 1 : index
    %c0_25 = arith.constant 0 : index
    %c0_26 = arith.constant 0 : index
    %20 = vector.load %arg1[%c0_23, %c1_24, %c0_25, %c0_26] : memref<1x18x18x8xf32, #tpu.memory_space<vmem>>, vector<1x16x16x8xf32>
    %21 = vector.shape_cast %20 : vector<1x16x16x8xf32> to vector<16x16x8xf32>
    %22 = vector.shape_cast %21 : vector<16x16x8xf32> to vector<256x8xf32>
    %c1_27 = arith.constant 1 : index
    %c0_28 = arith.constant 0 : index
    %c0_29 = arith.constant 0 : index
    %c0_30 = arith.constant 0 : index
    %23 = vector.load %arg2[%c1_27, %c0_28, %c0_29, %c0_30] : memref<3x3x8x32xf32, #tpu.memory_space<vmem>>, vector<1x1x8x32xf32>
    %24 = vector.shape_cast %23 : vector<1x1x8x32xf32> to vector<8x32xf32>
    %cst_31 = arith.constant dense<0.000000e+00> : vector<256x32xf32>
    %25 = tpu.matmul %22, %24, %cst_31 {dimension_numbers = #tpu.dot_dimension_numbers<[1], [0], [0], [1], [0, 0, 1, 1], [], []>} : vector<256x8xf32>, vector<8x32xf32>, vector<256x32xf32> -> vector<256x32xf32>
    %26 = arith.addf %19, %25 : vector<256x32xf32>
    %c0_32 = arith.constant 0 : index
    %c1_33 = arith.constant 1 : index
    %c1_34 = arith.constant 1 : index
    %c0_35 = arith.constant 0 : index
    %27 = vector.load %arg1[%c0_32, %c1_33, %c1_34, %c0_35] : memref<1x18x18x8xf32, #tpu.memory_space<vmem>>, vector<1x16x16x8xf32>
    %28 = vector.shape_cast %27 : vector<1x16x16x8xf32> to vector<16x16x8xf32>
    %29 = vector.shape_cast %28 : vector<16x16x8xf32> to vector<256x8xf32>
    %c1_36 = arith.constant 1 : index
    %c1_37 = arith.constant 1 : index
    %c0_38 = arith.constant 0 : index
    %c0_39 = arith.constant 0 : index
    %30 = vector.load %arg2[%c1_36, %c1_37, %c0_38, %c0_39] : memref<3x3x8x32xf32, #tpu.memory_space<vmem>>, vector<1x1x8x32xf32>
    %31 = vector.shape_cast %30 : vector<1x1x8x32xf32> to vector<8x32xf32>
    %cst_40 = arith.constant dense<0.000000e+00> : vector<256x32xf32>
    %32 = tpu.matmul %29, %31, %cst_40 {dimension_numbers = #tpu.dot_dimension_numbers<[1], [0], [0], [1], [0, 0, 1, 1], [], []>} : vector<256x8xf32>, vector<8x32xf32>, vector<256x32xf32> -> vector<256x32xf32>
    %33 = arith.addf %26, %32 : vector<256x32xf32>
    %c0_41 = arith.constant 0 : index
    %c1_42 = arith.constant 1 : index
    %c2_43 = arith.constant 2 : index
    %c0_44 = arith.constant 0 : index
    %34 = vector.load %arg1[%c0_41, %c1_42, %c2_43, %c0_44] : memref<1x18x18x8xf32, #tpu.memory_space<vmem>>, vector<1x16x16x8xf32>
    %35 = vector.shape_cast %34 : vector<1x16x16x8xf32> to vector<16x16x8xf32>
    %36 = vector.shape_cast %35 : vector<16x16x8xf32> to vector<256x8xf32>
    %c1_45 = arith.constant 1 : index
    %c2_46 = arith.constant 2 : index
    %c0_47 = arith.constant 0 : index
    %c0_48 = arith.constant 0 : index
    %37 = vector.load %arg2[%c1_45, %c2_46, %c0_47, %c0_48] : memref<3x3x8x32xf32, #tpu.memory_space<vmem>>, vector<1x1x8x32xf32>
    %38 = vector.shape_cast %37 : vector<1x1x8x32xf32> to vector<8x32xf32>
    %cst_49 = arith.constant dense<0.000000e+00> : vector<256x32xf32>
    %39 = tpu.matmul %36, %38, %cst_49 {dimension_numbers = #tpu.dot_dimension_numbers<[1], [0], [0], [1], [0, 0, 1, 1], [], []>} : vector<256x8xf32>, vector<8x32xf32>, vector<256x32xf32> -> vector<256x32xf32>
    %40 = arith.addf %33, %39 : vector<256x32xf32>
    %c0_50 = arith.constant 0 : index
    %c2_51 = arith.constant 2 : index
    %c0_52 = arith.constant 0 : index
    %c0_53 = arith.constant 0 : index
    %41 = vector.load %arg1[%c0_50, %c2_51, %c0_52, %c0_53] : memref<1x18x18x8xf32, #tpu.memory_space<vmem>>, vector<1x16x16x8xf32>
    %42 = vector.shape_cast %41 : vector<1x16x16x8xf32> to vector<16x16x8xf32>
    %43 = vector.shape_cast %42 : vector<16x16x8xf32> to vector<256x8xf32>
    %c2_54 = arith.constant 2 : index
    %c0_55 = arith.constant 0 : index
    %c0_56 = arith.constant 0 : index
    %c0_57 = arith.constant 0 : index
    %44 = vector.load %arg2[%c2_54, %c0_55, %c0_56, %c0_57] : memref<3x3x8x32xf32, #tpu.memory_space<vmem>>, vector<1x1x8x32xf32>
    %45 = vector.shape_cast %44 : vector<1x1x8x32xf32> to vector<8x32xf32>
    %cst_58 = arith.constant dense<0.000000e+00> : vector<256x32xf32>
    %46 = tpu.matmul %43, %45, %cst_58 {dimension_numbers = #tpu.dot_dimension_numbers<[1], [0], [0], [1], [0, 0, 1, 1], [], []>} : vector<256x8xf32>, vector<8x32xf32>, vector<256x32xf32> -> vector<256x32xf32>
    %47 = arith.addf %40, %46 : vector<256x32xf32>
    %c0_59 = arith.constant 0 : index
    %c2_60 = arith.constant 2 : index
    %c1_61 = arith.constant 1 : index
    %c0_62 = arith.constant 0 : index
    %48 = vector.load %arg1[%c0_59, %c2_60, %c1_61, %c0_62] : memref<1x18x18x8xf32, #tpu.memory_space<vmem>>, vector<1x16x16x8xf32>
    %49 = vector.shape_cast %48 : vector<1x16x16x8xf32> to vector<16x16x8xf32>
    %50 = vector.shape_cast %49 : vector<16x16x8xf32> to vector<256x8xf32>
    %c2_63 = arith.constant 2 : index
    %c1_64 = arith.constant 1 : index
    %c0_65 = arith.constant 0 : index
    %c0_66 = arith.constant 0 : index
    %51 = vector.load %arg2[%c2_63, %c1_64, %c0_65, %c0_66] : memref<3x3x8x32xf32, #tpu.memory_space<vmem>>, vector<1x1x8x32xf32>
    %52 = vector.shape_cast %51 : vector<1x1x8x32xf32> to vector<8x32xf32>
    %cst_67 = arith.constant dense<0.000000e+00> : vector<256x32xf32>
    %53 = tpu.matmul %50, %52, %cst_67 {dimension_numbers = #tpu.dot_dimension_numbers<[1], [0], [0], [1], [0, 0, 1, 1], [], []>} : vector<256x8xf32>, vector<8x32xf32>, vector<256x32xf32> -> vector<256x32xf32>
    %54 = arith.addf %47, %53 : vector<256x32xf32>
    %c0_68 = arith.constant 0 : index
    %c2_69 = arith.constant 2 : index
    %c2_70 = arith.constant 2 : index
    %c0_71 = arith.constant 0 : index
    %55 = vector.load %arg1[%c0_68, %c2_69, %c2_70, %c0_71] : memref<1x18x18x8xf32, #tpu.memory_space<vmem>>, vector<1x16x16x8xf32>
    %56 = vector.shape_cast %55 : vector<1x16x16x8xf32> to vector<16x16x8xf32>
    %57 = vector.shape_cast %56 : vector<16x16x8xf32> to vector<256x8xf32>
    %c2_72 = arith.constant 2 : index
    %c2_73 = arith.constant 2 : index
    %c0_74 = arith.constant 0 : index
    %c0_75 = arith.constant 0 : index
    %58 = vector.load %arg2[%c2_72, %c2_73, %c0_74, %c0_75] : memref<3x3x8x32xf32, #tpu.memory_space<vmem>>, vector<1x1x8x32xf32>
    %59 = vector.shape_cast %58 : vector<1x1x8x32xf32> to vector<8x32xf32>
    %cst_76 = arith.constant dense<0.000000e+00> : vector<256x32xf32>
    %60 = tpu.matmul %57, %59, %cst_76 {dimension_numbers = #tpu.dot_dimension_numbers<[1], [0], [0], [1], [0, 0, 1, 1], [], []>} : vector<256x8xf32>, vector<8x32xf32>, vector<256x32xf32> -> vector<256x32xf32>
    %61 = arith.addf %54, %60 : vector<256x32xf32>
    %c0_77 = arith.constant 0 : index
    %c0_78 = arith.constant 0 : index
    %62 = vector.load %arg3[%c0_77, %c0_78] : memref<1x32xf32, #tpu.memory_space<vmem>>, vector<1x32xf32>
    %63 = vector.broadcast %62 : vector<1x32xf32> to vector<256x32xf32>
    %64 = arith.addf %61, %63 : vector<256x32xf32>
    %cst_79 = arith.constant 0.000000e+00 : f32
    %65 = vector.broadcast %cst_79 : f32 to vector<256x32xf32>
    %66 = arith.maximumf %64, %65 : vector<256x32xf32>
    %cst_80 = arith.constant 0.000000e+00 : f32
    %67 = vector.broadcast %cst_80 : f32 to vector<18x18x32xf32>
    %c0_81 = arith.constant 0 : index
    %c0_82 = arith.constant 0 : index
    %c0_83 = arith.constant 0 : index
    %68 = vector.load %arg9[%c0_81, %c0_82, %c0_83] : memref<18x18x32xf32, #tpu.memory_space<vmem>>, vector<18x18x32xf32>
    tpu.vector_store %arg9[%c0_81, %c0_82, %c0_83], %67 {strides = array<i32>} : memref<18x18x32xf32, #tpu.memory_space<vmem>>, vector<18x18x32xf32>,
    %69 = vector.shape_cast %66 : vector<256x32xf32> to vector<16x16x32xf32>
    %c1_84 = arith.constant 1 : index
    %c1_85 = arith.constant 1 : index
    %c0_86 = arith.constant 0 : index
    %70 = vector.load %arg9[%c1_84, %c1_85, %c0_86] : memref<18x18x32xf32, #tpu.memory_space<vmem>>, vector<16x16x32xf32>
    tpu.vector_store %arg9[%c1_84, %c1_85, %c0_86], %69 {strides = array<i32>} : memref<18x18x32xf32, #tpu.memory_space<vmem>>, vector<16x16x32xf32>,
    %c0_87 = arith.constant 0 : index
    %c0_88 = arith.constant 0 : index
    %c0_89 = arith.constant 0 : index
    %71 = vector.load %arg9[%c0_87, %c0_88, %c0_89] : memref<18x18x32xf32, #tpu.memory_space<vmem>>, vector<16x16x32xf32>
    %72 = vector.shape_cast %71 : vector<16x16x32xf32> to vector<256x32xf32>
    %c0_90 = arith.constant 0 : index
    %c0_91 = arith.constant 0 : index
    %c0_92 = arith.constant 0 : index
    %c0_93 = arith.constant 0 : index
    %73 = vector.load %arg4[%c0_90, %c0_91, %c0_92, %c0_93] : memref<3x3x32x32xf32, #tpu.memory_space<vmem>>, vector<1x1x32x32xf32>
    %74 = vector.shape_cast %73 : vector<1x1x32x32xf32> to vector<32x32xf32>
    %cst_94 = arith.constant dense<0.000000e+00> : vector<256x32xf32>
    %75 = tpu.matmul %72, %74, %cst_94 {dimension_numbers = #tpu.dot_dimension_numbers<[1], [0], [0], [1], [0, 0, 1, 1], [], []>} : vector<256x32xf32>, vector<32x32xf32>, vector<256x32xf32> -> vector<256x32xf32>
    %c0_95 = arith.constant 0 : index
    %c1_96 = arith.constant 1 : index
    %c0_97 = arith.constant 0 : index
    %76 = vector.load %arg9[%c0_95, %c1_96, %c0_97] : memref<18x18x32xf32, #tpu.memory_space<vmem>>, vector<16x16x32xf32>
    %77 = vector.shape_cast %76 : vector<16x16x32xf32> to vector<256x32xf32>
    %c0_98 = arith.constant 0 : index
    %c1_99 = arith.constant 1 : index
    %c0_100 = arith.constant 0 : index
    %c0_101 = arith.constant 0 : index
    %78 = vector.load %arg4[%c0_98, %c1_99, %c0_100, %c0_101] : memref<3x3x32x32xf32, #tpu.memory_space<vmem>>, vector<1x1x32x32xf32>
    %79 = vector.shape_cast %78 : vector<1x1x32x32xf32> to vector<32x32xf32>
    %cst_102 = arith.constant dense<0.000000e+00> : vector<256x32xf32>
    %80 = tpu.matmul %77, %79, %cst_102 {dimension_numbers = #tpu.dot_dimension_numbers<[1], [0], [0], [1], [0, 0, 1, 1], [], []>} : vector<256x32xf32>, vector<32x32xf32>, vector<256x32xf32> -> vector<256x32xf32>
    %81 = arith.addf %75, %80 : vector<256x32xf32>
    %c0_103 = arith.constant 0 : index
    %c2_104 = arith.constant 2 : index
    %c0_105 = arith.constant 0 : index
    %82 = vector.load %arg9[%c0_103, %c2_104, %c0_105] : memref<18x18x32xf32, #tpu.memory_space<vmem>>, vector<16x16x32xf32>
    %83 = vector.shape_cast %82 : vector<16x16x32xf32> to vector<256x32xf32>
    %c0_106 = arith.constant 0 : index
    %c2_107 = arith.constant 2 : index
    %c0_108 = arith.constant 0 : index
    %c0_109 = arith.constant 0 : index
    %84 = vector.load %arg4[%c0_106, %c2_107, %c0_108, %c0_109] : memref<3x3x32x32xf32, #tpu.memory_space<vmem>>, vector<1x1x32x32xf32>
    %85 = vector.shape_cast %84 : vector<1x1x32x32xf32> to vector<32x32xf32>
    %cst_110 = arith.constant dense<0.000000e+00> : vector<256x32xf32>
    %86 = tpu.matmul %83, %85, %cst_110 {dimension_numbers = #tpu.dot_dimension_numbers<[1], [0], [0], [1], [0, 0, 1, 1], [], []>} : vector<256x32xf32>, vector<32x32xf32>, vector<256x32xf32> -> vector<256x32xf32>
    %87 = arith.addf %81, %86 : vector<256x32xf32>
    %c1_111 = arith.constant 1 : index
    %c0_112 = arith.constant 0 : index
    %c0_113 = arith.constant 0 : index
    %88 = vector.load %arg9[%c1_111, %c0_112, %c0_113] : memref<18x18x32xf32, #tpu.memory_space<vmem>>, vector<16x16x32xf32>
    %89 = vector.shape_cast %88 : vector<16x16x32xf32> to vector<256x32xf32>
    %c1_114 = arith.constant 1 : index
    %c0_115 = arith.constant 0 : index
    %c0_116 = arith.constant 0 : index
    %c0_117 = arith.constant 0 : index
    %90 = vector.load %arg4[%c1_114, %c0_115, %c0_116, %c0_117] : memref<3x3x32x32xf32, #tpu.memory_space<vmem>>, vector<1x1x32x32xf32>
    %91 = vector.shape_cast %90 : vector<1x1x32x32xf32> to vector<32x32xf32>
    %cst_118 = arith.constant dense<0.000000e+00> : vector<256x32xf32>
    %92 = tpu.matmul %89, %91, %cst_118 {dimension_numbers = #tpu.dot_dimension_numbers<[1], [0], [0], [1], [0, 0, 1, 1], [], []>} : vector<256x32xf32>, vector<32x32xf32>, vector<256x32xf32> -> vector<256x32xf32>
    %93 = arith.addf %87, %92 : vector<256x32xf32>
    %c1_119 = arith.constant 1 : index
    %c1_120 = arith.constant 1 : index
    %c0_121 = arith.constant 0 : index
    %94 = vector.load %arg9[%c1_119, %c1_120, %c0_121] : memref<18x18x32xf32, #tpu.memory_space<vmem>>, vector<16x16x32xf32>
    %95 = vector.shape_cast %94 : vector<16x16x32xf32> to vector<256x32xf32>
    %c1_122 = arith.constant 1 : index
    %c1_123 = arith.constant 1 : index
    %c0_124 = arith.constant 0 : index
    %c0_125 = arith.constant 0 : index
    %96 = vector.load %arg4[%c1_122, %c1_123, %c0_124, %c0_125] : memref<3x3x32x32xf32, #tpu.memory_space<vmem>>, vector<1x1x32x32xf32>
    %97 = vector.shape_cast %96 : vector<1x1x32x32xf32> to vector<32x32xf32>
    %cst_126 = arith.constant dense<0.000000e+00> : vector<256x32xf32>
    %98 = tpu.matmul %95, %97, %cst_126 {dimension_numbers = #tpu.dot_dimension_numbers<[1], [0], [0], [1], [0, 0, 1, 1], [], []>} : vector<256x32xf32>, vector<32x32xf32>, vector<256x32xf32> -> vector<256x32xf32>
    %99 = arith.addf %93, %98 : vector<256x32xf32>
    %c1_127 = arith.constant 1 : index
    %c2_128 = arith.constant 2 : index
    %c0_129 = arith.constant 0 : index
    %100 = vector.load %arg9[%c1_127, %c2_128, %c0_129] : memref<18x18x32xf32, #tpu.memory_space<vmem>>, vector<16x16x32xf32>
    %101 = vector.shape_cast %100 : vector<16x16x32xf32> to vector<256x32xf32>
    %c1_130 = arith.constant 1 : index
    %c2_131 = arith.constant 2 : index
    %c0_132 = arith.constant 0 : index
    %c0_133 = arith.constant 0 : index
    %102 = vector.load %arg4[%c1_130, %c2_131, %c0_132, %c0_133] : memref<3x3x32x32xf32, #tpu.memory_space<vmem>>, vector<1x1x32x32xf32>
    %103 = vector.shape_cast %102 : vector<1x1x32x32xf32> to vector<32x32xf32>
    %cst_134 = arith.constant dense<0.000000e+00> : vector<256x32xf32>
    %104 = tpu.matmul %101, %103, %cst_134 {dimension_numbers = #tpu.dot_dimension_numbers<[1], [0], [0], [1], [0, 0, 1, 1], [], []>} : vector<256x32xf32>, vector<32x32xf32>, vector<256x32xf32> -> vector<256x32xf32>
    %105 = arith.addf %99, %104 : vector<256x32xf32>
    %c2_135 = arith.constant 2 : index
    %c0_136 = arith.constant 0 : index
    %c0_137 = arith.constant 0 : index
    %106 = vector.load %arg9[%c2_135, %c0_136, %c0_137] : memref<18x18x32xf32, #tpu.memory_space<vmem>>, vector<16x16x32xf32>
    %107 = vector.shape_cast %106 : vector<16x16x32xf32> to vector<256x32xf32>
    %c2_138 = arith.constant 2 : index
    %c0_139 = arith.constant 0 : index
    %c0_140 = arith.constant 0 : index
    %c0_141 = arith.constant 0 : index
    %108 = vector.load %arg4[%c2_138, %c0_139, %c0_140, %c0_141] : memref<3x3x32x32xf32, #tpu.memory_space<vmem>>, vector<1x1x32x32xf32>
    %109 = vector.shape_cast %108 : vector<1x1x32x32xf32> to vector<32x32xf32>
    %cst_142 = arith.constant dense<0.000000e+00> : vector<256x32xf32>
    %110 = tpu.matmul %107, %109, %cst_142 {dimension_numbers = #tpu.dot_dimension_numbers<[1], [0], [0], [1], [0, 0, 1, 1], [], []>} : vector<256x32xf32>, vector<32x32xf32>, vector<256x32xf32> -> vector<256x32xf32>
    %111 = arith.addf %105, %110 : vector<256x32xf32>
    %c2_143 = arith.constant 2 : index
    %c1_144 = arith.constant 1 : index
    %c0_145 = arith.constant 0 : index
    %112 = vector.load %arg9[%c2_143, %c1_144, %c0_145] : memref<18x18x32xf32, #tpu.memory_space<vmem>>, vector<16x16x32xf32>
    %113 = vector.shape_cast %112 : vector<16x16x32xf32> to vector<256x32xf32>
    %c2_146 = arith.constant 2 : index
    %c1_147 = arith.constant 1 : index
    %c0_148 = arith.constant 0 : index
    %c0_149 = arith.constant 0 : index
    %114 = vector.load %arg4[%c2_146, %c1_147, %c0_148, %c0_149] : memref<3x3x32x32xf32, #tpu.memory_space<vmem>>, vector<1x1x32x32xf32>
    %115 = vector.shape_cast %114 : vector<1x1x32x32xf32> to vector<32x32xf32>
    %cst_150 = arith.constant dense<0.000000e+00> : vector<256x32xf32>
    %116 = tpu.matmul %113, %115, %cst_150 {dimension_numbers = #tpu.dot_dimension_numbers<[1], [0], [0], [1], [0, 0, 1, 1], [], []>} : vector<256x32xf32>, vector<32x32xf32>, vector<256x32xf32> -> vector<256x32xf32>
    %117 = arith.addf %111, %116 : vector<256x32xf32>
    %c2_151 = arith.constant 2 : index
    %c2_152 = arith.constant 2 : index
    %c0_153 = arith.constant 0 : index
    %118 = vector.load %arg9[%c2_151, %c2_152, %c0_153] : memref<18x18x32xf32, #tpu.memory_space<vmem>>, vector<16x16x32xf32>
    %119 = vector.shape_cast %118 : vector<16x16x32xf32> to vector<256x32xf32>
    %c2_154 = arith.constant 2 : index
    %c2_155 = arith.constant 2 : index
    %c0_156 = arith.constant 0 : index
    %c0_157 = arith.constant 0 : index
    %120 = vector.load %arg4[%c2_154, %c2_155, %c0_156, %c0_157] : memref<3x3x32x32xf32, #tpu.memory_space<vmem>>, vector<1x1x32x32xf32>
    %121 = vector.shape_cast %120 : vector<1x1x32x32xf32> to vector<32x32xf32>
    %cst_158 = arith.constant dense<0.000000e+00> : vector<256x32xf32>
    %122 = tpu.matmul %119, %121, %cst_158 {dimension_numbers = #tpu.dot_dimension_numbers<[1], [0], [0], [1], [0, 0, 1, 1], [], []>} : vector<256x32xf32>, vector<32x32xf32>, vector<256x32xf32> -> vector<256x32xf32>
    %123 = arith.addf %117, %122 : vector<256x32xf32>
    %c0_159 = arith.constant 0 : index
    %c0_160 = arith.constant 0 : index
    %124 = vector.load %arg5[%c0_159, %c0_160] : memref<1x32xf32, #tpu.memory_space<vmem>>, vector<1x32xf32>
    %125 = vector.broadcast %124 : vector<1x32xf32> to vector<256x32xf32>
    %126 = arith.addf %123, %125 : vector<256x32xf32>
    %cst_161 = arith.constant 0.000000e+00 : f32
    %127 = vector.broadcast %cst_161 : f32 to vector<256x32xf32>
    %128 = arith.maximumf %126, %127 : vector<256x32xf32>
    %cst_162 = arith.constant 0.000000e+00 : f32
    %129 = vector.broadcast %cst_162 : f32 to vector<18x18x32xf32>
    %c0_163 = arith.constant 0 : index
    %c0_164 = arith.constant 0 : index
    %c0_165 = arith.constant 0 : index
    %130 = vector.load %arg10[%c0_163, %c0_164, %c0_165] : memref<18x18x32xf32, #tpu.memory_space<vmem>>, vector<18x18x32xf32>
    tpu.vector_store %arg10[%c0_163, %c0_164, %c0_165], %129 {strides = array<i32>} : memref<18x18x32xf32, #tpu.memory_space<vmem>>, vector<18x18x32xf32>,
    %131 = vector.shape_cast %128 : vector<256x32xf32> to vector<16x16x32xf32>
    %c1_166 = arith.constant 1 : index
    %c1_167 = arith.constant 1 : index
    %c0_168 = arith.constant 0 : index
    %132 = vector.load %arg10[%c1_166, %c1_167, %c0_168] : memref<18x18x32xf32, #tpu.memory_space<vmem>>, vector<16x16x32xf32>
    tpu.vector_store %arg10[%c1_166, %c1_167, %c0_168], %131 {strides = array<i32>} : memref<18x18x32xf32, #tpu.memory_space<vmem>>, vector<16x16x32xf32>,
    %c0_169 = arith.constant 0 : index
    %c0_170 = arith.constant 0 : index
    %c0_171 = arith.constant 0 : index
    %133 = vector.load %arg10[%c0_169, %c0_170, %c0_171] : memref<18x18x32xf32, #tpu.memory_space<vmem>>, vector<16x16x32xf32>
    %134 = vector.shape_cast %133 : vector<16x16x32xf32> to vector<256x32xf32>
    %c0_172 = arith.constant 0 : index
    %c0_173 = arith.constant 0 : index
    %c0_174 = arith.constant 0 : index
    %c0_175 = arith.constant 0 : index
    %135 = vector.load %arg6[%c0_172, %c0_173, %c0_174, %c0_175] : memref<3x3x32x8xf32, #tpu.memory_space<vmem>>, vector<1x1x32x8xf32>
    %136 = vector.shape_cast %135 : vector<1x1x32x8xf32> to vector<32x8xf32>
    %cst_176 = arith.constant dense<0.000000e+00> : vector<256x8xf32>
    %137 = tpu.matmul %134, %136, %cst_176 {dimension_numbers = #tpu.dot_dimension_numbers<[1], [0], [0], [1], [0, 0, 1, 1], [], []>} : vector<256x32xf32>, vector<32x8xf32>, vector<256x8xf32> -> vector<256x8xf32>
    %c0_177 = arith.constant 0 : index
    %c1_178 = arith.constant 1 : index
    %c0_179 = arith.constant 0 : index
    %138 = vector.load %arg10[%c0_177, %c1_178, %c0_179] : memref<18x18x32xf32, #tpu.memory_space<vmem>>, vector<16x16x32xf32>
    %139 = vector.shape_cast %138 : vector<16x16x32xf32> to vector<256x32xf32>
    %c0_180 = arith.constant 0 : index
    %c1_181 = arith.constant 1 : index
    %c0_182 = arith.constant 0 : index
    %c0_183 = arith.constant 0 : index
    %140 = vector.load %arg6[%c0_180, %c1_181, %c0_182, %c0_183] : memref<3x3x32x8xf32, #tpu.memory_space<vmem>>, vector<1x1x32x8xf32>
    %141 = vector.shape_cast %140 : vector<1x1x32x8xf32> to vector<32x8xf32>
    %cst_184 = arith.constant dense<0.000000e+00> : vector<256x8xf32>
    %142 = tpu.matmul %139, %141, %cst_184 {dimension_numbers = #tpu.dot_dimension_numbers<[1], [0], [0], [1], [0, 0, 1, 1], [], []>} : vector<256x32xf32>, vector<32x8xf32>, vector<256x8xf32> -> vector<256x8xf32>
    %143 = arith.addf %137, %142 : vector<256x8xf32>
    %c0_185 = arith.constant 0 : index
    %c2_186 = arith.constant 2 : index
    %c0_187 = arith.constant 0 : index
    %144 = vector.load %arg10[%c0_185, %c2_186, %c0_187] : memref<18x18x32xf32, #tpu.memory_space<vmem>>, vector<16x16x32xf32>
    %145 = vector.shape_cast %144 : vector<16x16x32xf32> to vector<256x32xf32>
    %c0_188 = arith.constant 0 : index
    %c2_189 = arith.constant 2 : index
    %c0_190 = arith.constant 0 : index
    %c0_191 = arith.constant 0 : index
    %146 = vector.load %arg6[%c0_188, %c2_189, %c0_190, %c0_191] : memref<3x3x32x8xf32, #tpu.memory_space<vmem>>, vector<1x1x32x8xf32>
    %147 = vector.shape_cast %146 : vector<1x1x32x8xf32> to vector<32x8xf32>
    %cst_192 = arith.constant dense<0.000000e+00> : vector<256x8xf32>
    %148 = tpu.matmul %145, %147, %cst_192 {dimension_numbers = #tpu.dot_dimension_numbers<[1], [0], [0], [1], [0, 0, 1, 1], [], []>} : vector<256x32xf32>, vector<32x8xf32>, vector<256x8xf32> -> vector<256x8xf32>
    %149 = arith.addf %143, %148 : vector<256x8xf32>
    %c1_193 = arith.constant 1 : index
    %c0_194 = arith.constant 0 : index
    %c0_195 = arith.constant 0 : index
    %150 = vector.load %arg10[%c1_193, %c0_194, %c0_195] : memref<18x18x32xf32, #tpu.memory_space<vmem>>, vector<16x16x32xf32>
    %151 = vector.shape_cast %150 : vector<16x16x32xf32> to vector<256x32xf32>
    %c1_196 = arith.constant 1 : index
    %c0_197 = arith.constant 0 : index
    %c0_198 = arith.constant 0 : index
    %c0_199 = arith.constant 0 : index
    %152 = vector.load %arg6[%c1_196, %c0_197, %c0_198, %c0_199] : memref<3x3x32x8xf32, #tpu.memory_space<vmem>>, vector<1x1x32x8xf32>
    %153 = vector.shape_cast %152 : vector<1x1x32x8xf32> to vector<32x8xf32>
    %cst_200 = arith.constant dense<0.000000e+00> : vector<256x8xf32>
    %154 = tpu.matmul %151, %153, %cst_200 {dimension_numbers = #tpu.dot_dimension_numbers<[1], [0], [0], [1], [0, 0, 1, 1], [], []>} : vector<256x32xf32>, vector<32x8xf32>, vector<256x8xf32> -> vector<256x8xf32>
    %155 = arith.addf %149, %154 : vector<256x8xf32>
    %c1_201 = arith.constant 1 : index
    %c1_202 = arith.constant 1 : index
    %c0_203 = arith.constant 0 : index
    %156 = vector.load %arg10[%c1_201, %c1_202, %c0_203] : memref<18x18x32xf32, #tpu.memory_space<vmem>>, vector<16x16x32xf32>
    %157 = vector.shape_cast %156 : vector<16x16x32xf32> to vector<256x32xf32>
    %c1_204 = arith.constant 1 : index
    %c1_205 = arith.constant 1 : index
    %c0_206 = arith.constant 0 : index
    %c0_207 = arith.constant 0 : index
    %158 = vector.load %arg6[%c1_204, %c1_205, %c0_206, %c0_207] : memref<3x3x32x8xf32, #tpu.memory_space<vmem>>, vector<1x1x32x8xf32>
    %159 = vector.shape_cast %158 : vector<1x1x32x8xf32> to vector<32x8xf32>
    %cst_208 = arith.constant dense<0.000000e+00> : vector<256x8xf32>
    %160 = tpu.matmul %157, %159, %cst_208 {dimension_numbers = #tpu.dot_dimension_numbers<[1], [0], [0], [1], [0, 0, 1, 1], [], []>} : vector<256x32xf32>, vector<32x8xf32>, vector<256x8xf32> -> vector<256x8xf32>
    %161 = arith.addf %155, %160 : vector<256x8xf32>
    %c1_209 = arith.constant 1 : index
    %c2_210 = arith.constant 2 : index
    %c0_211 = arith.constant 0 : index
    %162 = vector.load %arg10[%c1_209, %c2_210, %c0_211] : memref<18x18x32xf32, #tpu.memory_space<vmem>>, vector<16x16x32xf32>
    %163 = vector.shape_cast %162 : vector<16x16x32xf32> to vector<256x32xf32>
    %c1_212 = arith.constant 1 : index
    %c2_213 = arith.constant 2 : index
    %c0_214 = arith.constant 0 : index
    %c0_215 = arith.constant 0 : index
    %164 = vector.load %arg6[%c1_212, %c2_213, %c0_214, %c0_215] : memref<3x3x32x8xf32, #tpu.memory_space<vmem>>, vector<1x1x32x8xf32>
    %165 = vector.shape_cast %164 : vector<1x1x32x8xf32> to vector<32x8xf32>
    %cst_216 = arith.constant dense<0.000000e+00> : vector<256x8xf32>
    %166 = tpu.matmul %163, %165, %cst_216 {dimension_numbers = #tpu.dot_dimension_numbers<[1], [0], [0], [1], [0, 0, 1, 1], [], []>} : vector<256x32xf32>, vector<32x8xf32>, vector<256x8xf32> -> vector<256x8xf32>
    %167 = arith.addf %161, %166 : vector<256x8xf32>
    %c2_217 = arith.constant 2 : index
    %c0_218 = arith.constant 0 : index
    %c0_219 = arith.constant 0 : index
    %168 = vector.load %arg10[%c2_217, %c0_218, %c0_219] : memref<18x18x32xf32, #tpu.memory_space<vmem>>, vector<16x16x32xf32>
    %169 = vector.shape_cast %168 : vector<16x16x32xf32> to vector<256x32xf32>
    %c2_220 = arith.constant 2 : index
    %c0_221 = arith.constant 0 : index
    %c0_222 = arith.constant 0 : index
    %c0_223 = arith.constant 0 : index
    %170 = vector.load %arg6[%c2_220, %c0_221, %c0_222, %c0_223] : memref<3x3x32x8xf32, #tpu.memory_space<vmem>>, vector<1x1x32x8xf32>
    %171 = vector.shape_cast %170 : vector<1x1x32x8xf32> to vector<32x8xf32>
    %cst_224 = arith.constant dense<0.000000e+00> : vector<256x8xf32>
    %172 = tpu.matmul %169, %171, %cst_224 {dimension_numbers = #tpu.dot_dimension_numbers<[1], [0], [0], [1], [0, 0, 1, 1], [], []>} : vector<256x32xf32>, vector<32x8xf32>, vector<256x8xf32> -> vector<256x8xf32>
    %173 = arith.addf %167, %172 : vector<256x8xf32>
    %c2_225 = arith.constant 2 : index
    %c1_226 = arith.constant 1 : index
    %c0_227 = arith.constant 0 : index
    %174 = vector.load %arg10[%c2_225, %c1_226, %c0_227] : memref<18x18x32xf32, #tpu.memory_space<vmem>>, vector<16x16x32xf32>
    %175 = vector.shape_cast %174 : vector<16x16x32xf32> to vector<256x32xf32>
    %c2_228 = arith.constant 2 : index
    %c1_229 = arith.constant 1 : index
    %c0_230 = arith.constant 0 : index
    %c0_231 = arith.constant 0 : index
    %176 = vector.load %arg6[%c2_228, %c1_229, %c0_230, %c0_231] : memref<3x3x32x8xf32, #tpu.memory_space<vmem>>, vector<1x1x32x8xf32>
    %177 = vector.shape_cast %176 : vector<1x1x32x8xf32> to vector<32x8xf32>
    %cst_232 = arith.constant dense<0.000000e+00> : vector<256x8xf32>
    %178 = tpu.matmul %175, %177, %cst_232 {dimension_numbers = #tpu.dot_dimension_numbers<[1], [0], [0], [1], [0, 0, 1, 1], [], []>} : vector<256x32xf32>, vector<32x8xf32>, vector<256x8xf32> -> vector<256x8xf32>
    %179 = arith.addf %173, %178 : vector<256x8xf32>
    %c2_233 = arith.constant 2 : index
    %c2_234 = arith.constant 2 : index
    %c0_235 = arith.constant 0 : index
    %180 = vector.load %arg10[%c2_233, %c2_234, %c0_235] : memref<18x18x32xf32, #tpu.memory_space<vmem>>, vector<16x16x32xf32>
    %181 = vector.shape_cast %180 : vector<16x16x32xf32> to vector<256x32xf32>
    %c2_236 = arith.constant 2 : index
    %c2_237 = arith.constant 2 : index
    %c0_238 = arith.constant 0 : index
    %c0_239 = arith.constant 0 : index
    %182 = vector.load %arg6[%c2_236, %c2_237, %c0_238, %c0_239] : memref<3x3x32x8xf32, #tpu.memory_space<vmem>>, vector<1x1x32x8xf32>
    %183 = vector.shape_cast %182 : vector<1x1x32x8xf32> to vector<32x8xf32>
    %cst_240 = arith.constant dense<0.000000e+00> : vector<256x8xf32>
    %184 = tpu.matmul %181, %183, %cst_240 {dimension_numbers = #tpu.dot_dimension_numbers<[1], [0], [0], [1], [0, 0, 1, 1], [], []>} : vector<256x32xf32>, vector<32x8xf32>, vector<256x8xf32> -> vector<256x8xf32>
    %185 = arith.addf %179, %184 : vector<256x8xf32>
    %c0_241 = arith.constant 0 : index
    %c0_242 = arith.constant 0 : index
    %186 = vector.load %arg7[%c0_241, %c0_242] : memref<1x8xf32, #tpu.memory_space<vmem>>, vector<1x8xf32>
    %187 = vector.broadcast %186 : vector<1x8xf32> to vector<256x8xf32>
    %188 = arith.addf %185, %187 : vector<256x8xf32>
    %c0_243 = arith.constant 0 : index
    %c0_244 = arith.constant 0 : index
    %c0_245 = arith.constant 0 : index
    %189 = vector.load %arg8[%c0_243, %c0_244, %c0_245] : memref<1x256x8xf32, #tpu.memory_space<vmem>>, vector<1x256x8xf32>
    %190 = vector.shape_cast %189 : vector<1x256x8xf32> to vector<256x8xf32>
    %191 = vector.shape_cast %188 : vector<256x8xf32> to vector<1x256x8xf32>
    tpu.vector_store %arg8[%c0_243, %c0_244, %c0_245], %191 {strides = array<i32>} : memref<1x256x8xf32, #tpu.memory_space<vmem>>, vector<1x256x8xf32>,
    return
  }
  func.func @transform_0(%arg0: i32) -> (i32, i32, i32, i32) {
    %c0_i32 = arith.constant 0 : i32
    %c0_i32_0 = arith.constant 0 : i32
    %c0_i32_1 = arith.constant 0 : i32
    %c0_i32_2 = arith.constant 0 : i32
    return %arg0, %c0_i32, %c0_i32_0, %c0_i32_1 : i32, i32, i32, i32
  }
  func.func @transform_1(%arg0: i32) -> (i32, i32, i32, i32) {
    %c0_i32 = arith.constant 0 : i32
    %c0_i32_0 = arith.constant 0 : i32
    %c0_i32_1 = arith.constant 0 : i32
    %c0_i32_2 = arith.constant 0 : i32
    %c0_i32_3 = arith.constant 0 : i32
    return %c0_i32, %c0_i32_0, %c0_i32_1, %c0_i32_2 : i32, i32, i32, i32
  }
  func.func @transform_2(%arg0: i32) -> (i32, i32) {
    %c0_i32 = arith.constant 0 : i32
    %c0_i32_0 = arith.constant 0 : i32
    %c0_i32_1 = arith.constant 0 : i32
    return %c0_i32, %c0_i32_0 : i32, i32
  }
  func.func @transform_3(%arg0: i32) -> (i32, i32, i32, i32) {
    %c0_i32 = arith.constant 0 : i32
    %c0_i32_0 = arith.constant 0 : i32
    %c0_i32_1 = arith.constant 0 : i32
    %c0_i32_2 = arith.constant 0 : i32
    %c0_i32_3 = arith.constant 0 : i32
    return %c0_i32, %c0_i32_0, %c0_i32_1, %c0_i32_2 : i32, i32, i32, i32
  }
  func.func @transform_4(%arg0: i32) -> (i32, i32) {
    %c0_i32 = arith.constant 0 : i32
    %c0_i32_0 = arith.constant 0 : i32
    %c0_i32_1 = arith.constant 0 : i32
    return %c0_i32, %c0_i32_0 : i32, i32
  }
  func.func @transform_5(%arg0: i32) -> (i32, i32, i32, i32) {
    %c0_i32 = arith.constant 0 : i32
    %c0_i32_0 = arith.constant 0 : i32
    %c0_i32_1 = arith.constant 0 : i32
    %c0_i32_2 = arith.constant 0 : i32
    %c0_i32_3 = arith.constant 0 : i32
    return %c0_i32, %c0_i32_0, %c0_i32_1, %c0_i32_2 : i32, i32, i32, i32
  }
  func.func @transform_6(%arg0: i32) -> (i32, i32) {
    %c0_i32 = arith.constant 0 : i32
    %c0_i32_0 = arith.constant 0 : i32
    %c0_i32_1 = arith.constant 0 : i32
    return %c0_i32, %c0_i32_0 : i32, i32
  }
  func.func @transform_7(%arg0: i32) -> (i32, i32, i32) {
    %c0_i32 = arith.constant 0 : i32
    %c0_i32_0 = arith.constant 0 : i32
    %c0_i32_1 = arith.constant 0 : i32
    return %arg0, %c0_i32, %c0_i32_0 : i32, i32, i32
  }
}

</mosaic_0001>

<llo_original>
// kernel: tpu_custom_call.1
$region0: #{tpu_custom_call.1}
  #allocation0 [shape = 'u32[]', space=smem, size = 0x4, offset = 0x4, fixed_abs, tag = 'smem constant byte address 0x4 - core index']
  #allocation1 [shape = 'u32[144,128]{1,0:T(1,128)}', space=vmem, size = 0x12000, scoped, tag = 'internal scratch']
  #allocation2 [shape = 'f32[18,18,32]{2,1,0:T(8,128)}', space=vmem, size = 0x36000, scoped, tag = 'scratch operand']
  #allocation3 [shape = 'f32[18,18,32]{2,1,0:T(8,128)}', space=vmem, size = 0x36000, scoped, tag = 'scratch operand']
  %s0 = inlined_call_operand.vmem [shape: f32[2,18,18,8], index: 0, kind: input, shape index: {}]
  %s1 = inlined_call_operand.vmem [shape: f32[3,3,8,32], index: 1, kind: input, shape index: {}]
  %s2 = inlined_call_operand.vmem [shape: f32[1,32], index: 2, kind: input, shape index: {}]
  %s3 = inlined_call_operand.vmem [shape: f32[3,3,32,32], index: 3, kind: input, shape index: {}]
  %s4 = inlined_call_operand.vmem [shape: f32[1,32], index: 4, kind: input, shape index: {}]
  %s5 = inlined_call_operand.vmem [shape: f32[3,3,32,8], index: 5, kind: input, shape index: {}]
  %s6 = inlined_call_operand.vmem [shape: f32[1,8], index: 6, kind: input, shape index: {}]
  %s7 = inlined_call_operand.vmem [shape: f32[2,256,8], index: 7, kind: output, shape index: {}]
  %s8 = sld [smem:[#allocation0]]
  $region61: #{tpu_custom_call.1} parent=0
    _
  %s10 = ssub.s32 1, %s8
  %s11 = scalar_select 0, %s10, %s8
  loop: start=0, step=1, limit=4
  $region2: #{tpu_custom_call.1} parent=0 // loop_pre_header
    _
  $region3: #{tpu_custom_call.1} parent=0 // loop_header
    %s13 = sphi 0, %s17
    %p14 = scmp.ge.s32.totalorder %s13, 4
    %s23 = sphi 0, %s25
    %s26 = sphi 0, %s23
    %s27 = sphi 0, %s26
    %s43 = sphi 0, %s27
    %s47 = sphi 0, %s47
    %s49 = sphi 0, %s47
    %s50 = sphi 0, %s49
    %s64 = sphi 0, %s50
    %s68 = sphi 0, %s68
    %s70 = sphi 0, %s68
    %s71 = sphi 0, %s70
    %s85 = sphi 0, %s71
    %s89 = sphi 0, %s89
    %s91 = sphi 0, %s89
    %s92 = sphi 0, %s91
    %s106 = sphi 0, %s92
    %s110 = sphi 0, %s110
    %s112 = sphi 0, %s110
    %s113 = sphi 0, %s112
    %s127 = sphi 0, %s113
    %s131 = sphi 0, %s131
    %s133 = sphi 0, %s131
    %s134 = sphi 0, %s133
    %s148 = sphi 0, %s134
    %s152 = sphi 0, %s152
    %s154 = sphi 0, %s152
    %s155 = sphi 0, %s154
    %s169 = sphi 0, %s155
    %s175 = sphi 0, %s177
    %s178 = sphi 0, %s175
    %s179 = sphi 0, %s178
    %s195 = sphi 0, %s179
  $region4: #{tpu_custom_call.1} parent=0 // loop_header_branch
    %16 = sbr.rel (%p14) target = $region8
  $region5: #{tpu_custom_call.1} parent=0 // loop_body
    %s18 = ssub.s32 %s13, 1
    %s19 = ssub.s32 %s13, 2
    %s20 = sadd.s32 %s13, 1
    %s21 = ssub.s32 %s13, %s20
    %p22 = scmp.eq.s32.totalorder %s21, 0
    %s24 = sadd.s32 %s23, 1
    %s25 = scalar_select %p22, %s23, %s24
    %p28 = pneg %p22
    %p29 = scmp.eq.s32.totalorder %s13, 1
    %p30 = por %p28, %p29
    %p31 = scmp.ne.s32.totalorder %s23, %s26
    %p32 = scmp.eq.s32.totalorder %s13, 0
    %p33 = por %p31, %p32
    %p34 = scmp.ne.s32.totalorder %s23, %s26
    %p35 = scmp.eq.s32.totalorder %s18, 1
    %p36 = por %p34, %p35
    %p37 = scmp.ne.s32.totalorder %s26, %s27
    %p38 = scmp.eq.s32.totalorder %s18, 0
    %p39 = por %p37, %p38
    %p40 = scmp.ne.s32.totalorder %s26, %s27
    %p41 = scmp.eq.s32.totalorder %s19, 1
    %p42 = por %p40, %p41
    %p44 = scmp.ne.s32.totalorder %s27, %s43
    %p45 = scmp.eq.s32.totalorder %s19, 0
    %p46 = por %p44, %p45
    %s48 = sadd.s32 %s47, 1
    %p51 = scmp.eq.s32.totalorder %s13, 1
    %p52 = scmp.ne.s32.totalorder %s47, %s49
    %p53 = scmp.eq.s32.totalorder %s13, 0
    %p54 = por %p52, %p53
    %p55 = scmp.ne.s32.totalorder %s47, %s49
    %p56 = scmp.eq.s32.totalorder %s18, 1
    %p57 = por %p55, %p56
    %p58 = scmp.ne.s32.totalorder %s49, %s50
    %p59 = scmp.eq.s32.totalorder %s18, 0
    %p60 = por %p58, %p59
    %p61 = scmp.ne.s32.totalorder %s49, %s50
    %p62 = scmp.eq.s32.totalorder %s19, 1
    %p63 = por %p61, %p62
    %p65 = scmp.ne.s32.totalorder %s50, %s64
    %p66 = scmp.eq.s32.totalorder %s19, 0
    %p67 = por %p65, %p66
    %s69 = sadd.s32 %s68, 1
    %p72 = scmp.eq.s32.totalorder %s13, 1
    %p73 = scmp.ne.s32.totalorder %s68, %s70
    %p74 = scmp.eq.s32.totalorder %s13, 0
    %p75 = por %p73, %p74
    %p76 = scmp.ne.s32.totalorder %s68, %s70
    %p77 = scmp.eq.s32.totalorder %s18, 1
    %p78 = por %p76, %p77
    %p79 = scmp.ne.s32.totalorder %s70, %s71
    %p80 = scmp.eq.s32.totalorder %s18, 0
    %p81 = por %p79, %p80
    %p82 = scmp.ne.s32.totalorder %s70, %s71
    %p83 = scmp.eq.s32.totalorder %s19, 1
    %p84 = por %p82, %p83
    %p86 = scmp.ne.s32.totalorder %s71, %s85
    %p87 = scmp.eq.s32.totalorder %s19, 0
    %p88 = por %p86, %p87
    %s90 = sadd.s32 %s89, 1
    %p93 = scmp.eq.s32.totalorder %s13, 1
    %p94 = scmp.ne.s32.totalorder %s89, %s91
    %p95 = scmp.eq.s32.totalorder %s13, 0
    %p96 = por %p94, %p95
    %p97 = scmp.ne.s32.totalorder %s89, %s91
    %p98 = scmp.eq.s32.totalorder %s18, 1
    %p99 = por %p97, %p98
    %p100 = scmp.ne.s32.totalorder %s91, %s92
    %p101 = scmp.eq.s32.totalorder %s18, 0
    %p102 = por %p100, %p101
    %p103 = scmp.ne.s32.totalorder %s91, %s92
    %p104 = scmp.eq.s32.totalorder %s19, 1
    %p105 = por %p103, %p104
    %p107 = scmp.ne.s32.totalorder %s92, %s106
    %p108 = scmp.eq.s32.totalorder %s19, 0
    %p109 = por %p107, %p108
    %s111 = sadd.s32 %s110, 1
    %p114 = scmp.eq.s32.totalorder %s13, 1
    %p115 = scmp.ne.s32.totalorder %s110, %s112
    %p116 = scmp.eq.s32.totalorder %s13, 0
    %p117 = por %p115, %p116
    %p118 = scmp.ne.s32.totalorder %s110, %s112
    %p119 = scmp.eq.s32.totalorder %s18, 1
    %p120 = por %p118, %p119
    %p121 = scmp.ne.s32.totalorder %s112, %s113
    %p122 = scmp.eq.s32.totalorder %s18, 0
    %p123 = por %p121, %p122
    %p124 = scmp.ne.s32.totalorder %s112, %s113
    %p125 = scmp.eq.s32.totalorder %s19, 1
    %p126 = por %p124, %p125
    %p128 = scmp.ne.s32.totalorder %s113, %s127
    %p129 = scmp.eq.s32.totalorder %s19, 0
    %p130 = por %p128, %p129
    %s132 = sadd.s32 %s131, 1
    %p135 = scmp.eq.s32.totalorder %s13, 1
    %p136 = scmp.ne.s32.totalorder %s131, %s133
    %p137 = scmp.eq.s32.totalorder %s13, 0
    %p138 = por %p136, %p137
    %p139 = scmp.ne.s32.totalorder %s131, %s133
    %p140 = scmp.eq.s32.totalorder %s18, 1
    %p141 = por %p139, %p140
    %p142 = scmp.ne.s32.totalorder %s133, %s134
    %p143 = scmp.eq.s32.totalorder %s18, 0
    %p144 = por %p142, %p143
    %p145 = scmp.ne.s32.totalorder %s133, %s134
    %p146 = scmp.eq.s32.totalorder %s19, 1
    %p147 = por %p145, %p146
    %p149 = scmp.ne.s32.totalorder %s134, %s148
    %p150 = scmp.eq.s32.totalorder %s19, 0
    %p151 = por %p149, %p150
    %s153 = sadd.s32 %s152, 1
    %p156 = scmp.eq.s32.totalorder %s13, 1
    %p157 = scmp.ne.s32.totalorder %s152, %s154
    %p158 = scmp.eq.s32.totalorder %s13, 0
    %p159 = por %p157, %p158
    %p160 = scmp.ne.s32.totalorder %s152, %s154
    %p161 = scmp.eq.s32.totalorder %s18, 1
    %p162 = por %p160, %p161
    %p163 = scmp.ne.s32.totalorder %s154, %s155
    %p164 = scmp.eq.s32.totalorder %s18, 0
    %p165 = por %p163, %p164
    %p166 = scmp.ne.s32.totalorder %s154, %s155
    %p167 = scmp.eq.s32.totalorder %s19, 1
    %p168 = por %p166, %p167
    %p170 = scmp.ne.s32.totalorder %s155, %s169
    %p171 = scmp.eq.s32.totalorder %s19, 0
    %p172 = por %p170, %p171
    %s173 = ssub.s32 %s13, %s20
    %p174 = scmp.eq.s32.totalorder %s173, 0
    %s176 = sadd.s32 %s175, 1
    %s177 = scalar_select %p174, %s175, %s176
    %p180 = pneg %p174
    %p181 = scmp.eq.s32.totalorder %s13, 1
    %p182 = por %p180, %p181
    %p183 = scmp.ne.s32.totalorder %s175, %s178
    %p184 = scmp.eq.s32.totalorder %s13, 0
    %p185 = por %p183, %p184
    %p186 = scmp.ne.s32.totalorder %s175, %s178
    %p187 = scmp.eq.s32.totalorder %s18, 1
    %p188 = por %p186, %p187
    %p189 = scmp.ne.s32.totalorder %s178, %s179
    %p190 = scmp.eq.s32.totalorder %s18, 0
    %p191 = por %p189, %p190
    %p192 = scmp.ne.s32.totalorder %s178, %s179
    %p193 = scmp.eq.s32.totalorder %s19, 1
    %p194 = por %p192, %p193
    %p196 = scmp.ne.s32.totalorder %s179, %s195
    %p197 = scmp.eq.s32.totalorder %s19, 0
    %p198 = por %p196, %p197
    %p199 = scmp.le.s32.totalorder 1, %s13
    %p200 = scmp.lt.s32.totalorder %s13, 3
    %p201 = pnand %p199, %p200
    %p202 = pneg %p201
    // Predicated region
    $region9: #{tpu_custom_call.1} parent=5 // pred_check
      _
    $region10: #{tpu_custom_call.1} parent=5 // pred_check_branch
      %204 = sbr.rel (%p201) target = $region12
    $region11: #{tpu_custom_call.1} parent=5 // pred_region
      %s205 = ssub.s32 %s13, 1
      // Predicated region
      $region13: #{tpu_custom_call.1} parent=11 // pred_check
        %p206 = pneg %p60
      $region14: #{tpu_custom_call.1} parent=11 // pred_check_branch
        %208 = sbr.rel (%p206) target = $region16
      $region15: #{tpu_custom_call.1} parent=11 // pred_region
        _
      $region16: #{tpu_custom_call.1} parent=11 // pred_fallthru
        _
      // Predicated region
      $region17: #{tpu_custom_call.1} parent=11 // pred_check
        %p209 = pneg %p81
      $region18: #{tpu_custom_call.1} parent=11 // pred_check_branch
        %211 = sbr.rel (%p209) target = $region20
      $region19: #{tpu_custom_call.1} parent=11 // pred_region
        _
      $region20: #{tpu_custom_call.1} parent=11 // pred_fallthru
        _
      // Predicated region
      $region21: #{tpu_custom_call.1} parent=11 // pred_check
        %p212 = pneg %p102
      $region22: #{tpu_custom_call.1} parent=11 // pred_check_branch
        %214 = sbr.rel (%p212) target = $region24
      $region23: #{tpu_custom_call.1} parent=11 // pred_region
        _
      $region24: #{tpu_custom_call.1} parent=11 // pred_fallthru
        _
      // Predicated region
      $region25: #{tpu_custom_call.1} parent=11 // pred_check
        %p215 = pneg %p123
      $region26: #{tpu_custom_call.1} parent=11 // pred_check_branch
        %217 = sbr.rel (%p215) target = $region28
      $region27: #{tpu_custom_call.1} parent=11 // pred_region
        _
      $region28: #{tpu_custom_call.1} parent=11 // pred_fallthru
        _
      // Predicated region
      $region29: #{tpu_custom_call.1} parent=11 // pred_check
        %p218 = pneg %p144
      $region30: #{tpu_custom_call.1} parent=11 // pred_check_branch
        %220 = sbr.rel (%p218) target = $region32
      $region31: #{tpu_custom_call.1} parent=11 // pred_region
        _
      $region32: #{tpu_custom_call.1} parent=11 // pred_fallthru
        _
      // Predicated region
      $region33: #{tpu_custom_call.1} parent=11 // pred_check
        %p221 = pneg %p165
      $region34: #{tpu_custom_call.1} parent=11 // pred_check_branch
        %223 = sbr.rel (%p221) target = $region36
      $region35: #{tpu_custom_call.1} parent=11 // pred_region
        _
      $region36: #{tpu_custom_call.1} parent=11 // pred_fallthru
        _
    $region12: #{tpu_custom_call.1} parent=5 // pred_fallthru
      _
    %p224 = scmp.lt.s32.totalorder %s13, 2
    // Predicated region
    $region37: #{tpu_custom_call.1} parent=5 // pred_check
      %p225 = pneg %p224
    $region38: #{tpu_custom_call.1} parent=5 // pred_check_branch
      %227 = sbr.rel (%p225) target = $region40
    $region39: #{tpu_custom_call.1} parent=5 // pred_region
      // Predicated region
      $region41: #{tpu_custom_call.1} parent=39 // pred_check
        %p228 = pneg %p33
      $region42: #{tpu_custom_call.1} parent=39 // pred_check_branch
        %230 = sbr.rel (%p228) target = $region44
      $region43: #{tpu_custom_call.1} parent=39 // pred_region
        %p231 = scmp.lt.s32.totalorder %s13, 1
        %s232 = scalar_select %p231, %s13, 1
        %s233 = smul.addr %s232, 54
        %s234 = smul.addr %s233, 8
        %s235 = scalar_lea.vmem %s0, %s234
      $region44: #{tpu_custom_call.1} parent=39 // pred_fallthru
        _
    $region40: #{tpu_custom_call.1} parent=5 // pred_fallthru
      _
    %p236 = scmp.le.s32.totalorder 1, %s13
    %p237 = scmp.lt.s32.totalorder %s13, 3
    %p238 = pnand %p236, %p237
    %p239 = pneg %p238
    // Predicated region
    $region45: #{tpu_custom_call.1} parent=5 // pred_check
      _
    $region46: #{tpu_custom_call.1} parent=5 // pred_check_branch
      %241 = sbr.rel (%p238) target = $region48
    $region47: #{tpu_custom_call.1} parent=5 // pred_region
      %s242 = ssub.s32 %s13, 1
      %p243 = scmp.lt.s32.totalorder %s18, 1
      %s244 = scalar_select %p243, %s18, 1
      %s245 = smul.addr %s244, 54
      %s246 = smul.addr %s245, 8
      %s247 = scalar_lea.vmem %s0, %s246
      %p248 = pneg %p39
      %p249 = pneg %p36
      %p250 = pneg %p60
      %p251 = pneg %p57
      %p252 = pneg %p81
      %p253 = pneg %p78
      %p254 = pneg %p102
      %p255 = pneg %p99
      %p256 = pneg %p123
      %p257 = pneg %p120
      %p258 = pneg %p144
      %p259 = pneg %p141
      %p260 = pneg %p165
      %p261 = pneg %p162
      %p262 = pneg %p191
      %p263 = pneg %p188
      %p264 = scmp.lt.s32.totalorder %s18, 1
      %s265 = scalar_select %p264, %s18, 1
      %s266 = smul.addr %s265, 32
      %s267 = smul.addr %s266, 8
      %s268 = scalar_lea.vmem %s7, %s267
      %p269 = scmp.lt.s32.totalorder %s18, 1
      %s270 = scalar_select %p269, %s18, 1
      %s271 = smul.addr %s270, 54
      %s272 = smul.addr %s271, 8
      %s273 = scalar_lea.vmem %s0, %s272
      %p274 = scmp.lt.s32.totalorder %s18, 1
      %s275 = scalar_select %p274, %s18, 1
      %s276 = smul.addr %s275, 32
      %s277 = smul.addr %s276, 8
      %s278 = scalar_lea.vmem %s7, %s277
      %v279 = vld [vmem:[%s273] sm:$0xff]
      %v280 = vld [vmem:[%s273 + $0x8] sm:$0xff]
      %v281 = vld [vmem:[%s273 + $0x18] sm:$0xff]
      %v282 = vld [vmem:[%s273 + $0x20] sm:$0xff]
      %v283 = vld [vmem:[%s273 + $0x30] sm:$0xff]
      %v284 = vld [vmem:[%s273 + $0x38] sm:$0xff]
      %v285 = vld [vmem:[%s273 + $0x48] sm:$0xff]
      %v286 = vld [vmem:[%s273 + $0x50] sm:$0xff]
      %v287 = vld [vmem:[%s273 + $0x60] sm:$0xff]
      %v288 = vld [vmem:[%s273 + $0x68] sm:$0xff]
      %v289 = vld [vmem:[%s273 + $0x78] sm:$0xff]
      %v290 = vld [vmem:[%s273 + $0x80] sm:$0xff]
      %v291 = vld [vmem:[%s273 + $0x90] sm:$0xff]
      %v292 = vld [vmem:[%s273 + $0x98] sm:$0xff]
      %v293 = vld [vmem:[%s273 + $0xa8] sm:$0xff]
      %v294 = vld [vmem:[%s273 + $0xb0] sm:$0xff]
      %v295 = vld [vmem:[%s273 + $0xc0] sm:$0xff]
      %v296 = vld [vmem:[%s273 + $0xc8] sm:$0xff]
      %v297 = vld [vmem:[%s273 + $0xd8] sm:$0xff]
      %v298 = vld [vmem:[%s273 + $0xe0] sm:$0xff]
      %v299 = vld [vmem:[%s273 + $0xf0] sm:$0xff]
      %v300 = vld [vmem:[%s273 + $0xf8] sm:$0xff]
      %v301 = vld [vmem:[%s273 + $0x108] sm:$0xff]
      %v302 = vld [vmem:[%s273 + $0x110] sm:$0xff]
      %v303 = vld [vmem:[%s273 + $0x120] sm:$0xff]
      %v304 = vld [vmem:[%s273 + $0x128] sm:$0xff]
      %v305 = vld [vmem:[%s273 + $0x138] sm:$0xff]
      %v306 = vld [vmem:[%s273 + $0x140] sm:$0xff]
      %v307 = vld [vmem:[%s273 + $0x150] sm:$0xff]
      %v308 = vld [vmem:[%s273 + $0x158] sm:$0xff]
      %v309 = vld [vmem:[%s273 + $0x168] sm:$0xff]
      %v310 = vld [vmem:[%s273 + $0x170] sm:$0xff]
      %v311 = vld [vmem:[%s1] sm:$0xff]
      %v312 = vld [vmem:[%s273 + $0x1] sm:$0xff]
      %v313 = vld [vmem:[%s273 + $0x9] sm:$0xff]
      %v314 = vld [vmem:[%s273 + $0x19] sm:$0xff]
      %v315 = vld [vmem:[%s273 + $0x21] sm:$0xff]
      %v316 = vld [vmem:[%s273 + $0x31] sm:$0xff]
      %v317 = vld [vmem:[%s273 + $0x39] sm:$0xff]
      %v318 = vld [vmem:[%s273 + $0x49] sm:$0xff]
      %v319 = vld [vmem:[%s273 + $0x51] sm:$0xff]
      %v320 = vld [vmem:[%s273 + $0x61] sm:$0xff]
      %v321 = vld [vmem:[%s273 + $0x69] sm:$0xff]
      %v322 = vld [vmem:[%s273 + $0x79] sm:$0xff]
      %v323 = vld [vmem:[%s273 + $0x81] sm:$0xff]
      %v324 = vld [vmem:[%s273 + $0x91] sm:$0xff]
      %v325 = vld [vmem:[%s273 + $0x99] sm:$0xff]
      %v326 = vld [vmem:[%s273 + $0xa9] sm:$0xff]
      %v327 = vld [vmem:[%s273 + $0xb1] sm:$0xff]
      %v328 = vld [vmem:[%s273 + $0xc1] sm:$0xff]
      %v329 = vld [vmem:[%s273 + $0xc9] sm:$0xff]
      %v330 = vld [vmem:[%s273 + $0xd9] sm:$0xff]
      %v331 = vld [vmem:[%s273 + $0xe1] sm:$0xff]
      %v332 = vld [vmem:[%s273 + $0xf1] sm:$0xff]
      %v333 = vld [vmem:[%s273 + $0xf9] sm:$0xff]
      %v334 = vld [vmem:[%s273 + $0x109] sm:$0xff]
      %v335 = vld [vmem:[%s273 + $0x111] sm:$0xff]
      %v336 = vld [vmem:[%s273 + $0x121] sm:$0xff]
      %v337 = vld [vmem:[%s273 + $0x129] sm:$0xff]
      %v338 = vld [vmem:[%s273 + $0x139] sm:$0xff]
      %v339 = vld [vmem:[%s273 + $0x141] sm:$0xff]
      %v340 = vld [vmem:[%s273 + $0x151] sm:$0xff]
      %v341 = vld [vmem:[%s273 + $0x159] sm:$0xff]
      %v342 = vld [vmem:[%s273 + $0x169] sm:$0xff]
      %v343 = vld [vmem:[%s273 + $0x171] sm:$0xff]
      %s344 = scalar_lea.vmem %s1, 8
      %v345 = vld [vmem:[%s344] sm:$0xff]
      %vm346 = vcmask 64512
      %v348 = vsel %vm346, %v312, 0
      %v351 = vsel %vm346, %v313, 0
      %v354 = vsel %vm346, %v314, 0
      %v357 = vsel %vm346, %v315, 0
      %v360 = vsel %vm346, %v316, 0
      %v363 = vsel %vm346, %v317, 0
      %v366 = vsel %vm346, %v318, 0
      %v369 = vsel %vm346, %v319, 0
      %v372 = vsel %vm346, %v320, 0
      %v375 = vsel %vm346, %v321, 0
      %v378 = vsel %vm346, %v322, 0
      %v381 = vsel %vm346, %v323, 0
      %v384 = vsel %vm346, %v324, 0
      %v387 = vsel %vm346, %v325, 0
      %v390 = vsel %vm346, %v326, 0
      %v393 = vsel %vm346, %v327, 0
      %v396 = vsel %vm346, %v328, 0
      %v399 = vsel %vm346, %v329, 0
      %v402 = vsel %vm346, %v330, 0
      %v405 = vsel %vm346, %v331, 0
      %v408 = vsel %vm346, %v332, 0
      %v411 = vsel %vm346, %v333, 0
      %v414 = vsel %vm346, %v334, 0
      %v417 = vsel %vm346, %v335, 0
      %v420 = vsel %vm346, %v336, 0
      %v423 = vsel %vm346, %v337, 0
      %v426 = vsel %vm346, %v338, 0
      %v429 = vsel %vm346, %v339, 0
      %v432 = vsel %vm346, %v340, 0
      %v435 = vsel %vm346, %v341, 0
      %v438 = vsel %vm346, %v342, 0
      %v441 = vsel %vm346, %v343, 0
      %443 = vmatprep.subr.mxu0 0.0
      %444 = vmatpush1.msra.mxu0 %v345
      %445 = vmatprep.subr.mxu0 0.0
      %446 = vmatpush1.msra.mxu0 0.0
      %447 = vmatprep.subr.mxu0 0.0
      %448 = vmatpush1.msra.mxu0 0.0
      %449 = vmatprep.subr.mxu0 0.0
      %450 = vmatpush1.msra.mxu0 0.0
      %451 = vmatprep.subr.mxu0 0.0
      %452 = vmatpush1.msra.mxu0 0.0
      %453 = vmatprep.subr.mxu0 0.0
      %454 = vmatpush1.msra.mxu0 0.0
      %455 = vmatprep.subr.mxu0 0.0
      %456 = vmatpush1.msra.mxu0 0.0
      %457 = vmatprep.subr.mxu0 0.0
      %458 = vmatpush1.msra.mxu0 0.0
      %459 = vmatprep.subr.mxu0 0.0
      %460 = vmatpush1.msra.mxu0 0.0
      %461 = vmatprep.subr.mxu0 0.0
      %462 = vmatpush1.msra.mxu0 0.0
      %463 = vmatprep.subr.mxu0 0.0
      %464 = vmatpush1.msra.mxu0 0.0
      %465 = vmatprep.subr.mxu0 0.0
      %466 = vmatpush1.msra.mxu0 0.0
      %467 = vmatprep.subr.mxu0 0.0
      %468 = vmatpush1.msra.mxu0 0.0
      %469 = vmatprep.subr.mxu0 0.0
      %470 = vmatpush1.msra.mxu0 0.0
      %471 = vmatprep.subr.mxu0 0.0
      %472 = vmatpush1.msra.mxu0 0.0
      %473 = vmatprep.subr.mxu0 0.0
      %474 = vmatpush1.msra.mxu0 0.0
      %475 = vmatprep.subr.mxu0 0.0
      %476 = vmatpush1.msra.mxu0 0.0
      %477 = vmatprep.subr.mxu0 0.0
      %478 = vmatpush1.msra.mxu0 0.0
      %479 = vmatprep.subr.mxu0 0.0
      %480 = vmatpush1.msra.mxu0 0.0
      %481 = vmatprep.subr.mxu0 0.0
      %482 = vmatpush1.msra.mxu0 0.0
      %483 = vmatprep.subr.mxu0 0.0
      %484 = vmatpush1.msra.mxu0 0.0
      %485 = vmatprep.subr.mxu0 0.0
      %486 = vmatpush1.msra.mxu0 0.0
      %487 = vmatprep.subr.mxu0 0.0
      %488 = vmatpush1.msra.mxu0 0.0
      %489 = vmatprep.subr.mxu0 0.0
      %490 = vmatpush1.msra.mxu0 0.0
      %491 = vmatprep.subr.mxu0 0.0
      %492 = vmatpush1.msra.mxu0 0.0
      %493 = vmatprep.subr.mxu0 0.0
      %494 = vmatpush1.msra.mxu0 0.0
      %495 = vmatprep.subr.mxu0 0.0
      %496 = vmatpush1.msra.mxu0 0.0
      %497 = vmatprep.subr.mxu0 0.0
      %498 = vmatpush1.msra.mxu0 0.0
      %499 = vmatprep.subr.mxu0 0.0
      %500 = vmatpush1.msra.mxu0 0.0
      %501 = vmatprep.subr.mxu0 0.0
      %502 = vmatpush1.msra.mxu0 0.0
      %503 = vmatprep.subr.mxu0 0.0
      %504 = vmatpush1.msra.mxu0 0.0
      %505 = vmatprep.subr.mxu0 0.0
      %506 = vmatpush1.msra.mxu0 0.0
      %507 = vmatprep.mubr.f32.mxu0 0.0
      %508 = vmatmul.mubr.f32.gmra.mrb[0].mxu0 %v348
      %v509 = vpop.f32.mrb[0].mxu0
      %v510 = vadd.f32 0.0, %v509
      %v511 = vpop.f32.mrb[0].mxu0
      %512 = vmatprep.mubr.f32.mxu0 0.0
      %513 = vmatmul.mubr.f32.gmra.mrb[0].mxu0 %v351
      %v514 = vpop.f32.mrb[0].mxu0
      %v515 = vadd.f32 0.0, %v514
      %v516 = vpop.f32.mrb[0].mxu0
      %517 = vmatprep.mubr.f32.mxu0 0.0
      %518 = vmatmul.mubr.f32.gmra.mrb[0].mxu0 %v354
      %v519 = vpop.f32.mrb[0].mxu0
      %v520 = vadd.f32 0.0, %v519
      %v521 = vpop.f32.mrb[0].mxu0
      %522 = vmatprep.mubr.f32.mxu0 0.0
      %523 = vmatmul.mubr.f32.gmra.mrb[0].mxu0 %v357
      %v524 = vpop.f32.mrb[0].mxu0
      %v525 = vadd.f32 0.0, %v524
      %v526 = vpop.f32.mrb[0].mxu0
      %527 = vmatprep.mubr.f32.mxu0 0.0
      %528 = vmatmul.mubr.f32.gmra.mrb[0].mxu0 %v360
      %v529 = vpop.f32.mrb[0].mxu0
      %v530 = vadd.f32 0.0, %v529
      %v531 = vpop.f32.mrb[0].mxu0
      %532 = vmatprep.mubr.f32.mxu0 0.0
      %533 = vmatmul.mubr.f32.gmra.mrb[0].mxu0 %v363
      %v534 = vpop.f32.mrb[0].mxu0
      %v535 = vadd.f32 0.0, %v534
      %v536 = vpop.f32.mrb[0].mxu0
      %537 = vmatprep.mubr.f32.mxu0 0.0
      %538 = vmatmul.mubr.f32.gmra.mrb[0].mxu0 %v366
      %v539 = vpop.f32.mrb[0].mxu0
      %v540 = vadd.f32 0.0, %v539
      %v541 = vpop.f32.mrb[0].mxu0
      %542 = vmatprep.mubr.f32.mxu0 0.0
      %543 = vmatmul.mubr.f32.gmra.mrb[0].mxu0 %v369
      %v544 = vpop.f32.mrb[0].mxu0
      %v545 = vadd.f32 0.0, %v544
      %v546 = vpop.f32.mrb[0].mxu0
      %547 = vmatprep.mubr.f32.mxu0 0.0
      %548 = vmatmul.mubr.f32.gmra.mrb[0].mxu0 %v372
      %v549 = vpop.f32.mrb[0].mxu0
      %v550 = vadd.f32 0.0, %v549
      %v551 = vpop.f32.mrb[0].mxu0
      %552 = vmatprep.mubr.f32.mxu0 0.0
      %553 = vmatmul.mubr.f32.gmra.mrb[0].mxu0 %v375
      %v554 = vpop.f32.mrb[0].mxu0
      %v555 = vadd.f32 0.0, %v554
      %v556 = vpop.f32.mrb[0].mxu0
      %557 = vmatprep.mubr.f32.mxu0 0.0
      %558 = vmatmul.mubr.f32.gmra.mrb[0].mxu0 %v378
      %v559 = vpop.f32.mrb[0].mxu0
      %v560 = vadd.f32 0.0, %v559
      %v561 = vpop.f32.mrb[0].mxu0
      %562 = vmatprep.mubr.f32.mxu0 0.0
      %563 = vmatmul.mubr.f32.gmra.mrb[0].mxu0 %v381
      %v564 = vpop.f32.mrb[0].mxu0
      %v565 = vadd.f32 0.0, %v564
      %v566 = vpop.f32.mrb[0].mxu0
      %567 = vmatprep.mubr.f32.mxu0 0.0
      %568 = vmatmul.mubr.f32.gmra.mrb[0].mxu0 %v384
      %v569 = vpop.f32.mrb[0].mxu0
      %v570 = vadd.f32 0.0, %v569
      %v571 = vpop.f32.mrb[0].mxu0
      %572 = vmatprep.mubr.f32.mxu0 0.0
      %573 = vmatmul.mubr.f32.gmra.mrb[0].mxu0 %v387
      %v574 = vpop.f32.mrb[0].mxu0
      %v575 = vadd.f32 0.0, %v574
      %v576 = vpop.f32.mrb[0].mxu0
      %577 = vmatprep.mubr.f32.mxu0 0.0
      %578 = vmatmul.mubr.f32.gmra.mrb[0].mxu0 %v390
      %v579 = vpop.f32.mrb[0].mxu0
      %v580 = vadd.f32 0.0, %v579
      %v581 = vpop.f32.mrb[0].mxu0
      %582 = vmatprep.mubr.f32.mxu0 0.0
      %583 = vmatmul.mubr.f32.gmra.mrb[0].mxu0 %v393
      %v584 = vpop.f32.mrb[0].mxu0
      %v585 = vadd.f32 0.0, %v584
      %v586 = vpop.f32.mrb[0].mxu0
      %587 = vmatprep.mubr.f32.mxu0 0.0
      %588 = vmatmul.mubr.f32.gmra.mrb[0].mxu0 %v396
      %v589 = vpop.f32.mrb[0].mxu0
      %v590 = vadd.f32 0.0, %v589
      %v591 = vpop.f32.mrb[0].mxu0
      %592 = vmatprep.mubr.f32.mxu0 0.0
      %593 = vmatmul.mubr.f32.gmra.mrb[0].mxu0 %v399
      %v594 = vpop.f32.mrb[0].mxu0
      %v595 = vadd.f32 0.0, %v594
      %v596 = vpop.f32.mrb[0].mxu0
      %597 = vmatprep.mubr.f32.mxu0 0.0
      %598 = vmatmul.mubr.f32.gmra.mrb[0].mxu0 %v402
      %v599 = vpop.f32.mrb[0].mxu0
      %v600 = vadd.f32 0.0, %v599
      %v601 = vpop.f32.mrb[0].mxu0
      %602 = vmatprep.mubr.f32.mxu0 0.0
      %603 = vmatmul.mubr.f32.gmra.mrb[0].mxu0 %v405
      %v604 = vpop.f32.mrb[0].mxu0
      %v605 = vadd.f32 0.0, %v604
      %v606 = vpop.f32.mrb[0].mxu0
      %607 = vmatprep.mubr.f32.mxu0 0.0
      %608 = vmatmul.mubr.f32.gmra.mrb[0].mxu0 %v408
      %v609 = vpop.f32.mrb[0].mxu0
      %v610 = vadd.f32 0.0, %v609
      %v611 = vpop.f32.mrb[0].mxu0
      %612 = vmatprep.mubr.f32.mxu0 0.0
      %613 = vmatmul.mubr.f32.gmra.mrb[0].mxu0 %v411
      %v614 = vpop.f32.mrb[0].mxu0
      %v615 = vadd.f32 0.0, %v614
      %v616 = vpop.f32.mrb[0].mxu0
      %617 = vmatprep.mubr.f32.mxu0 0.0
      %618 = vmatmul.mubr.f32.gmra.mrb[0].mxu0 %v414
      %v619 = vpop.f32.mrb[0].mxu0
      %v620 = vadd.f32 0.0, %v619
      %v621 = vpop.f32.mrb[0].mxu0
      %622 = vmatprep.mubr.f32.mxu0 0.0
      %623 = vmatmul.mubr.f32.gmra.mrb[0].mxu0 %v417
      %v624 = vpop.f32.mrb[0].mxu0
      %v625 = vadd.f32 0.0, %v624
      %v626 = vpop.f32.mrb[0].mxu0
      %627 = vmatprep.mubr.f32.mxu0 0.0
      %628 = vmatmul.mubr.f32.gmra.mrb[0].mxu0 %v420
      %v629 = vpop.f32.mrb[0].mxu0
      %v630 = vadd.f32 0.0, %v629
      %v631 = vpop.f32.mrb[0].mxu0
      %632 = vmatprep.mubr.f32.mxu0 0.0
      %633 = vmatmul.mubr.f32.gmra.mrb[0].mxu0 %v423
      %v634 = vpop.f32.mrb[0].mxu0
      %v635 = vadd.f32 0.0, %v634
      %v636 = vpop.f32.mrb[0].mxu0
      %637 = vmatprep.mubr.f32.mxu0 0.0
      %638 = vmatmul.mubr.f32.gmra.mrb[0].mxu0 %v426
      %v639 = vpop.f32.mrb[0].mxu0
      %v640 = vadd.f32 0.0, %v639
      %v641 = vpop.f32.mrb[0].mxu0
      %642 = vmatprep.mubr.f32.mxu0 0.0
      %643 = vmatmul.mubr.f32.gmra.mrb[0].mxu0 %v429
      %v644 = vpop.f32.mrb[0].mxu0
      %v645 = vadd.f32 0.0, %v644
      %v646 = vpop.f32.mrb[0].mxu0
      %647 = vmatprep.mubr.f32.mxu0 0.0
      %648 = vmatmul.mubr.f32.gmra.mrb[0].mxu0 %v432
      %v649 = vpop.f32.mrb[0].mxu0
      %v650 = vadd.f32 0.0, %v649
      %v651 = vpop.f32.mrb[0].mxu0
      %652 = vmatprep.mubr.f32.mxu0 0.0
      %653 = vmatmul.mubr.f32.gmra.mrb[0].mxu0 %v435
      %v654 = vpop.f32.mrb[0].mxu0
      %v655 = vadd.f32 0.0, %v654
      %v656 = vpop.f32.mrb[0].mxu0
      %657 = vmatprep.mubr.f32.mxu0 0.0
      %658 = vmatmul.mubr.f32.gmra.mrb[0].mxu0 %v438
      %v659 = vpop.f32.mrb[0].mxu0
      %v660 = vadd.f32 0.0, %v659
      %v661 = vpop.f32.mrb[0].mxu0
      %662 = vmatprep.mubr.f32.mxu0 0.0
      %663 = vmatmul.mubr.f32.gmra.mrb[0].mxu0 %v441
      %v664 = vpop.f32.mrb[0].mxu0
      %v665 = vadd.f32 0.0, %v664
      %v666 = vpop.f32.mrb[0].mxu0
      %667 = vdwg.mxu0
      %v669 = vsel %vm346, %v279, 0
      %v672 = vsel %vm346, %v280, 0
      %v675 = vsel %vm346, %v281, 0
      %v678 = vsel %vm346, %v282, 0
      %v681 = vsel %vm346, %v283, 0
      %v684 = vsel %vm346, %v284, 0
      %v687 = vsel %vm346, %v285, 0
      %v690 = vsel %vm346, %v286, 0
      %v693 = vsel %vm346, %v287, 0
      %v696 = vsel %vm346, %v288, 0
      %v699 = vsel %vm346, %v289, 0
      %v702 = vsel %vm346, %v290, 0
      %v705 = vsel %vm346, %v291, 0
      %v708 = vsel %vm346, %v292, 0
      %v711 = vsel %vm346, %v293, 0
      %v714 = vsel %vm346, %v294, 0
      %v717 = vsel %vm346, %v295, 0
      %v720 = vsel %vm346, %v296, 0
      %v723 = vsel %vm346, %v297, 0
      %v726 = vsel %vm346, %v298, 0
      %v729 = vsel %vm346, %v299, 0
      %v732 = vsel %vm346, %v300, 0
      %v735 = vsel %vm346, %v301, 0
      %v738 = vsel %vm346, %v302, 0
      %v741 = vsel %vm346, %v303, 0
      %v744 = vsel %vm346, %v304, 0
      %v747 = vsel %vm346, %v305, 0
      %v750 = vsel %vm346, %v306, 0
      %v753 = vsel %vm346, %v307, 0
      %v756 = vsel %vm346, %v308, 0
      %v759 = vsel %vm346, %v309, 0
      %v762 = vsel %vm346, %v310, 0
      %764 = vmatprep.subr.mxu0 0.0
      %765 = vmatpush1.msra.mxu0 %v311
      %766 = vmatprep.subr.mxu0 0.0
      %767 = vmatpush1.msra.mxu0 0.0
      %768 = vmatprep.subr.mxu0 0.0
      %769 = vmatpush1.msra.mxu0 0.0
      %770 = vmatprep.subr.mxu0 0.0
      %771 = vmatpush1.msra.mxu0 0.0
      %772 = vmatprep.subr.mxu0 0.0
      %773 = vmatpush1.msra.mxu0 0.0
      %774 = vmatprep.subr.mxu0 0.0
      %775 = vmatpush1.msra.mxu0 0.0
      %776 = vmatprep.subr.mxu0 0.0
      %777 = vmatpush1.msra.mxu0 0.0
      %778 = vmatprep.subr.mxu0 0.0
      %779 = vmatpush1.msra.mxu0 0.0
      %780 = vmatprep.subr.mxu0 0.0
      %781 = vmatpush1.msra.mxu0 0.0
      %782 = vmatprep.subr.mxu0 0.0
      %783 = vmatpush1.msra.mxu0 0.0
      %784 = vmatprep.subr.mxu0 0.0
      %785 = vmatpush1.msra.mxu0 0.0
      %786 = vmatprep.subr.mxu0 0.0
      %787 = vmatpush1.msra.mxu0 0.0
      %788 = vmatprep.subr.mxu0 0.0
      %789 = vmatpush1.msra.mxu0 0.0
      %790 = vmatprep.subr.mxu0 0.0
      %791 = vmatpush1.msra.mxu0 0.0
      %792 = vmatprep.subr.mxu0 0.0
      %793 = vmatpush1.msra.mxu0 0.0
      %794 = vmatprep.subr.mxu0 0.0
      %795 = vmatpush1.msra.mxu0 0.0
      %796 = vmatprep.subr.mxu0 0.0
      %797 = vmatpush1.msra.mxu0 0.0
      %798 = vmatprep.subr.mxu0 0.0
      %799 = vmatpush1.msra.mxu0 0.0
      %800 = vmatprep.subr.mxu0 0.0
      %801 = vmatpush1.msra.mxu0 0.0
      %802 = vmatprep.subr.mxu0 0.0
      %803 = vmatpush1.msra.mxu0 0.0
      %804 = vmatprep.subr.mxu0 0.0
      %805 = vmatpush1.msra.mxu0 0.0
      %806 = vmatprep.subr.mxu0 0.0
      %807 = vmatpush1.msra.mxu0 0.0
      %808 = vmatprep.subr.mxu0 0.0
      %809 = vmatpush1.msra.mxu0 0.0
      %810 = vmatprep.subr.mxu0 0.0
      %811 = vmatpush1.msra.mxu0 0.0
      %812 = vmatprep.subr.mxu0 0.0
      %813 = vmatpush1.msra.mxu0 0.0
      %814 = vmatprep.subr.mxu0 0.0
      %815 = vmatpush1.msra.mxu0 0.0
      %816 = vmatprep.subr.mxu0 0.0
      %817 = vmatpush1.msra.mxu0 0.0
      %818 = vmatprep.subr.mxu0 0.0
      %819 = vmatpush1.msra.mxu0 0.0
      %820 = vmatprep.subr.mxu0 0.0
      %821 = vmatpush1.msra.mxu0 0.0
      %822 = vmatprep.subr.mxu0 0.0
      %823 = vmatpush1.msra.mxu0 0.0
      %824 = vmatprep.subr.mxu0 0.0
      %825 = vmatpush1.msra.mxu0 0.0
      %826 = vmatprep.subr.mxu0 0.0
      %827 = vmatpush1.msra.mxu0 0.0
      %828 = vmatprep.mubr.f32.mxu0 0.0
      %829 = vmatmul.mubr.f32.gmra.mrb[0].mxu0 %v669
      %v830 = vpop.f32.mrb[0].mxu0
      %v831 = vadd.f32 %v510, %v830
      %v832 = vpop.f32.mrb[0].mxu0
      %833 = vmatprep.mubr.f32.mxu0 0.0
      %834 = vmatmul.mubr.f32.gmra.mrb[0].mxu0 %v672
      %v835 = vpop.f32.mrb[0].mxu0
      %v836 = vadd.f32 %v515, %v835
      %v837 = vpop.f32.mrb[0].mxu0
      %838 = vmatprep.mubr.f32.mxu0 0.0
      %839 = vmatmul.mubr.f32.gmra.mrb[0].mxu0 %v675
      %v840 = vpop.f32.mrb[0].mxu0
      %v841 = vadd.f32 %v520, %v840
      %v842 = vpop.f32.mrb[0].mxu0
      %843 = vmatprep.mubr.f32.mxu0 0.0
      %844 = vmatmul.mubr.f32.gmra.mrb[0].mxu0 %v678
      %v845 = vpop.f32.mrb[0].mxu0
      %v846 = vadd.f32 %v525, %v845
      %v847 = vpop.f32.mrb[0].mxu0
      %848 = vmatprep.mubr.f32.mxu0 0.0
      %849 = vmatmul.mubr.f32.gmra.mrb[0].mxu0 %v681
      %v850 = vpop.f32.mrb[0].mxu0
      %v851 = vadd.f32 %v530, %v850
      %v852 = vpop.f32.mrb[0].mxu0
      %853 = vmatprep.mubr.f32.mxu0 0.0
      %854 = vmatmul.mubr.f32.gmra.mrb[0].mxu0 %v684
      %v855 = vpop.f32.mrb[0].mxu0
      %v856 = vadd.f32 %v535, %v855
      %v857 = vpop.f32.mrb[0].mxu0
      %858 = vmatprep.mubr.f32.mxu0 0.0
      %859 = vmatmul.mubr.f32.gmra.mrb[0].mxu0 %v687
      %v860 = vpop.f32.mrb[0].mxu0
      %v861 = vadd.f32 %v540, %v860
      %v862 = vpop.f32.mrb[0].mxu0
      %863 = vmatprep.mubr.f32.mxu0 0.0
      %864 = vmatmul.mubr.f32.gmra.mrb[0].mxu0 %v690
      %v865 = vpop.f32.mrb[0].mxu0
      %v866 = vadd.f32 %v545, %v865
      %v867 = vpop.f32.mrb[0].mxu0
      %868 = vmatprep.mubr.f32.mxu0 0.0
      %869 = vmatmul.mubr.f32.gmra.mrb[0].mxu0 %v693
      %v870 = vpop.f32.mrb[0].mxu0
      %v871 = vadd.f32 %v550, %v870
      %v872 = vpop.f32.mrb[0].mxu0
      %873 = vmatprep.mubr.f32.mxu0 0.0
      %874 = vmatmul.mubr.f32.gmra.mrb[0].mxu0 %v696
      %v875 = vpop.f32.mrb[0].mxu0
      %v876 = vadd.f32 %v555, %v875
      %v877 = vpop.f32.mrb[0].mxu0
      %878 = vmatprep.mubr.f32.mxu0 0.0
      %879 = vmatmul.mubr.f32.gmra.mrb[0].mxu0 %v699
      %v880 = vpop.f32.mrb[0].mxu0
      %v881 = vadd.f32 %v560, %v880
      %v882 = vpop.f32.mrb[0].mxu0
      %883 = vmatprep.mubr.f32.mxu0 0.0
      %884 = vmatmul.mubr.f32.gmra.mrb[0].mxu0 %v702
      %v885 = vpop.f32.mrb[0].mxu0
      %v886 = vadd.f32 %v565, %v885
      %v887 = vpop.f32.mrb[0].mxu0
      %888 = vmatprep.mubr.f32.mxu0 0.0
      %889 = vmatmul.mubr.f32.gmra.mrb[0].mxu0 %v705
      %v890 = vpop.f32.mrb[0].mxu0
      %v891 = vadd.f32 %v570, %v890
      %v892 = vpop.f32.mrb[0].mxu0
      %893 = vmatprep.mubr.f32.mxu0 0.0
      %894 = vmatmul.mubr.f32.gmra.mrb[0].mxu0 %v708
      %v895 = vpop.f32.mrb[0].mxu0
      %v896 = vadd.f32 %v575, %v895
      %v897 = vpop.f32.mrb[0].mxu0
      %898 = vmatprep.mubr.f32.mxu0 0.0
      %899 = vmatmul.mubr.f32.gmra.mrb[0].mxu0 %v711
      %v900 = vpop.f32.mrb[0].mxu0
      %v901 = vadd.f32 %v580, %v900
      %v902 = vpop.f32.mrb[0].mxu0
      %903 = vmatprep.mubr.f32.mxu0 0.0
      %904 = vmatmul.mubr.f32.gmra.mrb[0].mxu0 %v714
      %v905 = vpop.f32.mrb[0].mxu0
      %v906 = vadd.f32 %v585, %v905
      %v907 = vpop.f32.mrb[0].mxu0
      %908 = vmatprep.mubr.f32.mxu0 0.0
      %909 = vmatmul.mubr.f32.gmra.mrb[0].mxu0 %v717
      %v910 = vpop.f32.mrb[0].mxu0
      %v911 = vadd.f32 %v590, %v910
      %v912 = vpop.f32.mrb[0].mxu0
      %913 = vmatprep.mubr.f32.mxu0 0.0
      %914 = vmatmul.mubr.f32.gmra.mrb[0].mxu0 %v720
      %v915 = vpop.f32.mrb[0].mxu0
      %v916 = vadd.f32 %v595, %v915
      %v917 = vpop.f32.mrb[0].mxu0
      %918 = vmatprep.mubr.f32.mxu0 0.0
      %919 = vmatmul.mubr.f32.gmra.mrb[0].mxu0 %v723
      %v920 = vpop.f32.mrb[0].mxu0
      %v921 = vadd.f32 %v600, %v920
      %v922 = vpop.f32.mrb[0].mxu0
      %923 = vmatprep.mubr.f32.mxu0 0.0
      %924 = vmatmul.mubr.f32.gmra.mrb[0].mxu0 %v726
      %v925 = vpop.f32.mrb[0].mxu0
      %v926 = vadd.f32 %v605, %v925
      %v927 = vpop.f32.mrb[0].mxu0
      %928 = vmatprep.mubr.f32.mxu0 0.0
      %929 = vmatmul.mubr.f32.gmra.mrb[0].mxu0 %v729
      %v930 = vpop.f32.mrb[0].mxu0
      %v931 = vadd.f32 %v610, %v930
      %v932 = vpop.f32.mrb[0].mxu0
      %933 = vmatprep.mubr.f32.mxu0 0.0
      %934 = vmatmul.mubr.f32.gmra.mrb[0].mxu0 %v732
      %v935 = vpop.f32.mrb[0].mxu0
      %v936 = vadd.f32 %v615, %v935
      %v937 = vpop.f32.mrb[0].mxu0
      %938 = vmatprep.mubr.f32.mxu0 0.0
      %939 = vmatmul.mubr.f32.gmra.mrb[0].mxu0 %v735
      %v940 = vpop.f32.mrb[0].mxu0
      %v941 = vadd.f32 %v620, %v940
      %v942 = vpop.f32.mrb[0].mxu0
      %943 = vmatprep.mubr.f32.mxu0 0.0
      %944 = vmatmul.mubr.f32.gmra.mrb[0].mxu0 %v738
      %v945 = vpop.f32.mrb[0].mxu0
      %v946 = vadd.f32 %v625, %v945
      %v947 = vpop.f32.mrb[0].mxu0
      %948 = vmatprep.mubr.f32.mxu0 0.0
      %949 = vmatmul.mubr.f32.gmra.mrb[0].mxu0 %v741
      %v950 = vpop.f32.mrb[0].mxu0
      %v951 = vadd.f32 %v630, %v950
      %v952 = vpop.f32.mrb[0].mxu0
      %953 = vmatprep.mubr.f32.mxu0 0.0
      %954 = vmatmul.mubr.f32.gmra.mrb[0].mxu0 %v744
      %v955 = vpop.f32.mrb[0].mxu0
      %v956 = vadd.f32 %v635, %v955
      %v957 = vpop.f32.mrb[0].mxu0
      %958 = vmatprep.mubr.f32.mxu0 0.0
      %959 = vmatmul.mubr.f32.gmra.mrb[0].mxu0 %v747
      %v960 = vpop.f32.mrb[0].mxu0
      %v961 = vadd.f32 %v640, %v960
      %v962 = vpop.f32.mrb[0].mxu0
      %963 = vmatprep.mubr.f32.mxu0 0.0
      %964 = vmatmul.mubr.f32.gmra.mrb[0].mxu0 %v750
      %v965 = vpop.f32.mrb[0].mxu0
      %v966 = vadd.f32 %v645, %v965
      %v967 = vpop.f32.mrb[0].mxu0
      %968 = vmatprep.mubr.f32.mxu0 0.0
      %969 = vmatmul.mubr.f32.gmra.mrb[0].mxu0 %v753
      %v970 = vpop.f32.mrb[0].mxu0
      %v971 = vadd.f32 %v650, %v970
      %v972 = vpop.f32.mrb[0].mxu0
      %973 = vmatprep.mubr.f32.mxu0 0.0
      %974 = vmatmul.mubr.f32.gmra.mrb[0].mxu0 %v756
      %v975 = vpop.f32.mrb[0].mxu0
      %v976 = vadd.f32 %v655, %v975
      %v977 = vpop.f32.mrb[0].mxu0
      %978 = vmatprep.mubr.f32.mxu0 0.0
      %979 = vmatmul.mubr.f32.gmra.mrb[0].mxu0 %v759
      %v980 = vpop.f32.mrb[0].mxu0
      %v981 = vadd.f32 %v660, %v980
      %v982 = vpop.f32.mrb[0].mxu0
      %983 = vmatprep.mubr.f32.mxu0 0.0
      %984 = vmatmul.mubr.f32.gmra.mrb[0].mxu0 %v762
      %v985 = vpop.f32.mrb[0].mxu0
      %v986 = vadd.f32 %v665, %v985
      %v987 = vpop.f32.mrb[0].mxu0
      %988 = vdwg.mxu0
      %v989 = vld [vmem:[%s273 + $0x2] sm:$0xff]
      %v990 = vld [vmem:[%s273 + $0xa] sm:$0xff]
      %v991 = vld [vmem:[%s273 + $0x1a] sm:$0xff]
      %v992 = vld [vmem:[%s273 + $0x22] sm:$0xff]
      %v993 = vld [vmem:[%s273 + $0x32] sm:$0xff]
      %v994 = vld [vmem:[%s273 + $0x3a] sm:$0xff]
      %v995 = vld [vmem:[%s273 + $0x4a] sm:$0xff]
      %v996 = vld [vmem:[%s273 + $0x52] sm:$0xff]
      %v997 = vld [vmem:[%s273 + $0x62] sm:$0xff]
      %v998 = vld [vmem:[%s273 + $0x6a] sm:$0xff]
      %v999 = vld [vmem:[%s273 + $0x7a] sm:$0xff]
      %v1000 = vld [vmem:[%s273 + $0x82] sm:$0xff]
      %v1001 = vld [vmem:[%s273 + $0x92] sm:$0xff]
      %v1002 = vld [vmem:[%s273 + $0x9a] sm:$0xff]
      %v1003 = vld [vmem:[%s273 + $0xaa] sm:$0xff]
      %v1004 = vld [vmem:[%s273 + $0xb2] sm:$0xff]
      %v1005 = vld [vmem:[%s273 + $0xc2] sm:$0xff]
      %v1006 = vld [vmem:[%s273 + $0xca] sm:$0xff]
      %v1007 = vld [vmem:[%s273 + $0xda] sm:$0xff]
      %v1008 = vld [vmem:[%s273 + $0xe2] sm:$0xff]
      %v1009 = vld [vmem:[%s273 + $0xf2] sm:$0xff]
      %v1010 = vld [vmem:[%s273 + $0xfa] sm:$0xff]
      %v1011 = vld [vmem:[%s273 + $0x10a] sm:$0xff]
      %v1012 = vld [vmem:[%s273 + $0x112] sm:$0xff]
      %v1013 = vld [vmem:[%s273 + $0x122] sm:$0xff]
      %v1014 = vld [vmem:[%s273 + $0x12a] sm:$0xff]
      %v1015 = vld [vmem:[%s273 + $0x13a] sm:$0xff]
      %v1016 = vld [vmem:[%s273 + $0x142] sm:$0xff]
      %v1017 = vld [vmem:[%s273 + $0x152] sm:$0xff]
      %v1018 = vld [vmem:[%s273 + $0x15a] sm:$0xff]
      %v1019 = vld [vmem:[%s273 + $0x16a] sm:$0xff]
      %v1020 = vld [vmem:[%s273 + $0x172] sm:$0xff]
      %s1021 = scalar_lea.vmem %s1, 16
      %v1022 = vld [vmem:[%s1021] sm:$0xff]
      %v1024 = vsel %vm346, %v989, 0
      %v1027 = vsel %vm346, %v990, 0
      %v1030 = vsel %vm346, %v991, 0
      %v1033 = vsel %vm346, %v992, 0
      %v1036 = vsel %vm346, %v993, 0
      %v1039 = vsel %vm346, %v994, 0
      %v1042 = vsel %vm346, %v995, 0
      %v1045 = vsel %vm346, %v996, 0
      %v1048 = vsel %vm346, %v997, 0
      %v1051 = vsel %vm346, %v998, 0
      %v1054 = vsel %vm346, %v999, 0
      %v1057 = vsel %vm346, %v1000, 0
      %v1060 = vsel %vm346, %v1001, 0
      %v1063 = vsel %vm346, %v1002, 0
      %v1066 = vsel %vm346, %v1003, 0
      %v1069 = vsel %vm346, %v1004, 0
      %v1072 = vsel %vm346, %v1005, 0
      %v1075 = vsel %vm346, %v1006, 0
      %v1078 = vsel %vm346, %v1007, 0
      %v1081 = vsel %vm346, %v1008, 0
      %v1084 = vsel %vm346, %v1009, 0
      %v1087 = vsel %vm346, %v1010, 0
      %v1090 = vsel %vm346, %v1011, 0
      %v1093 = vsel %vm346, %v1012, 0
      %v1096 = vsel %vm346, %v1013, 0
      %v1099 = vsel %vm346, %v1014, 0
      %v1102 = vsel %vm346, %v1015, 0
      %v1105 = vsel %vm346, %v1016, 0
      %v1108 = vsel %vm346, %v1017, 0
      %v1111 = vsel %vm346, %v1018, 0
      %v1114 = vsel %vm346, %v1019, 0
      %v1117 = vsel %vm346, %v1020, 0
      %1119 = vmatprep.subr.mxu0 0.0
      %1120 = vmatpush1.msra.mxu0 %v1022
      %1121 = vmatprep.subr.mxu0 0.0
      %1122 = vmatpush1.msra.mxu0 0.0
      %1123 = vmatprep.subr.mxu0 0.0
      %1124 = vmatpush1.msra.mxu0 0.0
      %1125 = vmatprep.subr.mxu0 0.0
      %1126 = vmatpush1.msra.mxu0 0.0
      %1127 = vmatprep.subr.mxu0 0.0
      %1128 = vmatpush1.msra.mxu0 0.0
      %1129 = vmatprep.subr.mxu0 0.0
      %1130 = vmatpush1.msra.mxu0 0.0
      %1131 = vmatprep.subr.mxu0 0.0
      %1132 = vmatpush1.msra.mxu0 0.0
      %1133 = vmatprep.subr.mxu0 0.0
      %1134 = vmatpush1.msra.mxu0 0.0
      %1135 = vmatprep.subr.mxu0 0.0
      %1136 = vmatpush1.msra.mxu0 0.0
      %1137 = vmatprep.subr.mxu0 0.0
      %1138 = vmatpush1.msra.mxu0 0.0
      %1139 = vmatprep.subr.mxu0 0.0
      %1140 = vmatpush1.msra.mxu0 0.0
      %1141 = vmatprep.subr.mxu0 0.0
      %1142 = vmatpush1.msra.mxu0 0.0
      %1143 = vmatprep.subr.mxu0 0.0
      %1144 = vmatpush1.msra.mxu0 0.0
      %1145 = vmatprep.subr.mxu0 0.0
      %1146 = vmatpush1.msra.mxu0 0.0
      %1147 = vmatprep.subr.mxu0 0.0
      %1148 = vmatpush1.msra.mxu0 0.0
      %1149 = vmatprep.subr.mxu0 0.0
      %1150 = vmatpush1.msra.mxu0 0.0
      %1151 = vmatprep.subr.mxu0 0.0
      %1152 = vmatpush1.msra.mxu0 0.0
      %1153 = vmatprep.subr.mxu0 0.0
      %1154 = vmatpush1.msra.mxu0 0.0
      %1155 = vmatprep.subr.mxu0 0.0
      %1156 = vmatpush1.msra.mxu0 0.0
      %1157 = vmatprep.subr.mxu0 0.0
      %1158 = vmatpush1.msra.mxu0 0.0
      %1159 = vmatprep.subr.mxu0 0.0
      %1160 = vmatpush1.msra.mxu0 0.0
      %1161 = vmatprep.subr.mxu0 0.0
      %1162 = vmatpush1.msra.mxu0 0.0
      %1163 = vmatprep.subr.mxu0 0.0
      %1164 = vmatpush1.msra.mxu0 0.0
      %1165 = vmatprep.subr.mxu0 0.0
      %1166 = vmatpush1.msra.mxu0 0.0
      %1167 = vmatprep.subr.mxu0 0.0
      %1168 = vmatpush1.msra.mxu0 0.0
      %1169 = vmatprep.subr.mxu0 0.0
      %1170 = vmatpush1.msra.mxu0 0.0
      %1171 = vmatprep.subr.mxu0 0.0
      %1172 = vmatpush1.msra.mxu0 0.0
      %1173 = vmatprep.subr.mxu0 0.0
      %1174 = vmatpush1.msra.mxu0 0.0
      %1175 = vmatprep.subr.mxu0 0.0
      %1176 = vmatpush1.msra.mxu0 0.0
      %1177 = vmatprep.subr.mxu0 0.0
      %1178 = vmatpush1.msra.mxu0 0.0
      %1179 = vmatprep.subr.mxu0 0.0
      %1180 = vmatpush1.msra.mxu0 0.0
      %1181 = vmatprep.subr.mxu0 0.0
      %1182 = vmatpush1.msra.mxu0 0.0
      %1183 = vmatprep.mubr.f32.mxu0 0.0
      %1184 = vmatmul.mubr.f32.gmra.mrb[0].mxu0 %v1024
      %v1185 = vpop.f32.mrb[0].mxu0
      %v1186 = vadd.f32 0.0, %v1185
      %v1187 = vpop.f32.mrb[0].mxu0
      %1188 = vmatprep.mubr.f32.mxu0 0.0
      %1189 = vmatmul.mubr.f32.gmra.mrb[0].mxu0 %v1027
      %v1190 = vpop.f32.mrb[0].mxu0
      %v1191 = vadd.f32 0.0, %v1190
      %v1192 = vpop.f32.mrb[0].mxu0
      %1193 = vmatprep.mubr.f32.mxu0 0.0
      %1194 = vmatmul.mubr.f32.gmra.mrb[0].mxu0 %v1030
      %v1195 = vpop.f32.mrb[0].mxu0
      %v1196 = vadd.f32 0.0, %v1195
      %v1197 = vpop.f32.mrb[0].mxu0
      %1198 = vmatprep.mubr.f32.mxu0 0.0
      %1199 = vmatmul.mubr.f32.gmra.mrb[0].mxu0 %v1033
      %v1200 = vpop.f32.mrb[0].mxu0
      %v1201 = vadd.f32 0.0, %v1200
      %v1202 = vpop.f32.mrb[0].mxu0
      %1203 = vmatprep.mubr.f32.mxu0 0.0
      %1204 = vmatmul.mubr.f32.gmra.mrb[0].mxu0 %v1036
      %v1205 = vpop.f32.mrb[0].mxu0
      %v1206 = vadd.f32 0.0, %v1205
      %v1207 = vpop.f32.mrb[0].mxu0
      %1208 = vmatprep.mubr.f32.mxu0 0.0
      %1209 = vmatmul.mubr.f32.gmra.mrb[0].mxu0 %v1039
      %v1210 = vpop.f32.mrb[0].mxu0
      %v1211 = vadd.f32 0.0, %v1210
      %v1212 = vpop.f32.mrb[0].mxu0
      %1213 = vmatprep.mubr.f32.mxu0 0.0
      %1214 = vmatmul.mubr.f32.gmra.mrb[0].mxu0 %v1042
      %v1215 = vpop.f32.mrb[0].mxu0
      %v1216 = vadd.f32 0.0, %v1215
      %v1217 = vpop.f32.mrb[0].mxu0
      %1218 = vmatprep.mubr.f32.mxu0 0.0
      %1219 = vmatmul.mubr.f32.gmra.mrb[0].mxu0 %v1045
      %v1220 = vpop.f32.mrb[0].mxu0
      %v1221 = vadd.f32 0.0, %v1220
      %v1222 = vpop.f32.mrb[0].mxu0
      %1223 = vmatprep.mubr.f32.mxu0 0.0
      %1224 = vmatmul.mubr.f32.gmra.mrb[0].mxu0 %v1048
      %v1225 = vpop.f32.mrb[0].mxu0
      %v1226 = vadd.f32 0.0, %v1225
      %v1227 = vpop.f32.mrb[0].mxu0
      %1228 = vmatprep.mubr.f32.mxu0 0.0
      %1229 = vmatmul.mubr.f32.gmra.mrb[0].mxu0 %v1051
      %v1230 = vpop.f32.mrb[0].mxu0
      %v1231 = vadd.f32 0.0, %v1230
      %v1232 = vpop.f32.mrb[0].mxu0
      %1233 = vmatprep.mubr.f32.mxu0 0.0
      %1234 = vmatmul.mubr.f32.gmra.mrb[0].mxu0 %v1054
      %v1235 = vpop.f32.mrb[0].mxu0
      %v1236 = vadd.f32 0.0, %v1235
      %v1237 = vpop.f32.mrb[0].mxu0
      %1238 = vmatprep.mubr.f32.mxu0 0.0
      %1239 = vmatmul.mubr.f32.gmra.mrb[0].mxu0 %v1057
      %v1240 = vpop.f32.mrb[0].mxu0
      %v1241 = vadd.f32 0.0, %v1240
      %v1242 = vpop.f32.mrb[0].mxu0
      %1243 = vmatprep.mubr.f32.mxu0 0.0
      %1244 = vmatmul.mubr.f32.gmra.mrb[0].mxu0 %v1060
      %v1245 = vpop.f32.mrb[0].mxu0
      %v1246 = vadd.f32 0.0, %v1245
      %v1247 = vpop.f32.mrb[0].mxu0
      %1248 = vmatprep.mubr.f32.mxu0 0.0
      %1249 = vmatmul.mubr.f32.gmra.mrb[0].mxu0 %v1063
      %v1250 = vpop.f32.mrb[0].mxu0
      %v1251 = vadd.f32 0.0, %v1250
      %v1252 = vpop.f32.mrb[0].mxu0
      %1253 = vmatprep.mubr.f32.mxu0 0.0
      %1254 = vmatmul.mubr.f32.gmra.mrb[0].mxu0 %v1066
      %v1255 = vpop.f32.mrb[0].mxu0
      %v1256 = vadd.f32 0.0, %v1255
      %v1257 = vpop.f32.mrb[0].mxu0
      %1258 = vmatprep.mubr.f32.mxu0 0.0
      %1259 = vmatmul.mubr.f32.gmra.mrb[0].mxu0 %v1069
      %v1260 = vpop.f32.mrb[0].mxu0
      %v1261 = vadd.f32 0.0, %v1260
      %v1262 = vpop.f32.mrb[0].mxu0
      %1263 = vmatprep.mubr.f32.mxu0 0.0
      %1264 = vmatmul.mubr.f32.gmra.mrb[0].mxu0 %v1072
      %v1265 = vpop.f32.mrb[0].mxu0
      %v1266 = vadd.f32 0.0, %v1265
      %v1267 = vpop.f32.mrb[0].mxu0
      %1268 = vmatprep.mubr.f32.mxu0 0.0
      %1269 = vmatmul.mubr.f32.gmra.mrb[0].mxu0 %v1075
      %v1270 = vpop.f32.mrb[0].mxu0
      %v1271 = vadd.f32 0.0, %v1270
      %v1272 = vpop.f32.mrb[0].mxu0
      %1273 = vmatprep.mubr.f32.mxu0 0.0
      %1274 = vmatmul.mubr.f32.gmra.mrb[0].mxu0 %v1078
      %v1275 = vpop.f32.mrb[0].mxu0
      %v1276 = vadd.f32 0.0, %v1275
      %v1277 = vpop.f32.mrb[0].mxu0
      %1278 = vmatprep.mubr.f32.mxu0 0.0
      %1279 = vmatmul.mubr.f32.gmra.mrb[0].mxu0 %v1081
      %v1280 = vpop.f32.mrb[0].mxu0
      %v1281 = vadd.f32 0.0, %v1280
      %v1282 = vpop.f32.mrb[0].mxu0
      %1283 = vmatprep.mubr.f32.mxu0 0.0
      %1284 = vmatmul.mubr.f32.gmra.mrb[0].mxu0 %v1084
      %v1285 = vpop.f32.mrb[0].mxu0
      %v1286 = vadd.f32 0.0, %v1285
      %v1287 = vpop.f32.mrb[0].mxu0
      %1288 = vmatprep.mubr.f32.mxu0 0.0
      %1289 = vmatmul.mubr.f32.gmra.mrb[0].mxu0 %v1087
      %v1290 = vpop.f32.mrb[0].mxu0
      %v1291 = vadd.f32 0.0, %v1290
      %v1292 = vpop.f32.mrb[0].mxu0
      %1293 = vmatprep.mubr.f32.mxu0 0.0
      %1294 = vmatmul.mubr.f32.gmra.mrb[0].mxu0 %v1090
      %v1295 = vpop.f32.mrb[0].mxu0
      %v1296 = vadd.f32 0.0, %v1295
      %v1297 = vpop.f32.mrb[0].mxu0
      %1298 = vmatprep.mubr.f32.mxu0 0.0
      %1299 = vmatmul.mubr.f32.gmra.mrb[0].mxu0 %v1093
      %v1300 = vpop.f32.mrb[0].mxu0
      %v1301 = vadd.f32 0.0, %v1300
      %v1302 = vpop.f32.mrb[0].mxu0
      %1303 = vmatprep.mubr.f32.mxu0 0.0
      %1304 = vmatmul.mubr.f32.gmra.mrb[0].mxu0 %v1096
      %v1305 = vpop.f32.mrb[0].mxu0
      %v1306 = vadd.f32 0.0, %v1305
      %v1307 = vpop.f32.mrb[0].mxu0
      %1308 = vmatprep.mubr.f32.mxu0 0.0
      %1309 = vmatmul.mubr.f32.gmra.mrb[0].mxu0 %v1099
      %v1310 = vpop.f32.mrb[0].mxu0
      %v1311 = vadd.f32 0.0, %v1310
      %v1312 = vpop.f32.mrb[0].mxu0
      %1313 = vmatprep.mubr.f32.mxu0 0.0
      %1314 = vmatmul.mubr.f32.gmra.mrb[0].mxu0 %v1102
      %v1315 = vpop.f32.mrb[0].mxu0
      %v1316 = vadd.f32 0.0, %v1315
      %v1317 = vpop.f32.mrb[0].mxu0
      %1318 = vmatprep.mubr.f32.mxu0 0.0
      %1319 = vmatmul.mubr.f32.gmra.mrb[0].mxu0 %v1105
      %v1320 = vpop.f32.mrb[0].mxu0
      %v1321 = vadd.f32 0.0, %v1320
      %v1322 = vpop.f32.mrb[0].mxu0
      %1323 = vmatprep.mubr.f32.mxu0 0.0
      %1324 = vmatmul.mubr.f32.gmra.mrb[0].mxu0 %v1108
      %v1325 = vpop.f32.mrb[0].mxu0
      %v1326 = vadd.f32 0.0, %v1325
      %v1327 = vpop.f32.mrb[0].mxu0
      %1328 = vmatprep.mubr.f32.mxu0 0.0
      %1329 = vmatmul.mubr.f32.gmra.mrb[0].mxu0 %v1111
      %v1330 = vpop.f32.mrb[0].mxu0
      %v1331 = vadd.f32 0.0, %v1330
      %v1332 = vpop.f32.mrb[0].mxu0
      %1333 = vmatprep.mubr.f32.mxu0 0.0
      %1334 = vmatmul.mubr.f32.gmra.mrb[0].mxu0 %v1114
      %v1335 = vpop.f32.mrb[0].mxu0
      %v1336 = vadd.f32 0.0, %v1335
      %v1337 = vpop.f32.mrb[0].mxu0
      %1338 = vmatprep.mubr.f32.mxu0 0.0
      %1339 = vmatmul.mubr.f32.gmra.mrb[0].mxu0 %v1117
      %v1340 = vpop.f32.mrb[0].mxu0
      %v1341 = vadd.f32 0.0, %v1340
      %v1342 = vpop.f32.mrb[0].mxu0
      %1343 = vdwg.mxu0
      %v1344 = vadd.f32 %v831, %v1186
      %v1345 = vadd.f32 %v836, %v1191
      %v1346 = vadd.f32 %v841, %v1196
      %v1347 = vadd.f32 %v846, %v1201
      %v1348 = vadd.f32 %v851, %v1206
      %v1349 = vadd.f32 %v856, %v1211
      %v1350 = vadd.f32 %v861, %v1216
      %v1351 = vadd.f32 %v866, %v1221
      %v1352 = vadd.f32 %v871, %v1226
      %v1353 = vadd.f32 %v876, %v1231
      %v1354 = vadd.f32 %v881, %v1236
      %v1355 = vadd.f32 %v886, %v1241
      %v1356 = vadd.f32 %v891, %v1246
      %v1357 = vadd.f32 %v896, %v1251
      %v1358 = vadd.f32 %v901, %v1256
      %v1359 = vadd.f32 %v906, %v1261
      %v1360 = vadd.f32 %v911, %v1266
      %v1361 = vadd.f32 %v916, %v1271
      %v1362 = vadd.f32 %v921, %v1276
      %v1363 = vadd.f32 %v926, %v1281
      %v1364 = vadd.f32 %v931, %v1286
      %v1365 = vadd.f32 %v936, %v1291
      %v1366 = vadd.f32 %v941, %v1296
      %v1367 = vadd.f32 %v946, %v1301
      %v1368 = vadd.f32 %v951, %v1306
      %v1369 = vadd.f32 %v956, %v1311
      %v1370 = vadd.f32 %v961, %v1316
      %v1371 = vadd.f32 %v966, %v1321
      %v1372 = vadd.f32 %v971, %v1326
      %v1373 = vadd.f32 %v976, %v1331
      %v1374 = vadd.f32 %v981, %v1336
      %v1375 = vadd.f32 %v986, %v1341
      %s1376 = scalar_lea.vmem %s273, 24
      %v1377 = vld [vmem:[%s1376] sm:$0xff]
      %v1378 = vld [vmem:[%s1376 + $0x8] sm:$0xff]
      %v1379 = vld [vmem:[%s1376 + $0x18] sm:$0xff]
      %v1380 = vld [vmem:[%s1376 + $0x20] sm:$0xff]
      %v1381 = vld [vmem:[%s1376 + $0x30] sm:$0xff]
      %v1382 = vld [vmem:[%s1376 + $0x38] sm:$0xff]
      %v1383 = vld [vmem:[%s1376 + $0x48] sm:$0xff]
      %v1384 = vld [vmem:[%s1376 + $0x50] sm:$0xff]
      %v1385 = vld [vmem:[%s1376 + $0x60] sm:$0xff]
      %v1386 = vld [vmem:[%s1376 + $0x68] sm:$0xff]
      %v1387 = vld [vmem:[%s1376 + $0x78] sm:$0xff]
      %v1388 = vld [vmem:[%s1376 + $0x80] sm:$0xff]
      %v1389 = vld [vmem:[%s1376 + $0x90] sm:$0xff]
      %v1390 = vld [vmem:[%s1376 + $0x98] sm:$0xff]
      %v1391 = vld [vmem:[%s1376 + $0xa8] sm:$0xff]
      %v1392 = vld [vmem:[%s1376 + $0xb0] sm:$0xff]
      %v1393 = vld [vmem:[%s1376 + $0xc0] sm:$0xff]
      %v1394 = vld [vmem:[%s1376 + $0xc8] sm:$0xff]
      %v1395 = vld [vmem:[%s1376 + $0xd8] sm:$0xff]
      %v1396 = vld [vmem:[%s1376 + $0xe0] sm:$0xff]
      %v1397 = vld [vmem:[%s1376 + $0xf0] sm:$0xff]
      %v1398 = vld [vmem:[%s1376 + $0xf8] sm:$0xff]
      %v1399 = vld [vmem:[%s1376 + $0x108] sm:$0xff]
      %v1400 = vld [vmem:[%s1376 + $0x110] sm:$0xff]
      %v1401 = vld [vmem:[%s1376 + $0x120] sm:$0xff]
      %v1402 = vld [vmem:[%s1376 + $0x128] sm:$0xff]
      %v1403 = vld [vmem:[%s1376 + $0x138] sm:$0xff]
      %v1404 = vld [vmem:[%s1376 + $0x140] sm:$0xff]
      %v1405 = vld [vmem:[%s1376 + $0x150] sm:$0xff]
      %v1406 = vld [vmem:[%s1376 + $0x158] sm:$0xff]
      %v1407 = vld [vmem:[%s1376 + $0x168] sm:$0xff]
      %v1408 = vld [vmem:[%s1376 + $0x170] sm:$0xff]
      %s1409 = scalar_lea.vmem %s1, 24
      %v1410 = vld [vmem:[%s1409] sm:$0xff]
      %v1412 = vsel %vm346, %v1377, 0
      %v1415 = vsel %vm346, %v1378, 0
      %v1418 = vsel %vm346, %v1379, 0
      %v1421 = vsel %vm346, %v1380, 0
      %v1424 = vsel %vm346, %v1381, 0
      %v1427 = vsel %vm346, %v1382, 0
      %v1430 = vsel %vm346, %v1383, 0
      %v1433 = vsel %vm346, %v1384, 0
      %v1436 = vsel %vm346, %v1385, 0
      %v1439 = vsel %vm346, %v1386, 0
      %v1442 = vsel %vm346, %v1387, 0
      %v1445 = vsel %vm346, %v1388, 0
      %v1448 = vsel %vm346, %v1389, 0
      %v1451 = vsel %vm346, %v1390, 0
      %v1454 = vsel %vm346, %v1391, 0
      %v1457 = vsel %vm346, %v1392, 0
      %v1460 = vsel %vm346, %v1393, 0
      %v1463 = vsel %vm346, %v1394, 0
      %v1466 = vsel %vm346, %v1395, 0
      %v1469 = vsel %vm346, %v1396, 0
      %v1472 = vsel %vm346, %v1397, 0
      %v1475 = vsel %vm346, %v1398, 0
      %v1478 = vsel %vm346, %v1399, 0
      %v1481 = vsel %vm346, %v1400, 0
      %v1484 = vsel %vm346, %v1401, 0
      %v1487 = vsel %vm346, %v1402, 0
      %v1490 = vsel %vm346, %v1403, 0
      %v1493 = vsel %vm346, %v1404, 0
      %v1496 = vsel %vm346, %v1405, 0
      %v1499 = vsel %vm346, %v1406, 0
      %v1502 = vsel %vm346, %v1407, 0
      %v1505 = vsel %vm346, %v1408, 0
      %1507 = vmatprep.subr.mxu0 0.0
      %1508 = vmatpush1.msra.mxu0 %v1410
      %1509 = vmatprep.subr.mxu0 0.0
      %1510 = vmatpush1.msra.mxu0 0.0
      %1511 = vmatprep.subr.mxu0 0.0
      %1512 = vmatpush1.msra.mxu0 0.0
      %1513 = vmatprep.subr.mxu0 0.0
      %1514 = vmatpush1.msra.mxu0 0.0
      %1515 = vmatprep.subr.mxu0 0.0
      %1516 = vmatpush1.msra.mxu0 0.0
      %1517 = vmatprep.subr.mxu0 0.0
      %1518 = vmatpush1.msra.mxu0 0.0
      %1519 = vmatprep.subr.mxu0 0.0
      %1520 = vmatpush1.msra.mxu0 0.0
      %1521 = vmatprep.subr.mxu0 0.0
      %1522 = vmatpush1.msra.mxu0 0.0
      %1523 = vmatprep.subr.mxu0 0.0
      %1524 = vmatpush1.msra.mxu0 0.0
      %1525 = vmatprep.subr.mxu0 0.0
      %1526 = vmatpush1.msra.mxu0 0.0
      %1527 = vmatprep.subr.mxu0 0.0
      %1528 = vmatpush1.msra.mxu0 0.0
      %1529 = vmatprep.subr.mxu0 0.0
      %1530 = vmatpush1.msra.mxu0 0.0
      %1531 = vmatprep.subr.mxu0 0.0
      %1532 = vmatpush1.msra.mxu0 0.0
      %1533 = vmatprep.subr.mxu0 0.0
      %1534 = vmatpush1.msra.mxu0 0.0
      %1535 = vmatprep.subr.mxu0 0.0
      %1536 = vmatpush1.msra.mxu0 0.0
      %1537 = vmatprep.subr.mxu0 0.0
      %1538 = vmatpush1.msra.mxu0 0.0
      %1539 = vmatprep.subr.mxu0 0.0
      %1540 = vmatpush1.msra.mxu0 0.0
      %1541 = vmatprep.subr.mxu0 0.0
      %1542 = vmatpush1.msra.mxu0 0.0
      %1543 = vmatprep.subr.mxu0 0.0
      %1544 = vmatpush1.msra.mxu0 0.0
      %1545 = vmatprep.subr.mxu0 0.0
      %1546 = vmatpush1.msra.mxu0 0.0
      %1547 = vmatprep.subr.mxu0 0.0
      %1548 = vmatpush1.msra.mxu0 0.0
      %1549 = vmatprep.subr.mxu0 0.0
      %1550 = vmatpush1.msra.mxu0 0.0
      %1551 = vmatprep.subr.mxu0 0.0
      %1552 = vmatpush1.msra.mxu0 0.0
      %1553 = vmatprep.subr.mxu0 0.0
      %1554 = vmatpush1.msra.mxu0 0.0
      %1555 = vmatprep.subr.mxu0 0.0
      %1556 = vmatpush1.msra.mxu0 0.0
      %1557 = vmatprep.subr.mxu0 0.0
      %1558 = vmatpush1.msra.mxu0 0.0
      %1559 = vmatprep.subr.mxu0 0.0
      %1560 = vmatpush1.msra.mxu0 0.0
      %1561 = vmatprep.subr.mxu0 0.0
      %1562 = vmatpush1.msra.mxu0 0.0
      %1563 = vmatprep.subr.mxu0 0.0
      %1564 = vmatpush1.msra.mxu0 0.0
      %1565 = vmatprep.subr.mxu0 0.0
      %1566 = vmatpush1.msra.mxu0 0.0
      %1567 = vmatprep.subr.mxu0 0.0
      %1568 = vmatpush1.msra.mxu0 0.0
      %1569 = vmatprep.subr.mxu0 0.0
      %1570 = vmatpush1.msra.mxu0 0.0
      %1571 = vmatprep.mubr.f32.mxu0 0.0
      %1572 = vmatmul.mubr.f32.gmra.mrb[0].mxu0 %v1412
      %v1573 = vpop.f32.mrb[0].mxu0
      %v1574 = vadd.f32 0.0, %v1573
      %v1575 = vpop.f32.mrb[0].mxu0
      %1576 = vmatprep.mubr.f32.mxu0 0.0
      %1577 = vmatmul.mubr.f32.gmra.mrb[0].mxu0 %v1415
      %v1578 = vpop.f32.mrb[0].mxu0
      %v1579 = vadd.f32 0.0, %v1578
      %v1580 = vpop.f32.mrb[0].mxu0
      %1581 = vmatprep.mubr.f32.mxu0 0.0
      %1582 = vmatmul.mubr.f32.gmra.mrb[0].mxu0 %v1418
      %v1583 = vpop.f32.mrb[0].mxu0
      %v1584 = vadd.f32 0.0, %v1583
      %v1585 = vpop.f32.mrb[0].mxu0
      %1586 = vmatprep.mubr.f32.mxu0 0.0
      %1587 = vmatmul.mubr.f32.gmra.mrb[0].mxu0 %v1421
      %v1588 = vpop.f32.mrb[0].mxu0
      %v1589 = vadd.f32 0.0, %v1588
      %v1590 = vpop.f32.mrb[0].mxu0
      %1591 = vmatprep.mubr.f32.mxu0 0.0
      %1592 = vmatmul.mubr.f32.gmra.mrb[0].mxu0 %v1424
      %v1593 = vpop.f32.mrb[0].mxu0
      %v1594 = vadd.f32 0.0, %v1593
      %v1595 = vpop.f32.mrb[0].mxu0
      %1596 = vmatprep.mubr.f32.mxu0 0.0
      %1597 = vmatmul.mubr.f32.gmra.mrb[0].mxu0 %v1427
      %v1598 = vpop.f32.mrb[0].mxu0
      %v1599 = vadd.f32 0.0, %v1598
      %v1600 = vpop.f32.mrb[0].mxu0
      %1601 = vmatprep.mubr.f32.mxu0 0.0
      %1602 = vmatmul.mubr.f32.gmra.mrb[0].mxu0 %v1430
      %v1603 = vpop.f32.mrb[0].mxu0
      %v1604 = vadd.f32 0.0, %v1603
      %v1605 = vpop.f32.mrb[0].mxu0
      %1606 = vmatprep.mubr.f32.mxu0 0.0
      %1607 = vmatmul.mubr.f32.gmra.mrb[0].mxu0 %v1433
      %v1608 = vpop.f32.mrb[0].mxu0
      %v1609 = vadd.f32 0.0, %v1608
      %v1610 = vpop.f32.mrb[0].mxu0
      %1611 = vmatprep.mubr.f32.mxu0 0.0
      %1612 = vmatmul.mubr.f32.gmra.mrb[0].mxu0 %v1436
      %v1613 = vpop.f32.mrb[0].mxu0
      %v1614 = vadd.f32 0.0, %v1613
      %v1615 = vpop.f32.mrb[0].mxu0
      %1616 = vmatprep.mubr.f32.mxu0 0.0
      %1617 = vmatmul.mubr.f32.gmra.mrb[0].mxu0 %v1439
      %v1618 = vpop.f32.mrb[0].mxu0
      %v1619 = vadd.f32 0.0, %v1618
      %v1620 = vpop.f32.mrb[0].mxu0
      %1621 = vmatprep.mubr.f32.mxu0 0.0
      %1622 = vmatmul.mubr.f32.gmra.mrb[0].mxu0 %v1442
      %v1623 = vpop.f32.mrb[0].mxu0
      %v1624 = vadd.f32 0.0, %v1623
      %v1625 = vpop.f32.mrb[0].mxu0
      %1626 = vmatprep.mubr.f32.mxu0 0.0
      %1627 = vmatmul.mubr.f32.gmra.mrb[0].mxu0 %v1445
      %v1628 = vpop.f32.mrb[0].mxu0
      %v1629 = vadd.f32 0.0, %v1628
      %v1630 = vpop.f32.mrb[0].mxu0
      %1631 = vmatprep.mubr.f32.mxu0 0.0
      %1632 = vmatmul.mubr.f32.gmra.mrb[0].mxu0 %v1448
      %v1633 = vpop.f32.mrb[0].mxu0
      %v1634 = vadd.f32 0.0, %v1633
      %v1635 = vpop.f32.mrb[0].mxu0
      %1636 = vmatprep.mubr.f32.mxu0 0.0
      %1637 = vmatmul.mubr.f32.gmra.mrb[0].mxu0 %v1451
      %v1638 = vpop.f32.mrb[0].mxu0
      %v1639 = vadd.f32 0.0, %v1638
      %v1640 = vpop.f32.mrb[0].mxu0
      %1641 = vmatprep.mubr.f32.mxu0 0.0
      %1642 = vmatmul.mubr.f32.gmra.mrb[0].mxu0 %v1454
      %v1643 = vpop.f32.mrb[0].mxu0
      %v1644 = vadd.f32 0.0, %v1643
      %v1645 = vpop.f32.mrb[0].mxu0
      %1646 = vmatprep.mubr.f32.mxu0 0.0
      %1647 = vmatmul.mubr.f32.gmra.mrb[0].mxu0 %v1457
      %v1648 = vpop.f32.mrb[0].mxu0
      %v1649 = vadd.f32 0.0, %v1648
      %v1650 = vpop.f32.mrb[0].mxu0
      %1651 = vmatprep.mubr.f32.mxu0 0.0
      %1652 = vmatmul.mubr.f32.gmra.mrb[0].mxu0 %v1460
      %v1653 = vpop.f32.mrb[0].mxu0
      %v1654 = vadd.f32 0.0, %v1653
      %v1655 = vpop.f32.mrb[0].mxu0
      %1656 = vmatprep.mubr.f32.mxu0 0.0
      %1657 = vmatmul.mubr.f32.gmra.mrb[0].mxu0 %v1463
      %v1658 = vpop.f32.mrb[0].mxu0
      %v1659 = vadd.f32 0.0, %v1658
      %v1660 = vpop.f32.mrb[0].mxu0
      %1661 = vmatprep.mubr.f32.mxu0 0.0
      %1662 = vmatmul.mubr.f32.gmra.mrb[0].mxu0 %v1466
      %v1663 = vpop.f32.mrb[0].mxu0
      %v1664 = vadd.f32 0.0, %v1663
      %v1665 = vpop.f32.mrb[0].mxu0
      %1666 = vmatprep.mubr.f32.mxu0 0.0
      %1667 = vmatmul.mubr.f32.gmra.mrb[0].mxu0 %v1469
      %v1668 = vpop.f32.mrb[0].mxu0
      %v1669 = vadd.f32 0.0, %v1668
      %v1670 = vpop.f32.mrb[0].mxu0
      %1671 = vmatprep.mubr.f32.mxu0 0.0
      %1672 = vmatmul.mubr.f32.gmra.mrb[0].mxu0 %v1472
      %v1673 = vpop.f32.mrb[0].mxu0
      %v1674 = vadd.f32 0.0, %v1673
      %v1675 = vpop.f32.mrb[0].mxu0
      %1676 = vmatprep.mubr.f32.mxu0 0.0
      %1677 = vmatmul.mubr.f32.gmra.mrb[0].mxu0 %v1475
      %v1678 = vpop.f32.mrb[0].mxu0
      %v1679 = vadd.f32 0.0, %v1678
      %v1680 = vpop.f32.mrb[0].mxu0
      %1681 = vmatprep.mubr.f32.mxu0 0.0
      %1682 = vmatmul.mubr.f32.gmra.mrb[0].mxu0 %v1478
      %v1683 = vpop.f32.mrb[0].mxu0
      %v1684 = vadd.f32 0.0, %v1683
      %v1685 = vpop.f32.mrb[0].mxu0
      %1686 = vmatprep.mubr.f32.mxu0 0.0
      %1687 = vmatmul.mubr.f32.gmra.mrb[0].mxu0 %v1481
      %v1688 = vpop.f32.mrb[0].mxu0
      %v1689 = vadd.f32 0.0, %v1688
      %v1690 = vpop.f32.mrb[0].mxu0
      %1691 = vmatprep.mubr.f32.mxu0 0.0
      %1692 = vmatmul.mubr.f32.gmra.mrb[0].mxu0 %v1484
      %v1693 = vpop.f32.mrb[0].mxu0
      %v1694 = vadd.f32 0.0, %v1693
      %v1695 = vpop.f32.mrb[0].mxu0
      %1696 = vmatprep.mubr.f32.mxu0 0.0
      %1697 = vmatmul.mubr.f32.gmra.mrb[0].mxu0 %v1487
      %v1698 = vpop.f32.mrb[0].mxu0
      %v1699 = vadd.f32 0.0, %v1698
      %v1700 = vpop.f32.mrb[0].mxu0
      %1701 = vmatprep.mubr.f32.mxu0 0.0
      %1702 = vmatmul.mubr.f32.gmra.mrb[0].mxu0 %v1490
      %v1703 = vpop.f32.mrb[0].mxu0
      %v1704 = vadd.f32 0.0, %v1703
      %v1705 = vpop.f32.mrb[0].mxu0
      %1706 = vmatprep.mubr.f32.mxu0 0.0
      %1707 = vmatmul.mubr.f32.gmra.mrb[0].mxu0 %v1493
      %v1708 = vpop.f32.mrb[0].mxu0
      %v1709 = vadd.f32 0.0, %v1708
      %v1710 = vpop.f32.mrb[0].mxu0
      %1711 = vmatprep.mubr.f32.mxu0 0.0
      %1712 = vmatmul.mubr.f32.gmra.mrb[0].mxu0 %v1496
      %v1713 = vpop.f32.mrb[0].mxu0
      %v1714 = vadd.f32 0.0, %v1713
      %v1715 = vpop.f32.mrb[0].mxu0
      %1716 = vmatprep.mubr.f32.mxu0 0.0
      %1717 = vmatmul.mubr.f32.gmra.mrb[0].mxu0 %v1499
      %v1718 = vpop.f32.mrb[0].mxu0
      %v1719 = vadd.f32 0.0, %v1718
      %v1720 = vpop.f32.mrb[0].mxu0
      %1721 = vmatprep.mubr.f32.mxu0 0.0
      %1722 = vmatmul.mubr.f32.gmra.mrb[0].mxu0 %v1502
      %v1723 = vpop.f32.mrb[0].mxu0
      %v1724 = vadd.f32 0.0, %v1723
      %v1725 = vpop.f32.mrb[0].mxu0
      %1726 = vmatprep.mubr.f32.mxu0 0.0
      %1727 = vmatmul.mubr.f32.gmra.mrb[0].mxu0 %v1505
      %v1728 = vpop.f32.mrb[0].mxu0
      %v1729 = vadd.f32 0.0, %v1728
      %v1730 = vpop.f32.mrb[0].mxu0
      %1731 = vdwg.mxu0
      %v1732 = vadd.f32 %v1344, %v1574
      %v1733 = vadd.f32 %v1345, %v1579
      %v1734 = vadd.f32 %v1346, %v1584
      %v1735 = vadd.f32 %v1347, %v1589
      %v1736 = vadd.f32 %v1348, %v1594
      %v1737 = vadd.f32 %v1349, %v1599
      %v1738 = vadd.f32 %v1350, %v1604
      %v1739 = vadd.f32 %v1351, %v1609
      %v1740 = vadd.f32 %v1352, %v1614
      %v1741 = vadd.f32 %v1353, %v1619
      %v1742 = vadd.f32 %v1354, %v1624
      %v1743 = vadd.f32 %v1355, %v1629
      %v1744 = vadd.f32 %v1356, %v1634
      %v1745 = vadd.f32 %v1357, %v1639
      %v1746 = vadd.f32 %v1358, %v1644
      %v1747 = vadd.f32 %v1359, %v1649
      %v1748 = vadd.f32 %v1360, %v1654
      %v1749 = vadd.f32 %v1361, %v1659
      %v1750 = vadd.f32 %v1362, %v1664
      %v1751 = vadd.f32 %v1363, %v1669
      %v1752 = vadd.f32 %v1364, %v1674
      %v1753 = vadd.f32 %v1365, %v1679
      %v1754 = vadd.f32 %v1366, %v1684
      %v1755 = vadd.f32 %v1367, %v1689
      %v1756 = vadd.f32 %v1368, %v1694
      %v1757 = vadd.f32 %v1369, %v1699
      %v1758 = vadd.f32 %v1370, %v1704
      %v1759 = vadd.f32 %v1371, %v1709
      %v1760 = vadd.f32 %v1372, %v1714
      %v1761 = vadd.f32 %v1373, %v1719
      %v1762 = vadd.f32 %v1374, %v1724
      %v1763 = vadd.f32 %v1375, %v1729
      %v1764 = vld [vmem:[%s1376 + $0x1] sm:$0xff]
      %v1765 = vld [vmem:[%s1376 + $0x9] sm:$0xff]
      %v1766 = vld [vmem:[%s1376 + $0x19] sm:$0xff]
      %v1767 = vld [vmem:[%s1376 + $0x21] sm:$0xff]
      %v1768 = vld [vmem:[%s1376 + $0x31] sm:$0xff]
      %v1769 = vld [vmem:[%s1376 + $0x39] sm:$0xff]
      %v1770 = vld [vmem:[%s1376 + $0x49] sm:$0xff]
      %v1771 = vld [vmem:[%s1376 + $0x51] sm:$0xff]
      %v1772 = vld [vmem:[%s1376 + $0x61] sm:$0xff]
      %v1773 = vld [vmem:[%s1376 + $0x69] sm:$0xff]
      %v1774 = vld [vmem:[%s1376 + $0x79] sm:$0xff]
      %v1775 = vld [vmem:[%s1376 + $0x81] sm:$0xff]
      %v1776 = vld [vmem:[%s1376 + $0x91] sm:$0xff]
      %v1777 = vld [vmem:[%s1376 + $0x99] sm:$0xff]
      %v1778 = vld [vmem:[%s1376 + $0xa9] sm:$0xff]
      %v1779 = vld [vmem:[%s1376 + $0xb1] sm:$0xff]
      %v1780 = vld [vmem:[%s1376 + $0xc1] sm:$0xff]
      %v1781 = vld [vmem:[%s1376 + $0xc9] sm:$0xff]
      %v1782 = vld [vmem:[%s1376 + $0xd9] sm:$0xff]
      %v1783 = vld [vmem:[%s1376 + $0xe1] sm:$0xff]
      %v1784 = vld [vmem:[%s1376 + $0xf1] sm:$0xff]
      %v1785 = vld [vmem:[%s1376 + $0xf9] sm:$0xff]
      %v1786 = vld [vmem:[%s1376 + $0x109] sm:$0xff]
      %v1787 = vld [vmem:[%s1376 + $0x111] sm:$0xff]
      %v1788 = vld [vmem:[%s1376 + $0x121] sm:$0xff]
      %v1789 = vld [vmem:[%s1376 + $0x129] sm:$0xff]
      %v1790 = vld [vmem:[%s1376 + $0x139] sm:$0xff]
      %v1791 = vld [vmem:[%s1376 + $0x141] sm:$0xff]
      %v1792 = vld [vmem:[%s1376 + $0x151] sm:$0xff]
      %v1793 = vld [vmem:[%s1376 + $0x159] sm:$0xff]
      %v1794 = vld [vmem:[%s1376 + $0x169] sm:$0xff]
      %v1795 = vld [vmem:[%s1376 + $0x171] sm:$0xff]
      %s1796 = scalar_lea.vmem %s1, 32
      %v1797 = vld [vmem:[%s1796] sm:$0xff]
      %v1799 = vsel %vm346, %v1764, 0
      %v1802 = vsel %vm346, %v1765, 0
      %v1805 = vsel %vm346, %v1766, 0
      %v1808 = vsel %vm346, %v1767, 0
      %v1811 = vsel %vm346, %v1768, 0
      %v1814 = vsel %vm346, %v1769, 0
      %v1817 = vsel %vm346, %v1770, 0
      %v1820 = vsel %vm346, %v1771, 0
      %v1823 = vsel %vm346, %v1772, 0
      %v1826 = vsel %vm346, %v1773, 0
      %v1829 = vsel %vm346, %v1774, 0
      %v1832 = vsel %vm346, %v1775, 0
      %v1835 = vsel %vm346, %v1776, 0
      %v1838 = vsel %vm346, %v1777, 0
      %v1841 = vsel %vm346, %v1778, 0
      %v1844 = vsel %vm346, %v1779, 0
      %v1847 = vsel %vm346, %v1780, 0
      %v1850 = vsel %vm346, %v1781, 0
      %v1853 = vsel %vm346, %v1782, 0
      %v1856 = vsel %vm346, %v1783, 0
      %v1859 = vsel %vm346, %v1784, 0
      %v1862 = vsel %vm346, %v1785, 0
      %v1865 = vsel %vm346, %v1786, 0
      %v1868 = vsel %vm346, %v1787, 0
      %v1871 = vsel %vm346, %v1788, 0
      %v1874 = vsel %vm346, %v1789, 0
      %v1877 = vsel %vm346, %v1790, 0
      %v1880 = vsel %vm346, %v1791, 0
      %v1883 = vsel %vm346, %v1792, 0
      %v1886 = vsel %vm346, %v1793, 0
      %v1889 = vsel %vm346, %v1794, 0
      %v1892 = vsel %vm346, %v1795, 0
      %1894 = vmatprep.subr.mxu0 0.0
      %1895 = vmatpush1.msra.mxu0 %v1797
      %1896 = vmatprep.subr.mxu0 0.0
      %1897 = vmatpush1.msra.mxu0 0.0
      %1898 = vmatprep.subr.mxu0 0.0
      %1899 = vmatpush1.msra.mxu0 0.0
      %1900 = vmatprep.subr.mxu0 0.0
      %1901 = vmatpush1.msra.mxu0 0.0
      %1902 = vmatprep.subr.mxu0 0.0
      %1903 = vmatpush1.msra.mxu0 0.0
      %1904 = vmatprep.subr.mxu0 0.0
      %1905 = vmatpush1.msra.mxu0 0.0
      %1906 = vmatprep.subr.mxu0 0.0
      %1907 = vmatpush1.msra.mxu0 0.0
      %1908 = vmatprep.subr.mxu0 0.0
      %1909 = vmatpush1.msra.mxu0 0.0
      %1910 = vmatprep.subr.mxu0 0.0
      %1911 = vmatpush1.msra.mxu0 0.0
      %1912 = vmatprep.subr.mxu0 0.0
      %1913 = vmatpush1.msra.mxu0 0.0
      %1914 = vmatprep.subr.mxu0 0.0
      %1915 = vmatpush1.msra.mxu0 0.0
      %1916 = vmatprep.subr.mxu0 0.0
      %1917 = vmatpush1.msra.mxu0 0.0
      %1918 = vmatprep.subr.mxu0 0.0
      %1919 = vmatpush1.msra.mxu0 0.0
      %1920 = vmatprep.subr.mxu0 0.0
      %1921 = vmatpush1.msra.mxu0 0.0
      %1922 = vmatprep.subr.mxu0 0.0
      %1923 = vmatpush1.msra.mxu0 0.0
      %1924 = vmatprep.subr.mxu0 0.0
      %1925 = vmatpush1.msra.mxu0 0.0
      %1926 = vmatprep.subr.mxu0 0.0
      %1927 = vmatpush1.msra.mxu0 0.0
      %1928 = vmatprep.subr.mxu0 0.0
      %1929 = vmatpush1.msra.mxu0 0.0
      %1930 = vmatprep.subr.mxu0 0.0
      %1931 = vmatpush1.msra.mxu0 0.0
      %1932 = vmatprep.subr.mxu0 0.0
      %1933 = vmatpush1.msra.mxu0 0.0
      %1934 = vmatprep.subr.mxu0 0.0
      %1935 = vmatpush1.msra.mxu0 0.0
      %1936 = vmatprep.subr.mxu0 0.0
      %1937 = vmatpush1.msra.mxu0 0.0
      %1938 = vmatprep.subr.mxu0 0.0
      %1939 = vmatpush1.msra.mxu0 0.0
      %1940 = vmatprep.subr.mxu0 0.0
      %1941 = vmatpush1.msra.mxu0 0.0
      %1942 = vmatprep.subr.mxu0 0.0
      %1943 = vmatpush1.msra.mxu0 0.0
      %1944 = vmatprep.subr.mxu0 0.0
      %1945 = vmatpush1.msra.mxu0 0.0
      %1946 = vmatprep.subr.mxu0 0.0
      %1947 = vmatpush1.msra.mxu0 0.0
      %1948 = vmatprep.subr.mxu0 0.0
      %1949 = vmatpush1.msra.mxu0 0.0
      %1950 = vmatprep.subr.mxu0 0.0
      %1951 = vmatpush1.msra.mxu0 0.0
      %1952 = vmatprep.subr.mxu0 0.0
      %1953 = vmatpush1.msra.mxu0 0.0
      %1954 = vmatprep.subr.mxu0 0.0
      %1955 = vmatpush1.msra.mxu0 0.0
      %1956 = vmatprep.subr.mxu0 0.0
      %1957 = vmatpush1.msra.mxu0 0.0
      %1958 = vmatprep.mubr.f32.mxu0 0.0
      %1959 = vmatmul.mubr.f32.gmra.mrb[0].mxu0 %v1799
      %v1960 = vpop.f32.mrb[0].mxu0
      %v1961 = vadd.f32 0.0, %v1960
      %v1962 = vpop.f32.mrb[0].mxu0
      %1963 = vmatprep.mubr.f32.mxu0 0.0
      %1964 = vmatmul.mubr.f32.gmra.mrb[0].mxu0 %v1802
      %v1965 = vpop.f32.mrb[0].mxu0
      %v1966 = vadd.f32 0.0, %v1965
      %v1967 = vpop.f32.mrb[0].mxu0
      %1968 = vmatprep.mubr.f32.mxu0 0.0
      %1969 = vmatmul.mubr.f32.gmra.mrb[0].mxu0 %v1805
      %v1970 = vpop.f32.mrb[0].mxu0
      %v1971 = vadd.f32 0.0, %v1970
      %v1972 = vpop.f32.mrb[0].mxu0
      %1973 = vmatprep.mubr.f32.mxu0 0.0
      %1974 = vmatmul.mubr.f32.gmra.mrb[0].mxu0 %v1808
      %v1975 = vpop.f32.mrb[0].mxu0
      %v1976 = vadd.f32 0.0, %v1975
      %v1977 = vpop.f32.mrb[0].mxu0
      %1978 = vmatprep.mubr.f32.mxu0 0.0
      %1979 = vmatmul.mubr.f32.gmra.mrb[0].mxu0 %v1811
      %v1980 = vpop.f32.mrb[0].mxu0
      %v1981 = vadd.f32 0.0, %v1980
      %v1982 = vpop.f32.mrb[0].mxu0
      %1983 = vmatprep.mubr.f32.mxu0 0.0
      %1984 = vmatmul.mubr.f32.gmra.mrb[0].mxu0 %v1814
      %v1985 = vpop.f32.mrb[0].mxu0
      %v1986 = vadd.f32 0.0, %v1985
      %v1987 = vpop.f32.mrb[0].mxu0
      %1988 = vmatprep.mubr.f32.mxu0 0.0
      %1989 = vmatmul.mubr.f32.gmra.mrb[0].mxu0 %v1817
      %v1990 = vpop.f32.mrb[0].mxu0
      %v1991 = vadd.f32 0.0, %v1990
      %v1992 = vpop.f32.mrb[0].mxu0
      %1993 = vmatprep.mubr.f32.mxu0 0.0
      %1994 = vmatmul.mubr.f32.gmra.mrb[0].mxu0 %v1820
      %v1995 = vpop.f32.mrb[0].mxu0
      %v1996 = vadd.f32 0.0, %v1995
      %v1997 = vpop.f32.mrb[0].mxu0
      %1998 = vmatprep.mubr.f32.mxu0 0.0
      %1999 = vmatmul.mubr.f32.gmra.mrb[0].mxu0 %v1823
      %v2000 = vpop.f32.mrb[0].mxu0
      %v2001 = vadd.f32 0.0, %v2000
      %v2002 = vpop.f32.mrb[0].mxu0
      %2003 = vmatprep.mubr.f32.mxu0 0.0
      %2004 = vmatmul.mubr.f32.gmra.mrb[0].mxu0 %v1826
      %v2005 = vpop.f32.mrb[0].mxu0
      %v2006 = vadd.f32 0.0, %v2005
      %v2007 = vpop.f32.mrb[0].mxu0
      %2008 = vmatprep.mubr.f32.mxu0 0.0
      %2009 = vmatmul.mubr.f32.gmra.mrb[0].mxu0 %v1829
      %v2010 = vpop.f32.mrb[0].mxu0
      %v2011 = vadd.f32 0.0, %v2010
      %v2012 = vpop.f32.mrb[0].mxu0
      %2013 = vmatprep.mubr.f32.mxu0 0.0
      %2014 = vmatmul.mubr.f32.gmra.mrb[0].mxu0 %v1832
      %v2015 = vpop.f32.mrb[0].mxu0
      %v2016 = vadd.f32 0.0, %v2015
      %v2017 = vpop.f32.mrb[0].mxu0
      %2018 = vmatprep.mubr.f32.mxu0 0.0
      %2019 = vmatmul.mubr.f32.gmra.mrb[0].mxu0 %v1835
      %v2020 = vpop.f32.mrb[0].mxu0
      %v2021 = vadd.f32 0.0, %v2020
      %v2022 = vpop.f32.mrb[0].mxu0
      %2023 = vmatprep.mubr.f32.mxu0 0.0
      %2024 = vmatmul.mubr.f32.gmra.mrb[0].mxu0 %v1838
      %v2025 = vpop.f32.mrb[0].mxu0
      %v2026 = vadd.f32 0.0, %v2025
      %v2027 = vpop.f32.mrb[0].mxu0
      %2028 = vmatprep.mubr.f32.mxu0 0.0
      %2029 = vmatmul.mubr.f32.gmra.mrb[0].mxu0 %v1841
      %v2030 = vpop.f32.mrb[0].mxu0
      %v2031 = vadd.f32 0.0, %v2030
      %v2032 = vpop.f32.mrb[0].mxu0
      %2033 = vmatprep.mubr.f32.mxu0 0.0
      %2034 = vmatmul.mubr.f32.gmra.mrb[0].mxu0 %v1844
      %v2035 = vpop.f32.mrb[0].mxu0
      %v2036 = vadd.f32 0.0, %v2035
      %v2037 = vpop.f32.mrb[0].mxu0
      %2038 = vmatprep.mubr.f32.mxu0 0.0
      %2039 = vmatmul.mubr.f32.gmra.mrb[0].mxu0 %v1847
      %v2040 = vpop.f32.mrb[0].mxu0
      %v2041 = vadd.f32 0.0, %v2040
      %v2042 = vpop.f32.mrb[0].mxu0
      %2043 = vmatprep.mubr.f32.mxu0 0.0
      %2044 = vmatmul.mubr.f32.gmra.mrb[0].mxu0 %v1850
      %v2045 = vpop.f32.mrb[0].mxu0
      %v2046 = vadd.f32 0.0, %v2045
      %v2047 = vpop.f32.mrb[0].mxu0
      %2048 = vmatprep.mubr.f32.mxu0 0.0
      %2049 = vmatmul.mubr.f32.gmra.mrb[0].mxu0 %v1853
      %v2050 = vpop.f32.mrb[0].mxu0
      %v2051 = vadd.f32 0.0, %v2050
      %v2052 = vpop.f32.mrb[0].mxu0
      %2053 = vmatprep.mubr.f32.mxu0 0.0
      %2054 = vmatmul.mubr.f32.gmra.mrb[0].mxu0 %v1856
      %v2055 = vpop.f32.mrb[0].mxu0
      %v2056 = vadd.f32 0.0, %v2055
      %v2057 = vpop.f32.mrb[0].mxu0
      %2058 = vmatprep.mubr.f32.mxu0 0.0
      %2059 = vmatmul.mubr.f32.gmra.mrb[0].mxu0 %v1859
      %v2060 = vpop.f32.mrb[0].mxu0
      %v2061 = vadd.f32 0.0, %v2060
      %v2062 = vpop.f32.mrb[0].mxu0
      %2063 = vmatprep.mubr.f32.mxu0 0.0
      %2064 = vmatmul.mubr.f32.gmra.mrb[0].mxu0 %v1862
      %v2065 = vpop.f32.mrb[0].mxu0
      %v2066 = vadd.f32 0.0, %v2065
      %v2067 = vpop.f32.mrb[0].mxu0
      %2068 = vmatprep.mubr.f32.mxu0 0.0
      %2069 = vmatmul.mubr.f32.gmra.mrb[0].mxu0 %v1865
      %v2070 = vpop.f32.mrb[0].mxu0
      %v2071 = vadd.f32 0.0, %v2070
      %v2072 = vpop.f32.mrb[0].mxu0
      %2073 = vmatprep.mubr.f32.mxu0 0.0
      %2074 = vmatmul.mubr.f32.gmra.mrb[0].mxu0 %v1868
      %v2075 = vpop.f32.mrb[0].mxu0
      %v2076 = vadd.f32 0.0, %v2075
      %v2077 = vpop.f32.mrb[0].mxu0
      %2078 = vmatprep.mubr.f32.mxu0 0.0
      %2079 = vmatmul.mubr.f32.gmra.mrb[0].mxu0 %v1871
      %v2080 = vpop.f32.mrb[0].mxu0
      %v2081 = vadd.f32 0.0, %v2080
      %v2082 = vpop.f32.mrb[0].mxu0
      %2083 = vmatprep.mubr.f32.mxu0 0.0
      %2084 = vmatmul.mubr.f32.gmra.mrb[0].mxu0 %v1874
      %v2085 = vpop.f32.mrb[0].mxu0
      %v2086 = vadd.f32 0.0, %v2085
      %v2087 = vpop.f32.mrb[0].mxu0
      %2088 = vmatprep.mubr.f32.mxu0 0.0
      %2089 = vmatmul.mubr.f32.gmra.mrb[0].mxu0 %v1877
      %v2090 = vpop.f32.mrb[0].mxu0
      %v2091 = vadd.f32 0.0, %v2090
      %v2092 = vpop.f32.mrb[0].mxu0
      %2093 = vmatprep.mubr.f32.mxu0 0.0
      %2094 = vmatmul.mubr.f32.gmra.mrb[0].mxu0 %v1880
      %v2095 = vpop.f32.mrb[0].mxu0
      %v2096 = vadd.f32 0.0, %v2095
      %v2097 = vpop.f32.mrb[0].mxu0
      %2098 = vmatprep.mubr.f32.mxu0 0.0
      %2099 = vmatmul.mubr.f32.gmra.mrb[0].mxu0 %v1883
      %v2100 = vpop.f32.mrb[0].mxu0
      %v2101 = vadd.f32 0.0, %v2100
      %v2102 = vpop.f32.mrb[0].mxu0
      %2103 = vmatprep.mubr.f32.mxu0 0.0
      %2104 = vmatmul.mubr.f32.gmra.mrb[0].mxu0 %v1886
      %v2105 = vpop.f32.mrb[0].mxu0
      %v2106 = vadd.f32 0.0, %v2105
      %v2107 = vpop.f32.mrb[0].mxu0
      %2108 = vmatprep.mubr.f32.mxu0 0.0
      %2109 = vmatmul.mubr.f32.gmra.mrb[0].mxu0 %v1889
      %v2110 = vpop.f32.mrb[0].mxu0
      %v2111 = vadd.f32 0.0, %v2110
      %v2112 = vpop.f32.mrb[0].mxu0
      %2113 = vmatprep.mubr.f32.mxu0 0.0
      %2114 = vmatmul.mubr.f32.gmra.mrb[0].mxu0 %v1892
      %v2115 = vpop.f32.mrb[0].mxu0
      %v2116 = vadd.f32 0.0, %v2115
      %v2117 = vpop.f32.mrb[0].mxu0
      %2118 = vdwg.mxu0
      %v2119 = vadd.f32 %v1732, %v1961
      %v2120 = vadd.f32 %v1733, %v1966
      %v2121 = vadd.f32 %v1734, %v1971
      %v2122 = vadd.f32 %v1735, %v1976
      %v2123 = vadd.f32 %v1736, %v1981
      %v2124 = vadd.f32 %v1737, %v1986
      %v2125 = vadd.f32 %v1738, %v1991
      %v2126 = vadd.f32 %v1739, %v1996
      %v2127 = vadd.f32 %v1740, %v2001
      %v2128 = vadd.f32 %v1741, %v2006
      %v2129 = vadd.f32 %v1742, %v2011
      %v2130 = vadd.f32 %v1743, %v2016
      %v2131 = vadd.f32 %v1744, %v2021
      %v2132 = vadd.f32 %v1745, %v2026
      %v2133 = vadd.f32 %v1746, %v2031
      %v2134 = vadd.f32 %v1747, %v2036
      %v2135 = vadd.f32 %v1748, %v2041
      %v2136 = vadd.f32 %v1749, %v2046
      %v2137 = vadd.f32 %v1750, %v2051
      %v2138 = vadd.f32 %v1751, %v2056
      %v2139 = vadd.f32 %v1752, %v2061
      %v2140 = vadd.f32 %v1753, %v2066
      %v2141 = vadd.f32 %v1754, %v2071
      %v2142 = vadd.f32 %v1755, %v2076
      %v2143 = vadd.f32 %v1756, %v2081
      %v2144 = vadd.f32 %v1757, %v2086
      %v2145 = vadd.f32 %v1758, %v2091
      %v2146 = vadd.f32 %v1759, %v2096
      %v2147 = vadd.f32 %v1760, %v2101
      %v2148 = vadd.f32 %v1761, %v2106
      %v2149 = vadd.f32 %v1762, %v2111
      %v2150 = vadd.f32 %v1763, %v2116
      %v2151 = vld [vmem:[%s1376 + $0x2] sm:$0xff]
      %v2152 = vld [vmem:[%s1376 + $0xa] sm:$0xff]
      %v2153 = vld [vmem:[%s1376 + $0x1a] sm:$0xff]
      %v2154 = vld [vmem:[%s1376 + $0x22] sm:$0xff]
      %v2155 = vld [vmem:[%s1376 + $0x32] sm:$0xff]
      %v2156 = vld [vmem:[%s1376 + $0x3a] sm:$0xff]
      %v2157 = vld [vmem:[%s1376 + $0x4a] sm:$0xff]
      %v2158 = vld [vmem:[%s1376 + $0x52] sm:$0xff]
      %v2159 = vld [vmem:[%s1376 + $0x62] sm:$0xff]
      %v2160 = vld [vmem:[%s1376 + $0x6a] sm:$0xff]
      %v2161 = vld [vmem:[%s1376 + $0x7a] sm:$0xff]
      %v2162 = vld [vmem:[%s1376 + $0x82] sm:$0xff]
      %v2163 = vld [vmem:[%s1376 + $0x92] sm:$0xff]
      %v2164 = vld [vmem:[%s1376 + $0x9a] sm:$0xff]
      %v2165 = vld [vmem:[%s1376 + $0xaa] sm:$0xff]
      %v2166 = vld [vmem:[%s1376 + $0xb2] sm:$0xff]
      %v2167 = vld [vmem:[%s1376 + $0xc2] sm:$0xff]
      %v2168 = vld [vmem:[%s1376 + $0xca] sm:$0xff]
      %v2169 = vld [vmem:[%s1376 + $0xda] sm:$0xff]
      %v2170 = vld [vmem:[%s1376 + $0xe2] sm:$0xff]
      %v2171 = vld [vmem:[%s1376 + $0xf2] sm:$0xff]
      %v2172 = vld [vmem:[%s1376 + $0xfa] sm:$0xff]
      %v2173 = vld [vmem:[%s1376 + $0x10a] sm:$0xff]
      %v2174 = vld [vmem:[%s1376 + $0x112] sm:$0xff]
      %v2175 = vld [vmem:[%s1376 + $0x122] sm:$0xff]
      %v2176 = vld [vmem:[%s1376 + $0x12a] sm:$0xff]
      %v2177 = vld [vmem:[%s1376 + $0x13a] sm:$0xff]
      %v2178 = vld [vmem:[%s1376 + $0x142] sm:$0xff]
      %v2179 = vld [vmem:[%s1376 + $0x152] sm:$0xff]
      %v2180 = vld [vmem:[%s1376 + $0x15a] sm:$0xff]
      %v2181 = vld [vmem:[%s1376 + $0x16a] sm:$0xff]
      %v2182 = vld [vmem:[%s1376 + $0x172] sm:$0xff]
      %s2183 = scalar_lea.vmem %s1, 40
      %v2184 = vld [vmem:[%s2183] sm:$0xff]
      %v2186 = vsel %vm346, %v2151, 0
      %v2189 = vsel %vm346, %v2152, 0
      %v2192 = vsel %vm346, %v2153, 0
      %v2195 = vsel %vm346, %v2154, 0
      %v2198 = vsel %vm346, %v2155, 0
      %v2201 = vsel %vm346, %v2156, 0
      %v2204 = vsel %vm346, %v2157, 0
      %v2207 = vsel %vm346, %v2158, 0
      %v2210 = vsel %vm346, %v2159, 0
      %v2213 = vsel %vm346, %v2160, 0
      %v2216 = vsel %vm346, %v2161, 0
      %v2219 = vsel %vm346, %v2162, 0
      %v2222 = vsel %vm346, %v2163, 0
      %v2225 = vsel %vm346, %v2164, 0
      %v2228 = vsel %vm346, %v2165, 0
      %v2231 = vsel %vm346, %v2166, 0
      %v2234 = vsel %vm346, %v2167, 0
      %v2237 = vsel %vm346, %v2168, 0
      %v2240 = vsel %vm346, %v2169, 0
      %v2243 = vsel %vm346, %v2170, 0
      %v2246 = vsel %vm346, %v2171, 0
      %v2249 = vsel %vm346, %v2172, 0
      %v2252 = vsel %vm346, %v2173, 0
      %v2255 = vsel %vm346, %v2174, 0
      %v2258 = vsel %vm346, %v2175, 0
      %v2261 = vsel %vm346, %v2176, 0
      %v2264 = vsel %vm346, %v2177, 0
      %v2267 = vsel %vm346, %v2178, 0
      %v2270 = vsel %vm346, %v2179, 0
      %v2273 = vsel %vm346, %v2180, 0
      %v2276 = vsel %vm346, %v2181, 0
      %v2279 = vsel %vm346, %v2182, 0
      %2281 = vmatprep.subr.mxu0 0.0
      %2282 = vmatpush1.msra.mxu0 %v2184
      %2283 = vmatprep.subr.mxu0 0.0
      %2284 = vmatpush1.msra.mxu0 0.0
      %2285 = vmatprep.subr.mxu0 0.0
      %2286 = vmatpush1.msra.mxu0 0.0
      %2287 = vmatprep.subr.mxu0 0.0
      %2288 = vmatpush1.msra.mxu0 0.0
      %2289 = vmatprep.subr.mxu0 0.0
      %2290 = vmatpush1.msra.mxu0 0.0
      %2291 = vmatprep.subr.mxu0 0.0
      %2292 = vmatpush1.msra.mxu0 0.0
      %2293 = vmatprep.subr.mxu0 0.0
      %2294 = vmatpush1.msra.mxu0 0.0
      %2295 = vmatprep.subr.mxu0 0.0
      %2296 = vmatpush1.msra.mxu0 0.0
      %2297 = vmatprep.subr.mxu0 0.0
      %2298 = vmatpush1.msra.mxu0 0.0
      %2299 = vmatprep.subr.mxu0 0.0
      %2300 = vmatpush1.msra.mxu0 0.0
      %2301 = vmatprep.subr.mxu0 0.0
      %2302 = vmatpush1.msra.mxu0 0.0
      %2303 = vmatprep.subr.mxu0 0.0
      %2304 = vmatpush1.msra.mxu0 0.0
      %2305 = vmatprep.subr.mxu0 0.0
      %2306 = vmatpush1.msra.mxu0 0.0
      %2307 = vmatprep.subr.mxu0 0.0
      %2308 = vmatpush1.msra.mxu0 0.0
      %2309 = vmatprep.subr.mxu0 0.0
      %2310 = vmatpush1.msra.mxu0 0.0
      %2311 = vmatprep.subr.mxu0 0.0
      %2312 = vmatpush1.msra.mxu0 0.0
      %2313 = vmatprep.subr.mxu0 0.0
      %2314 = vmatpush1.msra.mxu0 0.0
      %2315 = vmatprep.subr.mxu0 0.0
      %2316 = vmatpush1.msra.mxu0 0.0
      %2317 = vmatprep.subr.mxu0 0.0
      %2318 = vmatpush1.msra.mxu0 0.0
      %2319 = vmatprep.subr.mxu0 0.0
      %2320 = vmatpush1.msra.mxu0 0.0
      %2321 = vmatprep.subr.mxu0 0.0
      %2322 = vmatpush1.msra.mxu0 0.0
      %2323 = vmatprep.subr.mxu0 0.0
      %2324 = vmatpush1.msra.mxu0 0.0
      %2325 = vmatprep.subr.mxu0 0.0
      %2326 = vmatpush1.msra.mxu0 0.0
      %2327 = vmatprep.subr.mxu0 0.0
      %2328 = vmatpush1.msra.mxu0 0.0
      %2329 = vmatprep.subr.mxu0 0.0
      %2330 = vmatpush1.msra.mxu0 0.0
      %2331 = vmatprep.subr.mxu0 0.0
      %2332 = vmatpush1.msra.mxu0 0.0
      %2333 = vmatprep.subr.mxu0 0.0
      %2334 = vmatpush1.msra.mxu0 0.0
      %2335 = vmatprep.subr.mxu0 0.0
      %2336 = vmatpush1.msra.mxu0 0.0
      %2337 = vmatprep.subr.mxu0 0.0
      %2338 = vmatpush1.msra.mxu0 0.0
      %2339 = vmatprep.subr.mxu0 0.0
      %2340 = vmatpush1.msra.mxu0 0.0
      %2341 = vmatprep.subr.mxu0 0.0
      %2342 = vmatpush1.msra.mxu0 0.0
      %2343 = vmatprep.subr.mxu0 0.0
      %2344 = vmatpush1.msra.mxu0 0.0
      %2345 = vmatprep.mubr.f32.mxu0 0.0
      %2346 = vmatmul.mubr.f32.gmra.mrb[0].mxu0 %v2186
      %v2347 = vpop.f32.mrb[0].mxu0
      %v2348 = vadd.f32 0.0, %v2347
      %v2349 = vpop.f32.mrb[0].mxu0
      %2350 = vmatprep.mubr.f32.mxu0 0.0
      %2351 = vmatmul.mubr.f32.gmra.mrb[0].mxu0 %v2189
      %v2352 = vpop.f32.mrb[0].mxu0
      %v2353 = vadd.f32 0.0, %v2352
      %v2354 = vpop.f32.mrb[0].mxu0
      %2355 = vmatprep.mubr.f32.mxu0 0.0
      %2356 = vmatmul.mubr.f32.gmra.mrb[0].mxu0 %v2192
      %v2357 = vpop.f32.mrb[0].mxu0
      %v2358 = vadd.f32 0.0, %v2357
      %v2359 = vpop.f32.mrb[0].mxu0
      %2360 = vmatprep.mubr.f32.mxu0 0.0
      %2361 = vmatmul.mubr.f32.gmra.mrb[0].mxu0 %v2195
      %v2362 = vpop.f32.mrb[0].mxu0
      %v2363 = vadd.f32 0.0, %v2362
      %v2364 = vpop.f32.mrb[0].mxu0
      %2365 = vmatprep.mubr.f32.mxu0 0.0
      %2366 = vmatmul.mubr.f32.gmra.mrb[0].mxu0 %v2198
      %v2367 = vpop.f32.mrb[0].mxu0
      %v2368 = vadd.f32 0.0, %v2367
      %v2369 = vpop.f32.mrb[0].mxu0
      %2370 = vmatprep.mubr.f32.mxu0 0.0
      %2371 = vmatmul.mubr.f32.gmra.mrb[0].mxu0 %v2201
      %v2372 = vpop.f32.mrb[0].mxu0
      %v2373 = vadd.f32 0.0, %v2372
      %v2374 = vpop.f32.mrb[0].mxu0
      %2375 = vmatprep.mubr.f32.mxu0 0.0
      %2376 = vmatmul.mubr.f32.gmra.mrb[0].mxu0 %v2204
      %v2377 = vpop.f32.mrb[0].mxu0
      %v2378 = vadd.f32 0.0, %v2377
      %v2379 = vpop.f32.mrb[0].mxu0
      %2380 = vmatprep.mubr.f32.mxu0 0.0
      %2381 = vmatmul.mubr.f32.gmra.mrb[0].mxu0 %v2207
      %v2382 = vpop.f32.mrb[0].mxu0
      %v2383 = vadd.f32 0.0, %v2382
      %v2384 = vpop.f32.mrb[0].mxu0
      %2385 = vmatprep.mubr.f32.mxu0 0.0
      %2386 = vmatmul.mubr.f32.gmra.mrb[0].mxu0 %v2210
      %v2387 = vpop.f32.mrb[0].mxu0
      %v2388 = vadd.f32 0.0, %v2387
      %v2389 = vpop.f32.mrb[0].mxu0
      %2390 = vmatprep.mubr.f32.mxu0 0.0
      %2391 = vmatmul.mubr.f32.gmra.mrb[0].mxu0 %v2213
      %v2392 = vpop.f32.mrb[0].mxu0
      %v2393 = vadd.f32 0.0, %v2392
      %v2394 = vpop.f32.mrb[0].mxu0
      %2395 = vmatprep.mubr.f32.mxu0 0.0
      %2396 = vmatmul.mubr.f32.gmra.mrb[0].mxu0 %v2216
      %v2397 = vpop.f32.mrb[0].mxu0
      %v2398 = vadd.f32 0.0, %v2397
      %v2399 = vpop.f32.mrb[0].mxu0
      %2400 = vmatprep.mubr.f32.mxu0 0.0
      %2401 = vmatmul.mubr.f32.gmra.mrb[0].mxu0 %v2219
      %v2402 = vpop.f32.mrb[0].mxu0
      %v2403 = vadd.f32 0.0, %v2402
      %v2404 = vpop.f32.mrb[0].mxu0
      %2405 = vmatprep.mubr.f32.mxu0 0.0
      %2406 = vmatmul.mubr.f32.gmra.mrb[0].mxu0 %v2222
      %v2407 = vpop.f32.mrb[0].mxu0
      %v2408 = vadd.f32 0.0, %v2407
      %v2409 = vpop.f32.mrb[0].mxu0
      %2410 = vmatprep.mubr.f32.mxu0 0.0
      %2411 = vmatmul.mubr.f32.gmra.mrb[0].mxu0 %v2225
      %v2412 = vpop.f32.mrb[0].mxu0
      %v2413 = vadd.f32 0.0, %v2412
      %v2414 = vpop.f32.mrb[0].mxu0
      %2415 = vmatprep.mubr.f32.mxu0 0.0
      %2416 = vmatmul.mubr.f32.gmra.mrb[0].mxu0 %v2228
      %v2417 = vpop.f32.mrb[0].mxu0
      %v2418 = vadd.f32 0.0, %v2417
      %v2419 = vpop.f32.mrb[0].mxu0
      %2420 = vmatprep.mubr.f32.mxu0 0.0
      %2421 = vmatmul.mubr.f32.gmra.mrb[0].mxu0 %v2231
      %v2422 = vpop.f32.mrb[0].mxu0
      %v2423 = vadd.f32 0.0, %v2422
      %v2424 = vpop.f32.mrb[0].mxu0
      %2425 = vmatprep.mubr.f32.mxu0 0.0
      %2426 = vmatmul.mubr.f32.gmra.mrb[0].mxu0 %v2234
      %v2427 = vpop.f32.mrb[0].mxu0
      %v2428 = vadd.f32 0.0, %v2427
      %v2429 = vpop.f32.mrb[0].mxu0
      %2430 = vmatprep.mubr.f32.mxu0 0.0
      %2431 = vmatmul.mubr.f32.gmra.mrb[0].mxu0 %v2237
      %v2432 = vpop.f32.mrb[0].mxu0
      %v2433 = vadd.f32 0.0, %v2432
      %v2434 = vpop.f32.mrb[0].mxu0
      %2435 = vmatprep.mubr.f32.mxu0 0.0
      %2436 = vmatmul.mubr.f32.gmra.mrb[0].mxu0 %v2240
      %v2437 = vpop.f32.mrb[0].mxu0
      %v2438 = vadd.f32 0.0, %v2437
      %v2439 = vpop.f32.mrb[0].mxu0
      %2440 = vmatprep.mubr.f32.mxu0 0.0
      %2441 = vmatmul.mubr.f32.gmra.mrb[0].mxu0 %v2243
      %v2442 = vpop.f32.mrb[0].mxu0
      %v2443 = vadd.f32 0.0, %v2442
      %v2444 = vpop.f32.mrb[0].mxu0
      %2445 = vmatprep.mubr.f32.mxu0 0.0
      %2446 = vmatmul.mubr.f32.gmra.mrb[0].mxu0 %v2246
      %v2447 = vpop.f32.mrb[0].mxu0
      %v2448 = vadd.f32 0.0, %v2447
      %v2449 = vpop.f32.mrb[0].mxu0
      %2450 = vmatprep.mubr.f32.mxu0 0.0
      %2451 = vmatmul.mubr.f32.gmra.mrb[0].mxu0 %v2249
      %v2452 = vpop.f32.mrb[0].mxu0
      %v2453 = vadd.f32 0.0, %v2452
      %v2454 = vpop.f32.mrb[0].mxu0
      %2455 = vmatprep.mubr.f32.mxu0 0.0
      %2456 = vmatmul.mubr.f32.gmra.mrb[0].mxu0 %v2252
      %v2457 = vpop.f32.mrb[0].mxu0
      %v2458 = vadd.f32 0.0, %v2457
      %v2459 = vpop.f32.mrb[0].mxu0
      %2460 = vmatprep.mubr.f32.mxu0 0.0
      %2461 = vmatmul.mubr.f32.gmra.mrb[0].mxu0 %v2255
      %v2462 = vpop.f32.mrb[0].mxu0
      %v2463 = vadd.f32 0.0, %v2462
      %v2464 = vpop.f32.mrb[0].mxu0
      %2465 = vmatprep.mubr.f32.mxu0 0.0
      %2466 = vmatmul.mubr.f32.gmra.mrb[0].mxu0 %v2258
      %v2467 = vpop.f32.mrb[0].mxu0
      %v2468 = vadd.f32 0.0, %v2467
      %v2469 = vpop.f32.mrb[0].mxu0
      %2470 = vmatprep.mubr.f32.mxu0 0.0
      %2471 = vmatmul.mubr.f32.gmra.mrb[0].mxu0 %v2261
      %v2472 = vpop.f32.mrb[0].mxu0
      %v2473 = vadd.f32 0.0, %v2472
      %v2474 = vpop.f32.mrb[0].mxu0
      %2475 = vmatprep.mubr.f32.mxu0 0.0
      %2476 = vmatmul.mubr.f32.gmra.mrb[0].mxu0 %v2264
      %v2477 = vpop.f32.mrb[0].mxu0
      %v2478 = vadd.f32 0.0, %v2477
      %v2479 = vpop.f32.mrb[0].mxu0
      %2480 = vmatprep.mubr.f32.mxu0 0.0
      %2481 = vmatmul.mubr.f32.gmra.mrb[0].mxu0 %v2267
      %v2482 = vpop.f32.mrb[0].mxu0
      %v2483 = vadd.f32 0.0, %v2482
      %v2484 = vpop.f32.mrb[0].mxu0
      %2485 = vmatprep.mubr.f32.mxu0 0.0
      %2486 = vmatmul.mubr.f32.gmra.mrb[0].mxu0 %v2270
      %v2487 = vpop.f32.mrb[0].mxu0
      %v2488 = vadd.f32 0.0, %v2487
      %v2489 = vpop.f32.mrb[0].mxu0
      %2490 = vmatprep.mubr.f32.mxu0 0.0
      %2491 = vmatmul.mubr.f32.gmra.mrb[0].mxu0 %v2273
      %v2492 = vpop.f32.mrb[0].mxu0
      %v2493 = vadd.f32 0.0, %v2492
      %v2494 = vpop.f32.mrb[0].mxu0
      %2495 = vmatprep.mubr.f32.mxu0 0.0
      %2496 = vmatmul.mubr.f32.gmra.mrb[0].mxu0 %v2276
      %v2497 = vpop.f32.mrb[0].mxu0
      %v2498 = vadd.f32 0.0, %v2497
      %v2499 = vpop.f32.mrb[0].mxu0
      %2500 = vmatprep.mubr.f32.mxu0 0.0
      %2501 = vmatmul.mubr.f32.gmra.mrb[0].mxu0 %v2279
      %v2502 = vpop.f32.mrb[0].mxu0
      %v2503 = vadd.f32 0.0, %v2502
      %v2504 = vpop.f32.mrb[0].mxu0
      %2505 = vdwg.mxu0
      %v2506 = vadd.f32 %v2119, %v2348
      %v2507 = vadd.f32 %v2120, %v2353
      %v2508 = vadd.f32 %v2121, %v2358
      %v2509 = vadd.f32 %v2122, %v2363
      %v2510 = vadd.f32 %v2123, %v2368
      %v2511 = vadd.f32 %v2124, %v2373
      %v2512 = vadd.f32 %v2125, %v2378
      %v2513 = vadd.f32 %v2126, %v2383
      %v2514 = vadd.f32 %v2127, %v2388
      %v2515 = vadd.f32 %v2128, %v2393
      %v2516 = vadd.f32 %v2129, %v2398
      %v2517 = vadd.f32 %v2130, %v2403
      %v2518 = vadd.f32 %v2131, %v2408
      %v2519 = vadd.f32 %v2132, %v2413
      %v2520 = vadd.f32 %v2133, %v2418
      %v2521 = vadd.f32 %v2134, %v2423
      %v2522 = vadd.f32 %v2135, %v2428
      %v2523 = vadd.f32 %v2136, %v2433
      %v2524 = vadd.f32 %v2137, %v2438
      %v2525 = vadd.f32 %v2138, %v2443
      %v2526 = vadd.f32 %v2139, %v2448
      %v2527 = vadd.f32 %v2140, %v2453
      %v2528 = vadd.f32 %v2141, %v2458
      %v2529 = vadd.f32 %v2142, %v2463
      %v2530 = vadd.f32 %v2143, %v2468
      %v2531 = vadd.f32 %v2144, %v2473
      %v2532 = vadd.f32 %v2145, %v2478
      %v2533 = vadd.f32 %v2146, %v2483
      %v2534 = vadd.f32 %v2147, %v2488
      %v2535 = vadd.f32 %v2148, %v2493
      %v2536 = vadd.f32 %v2149, %v2498
      %v2537 = vadd.f32 %v2150, %v2503
      %s2538 = scalar_lea.vmem %s273, 48
      %v2539 = vld [vmem:[%s2538] sm:$0xff]
      %v2540 = vld [vmem:[%s2538 + $0x8] sm:$0xff]
      %v2541 = vld [vmem:[%s2538 + $0x18] sm:$0xff]
      %v2542 = vld [vmem:[%s2538 + $0x20] sm:$0xff]
      %v2543 = vld [vmem:[%s2538 + $0x30] sm:$0xff]
      %v2544 = vld [vmem:[%s2538 + $0x38] sm:$0xff]
      %v2545 = vld [vmem:[%s2538 + $0x48] sm:$0xff]
      %v2546 = vld [vmem:[%s2538 + $0x50] sm:$0xff]
      %v2547 = vld [vmem:[%s2538 + $0x60] sm:$0xff]
      %v2548 = vld [vmem:[%s2538 + $0x68] sm:$0xff]
      %v2549 = vld [vmem:[%s2538 + $0x78] sm:$0xff]
      %v2550 = vld [vmem:[%s2538 + $0x80] sm:$0xff]
      %v2551 = vld [vmem:[%s2538 + $0x90] sm:$0xff]
      %v2552 = vld [vmem:[%s2538 + $0x98] sm:$0xff]
      %v2553 = vld [vmem:[%s2538 + $0xa8] sm:$0xff]
      %v2554 = vld [vmem:[%s2538 + $0xb0] sm:$0xff]
      %v2555 = vld [vmem:[%s2538 + $0xc0] sm:$0xff]
      %v2556 = vld [vmem:[%s2538 + $0xc8] sm:$0xff]
      %v2557 = vld [vmem:[%s2538 + $0xd8] sm:$0xff]
      %v2558 = vld [vmem:[%s2538 + $0xe0] sm:$0xff]
      %v2559 = vld [vmem:[%s2538 + $0xf0] sm:$0xff]
      %v2560 = vld [vmem:[%s2538 + $0xf8] sm:$0xff]
      %v2561 = vld [vmem:[%s2538 + $0x108] sm:$0xff]
      %v2562 = vld [vmem:[%s2538 + $0x110] sm:$0xff]
      %v2563 = vld [vmem:[%s2538 + $0x120] sm:$0xff]
      %v2564 = vld [vmem:[%s2538 + $0x128] sm:$0xff]
      %v2565 = vld [vmem:[%s2538 + $0x138] sm:$0xff]
      %v2566 = vld [vmem:[%s2538 + $0x140] sm:$0xff]
      %v2567 = vld [vmem:[%s2538 + $0x150] sm:$0xff]
      %v2568 = vld [vmem:[%s2538 + $0x158] sm:$0xff]
      %v2569 = vld [vmem:[%s2538 + $0x168] sm:$0xff]
      %v2570 = vld [vmem:[%s2538 + $0x170] sm:$0xff]
      %s2571 = scalar_lea.vmem %s1, 48
      %v2572 = vld [vmem:[%s2571] sm:$0xff]
      %v2574 = vsel %vm346, %v2539, 0
      %v2577 = vsel %vm346, %v2540, 0
      %v2580 = vsel %vm346, %v2541, 0
      %v2583 = vsel %vm346, %v2542, 0
      %v2586 = vsel %vm346, %v2543, 0
      %v2589 = vsel %vm346, %v2544, 0
      %v2592 = vsel %vm346, %v2545, 0
      %v2595 = vsel %vm346, %v2546, 0
      %v2598 = vsel %vm346, %v2547, 0
      %v2601 = vsel %vm346, %v2548, 0
      %v2604 = vsel %vm346, %v2549, 0
      %v2607 = vsel %vm346, %v2550, 0
      %v2610 = vsel %vm346, %v2551, 0
      %v2613 = vsel %vm346, %v2552, 0
      %v2616 = vsel %vm346, %v2553, 0
      %v2619 = vsel %vm346, %v2554, 0
      %v2622 = vsel %vm346, %v2555, 0
      %v2625 = vsel %vm346, %v2556, 0
      %v2628 = vsel %vm346, %v2557, 0
      %v2631 = vsel %vm346, %v2558, 0
      %v2634 = vsel %vm346, %v2559, 0
      %v2637 = vsel %vm346, %v2560, 0
      %v2640 = vsel %vm346, %v2561, 0
      %v2643 = vsel %vm346, %v2562, 0
      %v2646 = vsel %vm346, %v2563, 0
      %v2649 = vsel %vm346, %v2564, 0
      %v2652 = vsel %vm346, %v2565, 0
      %v2655 = vsel %vm346, %v2566, 0
      %v2658 = vsel %vm346, %v2567, 0
      %v2661 = vsel %vm346, %v2568, 0
      %v2664 = vsel %vm346, %v2569, 0
      %v2667 = vsel %vm346, %v2570, 0
      %2669 = vmatprep.subr.mxu0 0.0
      %2670 = vmatpush1.msra.mxu0 %v2572
      %2671 = vmatprep.subr.mxu0 0.0
      %2672 = vmatpush1.msra.mxu0 0.0
      %2673 = vmatprep.subr.mxu0 0.0
      %2674 = vmatpush1.msra.mxu0 0.0
      %2675 = vmatprep.subr.mxu0 0.0
      %2676 = vmatpush1.msra.mxu0 0.0
      %2677 = vmatprep.subr.mxu0 0.0
      %2678 = vmatpush1.msra.mxu0 0.0
      %2679 = vmatprep.subr.mxu0 0.0
      %2680 = vmatpush1.msra.mxu0 0.0
      %2681 = vmatprep.subr.mxu0 0.0
      %2682 = vmatpush1.msra.mxu0 0.0
      %2683 = vmatprep.subr.mxu0 0.0
      %2684 = vmatpush1.msra.mxu0 0.0
      %2685 = vmatprep.subr.mxu0 0.0
      %2686 = vmatpush1.msra.mxu0 0.0
      %2687 = vmatprep.subr.mxu0 0.0
      %2688 = vmatpush1.msra.mxu0 0.0
      %2689 = vmatprep.subr.mxu0 0.0
      %2690 = vmatpush1.msra.mxu0 0.0
      %2691 = vmatprep.subr.mxu0 0.0
      %2692 = vmatpush1.msra.mxu0 0.0
      %2693 = vmatprep.subr.mxu0 0.0
      %2694 = vmatpush1.msra.mxu0 0.0
      %2695 = vmatprep.subr.mxu0 0.0
      %2696 = vmatpush1.msra.mxu0 0.0
      %2697 = vmatprep.subr.mxu0 0.0
      %2698 = vmatpush1.msra.mxu0 0.0
      %2699 = vmatprep.subr.mxu0 0.0
      %2700 = vmatpush1.msra.mxu0 0.0
      %2701 = vmatprep.subr.mxu0 0.0
      %2702 = vmatpush1.msra.mxu0 0.0
      %2703 = vmatprep.subr.mxu0 0.0
      %2704 = vmatpush1.msra.mxu0 0.0
      %2705 = vmatprep.subr.mxu0 0.0
      %2706 = vmatpush1.msra.mxu0 0.0
      %2707 = vmatprep.subr.mxu0 0.0
      %2708 = vmatpush1.msra.mxu0 0.0
      %2709 = vmatprep.subr.mxu0 0.0
      %2710 = vmatpush1.msra.mxu0 0.0
      %2711 = vmatprep.subr.mxu0 0.0
      %2712 = vmatpush1.msra.mxu0 0.0
      %2713 = vmatprep.subr.mxu0 0.0
      %2714 = vmatpush1.msra.mxu0 0.0
      %2715 = vmatprep.subr.mxu0 0.0
      %2716 = vmatpush1.msra.mxu0 0.0
      %2717 = vmatprep.subr.mxu0 0.0
      %2718 = vmatpush1.msra.mxu0 0.0
      %2719 = vmatprep.subr.mxu0 0.0
      %2720 = vmatpush1.msra.mxu0 0.0
      %2721 = vmatprep.subr.mxu0 0.0
      %2722 = vmatpush1.msra.mxu0 0.0
      %2723 = vmatprep.subr.mxu0 0.0
      %2724 = vmatpush1.msra.mxu0 0.0
      %2725 = vmatprep.subr.mxu0 0.0
      %2726 = vmatpush1.msra.mxu0 0.0
      %2727 = vmatprep.subr.mxu0 0.0
      %2728 = vmatpush1.msra.mxu0 0.0
      %2729 = vmatprep.subr.mxu0 0.0
      %2730 = vmatpush1.msra.mxu0 0.0
      %2731 = vmatprep.subr.mxu0 0.0
      %2732 = vmatpush1.msra.mxu0 0.0
      %2733 = vmatprep.mubr.f32.mxu0 0.0
      %2734 = vmatmul.mubr.f32.gmra.mrb[0].mxu0 %v2574
      %v2735 = vpop.f32.mrb[0].mxu0
      %v2736 = vadd.f32 0.0, %v2735
      %v2737 = vpop.f32.mrb[0].mxu0
      %2738 = vmatprep.mubr.f32.mxu0 0.0
      %2739 = vmatmul.mubr.f32.gmra.mrb[0].mxu0 %v2577
      %v2740 = vpop.f32.mrb[0].mxu0
      %v2741 = vadd.f32 0.0, %v2740
      %v2742 = vpop.f32.mrb[0].mxu0
      %2743 = vmatprep.mubr.f32.mxu0 0.0
      %2744 = vmatmul.mubr.f32.gmra.mrb[0].mxu0 %v2580
      %v2745 = vpop.f32.mrb[0].mxu0
      %v2746 = vadd.f32 0.0, %v2745
      %v2747 = vpop.f32.mrb[0].mxu0
      %2748 = vmatprep.mubr.f32.mxu0 0.0
      %2749 = vmatmul.mubr.f32.gmra.mrb[0].mxu0 %v2583
      %v2750 = vpop.f32.mrb[0].mxu0
      %v2751 = vadd.f32 0.0, %v2750
      %v2752 = vpop.f32.mrb[0].mxu0
      %2753 = vmatprep.mubr.f32.mxu0 0.0
      %2754 = vmatmul.mubr.f32.gmra.mrb[0].mxu0 %v2586
      %v2755 = vpop.f32.mrb[0].mxu0
      %v2756 = vadd.f32 0.0, %v2755
      %v2757 = vpop.f32.mrb[0].mxu0
      %2758 = vmatprep.mubr.f32.mxu0 0.0
      %2759 = vmatmul.mubr.f32.gmra.mrb[0].mxu0 %v2589
      %v2760 = vpop.f32.mrb[0].mxu0
      %v2761 = vadd.f32 0.0, %v2760
      %v2762 = vpop.f32.mrb[0].mxu0
      %2763 = vmatprep.mubr.f32.mxu0 0.0
      %2764 = vmatmul.mubr.f32.gmra.mrb[0].mxu0 %v2592
      %v2765 = vpop.f32.mrb[0].mxu0
      %v2766 = vadd.f32 0.0, %v2765
      %v2767 = vpop.f32.mrb[0].mxu0
      %2768 = vmatprep.mubr.f32.mxu0 0.0
      %2769 = vmatmul.mubr.f32.gmra.mrb[0].mxu0 %v2595
      %v2770 = vpop.f32.mrb[0].mxu0
      %v2771 = vadd.f32 0.0, %v2770
      %v2772 = vpop.f32.mrb[0].mxu0
      %2773 = vmatprep.mubr.f32.mxu0 0.0
      %2774 = vmatmul.mubr.f32.gmra.mrb[0].mxu0 %v2598
      %v2775 = vpop.f32.mrb[0].mxu0
      %v2776 = vadd.f32 0.0, %v2775
      %v2777 = vpop.f32.mrb[0].mxu0
      %2778 = vmatprep.mubr.f32.mxu0 0.0
      %2779 = vmatmul.mubr.f32.gmra.mrb[0].mxu0 %v2601
      %v2780 = vpop.f32.mrb[0].mxu0
      %v2781 = vadd.f32 0.0, %v2780
      %v2782 = vpop.f32.mrb[0].mxu0
      %2783 = vmatprep.mubr.f32.mxu0 0.0
      %2784 = vmatmul.mubr.f32.gmra.mrb[0].mxu0 %v2604
      %v2785 = vpop.f32.mrb[0].mxu0
      %v2786 = vadd.f32 0.0, %v2785
      %v2787 = vpop.f32.mrb[0].mxu0
      %2788 = vmatprep.mubr.f32.mxu0 0.0
      %2789 = vmatmul.mubr.f32.gmra.mrb[0].mxu0 %v2607
      %v2790 = vpop.f32.mrb[0].mxu0
      %v2791 = vadd.f32 0.0, %v2790
      %v2792 = vpop.f32.mrb[0].mxu0
      %2793 = vmatprep.mubr.f32.mxu0 0.0
      %2794 = vmatmul.mubr.f32.gmra.mrb[0].mxu0 %v2610
      %v2795 = vpop.f32.mrb[0].mxu0
      %v2796 = vadd.f32 0.0, %v2795
      %v2797 = vpop.f32.mrb[0].mxu0
      %2798 = vmatprep.mubr.f32.mxu0 0.0
      %2799 = vmatmul.mubr.f32.gmra.mrb[0].mxu0 %v2613
      %v2800 = vpop.f32.mrb[0].mxu0
      %v2801 = vadd.f32 0.0, %v2800
      %v2802 = vpop.f32.mrb[0].mxu0
      %2803 = vmatprep.mubr.f32.mxu0 0.0
      %2804 = vmatmul.mubr.f32.gmra.mrb[0].mxu0 %v2616
      %v2805 = vpop.f32.mrb[0].mxu0
      %v2806 = vadd.f32 0.0, %v2805
      %v2807 = vpop.f32.mrb[0].mxu0
      %2808 = vmatprep.mubr.f32.mxu0 0.0
      %2809 = vmatmul.mubr.f32.gmra.mrb[0].mxu0 %v2619
      %v2810 = vpop.f32.mrb[0].mxu0
      %v2811 = vadd.f32 0.0, %v2810
      %v2812 = vpop.f32.mrb[0].mxu0
      %2813 = vmatprep.mubr.f32.mxu0 0.0
      %2814 = vmatmul.mubr.f32.gmra.mrb[0].mxu0 %v2622
      %v2815 = vpop.f32.mrb[0].mxu0
      %v2816 = vadd.f32 0.0, %v2815
      %v2817 = vpop.f32.mrb[0].mxu0
      %2818 = vmatprep.mubr.f32.mxu0 0.0
      %2819 = vmatmul.mubr.f32.gmra.mrb[0].mxu0 %v2625
      %v2820 = vpop.f32.mrb[0].mxu0
      %v2821 = vadd.f32 0.0, %v2820
      %v2822 = vpop.f32.mrb[0].mxu0
      %2823 = vmatprep.mubr.f32.mxu0 0.0
      %2824 = vmatmul.mubr.f32.gmra.mrb[0].mxu0 %v2628
      %v2825 = vpop.f32.mrb[0].mxu0
      %v2826 = vadd.f32 0.0, %v2825
      %v2827 = vpop.f32.mrb[0].mxu0
      %2828 = vmatprep.mubr.f32.mxu0 0.0
      %2829 = vmatmul.mubr.f32.gmra.mrb[0].mxu0 %v2631
      %v2830 = vpop.f32.mrb[0].mxu0
      %v2831 = vadd.f32 0.0, %v2830
      %v2832 = vpop.f32.mrb[0].mxu0
      %2833 = vmatprep.mubr.f32.mxu0 0.0
      %2834 = vmatmul.mubr.f32.gmra.mrb[0].mxu0 %v2634
      %v2835 = vpop.f32.mrb[0].mxu0
      %v2836 = vadd.f32 0.0, %v2835
      %v2837 = vpop.f32.mrb[0].mxu0
      %2838 = vmatprep.mubr.f32.mxu0 0.0
      %2839 = vmatmul.mubr.f32.gmra.mrb[0].mxu0 %v2637
      %v2840 = vpop.f32.mrb[0].mxu0
      %v2841 = vadd.f32 0.0, %v2840
      %v2842 = vpop.f32.mrb[0].mxu0
      %2843 = vmatprep.mubr.f32.mxu0 0.0
      %2844 = vmatmul.mubr.f32.gmra.mrb[0].mxu0 %v2640
      %v2845 = vpop.f32.mrb[0].mxu0
      %v2846 = vadd.f32 0.0, %v2845
      %v2847 = vpop.f32.mrb[0].mxu0
      %2848 = vmatprep.mubr.f32.mxu0 0.0
      %2849 = vmatmul.mubr.f32.gmra.mrb[0].mxu0 %v2643
      %v2850 = vpop.f32.mrb[0].mxu0
      %v2851 = vadd.f32 0.0, %v2850
      %v2852 = vpop.f32.mrb[0].mxu0
      %2853 = vmatprep.mubr.f32.mxu0 0.0
      %2854 = vmatmul.mubr.f32.gmra.mrb[0].mxu0 %v2646
      %v2855 = vpop.f32.mrb[0].mxu0
      %v2856 = vadd.f32 0.0, %v2855
      %v2857 = vpop.f32.mrb[0].mxu0
      %2858 = vmatprep.mubr.f32.mxu0 0.0
      %2859 = vmatmul.mubr.f32.gmra.mrb[0].mxu0 %v2649
      %v2860 = vpop.f32.mrb[0].mxu0
      %v2861 = vadd.f32 0.0, %v2860
      %v2862 = vpop.f32.mrb[0].mxu0
      %2863 = vmatprep.mubr.f32.mxu0 0.0
      %2864 = vmatmul.mubr.f32.gmra.mrb[0].mxu0 %v2652
      %v2865 = vpop.f32.mrb[0].mxu0
      %v2866 = vadd.f32 0.0, %v2865
      %v2867 = vpop.f32.mrb[0].mxu0
      %2868 = vmatprep.mubr.f32.mxu0 0.0
      %2869 = vmatmul.mubr.f32.gmra.mrb[0].mxu0 %v2655
      %v2870 = vpop.f32.mrb[0].mxu0
      %v2871 = vadd.f32 0.0, %v2870
      %v2872 = vpop.f32.mrb[0].mxu0
      %2873 = vmatprep.mubr.f32.mxu0 0.0
      %2874 = vmatmul.mubr.f32.gmra.mrb[0].mxu0 %v2658
      %v2875 = vpop.f32.mrb[0].mxu0
      %v2876 = vadd.f32 0.0, %v2875
      %v2877 = vpop.f32.mrb[0].mxu0
      %2878 = vmatprep.mubr.f32.mxu0 0.0
      %2879 = vmatmul.mubr.f32.gmra.mrb[0].mxu0 %v2661
      %v2880 = vpop.f32.mrb[0].mxu0
      %v2881 = vadd.f32 0.0, %v2880
      %v2882 = vpop.f32.mrb[0].mxu0
      %2883 = vmatprep.mubr.f32.mxu0 0.0
      %2884 = vmatmul.mubr.f32.gmra.mrb[0].mxu0 %v2664
      %v2885 = vpop.f32.mrb[0].mxu0
      %v2886 = vadd.f32 0.0, %v2885
      %v2887 = vpop.f32.mrb[0].mxu0
      %2888 = vmatprep.mubr.f32.mxu0 0.0
      %2889 = vmatmul.mubr.f32.gmra.mrb[0].mxu0 %v2667
      %v2890 = vpop.f32.mrb[0].mxu0
      %v2891 = vadd.f32 0.0, %v2890
      %v2892 = vpop.f32.mrb[0].mxu0
      %2893 = vdwg.mxu0
      %v2894 = vadd.f32 %v2506, %v2736
      %v2895 = vadd.f32 %v2507, %v2741
      %v2896 = vadd.f32 %v2508, %v2746
      %v2897 = vadd.f32 %v2509, %v2751
      %v2898 = vadd.f32 %v2510, %v2756
      %v2899 = vadd.f32 %v2511, %v2761
      %v2900 = vadd.f32 %v2512, %v2766
      %v2901 = vadd.f32 %v2513, %v2771
      %v2902 = vadd.f32 %v2514, %v2776
      %v2903 = vadd.f32 %v2515, %v2781
      %v2904 = vadd.f32 %v2516, %v2786
      %v2905 = vadd.f32 %v2517, %v2791
      %v2906 = vadd.f32 %v2518, %v2796
      %v2907 = vadd.f32 %v2519, %v2801
      %v2908 = vadd.f32 %v2520, %v2806
      %v2909 = vadd.f32 %v2521, %v2811
      %v2910 = vadd.f32 %v2522, %v2816
      %v2911 = vadd.f32 %v2523, %v2821
      %v2912 = vadd.f32 %v2524, %v2826
      %v2913 = vadd.f32 %v2525, %v2831
      %v2914 = vadd.f32 %v2526, %v2836
      %v2915 = vadd.f32 %v2527, %v2841
      %v2916 = vadd.f32 %v2528, %v2846
      %v2917 = vadd.f32 %v2529, %v2851
      %v2918 = vadd.f32 %v2530, %v2856
      %v2919 = vadd.f32 %v2531, %v2861
      %v2920 = vadd.f32 %v2532, %v2866
      %v2921 = vadd.f32 %v2533, %v2871
      %v2922 = vadd.f32 %v2534, %v2876
      %v2923 = vadd.f32 %v2535, %v2881
      %v2924 = vadd.f32 %v2536, %v2886
      %v2925 = vadd.f32 %v2537, %v2891
      %v2926 = vld [vmem:[%s2538 + $0x1] sm:$0xff]
      %v2927 = vld [vmem:[%s2538 + $0x9] sm:$0xff]
      %v2928 = vld [vmem:[%s2538 + $0x19] sm:$0xff]
      %v2929 = vld [vmem:[%s2538 + $0x21] sm:$0xff]
      %v2930 = vld [vmem:[%s2538 + $0x31] sm:$0xff]
      %v2931 = vld [vmem:[%s2538 + $0x39] sm:$0xff]
      %v2932 = vld [vmem:[%s2538 + $0x49] sm:$0xff]
      %v2933 = vld [vmem:[%s2538 + $0x51] sm:$0xff]
      %v2934 = vld [vmem:[%s2538 + $0x61] sm:$0xff]
      %v2935 = vld [vmem:[%s2538 + $0x69] sm:$0xff]
      %v2936 = vld [vmem:[%s2538 + $0x79] sm:$0xff]
      %v2937 = vld [vmem:[%s2538 + $0x81] sm:$0xff]
      %v2938 = vld [vmem:[%s2538 + $0x91] sm:$0xff]
      %v2939 = vld [vmem:[%s2538 + $0x99] sm:$0xff]
      %v2940 = vld [vmem:[%s2538 + $0xa9] sm:$0xff]
      %v2941 = vld [vmem:[%s2538 + $0xb1] sm:$0xff]
      %v2942 = vld [vmem:[%s2538 + $0xc1] sm:$0xff]
      %v2943 = vld [vmem:[%s2538 + $0xc9] sm:$0xff]
      %v2944 = vld [vmem:[%s2538 + $0xd9] sm:$0xff]
      %v2945 = vld [vmem:[%s2538 + $0xe1] sm:$0xff]
      %v2946 = vld [vmem:[%s2538 + $0xf1] sm:$0xff]
      %v2947 = vld [vmem:[%s2538 + $0xf9] sm:$0xff]
      %v2948 = vld [vmem:[%s2538 + $0x109] sm:$0xff]
      %v2949 = vld [vmem:[%s2538 + $0x111] sm:$0xff]
      %v2950 = vld [vmem:[%s2538 + $0x121] sm:$0xff]
      %v2951 = vld [vmem:[%s2538 + $0x129] sm:$0xff]
      %v2952 = vld [vmem:[%s2538 + $0x139] sm:$0xff]
      %v2953 = vld [vmem:[%s2538 + $0x141] sm:$0xff]
      %v2954 = vld [vmem:[%s2538 + $0x151] sm:$0xff]
      %v2955 = vld [vmem:[%s2538 + $0x159] sm:$0xff]
      %v2956 = vld [vmem:[%s2538 + $0x169] sm:$0xff]
      %v2957 = vld [vmem:[%s2538 + $0x171] sm:$0xff]
      %s2958 = scalar_lea.vmem %s1, 56
      %v2959 = vld [vmem:[%s2958] sm:$0xff]
      %v2961 = vsel %vm346, %v2926, 0
      %v2964 = vsel %vm346, %v2927, 0
      %v2967 = vsel %vm346, %v2928, 0
      %v2970 = vsel %vm346, %v2929, 0
      %v2973 = vsel %vm346, %v2930, 0
      %v2976 = vsel %vm346, %v2931, 0
      %v2979 = vsel %vm346, %v2932, 0
      %v2982 = vsel %vm346, %v2933, 0
      %v2985 = vsel %vm346, %v2934, 0
      %v2988 = vsel %vm346, %v2935, 0
      %v2991 = vsel %vm346, %v2936, 0
      %v2994 = vsel %vm346, %v2937, 0
      %v2997 = vsel %vm346, %v2938, 0
      %v3000 = vsel %vm346, %v2939, 0
      %v3003 = vsel %vm346, %v2940, 0
      %v3006 = vsel %vm346, %v2941, 0
      %v3009 = vsel %vm346, %v2942, 0
      %v3012 = vsel %vm346, %v2943, 0
      %v3015 = vsel %vm346, %v2944, 0
      %v3018 = vsel %vm346, %v2945, 0
      %v3021 = vsel %vm346, %v2946, 0
      %v3024 = vsel %vm346, %v2947, 0
      %v3027 = vsel %vm346, %v2948, 0
      %v3030 = vsel %vm346, %v2949, 0
      %v3033 = vsel %vm346, %v2950, 0
      %v3036 = vsel %vm346, %v2951, 0
      %v3039 = vsel %vm346, %v2952, 0
      %v3042 = vsel %vm346, %v2953, 0
      %v3045 = vsel %vm346, %v2954, 0
      %v3048 = vsel %vm346, %v2955, 0
      %v3051 = vsel %vm346, %v2956, 0
      %v3054 = vsel %vm346, %v2957, 0
      %3056 = vmatprep.subr.mxu0 0.0
      %3057 = vmatpush1.msra.mxu0 %v2959
      %3058 = vmatprep.subr.mxu0 0.0
      %3059 = vmatpush1.msra.mxu0 0.0
      %3060 = vmatprep.subr.mxu0 0.0
      %3061 = vmatpush1.msra.mxu0 0.0
      %3062 = vmatprep.subr.mxu0 0.0
      %3063 = vmatpush1.msra.mxu0 0.0
      %3064 = vmatprep.subr.mxu0 0.0
      %3065 = vmatpush1.msra.mxu0 0.0
      %3066 = vmatprep.subr.mxu0 0.0
      %3067 = vmatpush1.msra.mxu0 0.0
      %3068 = vmatprep.subr.mxu0 0.0
      %3069 = vmatpush1.msra.mxu0 0.0
      %3070 = vmatprep.subr.mxu0 0.0
      %3071 = vmatpush1.msra.mxu0 0.0
      %3072 = vmatprep.subr.mxu0 0.0
      %3073 = vmatpush1.msra.mxu0 0.0
      %3074 = vmatprep.subr.mxu0 0.0
      %3075 = vmatpush1.msra.mxu0 0.0
      %3076 = vmatprep.subr.mxu0 0.0
      %3077 = vmatpush1.msra.mxu0 0.0
      %3078 = vmatprep.subr.mxu0 0.0
      %3079 = vmatpush1.msra.mxu0 0.0
      %3080 = vmatprep.subr.mxu0 0.0
      %3081 = vmatpush1.msra.mxu0 0.0
      %3082 = vmatprep.subr.mxu0 0.0
      %3083 = vmatpush1.msra.mxu0 0.0
      %3084 = vmatprep.subr.mxu0 0.0
      %3085 = vmatpush1.msra.mxu0 0.0
      %3086 = vmatprep.subr.mxu0 0.0
      %3087 = vmatpush1.msra.mxu0 0.0
      %3088 = vmatprep.subr.mxu0 0.0
      %3089 = vmatpush1.msra.mxu0 0.0
      %3090 = vmatprep.subr.mxu0 0.0
      %3091 = vmatpush1.msra.mxu0 0.0
      %3092 = vmatprep.subr.mxu0 0.0
      %3093 = vmatpush1.msra.mxu0 0.0
      %3094 = vmatprep.subr.mxu0 0.0
      %3095 = vmatpush1.msra.mxu0 0.0
      %3096 = vmatprep.subr.mxu0 0.0
      %3097 = vmatpush1.msra.mxu0 0.0
      %3098 = vmatprep.subr.mxu0 0.0
      %3099 = vmatpush1.msra.mxu0 0.0
      %3100 = vmatprep.subr.mxu0 0.0
      %3101 = vmatpush1.msra.mxu0 0.0
      %3102 = vmatprep.subr.mxu0 0.0
      %3103 = vmatpush1.msra.mxu0 0.0
      %3104 = vmatprep.subr.mxu0 0.0
      %3105 = vmatpush1.msra.mxu0 0.0
      %3106 = vmatprep.subr.mxu0 0.0
      %3107 = vmatpush1.msra.mxu0 0.0
      %3108 = vmatprep.subr.mxu0 0.0
      %3109 = vmatpush1.msra.mxu0 0.0
      %3110 = vmatprep.subr.mxu0 0.0
      %3111 = vmatpush1.msra.mxu0 0.0
      %3112 = vmatprep.subr.mxu0 0.0
      %3113 = vmatpush1.msra.mxu0 0.0
      %3114 = vmatprep.subr.mxu0 0.0
      %3115 = vmatpush1.msra.mxu0 0.0
      %3116 = vmatprep.subr.mxu0 0.0
      %3117 = vmatpush1.msra.mxu0 0.0
      %3118 = vmatprep.subr.mxu0 0.0
      %3119 = vmatpush1.msra.mxu0 0.0
      %3120 = vmatprep.mubr.f32.mxu0 0.0
      %3121 = vmatmul.mubr.f32.gmra.mrb[0].mxu0 %v2961
      %v3122 = vpop.f32.mrb[0].mxu0
      %v3123 = vadd.f32 0.0, %v3122
      %v3124 = vpop.f32.mrb[0].mxu0
      %3125 = vmatprep.mubr.f32.mxu0 0.0
      %3126 = vmatmul.mubr.f32.gmra.mrb[0].mxu0 %v2964
      %v3127 = vpop.f32.mrb[0].mxu0
      %v3128 = vadd.f32 0.0, %v3127
      %v3129 = vpop.f32.mrb[0].mxu0
      %3130 = vmatprep.mubr.f32.mxu0 0.0
      %3131 = vmatmul.mubr.f32.gmra.mrb[0].mxu0 %v2967
      %v3132 = vpop.f32.mrb[0].mxu0
      %v3133 = vadd.f32 0.0, %v3132
      %v3134 = vpop.f32.mrb[0].mxu0
      %3135 = vmatprep.mubr.f32.mxu0 0.0
      %3136 = vmatmul.mubr.f32.gmra.mrb[0].mxu0 %v2970
      %v3137 = vpop.f32.mrb[0].mxu0
      %v3138 = vadd.f32 0.0, %v3137
      %v3139 = vpop.f32.mrb[0].mxu0
      %3140 = vmatprep.mubr.f32.mxu0 0.0
      %3141 = vmatmul.mubr.f32.gmra.mrb[0].mxu0 %v2973
      %v3142 = vpop.f32.mrb[0].mxu0
      %v3143 = vadd.f32 0.0, %v3142
      %v3144 = vpop.f32.mrb[0].mxu0
      %3145 = vmatprep.mubr.f32.mxu0 0.0
      %3146 = vmatmul.mubr.f32.gmra.mrb[0].mxu0 %v2976
      %v3147 = vpop.f32.mrb[0].mxu0
      %v3148 = vadd.f32 0.0, %v3147
      %v3149 = vpop.f32.mrb[0].mxu0
      %3150 = vmatprep.mubr.f32.mxu0 0.0
      %3151 = vmatmul.mubr.f32.gmra.mrb[0].mxu0 %v2979
      %v3152 = vpop.f32.mrb[0].mxu0
      %v3153 = vadd.f32 0.0, %v3152
      %v3154 = vpop.f32.mrb[0].mxu0
      %3155 = vmatprep.mubr.f32.mxu0 0.0
      %3156 = vmatmul.mubr.f32.gmra.mrb[0].mxu0 %v2982
      %v3157 = vpop.f32.mrb[0].mxu0
      %v3158 = vadd.f32 0.0, %v3157
      %v3159 = vpop.f32.mrb[0].mxu0
      %3160 = vmatprep.mubr.f32.mxu0 0.0
      %3161 = vmatmul.mubr.f32.gmra.mrb[0].mxu0 %v2985
      %v3162 = vpop.f32.mrb[0].mxu0
      %v3163 = vadd.f32 0.0, %v3162
      %v3164 = vpop.f32.mrb[0].mxu0
      %3165 = vmatprep.mubr.f32.mxu0 0.0
      %3166 = vmatmul.mubr.f32.gmra.mrb[0].mxu0 %v2988
      %v3167 = vpop.f32.mrb[0].mxu0
      %v3168 = vadd.f32 0.0, %v3167
      %v3169 = vpop.f32.mrb[0].mxu0
      %3170 = vmatprep.mubr.f32.mxu0 0.0
      %3171 = vmatmul.mubr.f32.gmra.mrb[0].mxu0 %v2991
      %v3172 = vpop.f32.mrb[0].mxu0
      %v3173 = vadd.f32 0.0, %v3172
      %v3174 = vpop.f32.mrb[0].mxu0
      %3175 = vmatprep.mubr.f32.mxu0 0.0
      %3176 = vmatmul.mubr.f32.gmra.mrb[0].mxu0 %v2994
      %v3177 = vpop.f32.mrb[0].mxu0
      %v3178 = vadd.f32 0.0, %v3177
      %v3179 = vpop.f32.mrb[0].mxu0
      %3180 = vmatprep.mubr.f32.mxu0 0.0
      %3181 = vmatmul.mubr.f32.gmra.mrb[0].mxu0 %v2997
      %v3182 = vpop.f32.mrb[0].mxu0
      %v3183 = vadd.f32 0.0, %v3182
      %v3184 = vpop.f32.mrb[0].mxu0
      %3185 = vmatprep.mubr.f32.mxu0 0.0
      %3186 = vmatmul.mubr.f32.gmra.mrb[0].mxu0 %v3000
      %v3187 = vpop.f32.mrb[0].mxu0
      %v3188 = vadd.f32 0.0, %v3187
      %v3189 = vpop.f32.mrb[0].mxu0
      %3190 = vmatprep.mubr.f32.mxu0 0.0
      %3191 = vmatmul.mubr.f32.gmra.mrb[0].mxu0 %v3003
      %v3192 = vpop.f32.mrb[0].mxu0
      %v3193 = vadd.f32 0.0, %v3192
      %v3194 = vpop.f32.mrb[0].mxu0
      %3195 = vmatprep.mubr.f32.mxu0 0.0
      %3196 = vmatmul.mubr.f32.gmra.mrb[0].mxu0 %v3006
      %v3197 = vpop.f32.mrb[0].mxu0
      %v3198 = vadd.f32 0.0, %v3197
      %v3199 = vpop.f32.mrb[0].mxu0
      %3200 = vmatprep.mubr.f32.mxu0 0.0
      %3201 = vmatmul.mubr.f32.gmra.mrb[0].mxu0 %v3009
      %v3202 = vpop.f32.mrb[0].mxu0
      %v3203 = vadd.f32 0.0, %v3202
      %v3204 = vpop.f32.mrb[0].mxu0
      %3205 = vmatprep.mubr.f32.mxu0 0.0
      %3206 = vmatmul.mubr.f32.gmra.mrb[0].mxu0 %v3012
      %v3207 = vpop.f32.mrb[0].mxu0
      %v3208 = vadd.f32 0.0, %v3207
      %v3209 = vpop.f32.mrb[0].mxu0
      %3210 = vmatprep.mubr.f32.mxu0 0.0
      %3211 = vmatmul.mubr.f32.gmra.mrb[0].mxu0 %v3015
      %v3212 = vpop.f32.mrb[0].mxu0
      %v3213 = vadd.f32 0.0, %v3212
      %v3214 = vpop.f32.mrb[0].mxu0
      %3215 = vmatprep.mubr.f32.mxu0 0.0
      %3216 = vmatmul.mubr.f32.gmra.mrb[0].mxu0 %v3018
      %v3217 = vpop.f32.mrb[0].mxu0
      %v3218 = vadd.f32 0.0, %v3217
      %v3219 = vpop.f32.mrb[0].mxu0
      %3220 = vmatprep.mubr.f32.mxu0 0.0
      %3221 = vmatmul.mubr.f32.gmra.mrb[0].mxu0 %v3021
      %v3222 = vpop.f32.mrb[0].mxu0
      %v3223 = vadd.f32 0.0, %v3222
      %v3224 = vpop.f32.mrb[0].mxu0
      %3225 = vmatprep.mubr.f32.mxu0 0.0
      %3226 = vmatmul.mubr.f32.gmra.mrb[0].mxu0 %v3024
      %v3227 = vpop.f32.mrb[0].mxu0
      %v3228 = vadd.f32 0.0, %v3227
      %v3229 = vpop.f32.mrb[0].mxu0
      %3230 = vmatprep.mubr.f32.mxu0 0.0
      %3231 = vmatmul.mubr.f32.gmra.mrb[0].mxu0 %v3027
      %v3232 = vpop.f32.mrb[0].mxu0
      %v3233 = vadd.f32 0.0, %v3232
      %v3234 = vpop.f32.mrb[0].mxu0
      %3235 = vmatprep.mubr.f32.mxu0 0.0
      %3236 = vmatmul.mubr.f32.gmra.mrb[0].mxu0 %v3030
      %v3237 = vpop.f32.mrb[0].mxu0
      %v3238 = vadd.f32 0.0, %v3237
      %v3239 = vpop.f32.mrb[0].mxu0
      %3240 = vmatprep.mubr.f32.mxu0 0.0
      %3241 = vmatmul.mubr.f32.gmra.mrb[0].mxu0 %v3033
      %v3242 = vpop.f32.mrb[0].mxu0
      %v3243 = vadd.f32 0.0, %v3242
      %v3244 = vpop.f32.mrb[0].mxu0
      %3245 = vmatprep.mubr.f32.mxu0 0.0
      %3246 = vmatmul.mubr.f32.gmra.mrb[0].mxu0 %v3036
      %v3247 = vpop.f32.mrb[0].mxu0
      %v3248 = vadd.f32 0.0, %v3247
      %v3249 = vpop.f32.mrb[0].mxu0
      %3250 = vmatprep.mubr.f32.mxu0 0.0
      %3251 = vmatmul.mubr.f32.gmra.mrb[0].mxu0 %v3039
      %v3252 = vpop.f32.mrb[0].mxu0
      %v3253 = vadd.f32 0.0, %v3252
      %v3254 = vpop.f32.mrb[0].mxu0
      %3255 = vmatprep.mubr.f32.mxu0 0.0
      %3256 = vmatmul.mubr.f32.gmra.mrb[0].mxu0 %v3042
      %v3257 = vpop.f32.mrb[0].mxu0
      %v3258 = vadd.f32 0.0, %v3257
      %v3259 = vpop.f32.mrb[0].mxu0
      %3260 = vmatprep.mubr.f32.mxu0 0.0
      %3261 = vmatmul.mubr.f32.gmra.mrb[0].mxu0 %v3045
      %v3262 = vpop.f32.mrb[0].mxu0
      %v3263 = vadd.f32 0.0, %v3262
      %v3264 = vpop.f32.mrb[0].mxu0
      %3265 = vmatprep.mubr.f32.mxu0 0.0
      %3266 = vmatmul.mubr.f32.gmra.mrb[0].mxu0 %v3048
      %v3267 = vpop.f32.mrb[0].mxu0
      %v3268 = vadd.f32 0.0, %v3267
      %v3269 = vpop.f32.mrb[0].mxu0
      %3270 = vmatprep.mubr.f32.mxu0 0.0
      %3271 = vmatmul.mubr.f32.gmra.mrb[0].mxu0 %v3051
      %v3272 = vpop.f32.mrb[0].mxu0
      %v3273 = vadd.f32 0.0, %v3272
      %v3274 = vpop.f32.mrb[0].mxu0
      %3275 = vmatprep.mubr.f32.mxu0 0.0
      %3276 = vmatmul.mubr.f32.gmra.mrb[0].mxu0 %v3054
      %v3277 = vpop.f32.mrb[0].mxu0
      %v3278 = vadd.f32 0.0, %v3277
      %v3279 = vpop.f32.mrb[0].mxu0
      %3280 = vdwg.mxu0
      %v3281 = vadd.f32 %v2894, %v3123
      %v3282 = vadd.f32 %v2895, %v3128
      %v3283 = vadd.f32 %v2896, %v3133
      %v3284 = vadd.f32 %v2897, %v3138
      %v3285 = vadd.f32 %v2898, %v3143
      %v3286 = vadd.f32 %v2899, %v3148
      %v3287 = vadd.f32 %v2900, %v3153
      %v3288 = vadd.f32 %v2901, %v3158
      %v3289 = vadd.f32 %v2902, %v3163
      %v3290 = vadd.f32 %v2903, %v3168
      %v3291 = vadd.f32 %v2904, %v3173
      %v3292 = vadd.f32 %v2905, %v3178
      %v3293 = vadd.f32 %v2906, %v3183
      %v3294 = vadd.f32 %v2907, %v3188
      %v3295 = vadd.f32 %v2908, %v3193
      %v3296 = vadd.f32 %v2909, %v3198
      %v3297 = vadd.f32 %v2910, %v3203
      %v3298 = vadd.f32 %v2911, %v3208
      %v3299 = vadd.f32 %v2912, %v3213
      %v3300 = vadd.f32 %v2913, %v3218
      %v3301 = vadd.f32 %v2914, %v3223
      %v3302 = vadd.f32 %v2915, %v3228
      %v3303 = vadd.f32 %v2916, %v3233
      %v3304 = vadd.f32 %v2917, %v3238
      %v3305 = vadd.f32 %v2918, %v3243
      %v3306 = vadd.f32 %v2919, %v3248
      %v3307 = vadd.f32 %v2920, %v3253
      %v3308 = vadd.f32 %v2921, %v3258
      %v3309 = vadd.f32 %v2922, %v3263
      %v3310 = vadd.f32 %v2923, %v3268
      %v3311 = vadd.f32 %v2924, %v3273
      %v3312 = vadd.f32 %v2925, %v3278
      %v3313 = vld [vmem:[%s2538 + $0x2] sm:$0xff]
      %v3314 = vld [vmem:[%s2538 + $0xa] sm:$0xff]
      %v3315 = vld [vmem:[%s2538 + $0x1a] sm:$0xff]
      %v3316 = vld [vmem:[%s2538 + $0x22] sm:$0xff]
      %v3317 = vld [vmem:[%s2538 + $0x32] sm:$0xff]
      %v3318 = vld [vmem:[%s2538 + $0x3a] sm:$0xff]
      %v3319 = vld [vmem:[%s2538 + $0x4a] sm:$0xff]
      %v3320 = vld [vmem:[%s2538 + $0x52] sm:$0xff]
      %v3321 = vld [vmem:[%s2538 + $0x62] sm:$0xff]
      %v3322 = vld [vmem:[%s2538 + $0x6a] sm:$0xff]
      %v3323 = vld [vmem:[%s2538 + $0x7a] sm:$0xff]
      %v3324 = vld [vmem:[%s2538 + $0x82] sm:$0xff]
      %v3325 = vld [vmem:[%s2538 + $0x92] sm:$0xff]
      %v3326 = vld [vmem:[%s2538 + $0x9a] sm:$0xff]
      %v3327 = vld [vmem:[%s2538 + $0xaa] sm:$0xff]
      %v3328 = vld [vmem:[%s2538 + $0xb2] sm:$0xff]
      %v3329 = vld [vmem:[%s2538 + $0xc2] sm:$0xff]
      %v3330 = vld [vmem:[%s2538 + $0xca] sm:$0xff]
      %v3331 = vld [vmem:[%s2538 + $0xda] sm:$0xff]
      %v3332 = vld [vmem:[%s2538 + $0xe2] sm:$0xff]
      %v3333 = vld [vmem:[%s2538 + $0xf2] sm:$0xff]
      %v3334 = vld [vmem:[%s2538 + $0xfa] sm:$0xff]
      %v3335 = vld [vmem:[%s2538 + $0x10a] sm:$0xff]
      %v3336 = vld [vmem:[%s2538 + $0x112] sm:$0xff]
      %v3337 = vld [vmem:[%s2538 + $0x122] sm:$0xff]
      %v3338 = vld [vmem:[%s2538 + $0x12a] sm:$0xff]
      %v3339 = vld [vmem:[%s2538 + $0x13a] sm:$0xff]
      %v3340 = vld [vmem:[%s2538 + $0x142] sm:$0xff]
      %v3341 = vld [vmem:[%s2538 + $0x152] sm:$0xff]
      %v3342 = vld [vmem:[%s2538 + $0x15a] sm:$0xff]
      %v3343 = vld [vmem:[%s2538 + $0x16a] sm:$0xff]
      %v3344 = vld [vmem:[%s2538 + $0x172] sm:$0xff]
      %s3345 = scalar_lea.vmem %s1, 64
      %v3346 = vld [vmem:[%s3345] sm:$0xff]
      %v3348 = vsel %vm346, %v3313, 0
      %v3351 = vsel %vm346, %v3314, 0
      %v3354 = vsel %vm346, %v3315, 0
      %v3357 = vsel %vm346, %v3316, 0
      %v3360 = vsel %vm346, %v3317, 0
      %v3363 = vsel %vm346, %v3318, 0
      %v3366 = vsel %vm346, %v3319, 0
      %v3369 = vsel %vm346, %v3320, 0
      %v3372 = vsel %vm346, %v3321, 0
      %v3375 = vsel %vm346, %v3322, 0
      %v3378 = vsel %vm346, %v3323, 0
      %v3381 = vsel %vm346, %v3324, 0
      %v3384 = vsel %vm346, %v3325, 0
      %v3387 = vsel %vm346, %v3326, 0
      %v3390 = vsel %vm346, %v3327, 0
      %v3393 = vsel %vm346, %v3328, 0
      %v3396 = vsel %vm346, %v3329, 0
      %v3399 = vsel %vm346, %v3330, 0
      %v3402 = vsel %vm346, %v3331, 0
      %v3405 = vsel %vm346, %v3332, 0
      %v3408 = vsel %vm346, %v3333, 0
      %v3411 = vsel %vm346, %v3334, 0
      %v3414 = vsel %vm346, %v3335, 0
      %v3417 = vsel %vm346, %v3336, 0
      %v3420 = vsel %vm346, %v3337, 0
      %v3423 = vsel %vm346, %v3338, 0
      %v3426 = vsel %vm346, %v3339, 0
      %v3429 = vsel %vm346, %v3340, 0
      %v3432 = vsel %vm346, %v3341, 0
      %v3435 = vsel %vm346, %v3342, 0
      %v3438 = vsel %vm346, %v3343, 0
      %v3441 = vsel %vm346, %v3344, 0
      %3443 = vmatprep.subr.mxu0 0.0
      %3444 = vmatpush1.msra.mxu0 %v3346
      %3445 = vmatprep.subr.mxu0 0.0
      %3446 = vmatpush1.msra.mxu0 0.0
      %3447 = vmatprep.subr.mxu0 0.0
      %3448 = vmatpush1.msra.mxu0 0.0
      %3449 = vmatprep.subr.mxu0 0.0
      %3450 = vmatpush1.msra.mxu0 0.0
      %3451 = vmatprep.subr.mxu0 0.0
      %3452 = vmatpush1.msra.mxu0 0.0
      %3453 = vmatprep.subr.mxu0 0.0
      %3454 = vmatpush1.msra.mxu0 0.0
      %3455 = vmatprep.subr.mxu0 0.0
      %3456 = vmatpush1.msra.mxu0 0.0
      %3457 = vmatprep.subr.mxu0 0.0
      %3458 = vmatpush1.msra.mxu0 0.0
      %3459 = vmatprep.subr.mxu0 0.0
      %3460 = vmatpush1.msra.mxu0 0.0
      %3461 = vmatprep.subr.mxu0 0.0
      %3462 = vmatpush1.msra.mxu0 0.0
      %3463 = vmatprep.subr.mxu0 0.0
      %3464 = vmatpush1.msra.mxu0 0.0
      %3465 = vmatprep.subr.mxu0 0.0
      %3466 = vmatpush1.msra.mxu0 0.0
      %3467 = vmatprep.subr.mxu0 0.0
      %3468 = vmatpush1.msra.mxu0 0.0
      %3469 = vmatprep.subr.mxu0 0.0
      %3470 = vmatpush1.msra.mxu0 0.0
      %3471 = vmatprep.subr.mxu0 0.0
      %3472 = vmatpush1.msra.mxu0 0.0
      %3473 = vmatprep.subr.mxu0 0.0
      %3474 = vmatpush1.msra.mxu0 0.0
      %3475 = vmatprep.subr.mxu0 0.0
      %3476 = vmatpush1.msra.mxu0 0.0
      %3477 = vmatprep.subr.mxu0 0.0
      %3478 = vmatpush1.msra.mxu0 0.0
      %3479 = vmatprep.subr.mxu0 0.0
      %3480 = vmatpush1.msra.mxu0 0.0
      %3481 = vmatprep.subr.mxu0 0.0
      %3482 = vmatpush1.msra.mxu0 0.0
      %3483 = vmatprep.subr.mxu0 0.0
      %3484 = vmatpush1.msra.mxu0 0.0
      %3485 = vmatprep.subr.mxu0 0.0
      %3486 = vmatpush1.msra.mxu0 0.0
      %3487 = vmatprep.subr.mxu0 0.0
      %3488 = vmatpush1.msra.mxu0 0.0
      %3489 = vmatprep.subr.mxu0 0.0
      %3490 = vmatpush1.msra.mxu0 0.0
      %3491 = vmatprep.subr.mxu0 0.0
      %3492 = vmatpush1.msra.mxu0 0.0
      %3493 = vmatprep.subr.mxu0 0.0
      %3494 = vmatpush1.msra.mxu0 0.0
      %3495 = vmatprep.subr.mxu0 0.0
      %3496 = vmatpush1.msra.mxu0 0.0
      %3497 = vmatprep.subr.mxu0 0.0
      %3498 = vmatpush1.msra.mxu0 0.0
      %3499 = vmatprep.subr.mxu0 0.0
      %3500 = vmatpush1.msra.mxu0 0.0
      %3501 = vmatprep.subr.mxu0 0.0
      %3502 = vmatpush1.msra.mxu0 0.0
      %3503 = vmatprep.subr.mxu0 0.0
      %3504 = vmatpush1.msra.mxu0 0.0
      %3505 = vmatprep.subr.mxu0 0.0
      %3506 = vmatpush1.msra.mxu0 0.0
      %3507 = vmatprep.mubr.f32.mxu0 0.0
      %3508 = vmatmul.mubr.f32.gmra.mrb[0].mxu0 %v3348
      %v3509 = vpop.f32.mrb[0].mxu0
      %v3510 = vadd.f32 0.0, %v3509
      %v3511 = vpop.f32.mrb[0].mxu0
      %3512 = vmatprep.mubr.f32.mxu0 0.0
      %3513 = vmatmul.mubr.f32.gmra.mrb[0].mxu0 %v3351
      %v3514 = vpop.f32.mrb[0].mxu0
      %v3515 = vadd.f32 0.0, %v3514
      %v3516 = vpop.f32.mrb[0].mxu0
      %3517 = vmatprep.mubr.f32.mxu0 0.0
      %3518 = vmatmul.mubr.f32.gmra.mrb[0].mxu0 %v3354
      %v3519 = vpop.f32.mrb[0].mxu0
      %v3520 = vadd.f32 0.0, %v3519
      %v3521 = vpop.f32.mrb[0].mxu0
      %3522 = vmatprep.mubr.f32.mxu0 0.0
      %3523 = vmatmul.mubr.f32.gmra.mrb[0].mxu0 %v3357
      %v3524 = vpop.f32.mrb[0].mxu0
      %v3525 = vadd.f32 0.0, %v3524
      %v3526 = vpop.f32.mrb[0].mxu0
      %3527 = vmatprep.mubr.f32.mxu0 0.0
      %3528 = vmatmul.mubr.f32.gmra.mrb[0].mxu0 %v3360
      %v3529 = vpop.f32.mrb[0].mxu0
      %v3530 = vadd.f32 0.0, %v3529
      %v3531 = vpop.f32.mrb[0].mxu0
      %3532 = vmatprep.mubr.f32.mxu0 0.0
      %3533 = vmatmul.mubr.f32.gmra.mrb[0].mxu0 %v3363
      %v3534 = vpop.f32.mrb[0].mxu0
      %v3535 = vadd.f32 0.0, %v3534
      %v3536 = vpop.f32.mrb[0].mxu0
      %3537 = vmatprep.mubr.f32.mxu0 0.0
      %3538 = vmatmul.mubr.f32.gmra.mrb[0].mxu0 %v3366
      %v3539 = vpop.f32.mrb[0].mxu0
      %v3540 = vadd.f32 0.0, %v3539
      %v3541 = vpop.f32.mrb[0].mxu0
      %3542 = vmatprep.mubr.f32.mxu0 0.0
      %3543 = vmatmul.mubr.f32.gmra.mrb[0].mxu0 %v3369
      %v3544 = vpop.f32.mrb[0].mxu0
      %v3545 = vadd.f32 0.0, %v3544
      %v3546 = vpop.f32.mrb[0].mxu0
      %3547 = vmatprep.mubr.f32.mxu0 0.0
      %3548 = vmatmul.mubr.f32.gmra.mrb[0].mxu0 %v3372
      %v3549 = vpop.f32.mrb[0].mxu0
      %v3550 = vadd.f32 0.0, %v3549
      %v3551 = vpop.f32.mrb[0].mxu0
      %3552 = vmatprep.mubr.f32.mxu0 0.0
      %3553 = vmatmul.mubr.f32.gmra.mrb[0].mxu0 %v3375
      %v3554 = vpop.f32.mrb[0].mxu0
      %v3555 = vadd.f32 0.0, %v3554
      %v3556 = vpop.f32.mrb[0].mxu0
      %3557 = vmatprep.mubr.f32.mxu0 0.0
      %3558 = vmatmul.mubr.f32.gmra.mrb[0].mxu0 %v3378
      %v3559 = vpop.f32.mrb[0].mxu0
      %v3560 = vadd.f32 0.0, %v3559
      %v3561 = vpop.f32.mrb[0].mxu0
      %3562 = vmatprep.mubr.f32.mxu0 0.0
      %3563 = vmatmul.mubr.f32.gmra.mrb[0].mxu0 %v3381
      %v3564 = vpop.f32.mrb[0].mxu0
      %v3565 = vadd.f32 0.0, %v3564
      %v3566 = vpop.f32.mrb[0].mxu0
      %3567 = vmatprep.mubr.f32.mxu0 0.0
      %3568 = vmatmul.mubr.f32.gmra.mrb[0].mxu0 %v3384
      %v3569 = vpop.f32.mrb[0].mxu0
      %v3570 = vadd.f32 0.0, %v3569
      %v3571 = vpop.f32.mrb[0].mxu0
      %3572 = vmatprep.mubr.f32.mxu0 0.0
      %3573 = vmatmul.mubr.f32.gmra.mrb[0].mxu0 %v3387
      %v3574 = vpop.f32.mrb[0].mxu0
      %v3575 = vadd.f32 0.0, %v3574
      %v3576 = vpop.f32.mrb[0].mxu0
      %3577 = vmatprep.mubr.f32.mxu0 0.0
      %3578 = vmatmul.mubr.f32.gmra.mrb[0].mxu0 %v3390
      %v3579 = vpop.f32.mrb[0].mxu0
      %v3580 = vadd.f32 0.0, %v3579
      %v3581 = vpop.f32.mrb[0].mxu0
      %3582 = vmatprep.mubr.f32.mxu0 0.0
      %3583 = vmatmul.mubr.f32.gmra.mrb[0].mxu0 %v3393
      %v3584 = vpop.f32.mrb[0].mxu0
      %v3585 = vadd.f32 0.0, %v3584
      %v3586 = vpop.f32.mrb[0].mxu0
      %3587 = vmatprep.mubr.f32.mxu0 0.0
      %3588 = vmatmul.mubr.f32.gmra.mrb[0].mxu0 %v3396
      %v3589 = vpop.f32.mrb[0].mxu0
      %v3590 = vadd.f32 0.0, %v3589
      %v3591 = vpop.f32.mrb[0].mxu0
      %3592 = vmatprep.mubr.f32.mxu0 0.0
      %3593 = vmatmul.mubr.f32.gmra.mrb[0].mxu0 %v3399
      %v3594 = vpop.f32.mrb[0].mxu0
      %v3595 = vadd.f32 0.0, %v3594
      %v3596 = vpop.f32.mrb[0].mxu0
      %3597 = vmatprep.mubr.f32.mxu0 0.0
      %3598 = vmatmul.mubr.f32.gmra.mrb[0].mxu0 %v3402
      %v3599 = vpop.f32.mrb[0].mxu0
      %v3600 = vadd.f32 0.0, %v3599
      %v3601 = vpop.f32.mrb[0].mxu0
      %3602 = vmatprep.mubr.f32.mxu0 0.0
      %3603 = vmatmul.mubr.f32.gmra.mrb[0].mxu0 %v3405
      %v3604 = vpop.f32.mrb[0].mxu0
      %v3605 = vadd.f32 0.0, %v3604
      %v3606 = vpop.f32.mrb[0].mxu0
      %3607 = vmatprep.mubr.f32.mxu0 0.0
      %3608 = vmatmul.mubr.f32.gmra.mrb[0].mxu0 %v3408
      %v3609 = vpop.f32.mrb[0].mxu0
      %v3610 = vadd.f32 0.0, %v3609
      %v3611 = vpop.f32.mrb[0].mxu0
      %3612 = vmatprep.mubr.f32.mxu0 0.0
      %3613 = vmatmul.mubr.f32.gmra.mrb[0].mxu0 %v3411
      %v3614 = vpop.f32.mrb[0].mxu0
      %v3615 = vadd.f32 0.0, %v3614
      %v3616 = vpop.f32.mrb[0].mxu0
      %3617 = vmatprep.mubr.f32.mxu0 0.0
      %3618 = vmatmul.mubr.f32.gmra.mrb[0].mxu0 %v3414
      %v3619 = vpop.f32.mrb[0].mxu0
      %v3620 = vadd.f32 0.0, %v3619
      %v3621 = vpop.f32.mrb[0].mxu0
      %3622 = vmatprep.mubr.f32.mxu0 0.0
      %3623 = vmatmul.mubr.f32.gmra.mrb[0].mxu0 %v3417
      %v3624 = vpop.f32.mrb[0].mxu0
      %v3625 = vadd.f32 0.0, %v3624
      %v3626 = vpop.f32.mrb[0].mxu0
      %3627 = vmatprep.mubr.f32.mxu0 0.0
      %3628 = vmatmul.mubr.f32.gmra.mrb[0].mxu0 %v3420
      %v3629 = vpop.f32.mrb[0].mxu0
      %v3630 = vadd.f32 0.0, %v3629
      %v3631 = vpop.f32.mrb[0].mxu0
      %3632 = vmatprep.mubr.f32.mxu0 0.0
      %3633 = vmatmul.mubr.f32.gmra.mrb[0].mxu0 %v3423
      %v3634 = vpop.f32.mrb[0].mxu0
      %v3635 = vadd.f32 0.0, %v3634
      %v3636 = vpop.f32.mrb[0].mxu0
      %3637 = vmatprep.mubr.f32.mxu0 0.0
      %3638 = vmatmul.mubr.f32.gmra.mrb[0].mxu0 %v3426
      %v3639 = vpop.f32.mrb[0].mxu0
      %v3640 = vadd.f32 0.0, %v3639
      %v3641 = vpop.f32.mrb[0].mxu0
      %3642 = vmatprep.mubr.f32.mxu0 0.0
      %3643 = vmatmul.mubr.f32.gmra.mrb[0].mxu0 %v3429
      %v3644 = vpop.f32.mrb[0].mxu0
      %v3645 = vadd.f32 0.0, %v3644
      %v3646 = vpop.f32.mrb[0].mxu0
      %3647 = vmatprep.mubr.f32.mxu0 0.0
      %3648 = vmatmul.mubr.f32.gmra.mrb[0].mxu0 %v3432
      %v3649 = vpop.f32.mrb[0].mxu0
      %v3650 = vadd.f32 0.0, %v3649
      %v3651 = vpop.f32.mrb[0].mxu0
      %3652 = vmatprep.mubr.f32.mxu0 0.0
      %3653 = vmatmul.mubr.f32.gmra.mrb[0].mxu0 %v3435
      %v3654 = vpop.f32.mrb[0].mxu0
      %v3655 = vadd.f32 0.0, %v3654
      %v3656 = vpop.f32.mrb[0].mxu0
      %3657 = vmatprep.mubr.f32.mxu0 0.0
      %3658 = vmatmul.mubr.f32.gmra.mrb[0].mxu0 %v3438
      %v3659 = vpop.f32.mrb[0].mxu0
      %v3660 = vadd.f32 0.0, %v3659
      %v3661 = vpop.f32.mrb[0].mxu0
      %3662 = vmatprep.mubr.f32.mxu0 0.0
      %3663 = vmatmul.mubr.f32.gmra.mrb[0].mxu0 %v3441
      %v3664 = vpop.f32.mrb[0].mxu0
      %v3665 = vadd.f32 0.0, %v3664
      %v3666 = vpop.f32.mrb[0].mxu0
      %3667 = vdwg.mxu0
      %v3668 = vadd.f32 %v3281, %v3510
      %v3669 = vadd.f32 %v3282, %v3515
      %v3670 = vadd.f32 %v3283, %v3520
      %v3671 = vadd.f32 %v3284, %v3525
      %v3672 = vadd.f32 %v3285, %v3530
      %v3673 = vadd.f32 %v3286, %v3535
      %v3674 = vadd.f32 %v3287, %v3540
      %v3675 = vadd.f32 %v3288, %v3545
      %v3676 = vadd.f32 %v3289, %v3550
      %v3677 = vadd.f32 %v3290, %v3555
      %v3678 = vadd.f32 %v3291, %v3560
      %v3679 = vadd.f32 %v3292, %v3565
      %v3680 = vadd.f32 %v3293, %v3570
      %v3681 = vadd.f32 %v3294, %v3575
      %v3682 = vadd.f32 %v3295, %v3580
      %v3683 = vadd.f32 %v3296, %v3585
      %v3684 = vadd.f32 %v3297, %v3590
      %v3685 = vadd.f32 %v3298, %v3595
      %v3686 = vadd.f32 %v3299, %v3600
      %v3687 = vadd.f32 %v3300, %v3605
      %v3688 = vadd.f32 %v3301, %v3610
      %v3689 = vadd.f32 %v3302, %v3615
      %v3690 = vadd.f32 %v3303, %v3620
      %v3691 = vadd.f32 %v3304, %v3625
      %v3692 = vadd.f32 %v3305, %v3630
      %v3693 = vadd.f32 %v3306, %v3635
      %v3694 = vadd.f32 %v3307, %v3640
      %v3695 = vadd.f32 %v3308, %v3645
      %v3696 = vadd.f32 %v3309, %v3650
      %v3697 = vadd.f32 %v3310, %v3655
      %v3698 = vadd.f32 %v3311, %v3660
      %v3699 = vadd.f32 %v3312, %v3665
      %v3700 = vld [vmem:[%s2] sm:$0x1]
      %v3702 = vlaneseq
      %v3703 = vshrl.u32 %v3702, 7
      %v3704 = vsub.s32 0, %v3703
      %v3705 = vrot.slane %v3700, %v3704
      %v3707 = vadd.f32 %v3668, %v3705
      %v3708 = vadd.f32 %v3669, %v3705
      %v3709 = vadd.f32 %v3670, %v3705
      %v3710 = vadd.f32 %v3671, %v3705
      %v3711 = vadd.f32 %v3672, %v3705
      %v3712 = vadd.f32 %v3673, %v3705
      %v3713 = vadd.f32 %v3674, %v3705
      %v3714 = vadd.f32 %v3675, %v3705
      %v3715 = vadd.f32 %v3676, %v3705
      %v3716 = vadd.f32 %v3677, %v3705
      %v3717 = vadd.f32 %v3678, %v3705
      %v3718 = vadd.f32 %v3679, %v3705
      %v3719 = vadd.f32 %v3680, %v3705
      %v3720 = vadd.f32 %v3681, %v3705
      %v3721 = vadd.f32 %v3682, %v3705
      %v3722 = vadd.f32 %v3683, %v3705
      %v3723 = vadd.f32 %v3684, %v3705
      %v3724 = vadd.f32 %v3685, %v3705
      %v3725 = vadd.f32 %v3686, %v3705
      %v3726 = vadd.f32 %v3687, %v3705
      %v3727 = vadd.f32 %v3688, %v3705
      %v3728 = vadd.f32 %v3689, %v3705
      %v3729 = vadd.f32 %v3690, %v3705
      %v3730 = vadd.f32 %v3691, %v3705
      %v3731 = vadd.f32 %v3692, %v3705
      %v3732 = vadd.f32 %v3693, %v3705
      %v3733 = vadd.f32 %v3694, %v3705
      %v3734 = vadd.f32 %v3695, %v3705
      %v3735 = vadd.f32 %v3696, %v3705
      %v3736 = vadd.f32 %v3697, %v3705
      %v3737 = vadd.f32 %v3698, %v3705
      %v3738 = vadd.f32 %v3699, %v3705
      %v3739 = vmax.f32 %v3707, 0.0
      %v3740 = vmax.f32 %v3708, 0.0
      %v3741 = vmax.f32 %v3709, 0.0
      %v3742 = vmax.f32 %v3710, 0.0
      %v3743 = vmax.f32 %v3711, 0.0
      %v3744 = vmax.f32 %v3712, 0.0
      %v3745 = vmax.f32 %v3713, 0.0
      %v3746 = vmax.f32 %v3714, 0.0
      %v3747 = vmax.f32 %v3715, 0.0
      %v3748 = vmax.f32 %v3716, 0.0
      %v3749 = vmax.f32 %v3717, 0.0
      %v3750 = vmax.f32 %v3718, 0.0
      %v3751 = vmax.f32 %v3719, 0.0
      %v3752 = vmax.f32 %v3720, 0.0
      %v3753 = vmax.f32 %v3721, 0.0
      %v3754 = vmax.f32 %v3722, 0.0
      %v3755 = vmax.f32 %v3723, 0.0
      %v3756 = vmax.f32 %v3724, 0.0
      %v3757 = vmax.f32 %v3725, 0.0
      %v3758 = vmax.f32 %v3726, 0.0
      %v3759 = vmax.f32 %v3727, 0.0
      %v3760 = vmax.f32 %v3728, 0.0
      %v3761 = vmax.f32 %v3729, 0.0
      %v3762 = vmax.f32 %v3730, 0.0
      %v3763 = vmax.f32 %v3731, 0.0
      %v3764 = vmax.f32 %v3732, 0.0
      %v3765 = vmax.f32 %v3733, 0.0
      %v3766 = vmax.f32 %v3734, 0.0
      %v3767 = vmax.f32 %v3735, 0.0
      %v3768 = vmax.f32 %v3736, 0.0
      %v3769 = vmax.f32 %v3737, 0.0
      %v3770 = vmax.f32 %v3738, 0.0
      %vm3771 = vcmask 261120
      %3772 = vst.msk [vmem:[#allocation2] sm:$0xff] %vm3771, 0.0
      %3773 = vst.msk [vmem:[#allocation2 + $0x8] sm:$0xff] %vm3771, 0.0
      %vm3774 = vcmask 254976
      %3775 = vst.msk [vmem:[#allocation2 + $0x10] sm:$0x3] %vm3774, 0.0
      %3776 = vst.msk [vmem:[#allocation2 + $0x18] sm:$0xff] %vm3771, 0.0
      %3777 = vst.msk [vmem:[#allocation2 + $0x20] sm:$0xff] %vm3771, 0.0
      %3778 = vst.msk [vmem:[#allocation2 + $0x28] sm:$0x3] %vm3774, 0.0
      %3779 = vst.msk [vmem:[#allocation2 + $0x30] sm:$0xff] %vm3771, 0.0
      %3780 = vst.msk [vmem:[#allocation2 + $0x38] sm:$0xff] %vm3771, 0.0
      %3781 = vst.msk [vmem:[#allocation2 + $0x40] sm:$0x3] %vm3774, 0.0
      %3782 = vst.msk [vmem:[#allocation2 + $0x48] sm:$0xff] %vm3771, 0.0
      %3783 = vst.msk [vmem:[#allocation2 + $0x50] sm:$0xff] %vm3771, 0.0
      %3784 = vst.msk [vmem:[#allocation2 + $0x58] sm:$0x3] %vm3774, 0.0
      %3785 = vst.msk [vmem:[#allocation2 + $0x60] sm:$0xff] %vm3771, 0.0
      %3786 = vst.msk [vmem:[#allocation2 + $0x68] sm:$0xff] %vm3771, 0.0
      %3787 = vst.msk [vmem:[#allocation2 + $0x70] sm:$0x3] %vm3774, 0.0
      %3788 = vst.msk [vmem:[#allocation2 + $0x78] sm:$0xff] %vm3771, 0.0
      %3789 = vst.msk [vmem:[#allocation2 + $0x80] sm:$0xff] %vm3771, 0.0
      %3790 = vst.msk [vmem:[#allocation2 + $0x88] sm:$0x3] %vm3774, 0.0
      %3791 = vst.msk [vmem:[#allocation2 + $0x90] sm:$0xff] %vm3771, 0.0
      %3792 = vst.msk [vmem:[#allocation2 + $0x98] sm:$0xff] %vm3771, 0.0
      %3793 = vst.msk [vmem:[#allocation2 + $0xa0] sm:$0x3] %vm3774, 0.0
      %3794 = vst.msk [vmem:[#allocation2 + $0xa8] sm:$0xff] %vm3771, 0.0
      %3795 = vst.msk [vmem:[#allocation2 + $0xb0] sm:$0xff] %vm3771, 0.0
      %3796 = vst.msk [vmem:[#allocation2 + $0xb8] sm:$0x3] %vm3774, 0.0
      %3797 = vst.msk [vmem:[#allocation2 + $0xc0] sm:$0xff] %vm3771, 0.0
      %3798 = vst.msk [vmem:[#allocation2 + $0xc8] sm:$0xff] %vm3771, 0.0
      %3799 = vst.msk [vmem:[#allocation2 + $0xd0] sm:$0x3] %vm3774, 0.0
      %3800 = vst.msk [vmem:[#allocation2 + $0xd8] sm:$0xff] %vm3771, 0.0
      %3801 = vst.msk [vmem:[#allocation2 + $0xe0] sm:$0xff] %vm3771, 0.0
      %3802 = vst.msk [vmem:[#allocation2 + $0xe8] sm:$0x3] %vm3774, 0.0
      %3803 = vst.msk [vmem:[#allocation2 + $0xf0] sm:$0xff] %vm3771, 0.0
      %3804 = vst.msk [vmem:[#allocation2 + $0xf8] sm:$0xff] %vm3771, 0.0
      %3805 = vst.msk [vmem:[#allocation2 + $0x100] sm:$0x3] %vm3774, 0.0
      %3806 = vst.msk [vmem:[#allocation2 + $0x108] sm:$0xff] %vm3771, 0.0
      %3807 = vst.msk [vmem:[#allocation2 + $0x110] sm:$0xff] %vm3771, 0.0
      %3808 = vst.msk [vmem:[#allocation2 + $0x118] sm:$0x3] %vm3774, 0.0
      %3809 = vst.msk [vmem:[#allocation2 + $0x120] sm:$0xff] %vm3771, 0.0
      %3810 = vst.msk [vmem:[#allocation2 + $0x128] sm:$0xff] %vm3771, 0.0
      %3811 = vst.msk [vmem:[#allocation2 + $0x130] sm:$0x3] %vm3774, 0.0
      %3812 = vst.msk [vmem:[#allocation2 + $0x138] sm:$0xff] %vm3771, 0.0
      %3813 = vst.msk [vmem:[#allocation2 + $0x140] sm:$0xff] %vm3771, 0.0
      %3814 = vst.msk [vmem:[#allocation2 + $0x148] sm:$0x3] %vm3774, 0.0
      %3815 = vst.msk [vmem:[#allocation2 + $0x150] sm:$0xff] %vm3771, 0.0
      %3816 = vst.msk [vmem:[#allocation2 + $0x158] sm:$0xff] %vm3771, 0.0
      %3817 = vst.msk [vmem:[#allocation2 + $0x160] sm:$0x3] %vm3774, 0.0
      %3818 = vst.msk [vmem:[#allocation2 + $0x168] sm:$0xff] %vm3771, 0.0
      %3819 = vst.msk [vmem:[#allocation2 + $0x170] sm:$0xff] %vm3771, 0.0
      %3820 = vst.msk [vmem:[#allocation2 + $0x178] sm:$0x3] %vm3774, 0.0
      %3821 = vst.msk [vmem:[#allocation2 + $0x180] sm:$0xff] %vm3771, 0.0
      %3822 = vst.msk [vmem:[#allocation2 + $0x188] sm:$0xff] %vm3771, 0.0
      %3823 = vst.msk [vmem:[#allocation2 + $0x190] sm:$0x3] %vm3774, 0.0
      %3824 = vst.msk [vmem:[#allocation2 + $0x198] sm:$0xff] %vm3771, 0.0
      %3825 = vst.msk [vmem:[#allocation2 + $0x1a0] sm:$0xff] %vm3771, 0.0
      %3826 = vst.msk [vmem:[#allocation2 + $0x1a8] sm:$0x3] %vm3774, 0.0
      %s3827 = scalar_lea.vmem [#allocation2], 24
      %3828 = vst.msk [vmem:[%s3827 + $0x1] sm:$0xff] %vm3771, %v3739
      %3829 = vst.msk [vmem:[%s3827 + $0x9] sm:$0xff] %vm3771, %v3740
      %3830 = vst.msk [vmem:[%s3827 + $0x19] sm:$0xff] %vm3771, %v3741
      %3831 = vst.msk [vmem:[%s3827 + $0x21] sm:$0xff] %vm3771, %v3742
      %3832 = vst.msk [vmem:[%s3827 + $0x31] sm:$0xff] %vm3771, %v3743
      %3833 = vst.msk [vmem:[%s3827 + $0x39] sm:$0xff] %vm3771, %v3744
      %3834 = vst.msk [vmem:[%s3827 + $0x49] sm:$0xff] %vm3771, %v3745
      %3835 = vst.msk [vmem:[%s3827 + $0x51] sm:$0xff] %vm3771, %v3746
      %3836 = vst.msk [vmem:[%s3827 + $0x61] sm:$0xff] %vm3771, %v3747
      %3837 = vst.msk [vmem:[%s3827 + $0x69] sm:$0xff] %vm3771, %v3748
      %3838 = vst.msk [vmem:[%s3827 + $0x79] sm:$0xff] %vm3771, %v3749
      %3839 = vst.msk [vmem:[%s3827 + $0x81] sm:$0xff] %vm3771, %v3750
      %3840 = vst.msk [vmem:[%s3827 + $0x91] sm:$0xff] %vm3771, %v3751
      %3841 = vst.msk [vmem:[%s3827 + $0x99] sm:$0xff] %vm3771, %v3752
      %3842 = vst.msk [vmem:[%s3827 + $0xa9] sm:$0xff] %vm3771, %v3753
      %3843 = vst.msk [vmem:[%s3827 + $0xb1] sm:$0xff] %vm3771, %v3754
      %3844 = vst.msk [vmem:[%s3827 + $0xc1] sm:$0xff] %vm3771, %v3755
      %3845 = vst.msk [vmem:[%s3827 + $0xc9] sm:$0xff] %vm3771, %v3756
      %3846 = vst.msk [vmem:[%s3827 + $0xd9] sm:$0xff] %vm3771, %v3757
      %3847 = vst.msk [vmem:[%s3827 + $0xe1] sm:$0xff] %vm3771, %v3758
      %3848 = vst.msk [vmem:[%s3827 + $0xf1] sm:$0xff] %vm3771, %v3759
      %3849 = vst.msk [vmem:[%s3827 + $0xf9] sm:$0xff] %vm3771, %v3760
      %3850 = vst.msk [vmem:[%s3827 + $0x109] sm:$0xff] %vm3771, %v3761
      %3851 = vst.msk [vmem:[%s3827 + $0x111] sm:$0xff] %vm3771, %v3762
      %3852 = vst.msk [vmem:[%s3827 + $0x121] sm:$0xff] %vm3771, %v3763
      %3853 = vst.msk [vmem:[%s3827 + $0x129] sm:$0xff] %vm3771, %v3764
      %3854 = vst.msk [vmem:[%s3827 + $0x139] sm:$0xff] %vm3771, %v3765
      %3855 = vst.msk [vmem:[%s3827 + $0x141] sm:$0xff] %vm3771, %v3766
      %3856 = vst.msk [vmem:[%s3827 + $0x151] sm:$0xff] %vm3771, %v3767
      %3857 = vst.msk [vmem:[%s3827 + $0x159] sm:$0xff] %vm3771, %v3768
      %3858 = vst.msk [vmem:[%s3827 + $0x169] sm:$0xff] %vm3771, %v3769
      %3859 = vst.msk [vmem:[%s3827 + $0x171] sm:$0xff] %vm3771, %v3770
      %v3860 = vld [vmem:[#allocation2] sm:$0xff]
      %v3861 = vld [vmem:[#allocation2 + $0x8] sm:$0xff]
      %v3862 = vld [vmem:[#allocation2 + $0x18] sm:$0xff]
      %v3863 = vld [vmem:[#allocation2 + $0x20] sm:$0xff]
      %v3864 = vld [vmem:[#allocation2 + $0x30] sm:$0xff]
      %v3865 = vld [vmem:[#allocation2 + $0x38] sm:$0xff]
      %v3866 = vld [vmem:[#allocation2 + $0x48] sm:$0xff]
      %v3867 = vld [vmem:[#allocation2 + $0x50] sm:$0xff]
      %v3868 = vld [vmem:[#allocation2 + $0x60] sm:$0xff]
      %v3869 = vld [vmem:[#allocation2 + $0x68] sm:$0xff]
      %v3870 = vld [vmem:[#allocation2 + $0x78] sm:$0xff]
      %v3871 = vld [vmem:[#allocation2 + $0x80] sm:$0xff]
      %v3872 = vld [vmem:[#allocation2 + $0x90] sm:$0xff]
      %v3873 = vld [vmem:[#allocation2 + $0x98] sm:$0xff]
      %v3874 = vld [vmem:[#allocation2 + $0xa8] sm:$0xff]
      %v3875 = vld [vmem:[#allocation2 + $0xb0] sm:$0xff]
      %v3876 = vld [vmem:[#allocation2 + $0xc0] sm:$0xff]
      %v3877 = vld [vmem:[#allocation2 + $0xc8] sm:$0xff]
      %v3878 = vld [vmem:[#allocation2 + $0xd8] sm:$0xff]
      %v3879 = vld [vmem:[#allocation2 + $0xe0] sm:$0xff]
      %v3880 = vld [vmem:[#allocation2 + $0xf0] sm:$0xff]
      %v3881 = vld [vmem:[#allocation2 + $0xf8] sm:$0xff]
      %v3882 = vld [vmem:[#allocation2 + $0x108] sm:$0xff]
      %v3883 = vld [vmem:[#allocation2 + $0x110] sm:$0xff]
      %v3884 = vld [vmem:[#allocation2 + $0x120] sm:$0xff]
      %v3885 = vld [vmem:[#allocation2 + $0x128] sm:$0xff]
      %v3886 = vld [vmem:[#allocation2 + $0x138] sm:$0xff]
      %v3887 = vld [vmem:[#allocation2 + $0x140] sm:$0xff]
      %v3888 = vld [vmem:[#allocation2 + $0x150] sm:$0xff]
      %v3889 = vld [vmem:[#allocation2 + $0x158] sm:$0xff]
      %v3890 = vld [vmem:[#allocation2 + $0x168] sm:$0xff]
      %v3891 = vld [vmem:[#allocation2 + $0x170] sm:$0xff]
      %v3892 = vld [vmem:[%s3] sm:$0xff]
      %v3893 = vld [vmem:[%s3 + $0x8] sm:$0xff]
      %v3894 = vld [vmem:[%s3 + $0x10] sm:$0xff]
      %v3895 = vld [vmem:[%s3 + $0x18] sm:$0xff]
      %v3896 = vld [vmem:[#allocation2 + $0x1] sm:$0xff]
      %v3897 = vld [vmem:[#allocation2 + $0x9] sm:$0xff]
      %v3898 = vld [vmem:[#allocation2 + $0x19] sm:$0xff]
      %v3899 = vld [vmem:[#allocation2 + $0x21] sm:$0xff]
      %v3900 = vld [vmem:[#allocation2 + $0x31] sm:$0xff]
      %v3901 = vld [vmem:[#allocation2 + $0x39] sm:$0xff]
      %v3902 = vld [vmem:[#allocation2 + $0x49] sm:$0xff]
      %v3903 = vld [vmem:[#allocation2 + $0x51] sm:$0xff]
      %v3904 = vld [vmem:[#allocation2 + $0x61] sm:$0xff]
      %v3905 = vld [vmem:[#allocation2 + $0x69] sm:$0xff]
      %v3906 = vld [vmem:[#allocation2 + $0x79] sm:$0xff]
      %v3907 = vld [vmem:[#allocation2 + $0x81] sm:$0xff]
      %v3908 = vld [vmem:[#allocation2 + $0x91] sm:$0xff]
      %v3909 = vld [vmem:[#allocation2 + $0x99] sm:$0xff]
      %v3910 = vld [vmem:[#allocation2 + $0xa9] sm:$0xff]
      %v3911 = vld [vmem:[#allocation2 + $0xb1] sm:$0xff]
      %v3912 = vld [vmem:[#allocation2 + $0xc1] sm:$0xff]
      %v3913 = vld [vmem:[#allocation2 + $0xc9] sm:$0xff]
      %v3914 = vld [vmem:[#allocation2 + $0xd9] sm:$0xff]
      %v3915 = vld [vmem:[#allocation2 + $0xe1] sm:$0xff]
      %v3916 = vld [vmem:[#allocation2 + $0xf1] sm:$0xff]
      %v3917 = vld [vmem:[#allocation2 + $0xf9] sm:$0xff]
      %v3918 = vld [vmem:[#allocation2 + $0x109] sm:$0xff]
      %v3919 = vld [vmem:[#allocation2 + $0x111] sm:$0xff]
      %v3920 = vld [vmem:[#allocation2 + $0x121] sm:$0xff]
      %v3921 = vld [vmem:[#allocation2 + $0x129] sm:$0xff]
      %v3922 = vld [vmem:[#allocation2 + $0x139] sm:$0xff]
      %v3923 = vld [vmem:[#allocation2 + $0x141] sm:$0xff]
      %v3924 = vld [vmem:[#allocation2 + $0x151] sm:$0xff]
      %v3925 = vld [vmem:[#allocation2 + $0x159] sm:$0xff]
      %v3926 = vld [vmem:[#allocation2 + $0x169] sm:$0xff]
      %v3927 = vld [vmem:[#allocation2 + $0x171] sm:$0xff]
      %s3928 = scalar_lea.vmem %s3, 32
      %v3929 = vld [vmem:[%s3928] sm:$0xff]
      %v3930 = vld [vmem:[%s3928 + $0x8] sm:$0xff]
      %v3931 = vld [vmem:[%s3928 + $0x10] sm:$0xff]
      %v3932 = vld [vmem:[%s3928 + $0x18] sm:$0xff]
      %v3934 = vsel %vm3771, %v3896, 0
      %v3937 = vsel %vm3771, %v3897, 0
      %v3940 = vsel %vm3771, %v3898, 0
      %v3943 = vsel %vm3771, %v3899, 0
      %v3946 = vsel %vm3771, %v3900, 0
      %v3949 = vsel %vm3771, %v3901, 0
      %v3952 = vsel %vm3771, %v3902, 0
      %v3955 = vsel %vm3771, %v3903, 0
      %v3958 = vsel %vm3771, %v3904, 0
      %v3961 = vsel %vm3771, %v3905, 0
      %v3964 = vsel %vm3771, %v3906, 0
      %v3967 = vsel %vm3771, %v3907, 0
      %v3970 = vsel %vm3771, %v3908, 0
      %v3973 = vsel %vm3771, %v3909, 0
      %v3976 = vsel %vm3771, %v3910, 0
      %v3979 = vsel %vm3771, %v3911, 0
      %v3982 = vsel %vm3771, %v3912, 0
      %v3985 = vsel %vm3771, %v3913, 0
      %v3988 = vsel %vm3771, %v3914, 0
      %v3991 = vsel %vm3771, %v3915, 0
      %v3994 = vsel %vm3771, %v3916, 0
      %v3997 = vsel %vm3771, %v3917, 0
      %v4000 = vsel %vm3771, %v3918, 0
      %v4003 = vsel %vm3771, %v3919, 0
      %v4006 = vsel %vm3771, %v3920, 0
      %v4009 = vsel %vm3771, %v3921, 0
      %v4012 = vsel %vm3771, %v3922, 0
      %v4015 = vsel %vm3771, %v3923, 0
      %v4018 = vsel %vm3771, %v3924, 0
      %v4021 = vsel %vm3771, %v3925, 0
      %v4024 = vsel %vm3771, %v3926, 0
      %v4027 = vsel %vm3771, %v3927, 0
      %4029 = vmatprep.subr.mxu0 0.0
      %4030 = vmatpush1.msra.mxu0 %v3929
      %4031 = vmatprep.subr.mxu0 0.0
      %4032 = vmatpush1.msra.mxu0 %v3930
      %4033 = vmatprep.subr.mxu0 0.0
      %4034 = vmatpush1.msra.mxu0 %v3931
      %4035 = vmatprep.subr.mxu0 0.0
      %4036 = vmatpush1.msra.mxu0 %v3932
      %4037 = vmatprep.subr.mxu0 0.0
      %4038 = vmatpush1.msra.mxu0 0.0
      %4039 = vmatprep.subr.mxu0 0.0
      %4040 = vmatpush1.msra.mxu0 0.0
      %4041 = vmatprep.subr.mxu0 0.0
      %4042 = vmatpush1.msra.mxu0 0.0
      %4043 = vmatprep.subr.mxu0 0.0
      %4044 = vmatpush1.msra.mxu0 0.0
      %4045 = vmatprep.subr.mxu0 0.0
      %4046 = vmatpush1.msra.mxu0 0.0
      %4047 = vmatprep.subr.mxu0 0.0
      %4048 = vmatpush1.msra.mxu0 0.0
      %4049 = vmatprep.subr.mxu0 0.0
      %4050 = vmatpush1.msra.mxu0 0.0
      %4051 = vmatprep.subr.mxu0 0.0
      %4052 = vmatpush1.msra.mxu0 0.0
      %4053 = vmatprep.subr.mxu0 0.0
      %4054 = vmatpush1.msra.mxu0 0.0
      %4055 = vmatprep.subr.mxu0 0.0
      %4056 = vmatpush1.msra.mxu0 0.0
      %4057 = vmatprep.subr.mxu0 0.0
      %4058 = vmatpush1.msra.mxu0 0.0
      %4059 = vmatprep.subr.mxu0 0.0
      %4060 = vmatpush1.msra.mxu0 0.0
      %4061 = vmatprep.subr.mxu0 0.0
      %4062 = vmatpush1.msra.mxu0 0.0
      %4063 = vmatprep.subr.mxu0 0.0
      %4064 = vmatpush1.msra.mxu0 0.0
      %4065 = vmatprep.subr.mxu0 0.0
      %4066 = vmatpush1.msra.mxu0 0.0
      %4067 = vmatprep.subr.mxu0 0.0
      %4068 = vmatpush1.msra.mxu0 0.0
      %4069 = vmatprep.subr.mxu0 0.0
      %4070 = vmatpush1.msra.mxu0 0.0
      %4071 = vmatprep.subr.mxu0 0.0
      %4072 = vmatpush1.msra.mxu0 0.0
      %4073 = vmatprep.subr.mxu0 0.0
      %4074 = vmatpush1.msra.mxu0 0.0
      %4075 = vmatprep.subr.mxu0 0.0
      %4076 = vmatpush1.msra.mxu0 0.0
      %4077 = vmatprep.subr.mxu0 0.0
      %4078 = vmatpush1.msra.mxu0 0.0
      %4079 = vmatprep.subr.mxu0 0.0
      %4080 = vmatpush1.msra.mxu0 0.0
      %4081 = vmatprep.subr.mxu0 0.0
      %4082 = vmatpush1.msra.mxu0 0.0
      %4083 = vmatprep.subr.mxu0 0.0
      %4084 = vmatpush1.msra.mxu0 0.0
      %4085 = vmatprep.subr.mxu0 0.0
      %4086 = vmatpush1.msra.mxu0 0.0
      %4087 = vmatprep.subr.mxu0 0.0
      %4088 = vmatpush1.msra.mxu0 0.0
      %4089 = vmatprep.subr.mxu0 0.0
      %4090 = vmatpush1.msra.mxu0 0.0
      %4091 = vmatprep.subr.mxu0 0.0
      %4092 = vmatpush1.msra.mxu0 0.0
      %4093 = vmatprep.mubr.f32.mxu0 0.0
      %4094 = vmatmul.mubr.f32.gmra.mrb[0].mxu0 %v3934
      %v4095 = vpop.f32.mrb[0].mxu0
      %v4096 = vadd.f32 0.0, %v4095
      %v4097 = vpop.f32.mrb[0].mxu0
      %4098 = vmatprep.mubr.f32.mxu0 0.0
      %4099 = vmatmul.mubr.f32.gmra.mrb[0].mxu0 %v3937
      %v4100 = vpop.f32.mrb[0].mxu0
      %v4101 = vadd.f32 0.0, %v4100
      %v4102 = vpop.f32.mrb[0].mxu0
      %4103 = vmatprep.mubr.f32.mxu0 0.0
      %4104 = vmatmul.mubr.f32.gmra.mrb[0].mxu0 %v3940
      %v4105 = vpop.f32.mrb[0].mxu0
      %v4106 = vadd.f32 0.0, %v4105
      %v4107 = vpop.f32.mrb[0].mxu0
      %4108 = vmatprep.mubr.f32.mxu0 0.0
      %4109 = vmatmul.mubr.f32.gmra.mrb[0].mxu0 %v3943
      %v4110 = vpop.f32.mrb[0].mxu0
      %v4111 = vadd.f32 0.0, %v4110
      %v4112 = vpop.f32.mrb[0].mxu0
      %4113 = vmatprep.mubr.f32.mxu0 0.0
      %4114 = vmatmul.mubr.f32.gmra.mrb[0].mxu0 %v3946
      %v4115 = vpop.f32.mrb[0].mxu0
      %v4116 = vadd.f32 0.0, %v4115
      %v4117 = vpop.f32.mrb[0].mxu0
      %4118 = vmatprep.mubr.f32.mxu0 0.0
      %4119 = vmatmul.mubr.f32.gmra.mrb[0].mxu0 %v3949
      %v4120 = vpop.f32.mrb[0].mxu0
      %v4121 = vadd.f32 0.0, %v4120
      %v4122 = vpop.f32.mrb[0].mxu0
      %4123 = vmatprep.mubr.f32.mxu0 0.0
      %4124 = vmatmul.mubr.f32.gmra.mrb[0].mxu0 %v3952
      %v4125 = vpop.f32.mrb[0].mxu0
      %v4126 = vadd.f32 0.0, %v4125
      %v4127 = vpop.f32.mrb[0].mxu0
      %4128 = vmatprep.mubr.f32.mxu0 0.0
      %4129 = vmatmul.mubr.f32.gmra.mrb[0].mxu0 %v3955
      %v4130 = vpop.f32.mrb[0].mxu0
      %v4131 = vadd.f32 0.0, %v4130
      %v4132 = vpop.f32.mrb[0].mxu0
      %4133 = vmatprep.mubr.f32.mxu0 0.0
      %4134 = vmatmul.mubr.f32.gmra.mrb[0].mxu0 %v3958
      %v4135 = vpop.f32.mrb[0].mxu0
      %v4136 = vadd.f32 0.0, %v4135
      %v4137 = vpop.f32.mrb[0].mxu0
      %4138 = vmatprep.mubr.f32.mxu0 0.0
      %4139 = vmatmul.mubr.f32.gmra.mrb[0].mxu0 %v3961
      %v4140 = vpop.f32.mrb[0].mxu0
      %v4141 = vadd.f32 0.0, %v4140
      %v4142 = vpop.f32.mrb[0].mxu0
      %4143 = vmatprep.mubr.f32.mxu0 0.0
      %4144 = vmatmul.mubr.f32.gmra.mrb[0].mxu0 %v3964
      %v4145 = vpop.f32.mrb[0].mxu0
      %v4146 = vadd.f32 0.0, %v4145
      %v4147 = vpop.f32.mrb[0].mxu0
      %4148 = vmatprep.mubr.f32.mxu0 0.0
      %4149 = vmatmul.mubr.f32.gmra.mrb[0].mxu0 %v3967
      %v4150 = vpop.f32.mrb[0].mxu0
      %v4151 = vadd.f32 0.0, %v4150
      %v4152 = vpop.f32.mrb[0].mxu0
      %4153 = vmatprep.mubr.f32.mxu0 0.0
      %4154 = vmatmul.mubr.f32.gmra.mrb[0].mxu0 %v3970
      %v4155 = vpop.f32.mrb[0].mxu0
      %v4156 = vadd.f32 0.0, %v4155
      %v4157 = vpop.f32.mrb[0].mxu0
      %4158 = vmatprep.mubr.f32.mxu0 0.0
      %4159 = vmatmul.mubr.f32.gmra.mrb[0].mxu0 %v3973
      %v4160 = vpop.f32.mrb[0].mxu0
      %v4161 = vadd.f32 0.0, %v4160
      %v4162 = vpop.f32.mrb[0].mxu0
      %4163 = vmatprep.mubr.f32.mxu0 0.0
      %4164 = vmatmul.mubr.f32.gmra.mrb[0].mxu0 %v3976
      %v4165 = vpop.f32.mrb[0].mxu0
      %v4166 = vadd.f32 0.0, %v4165
      %v4167 = vpop.f32.mrb[0].mxu0
      %4168 = vmatprep.mubr.f32.mxu0 0.0
      %4169 = vmatmul.mubr.f32.gmra.mrb[0].mxu0 %v3979
      %v4170 = vpop.f32.mrb[0].mxu0
      %v4171 = vadd.f32 0.0, %v4170
      %v4172 = vpop.f32.mrb[0].mxu0
      %4173 = vmatprep.mubr.f32.mxu0 0.0
      %4174 = vmatmul.mubr.f32.gmra.mrb[0].mxu0 %v3982
      %v4175 = vpop.f32.mrb[0].mxu0
      %v4176 = vadd.f32 0.0, %v4175
      %v4177 = vpop.f32.mrb[0].mxu0
      %4178 = vmatprep.mubr.f32.mxu0 0.0
      %4179 = vmatmul.mubr.f32.gmra.mrb[0].mxu0 %v3985
      %v4180 = vpop.f32.mrb[0].mxu0
      %v4181 = vadd.f32 0.0, %v4180
      %v4182 = vpop.f32.mrb[0].mxu0
      %4183 = vmatprep.mubr.f32.mxu0 0.0
      %4184 = vmatmul.mubr.f32.gmra.mrb[0].mxu0 %v3988
      %v4185 = vpop.f32.mrb[0].mxu0
      %v4186 = vadd.f32 0.0, %v4185
      %v4187 = vpop.f32.mrb[0].mxu0
      %4188 = vmatprep.mubr.f32.mxu0 0.0
      %4189 = vmatmul.mubr.f32.gmra.mrb[0].mxu0 %v3991
      %v4190 = vpop.f32.mrb[0].mxu0
      %v4191 = vadd.f32 0.0, %v4190
      %v4192 = vpop.f32.mrb[0].mxu0
      %4193 = vmatprep.mubr.f32.mxu0 0.0
      %4194 = vmatmul.mubr.f32.gmra.mrb[0].mxu0 %v3994
      %v4195 = vpop.f32.mrb[0].mxu0
      %v4196 = vadd.f32 0.0, %v4195
      %v4197 = vpop.f32.mrb[0].mxu0
      %4198 = vmatprep.mubr.f32.mxu0 0.0
      %4199 = vmatmul.mubr.f32.gmra.mrb[0].mxu0 %v3997
      %v4200 = vpop.f32.mrb[0].mxu0
      %v4201 = vadd.f32 0.0, %v4200
      %v4202 = vpop.f32.mrb[0].mxu0
      %4203 = vmatprep.mubr.f32.mxu0 0.0
      %4204 = vmatmul.mubr.f32.gmra.mrb[0].mxu0 %v4000
      %v4205 = vpop.f32.mrb[0].mxu0
      %v4206 = vadd.f32 0.0, %v4205
      %v4207 = vpop.f32.mrb[0].mxu0
      %4208 = vmatprep.mubr.f32.mxu0 0.0
      %4209 = vmatmul.mubr.f32.gmra.mrb[0].mxu0 %v4003
      %v4210 = vpop.f32.mrb[0].mxu0
      %v4211 = vadd.f32 0.0, %v4210
      %v4212 = vpop.f32.mrb[0].mxu0
      %4213 = vmatprep.mubr.f32.mxu0 0.0
      %4214 = vmatmul.mubr.f32.gmra.mrb[0].mxu0 %v4006
      %v4215 = vpop.f32.mrb[0].mxu0
      %v4216 = vadd.f32 0.0, %v4215
      %v4217 = vpop.f32.mrb[0].mxu0
      %4218 = vmatprep.mubr.f32.mxu0 0.0
      %4219 = vmatmul.mubr.f32.gmra.mrb[0].mxu0 %v4009
      %v4220 = vpop.f32.mrb[0].mxu0
      %v4221 = vadd.f32 0.0, %v4220
      %v4222 = vpop.f32.mrb[0].mxu0
      %4223 = vmatprep.mubr.f32.mxu0 0.0
      %4224 = vmatmul.mubr.f32.gmra.mrb[0].mxu0 %v4012
      %v4225 = vpop.f32.mrb[0].mxu0
      %v4226 = vadd.f32 0.0, %v4225
      %v4227 = vpop.f32.mrb[0].mxu0
      %4228 = vmatprep.mubr.f32.mxu0 0.0
      %4229 = vmatmul.mubr.f32.gmra.mrb[0].mxu0 %v4015
      %v4230 = vpop.f32.mrb[0].mxu0
      %v4231 = vadd.f32 0.0, %v4230
      %v4232 = vpop.f32.mrb[0].mxu0
      %4233 = vmatprep.mubr.f32.mxu0 0.0
      %4234 = vmatmul.mubr.f32.gmra.mrb[0].mxu0 %v4018
      %v4235 = vpop.f32.mrb[0].mxu0
      %v4236 = vadd.f32 0.0, %v4235
      %v4237 = vpop.f32.mrb[0].mxu0
      %4238 = vmatprep.mubr.f32.mxu0 0.0
      %4239 = vmatmul.mubr.f32.gmra.mrb[0].mxu0 %v4021
      %v4240 = vpop.f32.mrb[0].mxu0
      %v4241 = vadd.f32 0.0, %v4240
      %v4242 = vpop.f32.mrb[0].mxu0
      %4243 = vmatprep.mubr.f32.mxu0 0.0
      %4244 = vmatmul.mubr.f32.gmra.mrb[0].mxu0 %v4024
      %v4245 = vpop.f32.mrb[0].mxu0
      %v4246 = vadd.f32 0.0, %v4245
      %v4247 = vpop.f32.mrb[0].mxu0
      %4248 = vmatprep.mubr.f32.mxu0 0.0
      %4249 = vmatmul.mubr.f32.gmra.mrb[0].mxu0 %v4027
      %v4250 = vpop.f32.mrb[0].mxu0
      %v4251 = vadd.f32 0.0, %v4250
      %v4252 = vpop.f32.mrb[0].mxu0
      %4253 = vdwg.mxu0
      %v4255 = vsel %vm3771, %v3860, 0
      %v4258 = vsel %vm3771, %v3861, 0
      %v4261 = vsel %vm3771, %v3862, 0
      %v4264 = vsel %vm3771, %v3863, 0
      %v4267 = vsel %vm3771, %v3864, 0
      %v4270 = vsel %vm3771, %v3865, 0
      %v4273 = vsel %vm3771, %v3866, 0
      %v4276 = vsel %vm3771, %v3867, 0
      %v4279 = vsel %vm3771, %v3868, 0
      %v4282 = vsel %vm3771, %v3869, 0
      %v4285 = vsel %vm3771, %v3870, 0
      %v4288 = vsel %vm3771, %v3871, 0
      %v4291 = vsel %vm3771, %v3872, 0
      %v4294 = vsel %vm3771, %v3873, 0
      %v4297 = vsel %vm3771, %v3874, 0
      %v4300 = vsel %vm3771, %v3875, 0
      %v4303 = vsel %vm3771, %v3876, 0
      %v4306 = vsel %vm3771, %v3877, 0
      %v4309 = vsel %vm3771, %v3878, 0
      %v4312 = vsel %vm3771, %v3879, 0
      %v4315 = vsel %vm3771, %v3880, 0
      %v4318 = vsel %vm3771, %v3881, 0
      %v4321 = vsel %vm3771, %v3882, 0
      %v4324 = vsel %vm3771, %v3883, 0
      %v4327 = vsel %vm3771, %v3884, 0
      %v4330 = vsel %vm3771, %v3885, 0
      %v4333 = vsel %vm3771, %v3886, 0
      %v4336 = vsel %vm3771, %v3887, 0
      %v4339 = vsel %vm3771, %v3888, 0
      %v4342 = vsel %vm3771, %v3889, 0
      %v4345 = vsel %vm3771, %v3890, 0
      %v4348 = vsel %vm3771, %v3891, 0
      %4350 = vmatprep.subr.mxu0 0.0
      %4351 = vmatpush1.msra.mxu0 %v3892
      %4352 = vmatprep.subr.mxu0 0.0
      %4353 = vmatpush1.msra.mxu0 %v3893
      %4354 = vmatprep.subr.mxu0 0.0
      %4355 = vmatpush1.msra.mxu0 %v3894
      %4356 = vmatprep.subr.mxu0 0.0
      %4357 = vmatpush1.msra.mxu0 %v3895
      %4358 = vmatprep.subr.mxu0 0.0
      %4359 = vmatpush1.msra.mxu0 0.0
      %4360 = vmatprep.subr.mxu0 0.0
      %4361 = vmatpush1.msra.mxu0 0.0
      %4362 = vmatprep.subr.mxu0 0.0
      %4363 = vmatpush1.msra.mxu0 0.0
      %4364 = vmatprep.subr.mxu0 0.0
      %4365 = vmatpush1.msra.mxu0 0.0
      %4366 = vmatprep.subr.mxu0 0.0
      %4367 = vmatpush1.msra.mxu0 0.0
      %4368 = vmatprep.subr.mxu0 0.0
      %4369 = vmatpush1.msra.mxu0 0.0
      %4370 = vmatprep.subr.mxu0 0.0
      %4371 = vmatpush1.msra.mxu0 0.0
      %4372 = vmatprep.subr.mxu0 0.0
      %4373 = vmatpush1.msra.mxu0 0.0
      %4374 = vmatprep.subr.mxu0 0.0
      %4375 = vmatpush1.msra.mxu0 0.0
      %4376 = vmatprep.subr.mxu0 0.0
      %4377 = vmatpush1.msra.mxu0 0.0
      %4378 = vmatprep.subr.mxu0 0.0
      %4379 = vmatpush1.msra.mxu0 0.0
      %4380 = vmatprep.subr.mxu0 0.0
      %4381 = vmatpush1.msra.mxu0 0.0
      %4382 = vmatprep.subr.mxu0 0.0
      %4383 = vmatpush1.msra.mxu0 0.0
      %4384 = vmatprep.subr.mxu0 0.0
      %4385 = vmatpush1.msra.mxu0 0.0
      %4386 = vmatprep.subr.mxu0 0.0
      %4387 = vmatpush1.msra.mxu0 0.0
      %4388 = vmatprep.subr.mxu0 0.0
      %4389 = vmatpush1.msra.mxu0 0.0
      %4390 = vmatprep.subr.mxu0 0.0
      %4391 = vmatpush1.msra.mxu0 0.0
      %4392 = vmatprep.subr.mxu0 0.0
      %4393 = vmatpush1.msra.mxu0 0.0
      %4394 = vmatprep.subr.mxu0 0.0
      %4395 = vmatpush1.msra.mxu0 0.0
      %4396 = vmatprep.subr.mxu0 0.0
      %4397 = vmatpush1.msra.mxu0 0.0
      %4398 = vmatprep.subr.mxu0 0.0
      %4399 = vmatpush1.msra.mxu0 0.0
      %4400 = vmatprep.subr.mxu0 0.0
      %4401 = vmatpush1.msra.mxu0 0.0
      %4402 = vmatprep.subr.mxu0 0.0
      %4403 = vmatpush1.msra.mxu0 0.0
      %4404 = vmatprep.subr.mxu0 0.0
      %4405 = vmatpush1.msra.mxu0 0.0
      %4406 = vmatprep.subr.mxu0 0.0
      %4407 = vmatpush1.msra.mxu0 0.0
      %4408 = vmatprep.subr.mxu0 0.0
      %4409 = vmatpush1.msra.mxu0 0.0
      %4410 = vmatprep.subr.mxu0 0.0
      %4411 = vmatpush1.msra.mxu0 0.0
      %4412 = vmatprep.subr.mxu0 0.0
      %4413 = vmatpush1.msra.mxu0 0.0
      %4414 = vmatprep.mubr.f32.mxu0 0.0
      %4415 = vmatmul.mubr.f32.gmra.mrb[0].mxu0 %v4255
      %v4416 = vpop.f32.mrb[0].mxu0
      %v4417 = vadd.f32 %v4096, %v4416
      %v4418 = vpop.f32.mrb[0].mxu0
      %4419 = vmatprep.mubr.f32.mxu0 0.0
      %4420 = vmatmul.mubr.f32.gmra.mrb[0].mxu0 %v4258
      %v4421 = vpop.f32.mrb[0].mxu0
      %v4422 = vadd.f32 %v4101, %v4421
      %v4423 = vpop.f32.mrb[0].mxu0
      %4424 = vmatprep.mubr.f32.mxu0 0.0
      %4425 = vmatmul.mubr.f32.gmra.mrb[0].mxu0 %v4261
      %v4426 = vpop.f32.mrb[0].mxu0
      %v4427 = vadd.f32 %v4106, %v4426
      %v4428 = vpop.f32.mrb[0].mxu0
      %4429 = vmatprep.mubr.f32.mxu0 0.0
      %4430 = vmatmul.mubr.f32.gmra.mrb[0].mxu0 %v4264
      %v4431 = vpop.f32.mrb[0].mxu0
      %v4432 = vadd.f32 %v4111, %v4431
      %v4433 = vpop.f32.mrb[0].mxu0
      %4434 = vmatprep.mubr.f32.mxu0 0.0
      %4435 = vmatmul.mubr.f32.gmra.mrb[0].mxu0 %v4267
      %v4436 = vpop.f32.mrb[0].mxu0
      %v4437 = vadd.f32 %v4116, %v4436
      %v4438 = vpop.f32.mrb[0].mxu0
      %4439 = vmatprep.mubr.f32.mxu0 0.0
      %4440 = vmatmul.mubr.f32.gmra.mrb[0].mxu0 %v4270
      %v4441 = vpop.f32.mrb[0].mxu0
      %v4442 = vadd.f32 %v4121, %v4441
      %v4443 = vpop.f32.mrb[0].mxu0
      %4444 = vmatprep.mubr.f32.mxu0 0.0
      %4445 = vmatmul.mubr.f32.gmra.mrb[0].mxu0 %v4273
      %v4446 = vpop.f32.mrb[0].mxu0
      %v4447 = vadd.f32 %v4126, %v4446
      %v4448 = vpop.f32.mrb[0].mxu0
      %4449 = vmatprep.mubr.f32.mxu0 0.0
      %4450 = vmatmul.mubr.f32.gmra.mrb[0].mxu0 %v4276
      %v4451 = vpop.f32.mrb[0].mxu0
      %v4452 = vadd.f32 %v4131, %v4451
      %v4453 = vpop.f32.mrb[0].mxu0
      %4454 = vmatprep.mubr.f32.mxu0 0.0
      %4455 = vmatmul.mubr.f32.gmra.mrb[0].mxu0 %v4279
      %v4456 = vpop.f32.mrb[0].mxu0
      %v4457 = vadd.f32 %v4136, %v4456
      %v4458 = vpop.f32.mrb[0].mxu0
      %4459 = vmatprep.mubr.f32.mxu0 0.0
      %4460 = vmatmul.mubr.f32.gmra.mrb[0].mxu0 %v4282
      %v4461 = vpop.f32.mrb[0].mxu0
      %v4462 = vadd.f32 %v4141, %v4461
      %v4463 = vpop.f32.mrb[0].mxu0
      %4464 = vmatprep.mubr.f32.mxu0 0.0
      %4465 = vmatmul.mubr.f32.gmra.mrb[0].mxu0 %v4285
      %v4466 = vpop.f32.mrb[0].mxu0
      %v4467 = vadd.f32 %v4146, %v4466
      %v4468 = vpop.f32.mrb[0].mxu0
      %4469 = vmatprep.mubr.f32.mxu0 0.0
      %4470 = vmatmul.mubr.f32.gmra.mrb[0].mxu0 %v4288
      %v4471 = vpop.f32.mrb[0].mxu0
      %v4472 = vadd.f32 %v4151, %v4471
      %v4473 = vpop.f32.mrb[0].mxu0
      %4474 = vmatprep.mubr.f32.mxu0 0.0
      %4475 = vmatmul.mubr.f32.gmra.mrb[0].mxu0 %v4291
      %v4476 = vpop.f32.mrb[0].mxu0
      %v4477 = vadd.f32 %v4156, %v4476
      %v4478 = vpop.f32.mrb[0].mxu0
      %4479 = vmatprep.mubr.f32.mxu0 0.0
      %4480 = vmatmul.mubr.f32.gmra.mrb[0].mxu0 %v4294
      %v4481 = vpop.f32.mrb[0].mxu0
      %v4482 = vadd.f32 %v4161, %v4481
      %v4483 = vpop.f32.mrb[0].mxu0
      %4484 = vmatprep.mubr.f32.mxu0 0.0
      %4485 = vmatmul.mubr.f32.gmra.mrb[0].mxu0 %v4297
      %v4486 = vpop.f32.mrb[0].mxu0
      %v4487 = vadd.f32 %v4166, %v4486
      %v4488 = vpop.f32.mrb[0].mxu0
      %4489 = vmatprep.mubr.f32.mxu0 0.0
      %4490 = vmatmul.mubr.f32.gmra.mrb[0].mxu0 %v4300
      %v4491 = vpop.f32.mrb[0].mxu0
      %v4492 = vadd.f32 %v4171, %v4491
      %v4493 = vpop.f32.mrb[0].mxu0
      %4494 = vmatprep.mubr.f32.mxu0 0.0
      %4495 = vmatmul.mubr.f32.gmra.mrb[0].mxu0 %v4303
      %v4496 = vpop.f32.mrb[0].mxu0
      %v4497 = vadd.f32 %v4176, %v4496
      %v4498 = vpop.f32.mrb[0].mxu0
      %4499 = vmatprep.mubr.f32.mxu0 0.0
      %4500 = vmatmul.mubr.f32.gmra.mrb[0].mxu0 %v4306
      %v4501 = vpop.f32.mrb[0].mxu0
      %v4502 = vadd.f32 %v4181, %v4501
      %v4503 = vpop.f32.mrb[0].mxu0
      %4504 = vmatprep.mubr.f32.mxu0 0.0
      %4505 = vmatmul.mubr.f32.gmra.mrb[0].mxu0 %v4309
      %v4506 = vpop.f32.mrb[0].mxu0
      %v4507 = vadd.f32 %v4186, %v4506
      %v4508 = vpop.f32.mrb[0].mxu0
      %4509 = vmatprep.mubr.f32.mxu0 0.0
      %4510 = vmatmul.mubr.f32.gmra.mrb[0].mxu0 %v4312
      %v4511 = vpop.f32.mrb[0].mxu0
      %v4512 = vadd.f32 %v4191, %v4511
      %v4513 = vpop.f32.mrb[0].mxu0
      %4514 = vmatprep.mubr.f32.mxu0 0.0
      %4515 = vmatmul.mubr.f32.gmra.mrb[0].mxu0 %v4315
      %v4516 = vpop.f32.mrb[0].mxu0
      %v4517 = vadd.f32 %v4196, %v4516
      %v4518 = vpop.f32.mrb[0].mxu0
      %4519 = vmatprep.mubr.f32.mxu0 0.0
      %4520 = vmatmul.mubr.f32.gmra.mrb[0].mxu0 %v4318
      %v4521 = vpop.f32.mrb[0].mxu0
      %v4522 = vadd.f32 %v4201, %v4521
      %v4523 = vpop.f32.mrb[0].mxu0
      %4524 = vmatprep.mubr.f32.mxu0 0.0
      %4525 = vmatmul.mubr.f32.gmra.mrb[0].mxu0 %v4321
      %v4526 = vpop.f32.mrb[0].mxu0
      %v4527 = vadd.f32 %v4206, %v4526
      %v4528 = vpop.f32.mrb[0].mxu0
      %4529 = vmatprep.mubr.f32.mxu0 0.0
      %4530 = vmatmul.mubr.f32.gmra.mrb[0].mxu0 %v4324
      %v4531 = vpop.f32.mrb[0].mxu0
      %v4532 = vadd.f32 %v4211, %v4531
      %v4533 = vpop.f32.mrb[0].mxu0
      %4534 = vmatprep.mubr.f32.mxu0 0.0
      %4535 = vmatmul.mubr.f32.gmra.mrb[0].mxu0 %v4327
      %v4536 = vpop.f32.mrb[0].mxu0
      %v4537 = vadd.f32 %v4216, %v4536
      %v4538 = vpop.f32.mrb[0].mxu0
      %4539 = vmatprep.mubr.f32.mxu0 0.0
      %4540 = vmatmul.mubr.f32.gmra.mrb[0].mxu0 %v4330
      %v4541 = vpop.f32.mrb[0].mxu0
      %v4542 = vadd.f32 %v4221, %v4541
      %v4543 = vpop.f32.mrb[0].mxu0
      %4544 = vmatprep.mubr.f32.mxu0 0.0
      %4545 = vmatmul.mubr.f32.gmra.mrb[0].mxu0 %v4333
      %v4546 = vpop.f32.mrb[0].mxu0
      %v4547 = vadd.f32 %v4226, %v4546
      %v4548 = vpop.f32.mrb[0].mxu0
      %4549 = vmatprep.mubr.f32.mxu0 0.0
      %4550 = vmatmul.mubr.f32.gmra.mrb[0].mxu0 %v4336
      %v4551 = vpop.f32.mrb[0].mxu0
      %v4552 = vadd.f32 %v4231, %v4551
      %v4553 = vpop.f32.mrb[0].mxu0
      %4554 = vmatprep.mubr.f32.mxu0 0.0
      %4555 = vmatmul.mubr.f32.gmra.mrb[0].mxu0 %v4339
      %v4556 = vpop.f32.mrb[0].mxu0
      %v4557 = vadd.f32 %v4236, %v4556
      %v4558 = vpop.f32.mrb[0].mxu0
      %4559 = vmatprep.mubr.f32.mxu0 0.0
      %4560 = vmatmul.mubr.f32.gmra.mrb[0].mxu0 %v4342
      %v4561 = vpop.f32.mrb[0].mxu0
      %v4562 = vadd.f32 %v4241, %v4561
      %v4563 = vpop.f32.mrb[0].mxu0
      %4564 = vmatprep.mubr.f32.mxu0 0.0
      %4565 = vmatmul.mubr.f32.gmra.mrb[0].mxu0 %v4345
      %v4566 = vpop.f32.mrb[0].mxu0
      %v4567 = vadd.f32 %v4246, %v4566
      %v4568 = vpop.f32.mrb[0].mxu0
      %4569 = vmatprep.mubr.f32.mxu0 0.0
      %4570 = vmatmul.mubr.f32.gmra.mrb[0].mxu0 %v4348
      %v4571 = vpop.f32.mrb[0].mxu0
      %v4572 = vadd.f32 %v4251, %v4571
      %v4573 = vpop.f32.mrb[0].mxu0
      %4574 = vdwg.mxu0
      %v4575 = vld [vmem:[#allocation2 + $0x2] sm:$0xff]
      %v4576 = vld [vmem:[#allocation2 + $0xa] sm:$0xff]
      %v4577 = vld [vmem:[#allocation2 + $0x1a] sm:$0xff]
      %v4578 = vld [vmem:[#allocation2 + $0x22] sm:$0xff]
      %v4579 = vld [vmem:[#allocation2 + $0x32] sm:$0xff]
      %v4580 = vld [vmem:[#allocation2 + $0x3a] sm:$0xff]
      %v4581 = vld [vmem:[#allocation2 + $0x4a] sm:$0xff]
      %v4582 = vld [vmem:[#allocation2 + $0x52] sm:$0xff]
      %v4583 = vld [vmem:[#allocation2 + $0x62] sm:$0xff]
      %v4584 = vld [vmem:[#allocation2 + $0x6a] sm:$0xff]
      %v4585 = vld [vmem:[#allocation2 + $0x7a] sm:$0xff]
      %v4586 = vld [vmem:[#allocation2 + $0x82] sm:$0xff]
      %v4587 = vld [vmem:[#allocation2 + $0x92] sm:$0xff]
      %v4588 = vld [vmem:[#allocation2 + $0x9a] sm:$0xff]
      %v4589 = vld [vmem:[#allocation2 + $0xaa] sm:$0xff]
      %v4590 = vld [vmem:[#allocation2 + $0xb2] sm:$0xff]
      %v4591 = vld [vmem:[#allocation2 + $0xc2] sm:$0xff]
      %v4592 = vld [vmem:[#allocation2 + $0xca] sm:$0xff]
      %v4593 = vld [vmem:[#allocation2 + $0xda] sm:$0xff]
      %v4594 = vld [vmem:[#allocation2 + $0xe2] sm:$0xff]
      %v4595 = vld [vmem:[#allocation2 + $0xf2] sm:$0xff]
      %v4596 = vld [vmem:[#allocation2 + $0xfa] sm:$0xff]
      %v4597 = vld [vmem:[#allocation2 + $0x10a] sm:$0xff]
      %v4598 = vld [vmem:[#allocation2 + $0x112] sm:$0xff]
      %v4599 = vld [vmem:[#allocation2 + $0x122] sm:$0xff]
      %v4600 = vld [vmem:[#allocation2 + $0x12a] sm:$0xff]
      %v4601 = vld [vmem:[#allocation2 + $0x13a] sm:$0xff]
      %v4602 = vld [vmem:[#allocation2 + $0x142] sm:$0xff]
      %v4603 = vld [vmem:[#allocation2 + $0x152] sm:$0xff]
      %v4604 = vld [vmem:[#allocation2 + $0x15a] sm:$0xff]
      %v4605 = vld [vmem:[#allocation2 + $0x16a] sm:$0xff]
      %v4606 = vld [vmem:[#allocation2 + $0x172] sm:$0xff]
      %s4607 = scalar_lea.vmem %s3, 64
      %v4608 = vld [vmem:[%s4607] sm:$0xff]
      %v4609 = vld [vmem:[%s4607 + $0x8] sm:$0xff]
      %v4610 = vld [vmem:[%s4607 + $0x10] sm:$0xff]
      %v4611 = vld [vmem:[%s4607 + $0x18] sm:$0xff]
      %v4613 = vsel %vm3771, %v4575, 0
      %v4616 = vsel %vm3771, %v4576, 0
      %v4619 = vsel %vm3771, %v4577, 0
      %v4622 = vsel %vm3771, %v4578, 0
      %v4625 = vsel %vm3771, %v4579, 0
      %v4628 = vsel %vm3771, %v4580, 0
      %v4631 = vsel %vm3771, %v4581, 0
      %v4634 = vsel %vm3771, %v4582, 0
      %v4637 = vsel %vm3771, %v4583, 0
      %v4640 = vsel %vm3771, %v4584, 0
      %v4643 = vsel %vm3771, %v4585, 0
      %v4646 = vsel %vm3771, %v4586, 0
      %v4649 = vsel %vm3771, %v4587, 0
      %v4652 = vsel %vm3771, %v4588, 0
      %v4655 = vsel %vm3771, %v4589, 0
      %v4658 = vsel %vm3771, %v4590, 0
      %v4661 = vsel %vm3771, %v4591, 0
      %v4664 = vsel %vm3771, %v4592, 0
      %v4667 = vsel %vm3771, %v4593, 0
      %v4670 = vsel %vm3771, %v4594, 0
      %v4673 = vsel %vm3771, %v4595, 0
      %v4676 = vsel %vm3771, %v4596, 0
      %v4679 = vsel %vm3771, %v4597, 0
      %v4682 = vsel %vm3771, %v4598, 0
      %v4685 = vsel %vm3771, %v4599, 0
      %v4688 = vsel %vm3771, %v4600, 0
      %v4691 = vsel %vm3771, %v4601, 0
      %v4694 = vsel %vm3771, %v4602, 0
      %v4697 = vsel %vm3771, %v4603, 0
      %v4700 = vsel %vm3771, %v4604, 0
      %v4703 = vsel %vm3771, %v4605, 0
      %v4706 = vsel %vm3771, %v4606, 0
      %4708 = vmatprep.subr.mxu0 0.0
      %4709 = vmatpush1.msra.mxu0 %v4608
      %4710 = vmatprep.subr.mxu0 0.0
      %4711 = vmatpush1.msra.mxu0 %v4609
      %4712 = vmatprep.subr.mxu0 0.0
      %4713 = vmatpush1.msra.mxu0 %v4610
      %4714 = vmatprep.subr.mxu0 0.0
      %4715 = vmatpush1.msra.mxu0 %v4611
      %4716 = vmatprep.subr.mxu0 0.0
      %4717 = vmatpush1.msra.mxu0 0.0
      %4718 = vmatprep.subr.mxu0 0.0
      %4719 = vmatpush1.msra.mxu0 0.0
      %4720 = vmatprep.subr.mxu0 0.0
      %4721 = vmatpush1.msra.mxu0 0.0
      %4722 = vmatprep.subr.mxu0 0.0
      %4723 = vmatpush1.msra.mxu0 0.0
      %4724 = vmatprep.subr.mxu0 0.0
      %4725 = vmatpush1.msra.mxu0 0.0
      %4726 = vmatprep.subr.mxu0 0.0
      %4727 = vmatpush1.msra.mxu0 0.0
      %4728 = vmatprep.subr.mxu0 0.0
      %4729 = vmatpush1.msra.mxu0 0.0
      %4730 = vmatprep.subr.mxu0 0.0
      %4731 = vmatpush1.msra.mxu0 0.0
      %4732 = vmatprep.subr.mxu0 0.0
      %4733 = vmatpush1.msra.mxu0 0.0
      %4734 = vmatprep.subr.mxu0 0.0
      %4735 = vmatpush1.msra.mxu0 0.0
      %4736 = vmatprep.subr.mxu0 0.0
      %4737 = vmatpush1.msra.mxu0 0.0
      %4738 = vmatprep.subr.mxu0 0.0
      %4739 = vmatpush1.msra.mxu0 0.0
      %4740 = vmatprep.subr.mxu0 0.0
      %4741 = vmatpush1.msra.mxu0 0.0
      %4742 = vmatprep.subr.mxu0 0.0
      %4743 = vmatpush1.msra.mxu0 0.0
      %4744 = vmatprep.subr.mxu0 0.0
      %4745 = vmatpush1.msra.mxu0 0.0
      %4746 = vmatprep.subr.mxu0 0.0
      %4747 = vmatpush1.msra.mxu0 0.0
      %4748 = vmatprep.subr.mxu0 0.0
      %4749 = vmatpush1.msra.mxu0 0.0
      %4750 = vmatprep.subr.mxu0 0.0
      %4751 = vmatpush1.msra.mxu0 0.0
      %4752 = vmatprep.subr.mxu0 0.0
      %4753 = vmatpush1.msra.mxu0 0.0
      %4754 = vmatprep.subr.mxu0 0.0
      %4755 = vmatpush1.msra.mxu0 0.0
      %4756 = vmatprep.subr.mxu0 0.0
      %4757 = vmatpush1.msra.mxu0 0.0
      %4758 = vmatprep.subr.mxu0 0.0
      %4759 = vmatpush1.msra.mxu0 0.0
      %4760 = vmatprep.subr.mxu0 0.0
      %4761 = vmatpush1.msra.mxu0 0.0
      %4762 = vmatprep.subr.mxu0 0.0
      %4763 = vmatpush1.msra.mxu0 0.0
      %4764 = vmatprep.subr.mxu0 0.0
      %4765 = vmatpush1.msra.mxu0 0.0
      %4766 = vmatprep.subr.mxu0 0.0
      %4767 = vmatpush1.msra.mxu0 0.0
      %4768 = vmatprep.subr.mxu0 0.0
      %4769 = vmatpush1.msra.mxu0 0.0
      %4770 = vmatprep.subr.mxu0 0.0
      %4771 = vmatpush1.msra.mxu0 0.0
      %4772 = vmatprep.mubr.f32.mxu0 0.0
      %4773 = vmatmul.mubr.f32.gmra.mrb[0].mxu0 %v4613
      %v4774 = vpop.f32.mrb[0].mxu0
      %v4775 = vadd.f32 0.0, %v4774
      %v4776 = vpop.f32.mrb[0].mxu0
      %4777 = vmatprep.mubr.f32.mxu0 0.0
      %4778 = vmatmul.mubr.f32.gmra.mrb[0].mxu0 %v4616
      %v4779 = vpop.f32.mrb[0].mxu0
      %v4780 = vadd.f32 0.0, %v4779
      %v4781 = vpop.f32.mrb[0].mxu0
      %4782 = vmatprep.mubr.f32.mxu0 0.0
      %4783 = vmatmul.mubr.f32.gmra.mrb[0].mxu0 %v4619
      %v4784 = vpop.f32.mrb[0].mxu0
      %v4785 = vadd.f32 0.0, %v4784
      %v4786 = vpop.f32.mrb[0].mxu0
      %4787 = vmatprep.mubr.f32.mxu0 0.0
      %4788 = vmatmul.mubr.f32.gmra.mrb[0].mxu0 %v4622
      %v4789 = vpop.f32.mrb[0].mxu0
      %v4790 = vadd.f32 0.0, %v4789
      %v4791 = vpop.f32.mrb[0].mxu0
      %4792 = vmatprep.mubr.f32.mxu0 0.0
      %4793 = vmatmul.mubr.f32.gmra.mrb[0].mxu0 %v4625
      %v4794 = vpop.f32.mrb[0].mxu0
      %v4795 = vadd.f32 0.0, %v4794
      %v4796 = vpop.f32.mrb[0].mxu0
      %4797 = vmatprep.mubr.f32.mxu0 0.0
      %4798 = vmatmul.mubr.f32.gmra.mrb[0].mxu0 %v4628
      %v4799 = vpop.f32.mrb[0].mxu0
      %v4800 = vadd.f32 0.0, %v4799
      %v4801 = vpop.f32.mrb[0].mxu0
      %4802 = vmatprep.mubr.f32.mxu0 0.0
      %4803 = vmatmul.mubr.f32.gmra.mrb[0].mxu0 %v4631
      %v4804 = vpop.f32.mrb[0].mxu0
      %v4805 = vadd.f32 0.0, %v4804
      %v4806 = vpop.f32.mrb[0].mxu0
      %4807 = vmatprep.mubr.f32.mxu0 0.0
      %4808 = vmatmul.mubr.f32.gmra.mrb[0].mxu0 %v4634
      %v4809 = vpop.f32.mrb[0].mxu0
      %v4810 = vadd.f32 0.0, %v4809
      %v4811 = vpop.f32.mrb[0].mxu0
      %4812 = vmatprep.mubr.f32.mxu0 0.0
      %4813 = vmatmul.mubr.f32.gmra.mrb[0].mxu0 %v4637
      %v4814 = vpop.f32.mrb[0].mxu0
      %v4815 = vadd.f32 0.0, %v4814
      %v4816 = vpop.f32.mrb[0].mxu0
      %4817 = vmatprep.mubr.f32.mxu0 0.0
      %4818 = vmatmul.mubr.f32.gmra.mrb[0].mxu0 %v4640
      %v4819 = vpop.f32.mrb[0].mxu0
      %v4820 = vadd.f32 0.0, %v4819
      %v4821 = vpop.f32.mrb[0].mxu0
      %4822 = vmatprep.mubr.f32.mxu0 0.0
      %4823 = vmatmul.mubr.f32.gmra.mrb[0].mxu0 %v4643
      %v4824 = vpop.f32.mrb[0].mxu0
      %v4825 = vadd.f32 0.0, %v4824
      %v4826 = vpop.f32.mrb[0].mxu0
      %4827 = vmatprep.mubr.f32.mxu0 0.0
      %4828 = vmatmul.mubr.f32.gmra.mrb[0].mxu0 %v4646
      %v4829 = vpop.f32.mrb[0].mxu0
      %v4830 = vadd.f32 0.0, %v4829
      %v4831 = vpop.f32.mrb[0].mxu0
      %4832 = vmatprep.mubr.f32.mxu0 0.0
      %4833 = vmatmul.mubr.f32.gmra.mrb[0].mxu0 %v4649
      %v4834 = vpop.f32.mrb[0].mxu0
      %v4835 = vadd.f32 0.0, %v4834
      %v4836 = vpop.f32.mrb[0].mxu0
      %4837 = vmatprep.mubr.f32.mxu0 0.0
      %4838 = vmatmul.mubr.f32.gmra.mrb[0].mxu0 %v4652
      %v4839 = vpop.f32.mrb[0].mxu0
      %v4840 = vadd.f32 0.0, %v4839
      %v4841 = vpop.f32.mrb[0].mxu0
      %4842 = vmatprep.mubr.f32.mxu0 0.0
      %4843 = vmatmul.mubr.f32.gmra.mrb[0].mxu0 %v4655
      %v4844 = vpop.f32.mrb[0].mxu0
      %v4845 = vadd.f32 0.0, %v4844
      %v4846 = vpop.f32.mrb[0].mxu0
      %4847 = vmatprep.mubr.f32.mxu0 0.0
      %4848 = vmatmul.mubr.f32.gmra.mrb[0].mxu0 %v4658
      %v4849 = vpop.f32.mrb[0].mxu0
      %v4850 = vadd.f32 0.0, %v4849
      %v4851 = vpop.f32.mrb[0].mxu0
      %4852 = vmatprep.mubr.f32.mxu0 0.0
      %4853 = vmatmul.mubr.f32.gmra.mrb[0].mxu0 %v4661
      %v4854 = vpop.f32.mrb[0].mxu0
      %v4855 = vadd.f32 0.0, %v4854
      %v4856 = vpop.f32.mrb[0].mxu0
      %4857 = vmatprep.mubr.f32.mxu0 0.0
      %4858 = vmatmul.mubr.f32.gmra.mrb[0].mxu0 %v4664
      %v4859 = vpop.f32.mrb[0].mxu0
      %v4860 = vadd.f32 0.0, %v4859
      %v4861 = vpop.f32.mrb[0].mxu0
      %4862 = vmatprep.mubr.f32.mxu0 0.0
      %4863 = vmatmul.mubr.f32.gmra.mrb[0].mxu0 %v4667
      %v4864 = vpop.f32.mrb[0].mxu0
      %v4865 = vadd.f32 0.0, %v4864
      %v4866 = vpop.f32.mrb[0].mxu0
      %4867 = vmatprep.mubr.f32.mxu0 0.0
      %4868 = vmatmul.mubr.f32.gmra.mrb[0].mxu0 %v4670
      %v4869 = vpop.f32.mrb[0].mxu0
      %v4870 = vadd.f32 0.0, %v4869
      %v4871 = vpop.f32.mrb[0].mxu0
      %4872 = vmatprep.mubr.f32.mxu0 0.0
      %4873 = vmatmul.mubr.f32.gmra.mrb[0].mxu0 %v4673
      %v4874 = vpop.f32.mrb[0].mxu0
      %v4875 = vadd.f32 0.0, %v4874
      %v4876 = vpop.f32.mrb[0].mxu0
      %4877 = vmatprep.mubr.f32.mxu0 0.0
      %4878 = vmatmul.mubr.f32.gmra.mrb[0].mxu0 %v4676
      %v4879 = vpop.f32.mrb[0].mxu0
      %v4880 = vadd.f32 0.0, %v4879
      %v4881 = vpop.f32.mrb[0].mxu0
      %4882 = vmatprep.mubr.f32.mxu0 0.0
      %4883 = vmatmul.mubr.f32.gmra.mrb[0].mxu0 %v4679
      %v4884 = vpop.f32.mrb[0].mxu0
      %v4885 = vadd.f32 0.0, %v4884
      %v4886 = vpop.f32.mrb[0].mxu0
      %4887 = vmatprep.mubr.f32.mxu0 0.0
      %4888 = vmatmul.mubr.f32.gmra.mrb[0].mxu0 %v4682
      %v4889 = vpop.f32.mrb[0].mxu0
      %v4890 = vadd.f32 0.0, %v4889
      %v4891 = vpop.f32.mrb[0].mxu0
      %4892 = vmatprep.mubr.f32.mxu0 0.0
      %4893 = vmatmul.mubr.f32.gmra.mrb[0].mxu0 %v4685
      %v4894 = vpop.f32.mrb[0].mxu0
      %v4895 = vadd.f32 0.0, %v4894
      %v4896 = vpop.f32.mrb[0].mxu0
      %4897 = vmatprep.mubr.f32.mxu0 0.0
      %4898 = vmatmul.mubr.f32.gmra.mrb[0].mxu0 %v4688
      %v4899 = vpop.f32.mrb[0].mxu0
      %v4900 = vadd.f32 0.0, %v4899
      %v4901 = vpop.f32.mrb[0].mxu0
      %4902 = vmatprep.mubr.f32.mxu0 0.0
      %4903 = vmatmul.mubr.f32.gmra.mrb[0].mxu0 %v4691
      %v4904 = vpop.f32.mrb[0].mxu0
      %v4905 = vadd.f32 0.0, %v4904
      %v4906 = vpop.f32.mrb[0].mxu0
      %4907 = vmatprep.mubr.f32.mxu0 0.0
      %4908 = vmatmul.mubr.f32.gmra.mrb[0].mxu0 %v4694
      %v4909 = vpop.f32.mrb[0].mxu0
      %v4910 = vadd.f32 0.0, %v4909
      %v4911 = vpop.f32.mrb[0].mxu0
      %4912 = vmatprep.mubr.f32.mxu0 0.0
      %4913 = vmatmul.mubr.f32.gmra.mrb[0].mxu0 %v4697
      %v4914 = vpop.f32.mrb[0].mxu0
      %v4915 = vadd.f32 0.0, %v4914
      %v4916 = vpop.f32.mrb[0].mxu0
      %4917 = vmatprep.mubr.f32.mxu0 0.0
      %4918 = vmatmul.mubr.f32.gmra.mrb[0].mxu0 %v4700
      %v4919 = vpop.f32.mrb[0].mxu0
      %v4920 = vadd.f32 0.0, %v4919
      %v4921 = vpop.f32.mrb[0].mxu0
      %4922 = vmatprep.mubr.f32.mxu0 0.0
      %4923 = vmatmul.mubr.f32.gmra.mrb[0].mxu0 %v4703
      %v4924 = vpop.f32.mrb[0].mxu0
      %v4925 = vadd.f32 0.0, %v4924
      %v4926 = vpop.f32.mrb[0].mxu0
      %4927 = vmatprep.mubr.f32.mxu0 0.0
      %4928 = vmatmul.mubr.f32.gmra.mrb[0].mxu0 %v4706
      %v4929 = vpop.f32.mrb[0].mxu0
      %v4930 = vadd.f32 0.0, %v4929
      %v4931 = vpop.f32.mrb[0].mxu0
      %4932 = vdwg.mxu0
      %v4933 = vadd.f32 %v4417, %v4775
      %v4934 = vadd.f32 %v4422, %v4780
      %v4935 = vadd.f32 %v4427, %v4785
      %v4936 = vadd.f32 %v4432, %v4790
      %v4937 = vadd.f32 %v4437, %v4795
      %v4938 = vadd.f32 %v4442, %v4800
      %v4939 = vadd.f32 %v4447, %v4805
      %v4940 = vadd.f32 %v4452, %v4810
      %v4941 = vadd.f32 %v4457, %v4815
      %v4942 = vadd.f32 %v4462, %v4820
      %v4943 = vadd.f32 %v4467, %v4825
      %v4944 = vadd.f32 %v4472, %v4830
      %v4945 = vadd.f32 %v4477, %v4835
      %v4946 = vadd.f32 %v4482, %v4840
      %v4947 = vadd.f32 %v4487, %v4845
      %v4948 = vadd.f32 %v4492, %v4850
      %v4949 = vadd.f32 %v4497, %v4855
      %v4950 = vadd.f32 %v4502, %v4860
      %v4951 = vadd.f32 %v4507, %v4865
      %v4952 = vadd.f32 %v4512, %v4870
      %v4953 = vadd.f32 %v4517, %v4875
      %v4954 = vadd.f32 %v4522, %v4880
      %v4955 = vadd.f32 %v4527, %v4885
      %v4956 = vadd.f32 %v4532, %v4890
      %v4957 = vadd.f32 %v4537, %v4895
      %v4958 = vadd.f32 %v4542, %v4900
      %v4959 = vadd.f32 %v4547, %v4905
      %v4960 = vadd.f32 %v4552, %v4910
      %v4961 = vadd.f32 %v4557, %v4915
      %v4962 = vadd.f32 %v4562, %v4920
      %v4963 = vadd.f32 %v4567, %v4925
      %v4964 = vadd.f32 %v4572, %v4930
      %v4965 = vld [vmem:[%s3827] sm:$0xff]
      %v4966 = vld [vmem:[%s3827 + $0x8] sm:$0xff]
      %v4967 = vld [vmem:[%s3827 + $0x18] sm:$0xff]
      %v4968 = vld [vmem:[%s3827 + $0x20] sm:$0xff]
      %v4969 = vld [vmem:[%s3827 + $0x30] sm:$0xff]
      %v4970 = vld [vmem:[%s3827 + $0x38] sm:$0xff]
      %v4971 = vld [vmem:[%s3827 + $0x48] sm:$0xff]
      %v4972 = vld [vmem:[%s3827 + $0x50] sm:$0xff]
      %v4973 = vld [vmem:[%s3827 + $0x60] sm:$0xff]
      %v4974 = vld [vmem:[%s3827 + $0x68] sm:$0xff]
      %v4975 = vld [vmem:[%s3827 + $0x78] sm:$0xff]
      %v4976 = vld [vmem:[%s3827 + $0x80] sm:$0xff]
      %v4977 = vld [vmem:[%s3827 + $0x90] sm:$0xff]
      %v4978 = vld [vmem:[%s3827 + $0x98] sm:$0xff]
      %v4979 = vld [vmem:[%s3827 + $0xa8] sm:$0xff]
      %v4980 = vld [vmem:[%s3827 + $0xb0] sm:$0xff]
      %v4981 = vld [vmem:[%s3827 + $0xc0] sm:$0xff]
      %v4982 = vld [vmem:[%s3827 + $0xc8] sm:$0xff]
      %v4983 = vld [vmem:[%s3827 + $0xd8] sm:$0xff]
      %v4984 = vld [vmem:[%s3827 + $0xe0] sm:$0xff]
      %v4985 = vld [vmem:[%s3827 + $0xf0] sm:$0xff]
      %v4986 = vld [vmem:[%s3827 + $0xf8] sm:$0xff]
      %v4987 = vld [vmem:[%s3827 + $0x108] sm:$0xff]
      %v4988 = vld [vmem:[%s3827 + $0x110] sm:$0xff]
      %v4989 = vld [vmem:[%s3827 + $0x120] sm:$0xff]
      %v4990 = vld [vmem:[%s3827 + $0x128] sm:$0xff]
      %v4991 = vld [vmem:[%s3827 + $0x138] sm:$0xff]
      %v4992 = vld [vmem:[%s3827 + $0x140] sm:$0xff]
      %v4993 = vld [vmem:[%s3827 + $0x150] sm:$0xff]
      %v4994 = vld [vmem:[%s3827 + $0x158] sm:$0xff]
      %v4995 = vld [vmem:[%s3827 + $0x168] sm:$0xff]
      %v4996 = vld [vmem:[%s3827 + $0x170] sm:$0xff]
      %s4997 = scalar_lea.vmem %s3, 96
      %v4998 = vld [vmem:[%s4997] sm:$0xff]
      %v4999 = vld [vmem:[%s4997 + $0x8] sm:$0xff]
      %v5000 = vld [vmem:[%s4997 + $0x10] sm:$0xff]
      %v5001 = vld [vmem:[%s4997 + $0x18] sm:$0xff]
      %v5003 = vsel %vm3771, %v4965, 0
      %v5006 = vsel %vm3771, %v4966, 0
      %v5009 = vsel %vm3771, %v4967, 0
      %v5012 = vsel %vm3771, %v4968, 0
      %v5015 = vsel %vm3771, %v4969, 0
      %v5018 = vsel %vm3771, %v4970, 0
      %v5021 = vsel %vm3771, %v4971, 0
      %v5024 = vsel %vm3771, %v4972, 0
      %v5027 = vsel %vm3771, %v4973, 0
      %v5030 = vsel %vm3771, %v4974, 0
      %v5033 = vsel %vm3771, %v4975, 0
      %v5036 = vsel %vm3771, %v4976, 0
      %v5039 = vsel %vm3771, %v4977, 0
      %v5042 = vsel %vm3771, %v4978, 0
      %v5045 = vsel %vm3771, %v4979, 0
      %v5048 = vsel %vm3771, %v4980, 0
      %v5051 = vsel %vm3771, %v4981, 0
      %v5054 = vsel %vm3771, %v4982, 0
      %v5057 = vsel %vm3771, %v4983, 0
      %v5060 = vsel %vm3771, %v4984, 0
      %v5063 = vsel %vm3771, %v4985, 0
      %v5066 = vsel %vm3771, %v4986, 0
      %v5069 = vsel %vm3771, %v4987, 0
      %v5072 = vsel %vm3771, %v4988, 0
      %v5075 = vsel %vm3771, %v4989, 0
      %v5078 = vsel %vm3771, %v4990, 0
      %v5081 = vsel %vm3771, %v4991, 0
      %v5084 = vsel %vm3771, %v4992, 0
      %v5087 = vsel %vm3771, %v4993, 0
      %v5090 = vsel %vm3771, %v4994, 0
      %v5093 = vsel %vm3771, %v4995, 0
      %v5096 = vsel %vm3771, %v4996, 0
      %5098 = vmatprep.subr.mxu0 0.0
      %5099 = vmatpush1.msra.mxu0 %v4998
      %5100 = vmatprep.subr.mxu0 0.0
      %5101 = vmatpush1.msra.mxu0 %v4999
      %5102 = vmatprep.subr.mxu0 0.0
      %5103 = vmatpush1.msra.mxu0 %v5000
      %5104 = vmatprep.subr.mxu0 0.0
      %5105 = vmatpush1.msra.mxu0 %v5001
      %5106 = vmatprep.subr.mxu0 0.0
      %5107 = vmatpush1.msra.mxu0 0.0
      %5108 = vmatprep.subr.mxu0 0.0
      %5109 = vmatpush1.msra.mxu0 0.0
      %5110 = vmatprep.subr.mxu0 0.0
      %5111 = vmatpush1.msra.mxu0 0.0
      %5112 = vmatprep.subr.mxu0 0.0
      %5113 = vmatpush1.msra.mxu0 0.0
      %5114 = vmatprep.subr.mxu0 0.0
      %5115 = vmatpush1.msra.mxu0 0.0
      %5116 = vmatprep.subr.mxu0 0.0
      %5117 = vmatpush1.msra.mxu0 0.0
      %5118 = vmatprep.subr.mxu0 0.0
      %5119 = vmatpush1.msra.mxu0 0.0
      %5120 = vmatprep.subr.mxu0 0.0
      %5121 = vmatpush1.msra.mxu0 0.0
      %5122 = vmatprep.subr.mxu0 0.0
      %5123 = vmatpush1.msra.mxu0 0.0
      %5124 = vmatprep.subr.mxu0 0.0
      %5125 = vmatpush1.msra.mxu0 0.0
      %5126 = vmatprep.subr.mxu0 0.0
      %5127 = vmatpush1.msra.mxu0 0.0
      %5128 = vmatprep.subr.mxu0 0.0
      %5129 = vmatpush1.msra.mxu0 0.0
      %5130 = vmatprep.subr.mxu0 0.0
      %5131 = vmatpush1.msra.mxu0 0.0
      %5132 = vmatprep.subr.mxu0 0.0
      %5133 = vmatpush1.msra.mxu0 0.0
      %5134 = vmatprep.subr.mxu0 0.0
      %5135 = vmatpush1.msra.mxu0 0.0
      %5136 = vmatprep.subr.mxu0 0.0
      %5137 = vmatpush1.msra.mxu0 0.0
      %5138 = vmatprep.subr.mxu0 0.0
      %5139 = vmatpush1.msra.mxu0 0.0
      %5140 = vmatprep.subr.mxu0 0.0
      %5141 = vmatpush1.msra.mxu0 0.0
      %5142 = vmatprep.subr.mxu0 0.0
      %5143 = vmatpush1.msra.mxu0 0.0
      %5144 = vmatprep.subr.mxu0 0.0
      %5145 = vmatpush1.msra.mxu0 0.0
      %5146 = vmatprep.subr.mxu0 0.0
      %5147 = vmatpush1.msra.mxu0 0.0
      %5148 = vmatprep.subr.mxu0 0.0
      %5149 = vmatpush1.msra.mxu0 0.0
      %5150 = vmatprep.subr.mxu0 0.0
      %5151 = vmatpush1.msra.mxu0 0.0
      %5152 = vmatprep.subr.mxu0 0.0
      %5153 = vmatpush1.msra.mxu0 0.0
      %5154 = vmatprep.subr.mxu0 0.0
      %5155 = vmatpush1.msra.mxu0 0.0
      %5156 = vmatprep.subr.mxu0 0.0
      %5157 = vmatpush1.msra.mxu0 0.0
      %5158 = vmatprep.subr.mxu0 0.0
      %5159 = vmatpush1.msra.mxu0 0.0
      %5160 = vmatprep.subr.mxu0 0.0
      %5161 = vmatpush1.msra.mxu0 0.0
      %5162 = vmatprep.mubr.f32.mxu0 0.0
      %5163 = vmatmul.mubr.f32.gmra.mrb[0].mxu0 %v5003
      %v5164 = vpop.f32.mrb[0].mxu0
      %v5165 = vadd.f32 0.0, %v5164
      %v5166 = vpop.f32.mrb[0].mxu0
      %5167 = vmatprep.mubr.f32.mxu0 0.0
      %5168 = vmatmul.mubr.f32.gmra.mrb[0].mxu0 %v5006
      %v5169 = vpop.f32.mrb[0].mxu0
      %v5170 = vadd.f32 0.0, %v5169
      %v5171 = vpop.f32.mrb[0].mxu0
      %5172 = vmatprep.mubr.f32.mxu0 0.0
      %5173 = vmatmul.mubr.f32.gmra.mrb[0].mxu0 %v5009
      %v5174 = vpop.f32.mrb[0].mxu0
      %v5175 = vadd.f32 0.0, %v5174
      %v5176 = vpop.f32.mrb[0].mxu0
      %5177 = vmatprep.mubr.f32.mxu0 0.0
      %5178 = vmatmul.mubr.f32.gmra.mrb[0].mxu0 %v5012
      %v5179 = vpop.f32.mrb[0].mxu0
      %v5180 = vadd.f32 0.0, %v5179
      %v5181 = vpop.f32.mrb[0].mxu0
      %5182 = vmatprep.mubr.f32.mxu0 0.0
      %5183 = vmatmul.mubr.f32.gmra.mrb[0].mxu0 %v5015
      %v5184 = vpop.f32.mrb[0].mxu0
      %v5185 = vadd.f32 0.0, %v5184
      %v5186 = vpop.f32.mrb[0].mxu0
      %5187 = vmatprep.mubr.f32.mxu0 0.0
      %5188 = vmatmul.mubr.f32.gmra.mrb[0].mxu0 %v5018
      %v5189 = vpop.f32.mrb[0].mxu0
      %v5190 = vadd.f32 0.0, %v5189
      %v5191 = vpop.f32.mrb[0].mxu0
      %5192 = vmatprep.mubr.f32.mxu0 0.0
      %5193 = vmatmul.mubr.f32.gmra.mrb[0].mxu0 %v5021
      %v5194 = vpop.f32.mrb[0].mxu0
      %v5195 = vadd.f32 0.0, %v5194
      %v5196 = vpop.f32.mrb[0].mxu0
      %5197 = vmatprep.mubr.f32.mxu0 0.0
      %5198 = vmatmul.mubr.f32.gmra.mrb[0].mxu0 %v5024
      %v5199 = vpop.f32.mrb[0].mxu0
      %v5200 = vadd.f32 0.0, %v5199
      %v5201 = vpop.f32.mrb[0].mxu0
      %5202 = vmatprep.mubr.f32.mxu0 0.0
      %5203 = vmatmul.mubr.f32.gmra.mrb[0].mxu0 %v5027
      %v5204 = vpop.f32.mrb[0].mxu0
      %v5205 = vadd.f32 0.0, %v5204
      %v5206 = vpop.f32.mrb[0].mxu0
      %5207 = vmatprep.mubr.f32.mxu0 0.0
      %5208 = vmatmul.mubr.f32.gmra.mrb[0].mxu0 %v5030
      %v5209 = vpop.f32.mrb[0].mxu0
      %v5210 = vadd.f32 0.0, %v5209
      %v5211 = vpop.f32.mrb[0].mxu0
      %5212 = vmatprep.mubr.f32.mxu0 0.0
      %5213 = vmatmul.mubr.f32.gmra.mrb[0].mxu0 %v5033
      %v5214 = vpop.f32.mrb[0].mxu0
      %v5215 = vadd.f32 0.0, %v5214
      %v5216 = vpop.f32.mrb[0].mxu0
      %5217 = vmatprep.mubr.f32.mxu0 0.0
      %5218 = vmatmul.mubr.f32.gmra.mrb[0].mxu0 %v5036
      %v5219 = vpop.f32.mrb[0].mxu0
      %v5220 = vadd.f32 0.0, %v5219
      %v5221 = vpop.f32.mrb[0].mxu0
      %5222 = vmatprep.mubr.f32.mxu0 0.0
      %5223 = vmatmul.mubr.f32.gmra.mrb[0].mxu0 %v5039
      %v5224 = vpop.f32.mrb[0].mxu0
      %v5225 = vadd.f32 0.0, %v5224
      %v5226 = vpop.f32.mrb[0].mxu0
      %5227 = vmatprep.mubr.f32.mxu0 0.0
      %5228 = vmatmul.mubr.f32.gmra.mrb[0].mxu0 %v5042
      %v5229 = vpop.f32.mrb[0].mxu0
      %v5230 = vadd.f32 0.0, %v5229
      %v5231 = vpop.f32.mrb[0].mxu0
      %5232 = vmatprep.mubr.f32.mxu0 0.0
      %5233 = vmatmul.mubr.f32.gmra.mrb[0].mxu0 %v5045
      %v5234 = vpop.f32.mrb[0].mxu0
      %v5235 = vadd.f32 0.0, %v5234
      %v5236 = vpop.f32.mrb[0].mxu0
      %5237 = vmatprep.mubr.f32.mxu0 0.0
      %5238 = vmatmul.mubr.f32.gmra.mrb[0].mxu0 %v5048
      %v5239 = vpop.f32.mrb[0].mxu0
      %v5240 = vadd.f32 0.0, %v5239
      %v5241 = vpop.f32.mrb[0].mxu0
      %5242 = vmatprep.mubr.f32.mxu0 0.0
      %5243 = vmatmul.mubr.f32.gmra.mrb[0].mxu0 %v5051
      %v5244 = vpop.f32.mrb[0].mxu0
      %v5245 = vadd.f32 0.0, %v5244
      %v5246 = vpop.f32.mrb[0].mxu0
      %5247 = vmatprep.mubr.f32.mxu0 0.0
      %5248 = vmatmul.mubr.f32.gmra.mrb[0].mxu0 %v5054
      %v5249 = vpop.f32.mrb[0].mxu0
      %v5250 = vadd.f32 0.0, %v5249
      %v5251 = vpop.f32.mrb[0].mxu0
      %5252 = vmatprep.mubr.f32.mxu0 0.0
      %5253 = vmatmul.mubr.f32.gmra.mrb[0].mxu0 %v5057
      %v5254 = vpop.f32.mrb[0].mxu0
      %v5255 = vadd.f32 0.0, %v5254
      %v5256 = vpop.f32.mrb[0].mxu0
      %5257 = vmatprep.mubr.f32.mxu0 0.0
      %5258 = vmatmul.mubr.f32.gmra.mrb[0].mxu0 %v5060
      %v5259 = vpop.f32.mrb[0].mxu0
      %v5260 = vadd.f32 0.0, %v5259
      %v5261 = vpop.f32.mrb[0].mxu0
      %5262 = vmatprep.mubr.f32.mxu0 0.0
      %5263 = vmatmul.mubr.f32.gmra.mrb[0].mxu0 %v5063
      %v5264 = vpop.f32.mrb[0].mxu0
      %v5265 = vadd.f32 0.0, %v5264
      %v5266 = vpop.f32.mrb[0].mxu0
      %5267 = vmatprep.mubr.f32.mxu0 0.0
      %5268 = vmatmul.mubr.f32.gmra.mrb[0].mxu0 %v5066
      %v5269 = vpop.f32.mrb[0].mxu0
      %v5270 = vadd.f32 0.0, %v5269
      %v5271 = vpop.f32.mrb[0].mxu0
      %5272 = vmatprep.mubr.f32.mxu0 0.0
      %5273 = vmatmul.mubr.f32.gmra.mrb[0].mxu0 %v5069
      %v5274 = vpop.f32.mrb[0].mxu0
      %v5275 = vadd.f32 0.0, %v5274
      %v5276 = vpop.f32.mrb[0].mxu0
      %5277 = vmatprep.mubr.f32.mxu0 0.0
      %5278 = vmatmul.mubr.f32.gmra.mrb[0].mxu0 %v5072
      %v5279 = vpop.f32.mrb[0].mxu0
      %v5280 = vadd.f32 0.0, %v5279
      %v5281 = vpop.f32.mrb[0].mxu0
      %5282 = vmatprep.mubr.f32.mxu0 0.0
      %5283 = vmatmul.mubr.f32.gmra.mrb[0].mxu0 %v5075
      %v5284 = vpop.f32.mrb[0].mxu0
      %v5285 = vadd.f32 0.0, %v5284
      %v5286 = vpop.f32.mrb[0].mxu0
      %5287 = vmatprep.mubr.f32.mxu0 0.0
      %5288 = vmatmul.mubr.f32.gmra.mrb[0].mxu0 %v5078
      %v5289 = vpop.f32.mrb[0].mxu0
      %v5290 = vadd.f32 0.0, %v5289
      %v5291 = vpop.f32.mrb[0].mxu0
      %5292 = vmatprep.mubr.f32.mxu0 0.0
      %5293 = vmatmul.mubr.f32.gmra.mrb[0].mxu0 %v5081
      %v5294 = vpop.f32.mrb[0].mxu0
      %v5295 = vadd.f32 0.0, %v5294
      %v5296 = vpop.f32.mrb[0].mxu0
      %5297 = vmatprep.mubr.f32.mxu0 0.0
      %5298 = vmatmul.mubr.f32.gmra.mrb[0].mxu0 %v5084
      %v5299 = vpop.f32.mrb[0].mxu0
      %v5300 = vadd.f32 0.0, %v5299
      %v5301 = vpop.f32.mrb[0].mxu0
      %5302 = vmatprep.mubr.f32.mxu0 0.0
      %5303 = vmatmul.mubr.f32.gmra.mrb[0].mxu0 %v5087
      %v5304 = vpop.f32.mrb[0].mxu0
      %v5305 = vadd.f32 0.0, %v5304
      %v5306 = vpop.f32.mrb[0].mxu0
      %5307 = vmatprep.mubr.f32.mxu0 0.0
      %5308 = vmatmul.mubr.f32.gmra.mrb[0].mxu0 %v5090
      %v5309 = vpop.f32.mrb[0].mxu0
      %v5310 = vadd.f32 0.0, %v5309
      %v5311 = vpop.f32.mrb[0].mxu0
      %5312 = vmatprep.mubr.f32.mxu0 0.0
      %5313 = vmatmul.mubr.f32.gmra.mrb[0].mxu0 %v5093
      %v5314 = vpop.f32.mrb[0].mxu0
      %v5315 = vadd.f32 0.0, %v5314
      %v5316 = vpop.f32.mrb[0].mxu0
      %5317 = vmatprep.mubr.f32.mxu0 0.0
      %5318 = vmatmul.mubr.f32.gmra.mrb[0].mxu0 %v5096
      %v5319 = vpop.f32.mrb[0].mxu0
      %v5320 = vadd.f32 0.0, %v5319
      %v5321 = vpop.f32.mrb[0].mxu0
      %5322 = vdwg.mxu0
      %v5323 = vadd.f32 %v4933, %v5165
      %v5324 = vadd.f32 %v4934, %v5170
      %v5325 = vadd.f32 %v4935, %v5175
      %v5326 = vadd.f32 %v4936, %v5180
      %v5327 = vadd.f32 %v4937, %v5185
      %v5328 = vadd.f32 %v4938, %v5190
      %v5329 = vadd.f32 %v4939, %v5195
      %v5330 = vadd.f32 %v4940, %v5200
      %v5331 = vadd.f32 %v4941, %v5205
      %v5332 = vadd.f32 %v4942, %v5210
      %v5333 = vadd.f32 %v4943, %v5215
      %v5334 = vadd.f32 %v4944, %v5220
      %v5335 = vadd.f32 %v4945, %v5225
      %v5336 = vadd.f32 %v4946, %v5230
      %v5337 = vadd.f32 %v4947, %v5235
      %v5338 = vadd.f32 %v4948, %v5240
      %v5339 = vadd.f32 %v4949, %v5245
      %v5340 = vadd.f32 %v4950, %v5250
      %v5341 = vadd.f32 %v4951, %v5255
      %v5342 = vadd.f32 %v4952, %v5260
      %v5343 = vadd.f32 %v4953, %v5265
      %v5344 = vadd.f32 %v4954, %v5270
      %v5345 = vadd.f32 %v4955, %v5275
      %v5346 = vadd.f32 %v4956, %v5280
      %v5347 = vadd.f32 %v4957, %v5285
      %v5348 = vadd.f32 %v4958, %v5290
      %v5349 = vadd.f32 %v4959, %v5295
      %v5350 = vadd.f32 %v4960, %v5300
      %v5351 = vadd.f32 %v4961, %v5305
      %v5352 = vadd.f32 %v4962, %v5310
      %v5353 = vadd.f32 %v4963, %v5315
      %v5354 = vadd.f32 %v4964, %v5320
      %v5355 = vld [vmem:[%s3827 + $0x1] sm:$0xff]
      %v5356 = vld [vmem:[%s3827 + $0x9] sm:$0xff]
      %v5357 = vld [vmem:[%s3827 + $0x19] sm:$0xff]
      %v5358 = vld [vmem:[%s3827 + $0x21] sm:$0xff]
      %v5359 = vld [vmem:[%s3827 + $0x31] sm:$0xff]
      %v5360 = vld [vmem:[%s3827 + $0x39] sm:$0xff]
      %v5361 = vld [vmem:[%s3827 + $0x49] sm:$0xff]
      %v5362 = vld [vmem:[%s3827 + $0x51] sm:$0xff]
      %v5363 = vld [vmem:[%s3827 + $0x61] sm:$0xff]
      %v5364 = vld [vmem:[%s3827 + $0x69] sm:$0xff]
      %v5365 = vld [vmem:[%s3827 + $0x79] sm:$0xff]
      %v5366 = vld [vmem:[%s3827 + $0x81] sm:$0xff]
      %v5367 = vld [vmem:[%s3827 + $0x91] sm:$0xff]
      %v5368 = vld [vmem:[%s3827 + $0x99] sm:$0xff]
      %v5369 = vld [vmem:[%s3827 + $0xa9] sm:$0xff]
      %v5370 = vld [vmem:[%s3827 + $0xb1] sm:$0xff]
      %v5371 = vld [vmem:[%s3827 + $0xc1] sm:$0xff]
      %v5372 = vld [vmem:[%s3827 + $0xc9] sm:$0xff]
      %v5373 = vld [vmem:[%s3827 + $0xd9] sm:$0xff]
      %v5374 = vld [vmem:[%s3827 + $0xe1] sm:$0xff]
      %v5375 = vld [vmem:[%s3827 + $0xf1] sm:$0xff]
      %v5376 = vld [vmem:[%s3827 + $0xf9] sm:$0xff]
      %v5377 = vld [vmem:[%s3827 + $0x109] sm:$0xff]
      %v5378 = vld [vmem:[%s3827 + $0x111] sm:$0xff]
      %v5379 = vld [vmem:[%s3827 + $0x121] sm:$0xff]
      %v5380 = vld [vmem:[%s3827 + $0x129] sm:$0xff]
      %v5381 = vld [vmem:[%s3827 + $0x139] sm:$0xff]
      %v5382 = vld [vmem:[%s3827 + $0x141] sm:$0xff]
      %v5383 = vld [vmem:[%s3827 + $0x151] sm:$0xff]
      %v5384 = vld [vmem:[%s3827 + $0x159] sm:$0xff]
      %v5385 = vld [vmem:[%s3827 + $0x169] sm:$0xff]
      %v5386 = vld [vmem:[%s3827 + $0x171] sm:$0xff]
      %s5387 = scalar_lea.vmem %s3, 128
      %v5388 = vld [vmem:[%s5387] sm:$0xff]
      %v5389 = vld [vmem:[%s5387 + $0x8] sm:$0xff]
      %v5390 = vld [vmem:[%s5387 + $0x10] sm:$0xff]
      %v5391 = vld [vmem:[%s5387 + $0x18] sm:$0xff]
      %v5393 = vsel %vm3771, %v5355, 0
      %v5396 = vsel %vm3771, %v5356, 0
      %v5399 = vsel %vm3771, %v5357, 0
      %v5402 = vsel %vm3771, %v5358, 0
      %v5405 = vsel %vm3771, %v5359, 0
      %v5408 = vsel %vm3771, %v5360, 0
      %v5411 = vsel %vm3771, %v5361, 0
      %v5414 = vsel %vm3771, %v5362, 0
      %v5417 = vsel %vm3771, %v5363, 0
      %v5420 = vsel %vm3771, %v5364, 0
      %v5423 = vsel %vm3771, %v5365, 0
      %v5426 = vsel %vm3771, %v5366, 0
      %v5429 = vsel %vm3771, %v5367, 0
      %v5432 = vsel %vm3771, %v5368, 0
      %v5435 = vsel %vm3771, %v5369, 0
      %v5438 = vsel %vm3771, %v5370, 0
      %v5441 = vsel %vm3771, %v5371, 0
      %v5444 = vsel %vm3771, %v5372, 0
      %v5447 = vsel %vm3771, %v5373, 0
      %v5450 = vsel %vm3771, %v5374, 0
      %v5453 = vsel %vm3771, %v5375, 0
      %v5456 = vsel %vm3771, %v5376, 0
      %v5459 = vsel %vm3771, %v5377, 0
      %v5462 = vsel %vm3771, %v5378, 0
      %v5465 = vsel %vm3771, %v5379, 0
      %v5468 = vsel %vm3771, %v5380, 0
      %v5471 = vsel %vm3771, %v5381, 0
      %v5474 = vsel %vm3771, %v5382, 0
      %v5477 = vsel %vm3771, %v5383, 0
      %v5480 = vsel %vm3771, %v5384, 0
      %v5483 = vsel %vm3771, %v5385, 0
      %v5486 = vsel %vm3771, %v5386, 0
      %5488 = vmatprep.subr.mxu0 0.0
      %5489 = vmatpush1.msra.mxu0 %v5388
      %5490 = vmatprep.subr.mxu0 0.0
      %5491 = vmatpush1.msra.mxu0 %v5389
      %5492 = vmatprep.subr.mxu0 0.0
      %5493 = vmatpush1.msra.mxu0 %v5390
      %5494 = vmatprep.subr.mxu0 0.0
      %5495 = vmatpush1.msra.mxu0 %v5391
      %5496 = vmatprep.subr.mxu0 0.0
      %5497 = vmatpush1.msra.mxu0 0.0
      %5498 = vmatprep.subr.mxu0 0.0
      %5499 = vmatpush1.msra.mxu0 0.0
      %5500 = vmatprep.subr.mxu0 0.0
      %5501 = vmatpush1.msra.mxu0 0.0
      %5502 = vmatprep.subr.mxu0 0.0
      %5503 = vmatpush1.msra.mxu0 0.0
      %5504 = vmatprep.subr.mxu0 0.0
      %5505 = vmatpush1.msra.mxu0 0.0
      %5506 = vmatprep.subr.mxu0 0.0
      %5507 = vmatpush1.msra.mxu0 0.0
      %5508 = vmatprep.subr.mxu0 0.0
      %5509 = vmatpush1.msra.mxu0 0.0
      %5510 = vmatprep.subr.mxu0 0.0
      %5511 = vmatpush1.msra.mxu0 0.0
      %5512 = vmatprep.subr.mxu0 0.0
      %5513 = vmatpush1.msra.mxu0 0.0
      %5514 = vmatprep.subr.mxu0 0.0
      %5515 = vmatpush1.msra.mxu0 0.0
      %5516 = vmatprep.subr.mxu0 0.0
      %5517 = vmatpush1.msra.mxu0 0.0
      %5518 = vmatprep.subr.mxu0 0.0
      %5519 = vmatpush1.msra.mxu0 0.0
      %5520 = vmatprep.subr.mxu0 0.0
      %5521 = vmatpush1.msra.mxu0 0.0
      %5522 = vmatprep.subr.mxu0 0.0
      %5523 = vmatpush1.msra.mxu0 0.0
      %5524 = vmatprep.subr.mxu0 0.0
      %5525 = vmatpush1.msra.mxu0 0.0
      %5526 = vmatprep.subr.mxu0 0.0
      %5527 = vmatpush1.msra.mxu0 0.0
      %5528 = vmatprep.subr.mxu0 0.0
      %5529 = vmatpush1.msra.mxu0 0.0
      %5530 = vmatprep.subr.mxu0 0.0
      %5531 = vmatpush1.msra.mxu0 0.0
      %5532 = vmatprep.subr.mxu0 0.0
      %5533 = vmatpush1.msra.mxu0 0.0
      %5534 = vmatprep.subr.mxu0 0.0
      %5535 = vmatpush1.msra.mxu0 0.0
      %5536 = vmatprep.subr.mxu0 0.0
      %5537 = vmatpush1.msra.mxu0 0.0
      %5538 = vmatprep.subr.mxu0 0.0
      %5539 = vmatpush1.msra.mxu0 0.0
      %5540 = vmatprep.subr.mxu0 0.0
      %5541 = vmatpush1.msra.mxu0 0.0
      %5542 = vmatprep.subr.mxu0 0.0
      %5543 = vmatpush1.msra.mxu0 0.0
      %5544 = vmatprep.subr.mxu0 0.0
      %5545 = vmatpush1.msra.mxu0 0.0
      %5546 = vmatprep.subr.mxu0 0.0
      %5547 = vmatpush1.msra.mxu0 0.0
      %5548 = vmatprep.subr.mxu0 0.0
      %5549 = vmatpush1.msra.mxu0 0.0
      %5550 = vmatprep.subr.mxu0 0.0
      %5551 = vmatpush1.msra.mxu0 0.0
      %5552 = vmatprep.mubr.f32.mxu0 0.0
      %5553 = vmatmul.mubr.f32.gmra.mrb[0].mxu0 %v5393
      %v5554 = vpop.f32.mrb[0].mxu0
      %v5555 = vadd.f32 0.0, %v5554
      %v5556 = vpop.f32.mrb[0].mxu0
      %5557 = vmatprep.mubr.f32.mxu0 0.0
      %5558 = vmatmul.mubr.f32.gmra.mrb[0].mxu0 %v5396
      %v5559 = vpop.f32.mrb[0].mxu0
      %v5560 = vadd.f32 0.0, %v5559
      %v5561 = vpop.f32.mrb[0].mxu0
      %5562 = vmatprep.mubr.f32.mxu0 0.0
      %5563 = vmatmul.mubr.f32.gmra.mrb[0].mxu0 %v5399
      %v5564 = vpop.f32.mrb[0].mxu0
      %v5565 = vadd.f32 0.0, %v5564
      %v5566 = vpop.f32.mrb[0].mxu0
      %5567 = vmatprep.mubr.f32.mxu0 0.0
      %5568 = vmatmul.mubr.f32.gmra.mrb[0].mxu0 %v5402
      %v5569 = vpop.f32.mrb[0].mxu0
      %v5570 = vadd.f32 0.0, %v5569
      %v5571 = vpop.f32.mrb[0].mxu0
      %5572 = vmatprep.mubr.f32.mxu0 0.0
      %5573 = vmatmul.mubr.f32.gmra.mrb[0].mxu0 %v5405
      %v5574 = vpop.f32.mrb[0].mxu0
      %v5575 = vadd.f32 0.0, %v5574
      %v5576 = vpop.f32.mrb[0].mxu0
      %5577 = vmatprep.mubr.f32.mxu0 0.0
      %5578 = vmatmul.mubr.f32.gmra.mrb[0].mxu0 %v5408
      %v5579 = vpop.f32.mrb[0].mxu0
      %v5580 = vadd.f32 0.0, %v5579
      %v5581 = vpop.f32.mrb[0].mxu0
      %5582 = vmatprep.mubr.f32.mxu0 0.0
      %5583 = vmatmul.mubr.f32.gmra.mrb[0].mxu0 %v5411
      %v5584 = vpop.f32.mrb[0].mxu0
      %v5585 = vadd.f32 0.0, %v5584
      %v5586 = vpop.f32.mrb[0].mxu0
      %5587 = vmatprep.mubr.f32.mxu0 0.0
      %5588 = vmatmul.mubr.f32.gmra.mrb[0].mxu0 %v5414
      %v5589 = vpop.f32.mrb[0].mxu0
      %v5590 = vadd.f32 0.0, %v5589
      %v5591 = vpop.f32.mrb[0].mxu0
      %5592 = vmatprep.mubr.f32.mxu0 0.0
      %5593 = vmatmul.mubr.f32.gmra.mrb[0].mxu0 %v5417
      %v5594 = vpop.f32.mrb[0].mxu0
      %v5595 = vadd.f32 0.0, %v5594
      %v5596 = vpop.f32.mrb[0].mxu0
      %5597 = vmatprep.mubr.f32.mxu0 0.0
      %5598 = vmatmul.mubr.f32.gmra.mrb[0].mxu0 %v5420
      %v5599 = vpop.f32.mrb[0].mxu0
      %v5600 = vadd.f32 0.0, %v5599
      %v5601 = vpop.f32.mrb[0].mxu0
      %5602 = vmatprep.mubr.f32.mxu0 0.0
      %5603 = vmatmul.mubr.f32.gmra.mrb[0].mxu0 %v5423
      %v5604 = vpop.f32.mrb[0].mxu0
      %v5605 = vadd.f32 0.0, %v5604
      %v5606 = vpop.f32.mrb[0].mxu0
      %5607 = vmatprep.mubr.f32.mxu0 0.0
      %5608 = vmatmul.mubr.f32.gmra.mrb[0].mxu0 %v5426
      %v5609 = vpop.f32.mrb[0].mxu0
      %v5610 = vadd.f32 0.0, %v5609
      %v5611 = vpop.f32.mrb[0].mxu0
      %5612 = vmatprep.mubr.f32.mxu0 0.0
      %5613 = vmatmul.mubr.f32.gmra.mrb[0].mxu0 %v5429
      %v5614 = vpop.f32.mrb[0].mxu0
      %v5615 = vadd.f32 0.0, %v5614
      %v5616 = vpop.f32.mrb[0].mxu0
      %5617 = vmatprep.mubr.f32.mxu0 0.0
      %5618 = vmatmul.mubr.f32.gmra.mrb[0].mxu0 %v5432
      %v5619 = vpop.f32.mrb[0].mxu0
      %v5620 = vadd.f32 0.0, %v5619
      %v5621 = vpop.f32.mrb[0].mxu0
      %5622 = vmatprep.mubr.f32.mxu0 0.0
      %5623 = vmatmul.mubr.f32.gmra.mrb[0].mxu0 %v5435
      %v5624 = vpop.f32.mrb[0].mxu0
      %v5625 = vadd.f32 0.0, %v5624
      %v5626 = vpop.f32.mrb[0].mxu0
      %5627 = vmatprep.mubr.f32.mxu0 0.0
      %5628 = vmatmul.mubr.f32.gmra.mrb[0].mxu0 %v5438
      %v5629 = vpop.f32.mrb[0].mxu0
      %v5630 = vadd.f32 0.0, %v5629
      %v5631 = vpop.f32.mrb[0].mxu0
      %5632 = vmatprep.mubr.f32.mxu0 0.0
      %5633 = vmatmul.mubr.f32.gmra.mrb[0].mxu0 %v5441
      %v5634 = vpop.f32.mrb[0].mxu0
      %v5635 = vadd.f32 0.0, %v5634
      %v5636 = vpop.f32.mrb[0].mxu0
      %5637 = vmatprep.mubr.f32.mxu0 0.0
      %5638 = vmatmul.mubr.f32.gmra.mrb[0].mxu0 %v5444
      %v5639 = vpop.f32.mrb[0].mxu0
      %v5640 = vadd.f32 0.0, %v5639
      %v5641 = vpop.f32.mrb[0].mxu0
      %5642 = vmatprep.mubr.f32.mxu0 0.0
      %5643 = vmatmul.mubr.f32.gmra.mrb[0].mxu0 %v5447
      %v5644 = vpop.f32.mrb[0].mxu0
      %v5645 = vadd.f32 0.0, %v5644
      %v5646 = vpop.f32.mrb[0].mxu0
      %5647 = vmatprep.mubr.f32.mxu0 0.0
      %5648 = vmatmul.mubr.f32.gmra.mrb[0].mxu0 %v5450
      %v5649 = vpop.f32.mrb[0].mxu0
      %v5650 = vadd.f32 0.0, %v5649
      %v5651 = vpop.f32.mrb[0].mxu0
      %5652 = vmatprep.mubr.f32.mxu0 0.0
      %5653 = vmatmul.mubr.f32.gmra.mrb[0].mxu0 %v5453
      %v5654 = vpop.f32.mrb[0].mxu0
      %v5655 = vadd.f32 0.0, %v5654
      %v5656 = vpop.f32.mrb[0].mxu0
      %5657 = vmatprep.mubr.f32.mxu0 0.0
      %5658 = vmatmul.mubr.f32.gmra.mrb[0].mxu0 %v5456
      %v5659 = vpop.f32.mrb[0].mxu0
      %v5660 = vadd.f32 0.0, %v5659
      %v5661 = vpop.f32.mrb[0].mxu0
      %5662 = vmatprep.mubr.f32.mxu0 0.0
      %5663 = vmatmul.mubr.f32.gmra.mrb[0].mxu0 %v5459
      %v5664 = vpop.f32.mrb[0].mxu0
      %v5665 = vadd.f32 0.0, %v5664
      %v5666 = vpop.f32.mrb[0].mxu0
      %5667 = vmatprep.mubr.f32.mxu0 0.0
      %5668 = vmatmul.mubr.f32.gmra.mrb[0].mxu0 %v5462
      %v5669 = vpop.f32.mrb[0].mxu0
      %v5670 = vadd.f32 0.0, %v5669
      %v5671 = vpop.f32.mrb[0].mxu0
      %5672 = vmatprep.mubr.f32.mxu0 0.0
      %5673 = vmatmul.mubr.f32.gmra.mrb[0].mxu0 %v5465
      %v5674 = vpop.f32.mrb[0].mxu0
      %v5675 = vadd.f32 0.0, %v5674
      %v5676 = vpop.f32.mrb[0].mxu0
      %5677 = vmatprep.mubr.f32.mxu0 0.0
      %5678 = vmatmul.mubr.f32.gmra.mrb[0].mxu0 %v5468
      %v5679 = vpop.f32.mrb[0].mxu0
      %v5680 = vadd.f32 0.0, %v5679
      %v5681 = vpop.f32.mrb[0].mxu0
      %5682 = vmatprep.mubr.f32.mxu0 0.0
      %5683 = vmatmul.mubr.f32.gmra.mrb[0].mxu0 %v5471
      %v5684 = vpop.f32.mrb[0].mxu0
      %v5685 = vadd.f32 0.0, %v5684
      %v5686 = vpop.f32.mrb[0].mxu0
      %5687 = vmatprep.mubr.f32.mxu0 0.0
      %5688 = vmatmul.mubr.f32.gmra.mrb[0].mxu0 %v5474
      %v5689 = vpop.f32.mrb[0].mxu0
      %v5690 = vadd.f32 0.0, %v5689
      %v5691 = vpop.f32.mrb[0].mxu0
      %5692 = vmatprep.mubr.f32.mxu0 0.0
      %5693 = vmatmul.mubr.f32.gmra.mrb[0].mxu0 %v5477
      %v5694 = vpop.f32.mrb[0].mxu0
      %v5695 = vadd.f32 0.0, %v5694
      %v5696 = vpop.f32.mrb[0].mxu0
      %5697 = vmatprep.mubr.f32.mxu0 0.0
      %5698 = vmatmul.mubr.f32.gmra.mrb[0].mxu0 %v5480
      %v5699 = vpop.f32.mrb[0].mxu0
      %v5700 = vadd.f32 0.0, %v5699
      %v5701 = vpop.f32.mrb[0].mxu0
      %5702 = vmatprep.mubr.f32.mxu0 0.0
      %5703 = vmatmul.mubr.f32.gmra.mrb[0].mxu0 %v5483
      %v5704 = vpop.f32.mrb[0].mxu0
      %v5705 = vadd.f32 0.0, %v5704
      %v5706 = vpop.f32.mrb[0].mxu0
      %5707 = vmatprep.mubr.f32.mxu0 0.0
      %5708 = vmatmul.mubr.f32.gmra.mrb[0].mxu0 %v5486
      %v5709 = vpop.f32.mrb[0].mxu0
      %v5710 = vadd.f32 0.0, %v5709
      %v5711 = vpop.f32.mrb[0].mxu0
      %5712 = vdwg.mxu0
      %v5713 = vadd.f32 %v5323, %v5555
      %v5714 = vadd.f32 %v5324, %v5560
      %v5715 = vadd.f32 %v5325, %v5565
      %v5716 = vadd.f32 %v5326, %v5570
      %v5717 = vadd.f32 %v5327, %v5575
      %v5718 = vadd.f32 %v5328, %v5580
      %v5719 = vadd.f32 %v5329, %v5585
      %v5720 = vadd.f32 %v5330, %v5590
      %v5721 = vadd.f32 %v5331, %v5595
      %v5722 = vadd.f32 %v5332, %v5600
      %v5723 = vadd.f32 %v5333, %v5605
      %v5724 = vadd.f32 %v5334, %v5610
      %v5725 = vadd.f32 %v5335, %v5615
      %v5726 = vadd.f32 %v5336, %v5620
      %v5727 = vadd.f32 %v5337, %v5625
      %v5728 = vadd.f32 %v5338, %v5630
      %v5729 = vadd.f32 %v5339, %v5635
      %v5730 = vadd.f32 %v5340, %v5640
      %v5731 = vadd.f32 %v5341, %v5645
      %v5732 = vadd.f32 %v5342, %v5650
      %v5733 = vadd.f32 %v5343, %v5655
      %v5734 = vadd.f32 %v5344, %v5660
      %v5735 = vadd.f32 %v5345, %v5665
      %v5736 = vadd.f32 %v5346, %v5670
      %v5737 = vadd.f32 %v5347, %v5675
      %v5738 = vadd.f32 %v5348, %v5680
      %v5739 = vadd.f32 %v5349, %v5685
      %v5740 = vadd.f32 %v5350, %v5690
      %v5741 = vadd.f32 %v5351, %v5695
      %v5742 = vadd.f32 %v5352, %v5700
      %v5743 = vadd.f32 %v5353, %v5705
      %v5744 = vadd.f32 %v5354, %v5710
      %v5745 = vld [vmem:[%s3827 + $0x2] sm:$0xff]
      %v5746 = vld [vmem:[%s3827 + $0xa] sm:$0xff]
      %v5747 = vld [vmem:[%s3827 + $0x1a] sm:$0xff]
      %v5748 = vld [vmem:[%s3827 + $0x22] sm:$0xff]
      %v5749 = vld [vmem:[%s3827 + $0x32] sm:$0xff]
      %v5750 = vld [vmem:[%s3827 + $0x3a] sm:$0xff]
      %v5751 = vld [vmem:[%s3827 + $0x4a] sm:$0xff]
      %v5752 = vld [vmem:[%s3827 + $0x52] sm:$0xff]
      %v5753 = vld [vmem:[%s3827 + $0x62] sm:$0xff]
      %v5754 = vld [vmem:[%s3827 + $0x6a] sm:$0xff]
      %v5755 = vld [vmem:[%s3827 + $0x7a] sm:$0xff]
      %v5756 = vld [vmem:[%s3827 + $0x82] sm:$0xff]
      %v5757 = vld [vmem:[%s3827 + $0x92] sm:$0xff]
      %v5758 = vld [vmem:[%s3827 + $0x9a] sm:$0xff]
      %v5759 = vld [vmem:[%s3827 + $0xaa] sm:$0xff]
      %v5760 = vld [vmem:[%s3827 + $0xb2] sm:$0xff]
      %v5761 = vld [vmem:[%s3827 + $0xc2] sm:$0xff]
      %v5762 = vld [vmem:[%s3827 + $0xca] sm:$0xff]
      %v5763 = vld [vmem:[%s3827 + $0xda] sm:$0xff]
      %v5764 = vld [vmem:[%s3827 + $0xe2] sm:$0xff]
      %v5765 = vld [vmem:[%s3827 + $0xf2] sm:$0xff]
      %v5766 = vld [vmem:[%s3827 + $0xfa] sm:$0xff]
      %v5767 = vld [vmem:[%s3827 + $0x10a] sm:$0xff]
      %v5768 = vld [vmem:[%s3827 + $0x112] sm:$0xff]
      %v5769 = vld [vmem:[%s3827 + $0x122] sm:$0xff]
      %v5770 = vld [vmem:[%s3827 + $0x12a] sm:$0xff]
      %v5771 = vld [vmem:[%s3827 + $0x13a] sm:$0xff]
      %v5772 = vld [vmem:[%s3827 + $0x142] sm:$0xff]
      %v5773 = vld [vmem:[%s3827 + $0x152] sm:$0xff]
      %v5774 = vld [vmem:[%s3827 + $0x15a] sm:$0xff]
      %v5775 = vld [vmem:[%s3827 + $0x16a] sm:$0xff]
      %v5776 = vld [vmem:[%s3827 + $0x172] sm:$0xff]
      %s5777 = scalar_lea.vmem %s3, 160
      %v5778 = vld [vmem:[%s5777] sm:$0xff]
      %v5779 = vld [vmem:[%s5777 + $0x8] sm:$0xff]
      %v5780 = vld [vmem:[%s5777 + $0x10] sm:$0xff]
      %v5781 = vld [vmem:[%s5777 + $0x18] sm:$0xff]
      %v5783 = vsel %vm3771, %v5745, 0
      %v5786 = vsel %vm3771, %v5746, 0
      %v5789 = vsel %vm3771, %v5747, 0
      %v5792 = vsel %vm3771, %v5748, 0
      %v5795 = vsel %vm3771, %v5749, 0
      %v5798 = vsel %vm3771, %v5750, 0
      %v5801 = vsel %vm3771, %v5751, 0
      %v5804 = vsel %vm3771, %v5752, 0
      %v5807 = vsel %vm3771, %v5753, 0
      %v5810 = vsel %vm3771, %v5754, 0
      %v5813 = vsel %vm3771, %v5755, 0
      %v5816 = vsel %vm3771, %v5756, 0
      %v5819 = vsel %vm3771, %v5757, 0
      %v5822 = vsel %vm3771, %v5758, 0
      %v5825 = vsel %vm3771, %v5759, 0
      %v5828 = vsel %vm3771, %v5760, 0
      %v5831 = vsel %vm3771, %v5761, 0
      %v5834 = vsel %vm3771, %v5762, 0
      %v5837 = vsel %vm3771, %v5763, 0
      %v5840 = vsel %vm3771, %v5764, 0
      %v5843 = vsel %vm3771, %v5765, 0
      %v5846 = vsel %vm3771, %v5766, 0
      %v5849 = vsel %vm3771, %v5767, 0
      %v5852 = vsel %vm3771, %v5768, 0
      %v5855 = vsel %vm3771, %v5769, 0
      %v5858 = vsel %vm3771, %v5770, 0
      %v5861 = vsel %vm3771, %v5771, 0
      %v5864 = vsel %vm3771, %v5772, 0
      %v5867 = vsel %vm3771, %v5773, 0
      %v5870 = vsel %vm3771, %v5774, 0
      %v5873 = vsel %vm3771, %v5775, 0
      %v5876 = vsel %vm3771, %v5776, 0
      %5878 = vmatprep.subr.mxu0 0.0
      %5879 = vmatpush1.msra.mxu0 %v5778
      %5880 = vmatprep.subr.mxu0 0.0
      %5881 = vmatpush1.msra.mxu0 %v5779
      %5882 = vmatprep.subr.mxu0 0.0
      %5883 = vmatpush1.msra.mxu0 %v5780
      %5884 = vmatprep.subr.mxu0 0.0
      %5885 = vmatpush1.msra.mxu0 %v5781
      %5886 = vmatprep.subr.mxu0 0.0
      %5887 = vmatpush1.msra.mxu0 0.0
      %5888 = vmatprep.subr.mxu0 0.0
      %5889 = vmatpush1.msra.mxu0 0.0
      %5890 = vmatprep.subr.mxu0 0.0
      %5891 = vmatpush1.msra.mxu0 0.0
      %5892 = vmatprep.subr.mxu0 0.0
      %5893 = vmatpush1.msra.mxu0 0.0
      %5894 = vmatprep.subr.mxu0 0.0
      %5895 = vmatpush1.msra.mxu0 0.0
      %5896 = vmatprep.subr.mxu0 0.0
      %5897 = vmatpush1.msra.mxu0 0.0
      %5898 = vmatprep.subr.mxu0 0.0
      %5899 = vmatpush1.msra.mxu0 0.0
      %5900 = vmatprep.subr.mxu0 0.0
      %5901 = vmatpush1.msra.mxu0 0.0
      %5902 = vmatprep.subr.mxu0 0.0
      %5903 = vmatpush1.msra.mxu0 0.0
      %5904 = vmatprep.subr.mxu0 0.0
      %5905 = vmatpush1.msra.mxu0 0.0
      %5906 = vmatprep.subr.mxu0 0.0
      %5907 = vmatpush1.msra.mxu0 0.0
      %5908 = vmatprep.subr.mxu0 0.0
      %5909 = vmatpush1.msra.mxu0 0.0
      %5910 = vmatprep.subr.mxu0 0.0
      %5911 = vmatpush1.msra.mxu0 0.0
      %5912 = vmatprep.subr.mxu0 0.0
      %5913 = vmatpush1.msra.mxu0 0.0
      %5914 = vmatprep.subr.mxu0 0.0
      %5915 = vmatpush1.msra.mxu0 0.0
      %5916 = vmatprep.subr.mxu0 0.0
      %5917 = vmatpush1.msra.mxu0 0.0
      %5918 = vmatprep.subr.mxu0 0.0
      %5919 = vmatpush1.msra.mxu0 0.0
      %5920 = vmatprep.subr.mxu0 0.0
      %5921 = vmatpush1.msra.mxu0 0.0
      %5922 = vmatprep.subr.mxu0 0.0
      %5923 = vmatpush1.msra.mxu0 0.0
      %5924 = vmatprep.subr.mxu0 0.0
      %5925 = vmatpush1.msra.mxu0 0.0
      %5926 = vmatprep.subr.mxu0 0.0
      %5927 = vmatpush1.msra.mxu0 0.0
      %5928 = vmatprep.subr.mxu0 0.0
      %5929 = vmatpush1.msra.mxu0 0.0
      %5930 = vmatprep.subr.mxu0 0.0
      %5931 = vmatpush1.msra.mxu0 0.0
      %5932 = vmatprep.subr.mxu0 0.0
      %5933 = vmatpush1.msra.mxu0 0.0
      %5934 = vmatprep.subr.mxu0 0.0
      %5935 = vmatpush1.msra.mxu0 0.0
      %5936 = vmatprep.subr.mxu0 0.0
      %5937 = vmatpush1.msra.mxu0 0.0
      %5938 = vmatprep.subr.mxu0 0.0
      %5939 = vmatpush1.msra.mxu0 0.0
      %5940 = vmatprep.subr.mxu0 0.0
      %5941 = vmatpush1.msra.mxu0 0.0
      %5942 = vmatprep.mubr.f32.mxu0 0.0
      %5943 = vmatmul.mubr.f32.gmra.mrb[0].mxu0 %v5783
      %v5944 = vpop.f32.mrb[0].mxu0
      %v5945 = vadd.f32 0.0, %v5944
      %v5946 = vpop.f32.mrb[0].mxu0
      %5947 = vmatprep.mubr.f32.mxu0 0.0
      %5948 = vmatmul.mubr.f32.gmra.mrb[0].mxu0 %v5786
      %v5949 = vpop.f32.mrb[0].mxu0
      %v5950 = vadd.f32 0.0, %v5949
      %v5951 = vpop.f32.mrb[0].mxu0
      %5952 = vmatprep.mubr.f32.mxu0 0.0
      %5953 = vmatmul.mubr.f32.gmra.mrb[0].mxu0 %v5789
      %v5954 = vpop.f32.mrb[0].mxu0
      %v5955 = vadd.f32 0.0, %v5954
      %v5956 = vpop.f32.mrb[0].mxu0
      %5957 = vmatprep.mubr.f32.mxu0 0.0
      %5958 = vmatmul.mubr.f32.gmra.mrb[0].mxu0 %v5792
      %v5959 = vpop.f32.mrb[0].mxu0
      %v5960 = vadd.f32 0.0, %v5959
      %v5961 = vpop.f32.mrb[0].mxu0
      %5962 = vmatprep.mubr.f32.mxu0 0.0
      %5963 = vmatmul.mubr.f32.gmra.mrb[0].mxu0 %v5795
      %v5964 = vpop.f32.mrb[0].mxu0
      %v5965 = vadd.f32 0.0, %v5964
      %v5966 = vpop.f32.mrb[0].mxu0
      %5967 = vmatprep.mubr.f32.mxu0 0.0
      %5968 = vmatmul.mubr.f32.gmra.mrb[0].mxu0 %v5798
      %v5969 = vpop.f32.mrb[0].mxu0
      %v5970 = vadd.f32 0.0, %v5969
      %v5971 = vpop.f32.mrb[0].mxu0
      %5972 = vmatprep.mubr.f32.mxu0 0.0
      %5973 = vmatmul.mubr.f32.gmra.mrb[0].mxu0 %v5801
      %v5974 = vpop.f32.mrb[0].mxu0
      %v5975 = vadd.f32 0.0, %v5974
      %v5976 = vpop.f32.mrb[0].mxu0
      %5977 = vmatprep.mubr.f32.mxu0 0.0
      %5978 = vmatmul.mubr.f32.gmra.mrb[0].mxu0 %v5804
      %v5979 = vpop.f32.mrb[0].mxu0
      %v5980 = vadd.f32 0.0, %v5979
      %v5981 = vpop.f32.mrb[0].mxu0
      %5982 = vmatprep.mubr.f32.mxu0 0.0
      %5983 = vmatmul.mubr.f32.gmra.mrb[0].mxu0 %v5807
      %v5984 = vpop.f32.mrb[0].mxu0
      %v5985 = vadd.f32 0.0, %v5984
      %v5986 = vpop.f32.mrb[0].mxu0
      %5987 = vmatprep.mubr.f32.mxu0 0.0
      %5988 = vmatmul.mubr.f32.gmra.mrb[0].mxu0 %v5810
      %v5989 = vpop.f32.mrb[0].mxu0
      %v5990 = vadd.f32 0.0, %v5989
      %v5991 = vpop.f32.mrb[0].mxu0
      %5992 = vmatprep.mubr.f32.mxu0 0.0
      %5993 = vmatmul.mubr.f32.gmra.mrb[0].mxu0 %v5813
      %v5994 = vpop.f32.mrb[0].mxu0
      %v5995 = vadd.f32 0.0, %v5994
      %v5996 = vpop.f32.mrb[0].mxu0
      %5997 = vmatprep.mubr.f32.mxu0 0.0
      %5998 = vmatmul.mubr.f32.gmra.mrb[0].mxu0 %v5816
      %v5999 = vpop.f32.mrb[0].mxu0
      %v6000 = vadd.f32 0.0, %v5999
      %v6001 = vpop.f32.mrb[0].mxu0
      %6002 = vmatprep.mubr.f32.mxu0 0.0
      %6003 = vmatmul.mubr.f32.gmra.mrb[0].mxu0 %v5819
      %v6004 = vpop.f32.mrb[0].mxu0
      %v6005 = vadd.f32 0.0, %v6004
      %v6006 = vpop.f32.mrb[0].mxu0
      %6007 = vmatprep.mubr.f32.mxu0 0.0
      %6008 = vmatmul.mubr.f32.gmra.mrb[0].mxu0 %v5822
      %v6009 = vpop.f32.mrb[0].mxu0
      %v6010 = vadd.f32 0.0, %v6009
      %v6011 = vpop.f32.mrb[0].mxu0
      %6012 = vmatprep.mubr.f32.mxu0 0.0
      %6013 = vmatmul.mubr.f32.gmra.mrb[0].mxu0 %v5825
      %v6014 = vpop.f32.mrb[0].mxu0
      %v6015 = vadd.f32 0.0, %v6014
      %v6016 = vpop.f32.mrb[0].mxu0
      %6017 = vmatprep.mubr.f32.mxu0 0.0
      %6018 = vmatmul.mubr.f32.gmra.mrb[0].mxu0 %v5828
      %v6019 = vpop.f32.mrb[0].mxu0
      %v6020 = vadd.f32 0.0, %v6019
      %v6021 = vpop.f32.mrb[0].mxu0
      %6022 = vmatprep.mubr.f32.mxu0 0.0
      %6023 = vmatmul.mubr.f32.gmra.mrb[0].mxu0 %v5831
      %v6024 = vpop.f32.mrb[0].mxu0
      %v6025 = vadd.f32 0.0, %v6024
      %v6026 = vpop.f32.mrb[0].mxu0
      %6027 = vmatprep.mubr.f32.mxu0 0.0
      %6028 = vmatmul.mubr.f32.gmra.mrb[0].mxu0 %v5834
      %v6029 = vpop.f32.mrb[0].mxu0
      %v6030 = vadd.f32 0.0, %v6029
      %v6031 = vpop.f32.mrb[0].mxu0
      %6032 = vmatprep.mubr.f32.mxu0 0.0
      %6033 = vmatmul.mubr.f32.gmra.mrb[0].mxu0 %v5837
      %v6034 = vpop.f32.mrb[0].mxu0
      %v6035 = vadd.f32 0.0, %v6034
      %v6036 = vpop.f32.mrb[0].mxu0
      %6037 = vmatprep.mubr.f32.mxu0 0.0
      %6038 = vmatmul.mubr.f32.gmra.mrb[0].mxu0 %v5840
      %v6039 = vpop.f32.mrb[0].mxu0
      %v6040 = vadd.f32 0.0, %v6039
      %v6041 = vpop.f32.mrb[0].mxu0
      %6042 = vmatprep.mubr.f32.mxu0 0.0
      %6043 = vmatmul.mubr.f32.gmra.mrb[0].mxu0 %v5843
      %v6044 = vpop.f32.mrb[0].mxu0
      %v6045 = vadd.f32 0.0, %v6044
      %v6046 = vpop.f32.mrb[0].mxu0
      %6047 = vmatprep.mubr.f32.mxu0 0.0
      %6048 = vmatmul.mubr.f32.gmra.mrb[0].mxu0 %v5846
      %v6049 = vpop.f32.mrb[0].mxu0
      %v6050 = vadd.f32 0.0, %v6049
      %v6051 = vpop.f32.mrb[0].mxu0
      %6052 = vmatprep.mubr.f32.mxu0 0.0
      %6053 = vmatmul.mubr.f32.gmra.mrb[0].mxu0 %v5849
      %v6054 = vpop.f32.mrb[0].mxu0
      %v6055 = vadd.f32 0.0, %v6054
      %v6056 = vpop.f32.mrb[0].mxu0
      %6057 = vmatprep.mubr.f32.mxu0 0.0
      %6058 = vmatmul.mubr.f32.gmra.mrb[0].mxu0 %v5852
      %v6059 = vpop.f32.mrb[0].mxu0
      %v6060 = vadd.f32 0.0, %v6059
      %v6061 = vpop.f32.mrb[0].mxu0
      %6062 = vmatprep.mubr.f32.mxu0 0.0
      %6063 = vmatmul.mubr.f32.gmra.mrb[0].mxu0 %v5855
      %v6064 = vpop.f32.mrb[0].mxu0
      %v6065 = vadd.f32 0.0, %v6064
      %v6066 = vpop.f32.mrb[0].mxu0
      %6067 = vmatprep.mubr.f32.mxu0 0.0
      %6068 = vmatmul.mubr.f32.gmra.mrb[0].mxu0 %v5858
      %v6069 = vpop.f32.mrb[0].mxu0
      %v6070 = vadd.f32 0.0, %v6069
      %v6071 = vpop.f32.mrb[0].mxu0
      %6072 = vmatprep.mubr.f32.mxu0 0.0
      %6073 = vmatmul.mubr.f32.gmra.mrb[0].mxu0 %v5861
      %v6074 = vpop.f32.mrb[0].mxu0
      %v6075 = vadd.f32 0.0, %v6074
      %v6076 = vpop.f32.mrb[0].mxu0
      %6077 = vmatprep.mubr.f32.mxu0 0.0
      %6078 = vmatmul.mubr.f32.gmra.mrb[0].mxu0 %v5864
      %v6079 = vpop.f32.mrb[0].mxu0
      %v6080 = vadd.f32 0.0, %v6079
      %v6081 = vpop.f32.mrb[0].mxu0
      %6082 = vmatprep.mubr.f32.mxu0 0.0
      %6083 = vmatmul.mubr.f32.gmra.mrb[0].mxu0 %v5867
      %v6084 = vpop.f32.mrb[0].mxu0
      %v6085 = vadd.f32 0.0, %v6084
      %v6086 = vpop.f32.mrb[0].mxu0
      %6087 = vmatprep.mubr.f32.mxu0 0.0
      %6088 = vmatmul.mubr.f32.gmra.mrb[0].mxu0 %v5870
      %v6089 = vpop.f32.mrb[0].mxu0
      %v6090 = vadd.f32 0.0, %v6089
      %v6091 = vpop.f32.mrb[0].mxu0
      %6092 = vmatprep.mubr.f32.mxu0 0.0
      %6093 = vmatmul.mubr.f32.gmra.mrb[0].mxu0 %v5873
      %v6094 = vpop.f32.mrb[0].mxu0
      %v6095 = vadd.f32 0.0, %v6094
      %v6096 = vpop.f32.mrb[0].mxu0
      %6097 = vmatprep.mubr.f32.mxu0 0.0
      %6098 = vmatmul.mubr.f32.gmra.mrb[0].mxu0 %v5876
      %v6099 = vpop.f32.mrb[0].mxu0
      %v6100 = vadd.f32 0.0, %v6099
      %v6101 = vpop.f32.mrb[0].mxu0
      %6102 = vdwg.mxu0
      %v6103 = vadd.f32 %v5713, %v5945
      %v6104 = vadd.f32 %v5714, %v5950
      %v6105 = vadd.f32 %v5715, %v5955
      %v6106 = vadd.f32 %v5716, %v5960
      %v6107 = vadd.f32 %v5717, %v5965
      %v6108 = vadd.f32 %v5718, %v5970
      %v6109 = vadd.f32 %v5719, %v5975
      %v6110 = vadd.f32 %v5720, %v5980
      %v6111 = vadd.f32 %v5721, %v5985
      %v6112 = vadd.f32 %v5722, %v5990
      %v6113 = vadd.f32 %v5723, %v5995
      %v6114 = vadd.f32 %v5724, %v6000
      %v6115 = vadd.f32 %v5725, %v6005
      %v6116 = vadd.f32 %v5726, %v6010
      %v6117 = vadd.f32 %v5727, %v6015
      %v6118 = vadd.f32 %v5728, %v6020
      %v6119 = vadd.f32 %v5729, %v6025
      %v6120 = vadd.f32 %v5730, %v6030
      %v6121 = vadd.f32 %v5731, %v6035
      %v6122 = vadd.f32 %v5732, %v6040
      %v6123 = vadd.f32 %v5733, %v6045
      %v6124 = vadd.f32 %v5734, %v6050
      %v6125 = vadd.f32 %v5735, %v6055
      %v6126 = vadd.f32 %v5736, %v6060
      %v6127 = vadd.f32 %v5737, %v6065
      %v6128 = vadd.f32 %v5738, %v6070
      %v6129 = vadd.f32 %v5739, %v6075
      %v6130 = vadd.f32 %v5740, %v6080
      %v6131 = vadd.f32 %v5741, %v6085
      %v6132 = vadd.f32 %v5742, %v6090
      %v6133 = vadd.f32 %v5743, %v6095
      %v6134 = vadd.f32 %v5744, %v6100
      %s6135 = scalar_lea.vmem [#allocation2], 48
      %v6136 = vld [vmem:[%s6135] sm:$0xff]
      %v6137 = vld [vmem:[%s6135 + $0x8] sm:$0xff]
      %v6138 = vld [vmem:[%s6135 + $0x18] sm:$0xff]
      %v6139 = vld [vmem:[%s6135 + $0x20] sm:$0xff]
      %v6140 = vld [vmem:[%s6135 + $0x30] sm:$0xff]
      %v6141 = vld [vmem:[%s6135 + $0x38] sm:$0xff]
      %v6142 = vld [vmem:[%s6135 + $0x48] sm:$0xff]
      %v6143 = vld [vmem:[%s6135 + $0x50] sm:$0xff]
      %v6144 = vld [vmem:[%s6135 + $0x60] sm:$0xff]
      %v6145 = vld [vmem:[%s6135 + $0x68] sm:$0xff]
      %v6146 = vld [vmem:[%s6135 + $0x78] sm:$0xff]
      %v6147 = vld [vmem:[%s6135 + $0x80] sm:$0xff]
      %v6148 = vld [vmem:[%s6135 + $0x90] sm:$0xff]
      %v6149 = vld [vmem:[%s6135 + $0x98] sm:$0xff]
      %v6150 = vld [vmem:[%s6135 + $0xa8] sm:$0xff]
      %v6151 = vld [vmem:[%s6135 + $0xb0] sm:$0xff]
      %v6152 = vld [vmem:[%s6135 + $0xc0] sm:$0xff]
      %v6153 = vld [vmem:[%s6135 + $0xc8] sm:$0xff]
      %v6154 = vld [vmem:[%s6135 + $0xd8] sm:$0xff]
      %v6155 = vld [vmem:[%s6135 + $0xe0] sm:$0xff]
      %v6156 = vld [vmem:[%s6135 + $0xf0] sm:$0xff]
      %v6157 = vld [vmem:[%s6135 + $0xf8] sm:$0xff]
      %v6158 = vld [vmem:[%s6135 + $0x108] sm:$0xff]
      %v6159 = vld [vmem:[%s6135 + $0x110] sm:$0xff]
      %v6160 = vld [vmem:[%s6135 + $0x120] sm:$0xff]
      %v6161 = vld [vmem:[%s6135 + $0x128] sm:$0xff]
      %v6162 = vld [vmem:[%s6135 + $0x138] sm:$0xff]
      %v6163 = vld [vmem:[%s6135 + $0x140] sm:$0xff]
      %v6164 = vld [vmem:[%s6135 + $0x150] sm:$0xff]
      %v6165 = vld [vmem:[%s6135 + $0x158] sm:$0xff]
      %v6166 = vld [vmem:[%s6135 + $0x168] sm:$0xff]
      %v6167 = vld [vmem:[%s6135 + $0x170] sm:$0xff]
      %s6168 = scalar_lea.vmem %s3, 192
      %v6169 = vld [vmem:[%s6168] sm:$0xff]
      %v6170 = vld [vmem:[%s6168 + $0x8] sm:$0xff]
      %v6171 = vld [vmem:[%s6168 + $0x10] sm:$0xff]
      %v6172 = vld [vmem:[%s6168 + $0x18] sm:$0xff]
      %v6174 = vsel %vm3771, %v6136, 0
      %v6177 = vsel %vm3771, %v6137, 0
      %v6180 = vsel %vm3771, %v6138, 0
      %v6183 = vsel %vm3771, %v6139, 0
      %v6186 = vsel %vm3771, %v6140, 0
      %v6189 = vsel %vm3771, %v6141, 0
      %v6192 = vsel %vm3771, %v6142, 0
      %v6195 = vsel %vm3771, %v6143, 0
      %v6198 = vsel %vm3771, %v6144, 0
      %v6201 = vsel %vm3771, %v6145, 0
      %v6204 = vsel %vm3771, %v6146, 0
      %v6207 = vsel %vm3771, %v6147, 0
      %v6210 = vsel %vm3771, %v6148, 0
      %v6213 = vsel %vm3771, %v6149, 0
      %v6216 = vsel %vm3771, %v6150, 0
      %v6219 = vsel %vm3771, %v6151, 0
      %v6222 = vsel %vm3771, %v6152, 0
      %v6225 = vsel %vm3771, %v6153, 0
      %v6228 = vsel %vm3771, %v6154, 0
      %v6231 = vsel %vm3771, %v6155, 0
      %v6234 = vsel %vm3771, %v6156, 0
      %v6237 = vsel %vm3771, %v6157, 0
      %v6240 = vsel %vm3771, %v6158, 0
      %v6243 = vsel %vm3771, %v6159, 0
      %v6246 = vsel %vm3771, %v6160, 0
      %v6249 = vsel %vm3771, %v6161, 0
      %v6252 = vsel %vm3771, %v6162, 0
      %v6255 = vsel %vm3771, %v6163, 0
      %v6258 = vsel %vm3771, %v6164, 0
      %v6261 = vsel %vm3771, %v6165, 0
      %v6264 = vsel %vm3771, %v6166, 0
      %v6267 = vsel %vm3771, %v6167, 0
      %6269 = vmatprep.subr.mxu0 0.0
      %6270 = vmatpush1.msra.mxu0 %v6169
      %6271 = vmatprep.subr.mxu0 0.0
      %6272 = vmatpush1.msra.mxu0 %v6170
      %6273 = vmatprep.subr.mxu0 0.0
      %6274 = vmatpush1.msra.mxu0 %v6171
      %6275 = vmatprep.subr.mxu0 0.0
      %6276 = vmatpush1.msra.mxu0 %v6172
      %6277 = vmatprep.subr.mxu0 0.0
      %6278 = vmatpush1.msra.mxu0 0.0
      %6279 = vmatprep.subr.mxu0 0.0
      %6280 = vmatpush1.msra.mxu0 0.0
      %6281 = vmatprep.subr.mxu0 0.0
      %6282 = vmatpush1.msra.mxu0 0.0
      %6283 = vmatprep.subr.mxu0 0.0
      %6284 = vmatpush1.msra.mxu0 0.0
      %6285 = vmatprep.subr.mxu0 0.0
      %6286 = vmatpush1.msra.mxu0 0.0
      %6287 = vmatprep.subr.mxu0 0.0
      %6288 = vmatpush1.msra.mxu0 0.0
      %6289 = vmatprep.subr.mxu0 0.0
      %6290 = vmatpush1.msra.mxu0 0.0
      %6291 = vmatprep.subr.mxu0 0.0
      %6292 = vmatpush1.msra.mxu0 0.0
      %6293 = vmatprep.subr.mxu0 0.0
      %6294 = vmatpush1.msra.mxu0 0.0
      %6295 = vmatprep.subr.mxu0 0.0
      %6296 = vmatpush1.msra.mxu0 0.0
      %6297 = vmatprep.subr.mxu0 0.0
      %6298 = vmatpush1.msra.mxu0 0.0
      %6299 = vmatprep.subr.mxu0 0.0
      %6300 = vmatpush1.msra.mxu0 0.0
      %6301 = vmatprep.subr.mxu0 0.0
      %6302 = vmatpush1.msra.mxu0 0.0
      %6303 = vmatprep.subr.mxu0 0.0
      %6304 = vmatpush1.msra.mxu0 0.0
      %6305 = vmatprep.subr.mxu0 0.0
      %6306 = vmatpush1.msra.mxu0 0.0
      %6307 = vmatprep.subr.mxu0 0.0
      %6308 = vmatpush1.msra.mxu0 0.0
      %6309 = vmatprep.subr.mxu0 0.0
      %6310 = vmatpush1.msra.mxu0 0.0
      %6311 = vmatprep.subr.mxu0 0.0
      %6312 = vmatpush1.msra.mxu0 0.0
      %6313 = vmatprep.subr.mxu0 0.0
      %6314 = vmatpush1.msra.mxu0 0.0
      %6315 = vmatprep.subr.mxu0 0.0
      %6316 = vmatpush1.msra.mxu0 0.0
      %6317 = vmatprep.subr.mxu0 0.0
      %6318 = vmatpush1.msra.mxu0 0.0
      %6319 = vmatprep.subr.mxu0 0.0
      %6320 = vmatpush1.msra.mxu0 0.0
      %6321 = vmatprep.subr.mxu0 0.0
      %6322 = vmatpush1.msra.mxu0 0.0
      %6323 = vmatprep.subr.mxu0 0.0
      %6324 = vmatpush1.msra.mxu0 0.0
      %6325 = vmatprep.subr.mxu0 0.0
      %6326 = vmatpush1.msra.mxu0 0.0
      %6327 = vmatprep.subr.mxu0 0.0
      %6328 = vmatpush1.msra.mxu0 0.0
      %6329 = vmatprep.subr.mxu0 0.0
      %6330 = vmatpush1.msra.mxu0 0.0
      %6331 = vmatprep.subr.mxu0 0.0
      %6332 = vmatpush1.msra.mxu0 0.0
      %6333 = vmatprep.mubr.f32.mxu0 0.0
      %6334 = vmatmul.mubr.f32.gmra.mrb[0].mxu0 %v6174
      %v6335 = vpop.f32.mrb[0].mxu0
      %v6336 = vadd.f32 0.0, %v6335
      %v6337 = vpop.f32.mrb[0].mxu0
      %6338 = vmatprep.mubr.f32.mxu0 0.0
      %6339 = vmatmul.mubr.f32.gmra.mrb[0].mxu0 %v6177
      %v6340 = vpop.f32.mrb[0].mxu0
      %v6341 = vadd.f32 0.0, %v6340
      %v6342 = vpop.f32.mrb[0].mxu0
      %6343 = vmatprep.mubr.f32.mxu0 0.0
      %6344 = vmatmul.mubr.f32.gmra.mrb[0].mxu0 %v6180
      %v6345 = vpop.f32.mrb[0].mxu0
      %v6346 = vadd.f32 0.0, %v6345
      %v6347 = vpop.f32.mrb[0].mxu0
      %6348 = vmatprep.mubr.f32.mxu0 0.0
      %6349 = vmatmul.mubr.f32.gmra.mrb[0].mxu0 %v6183
      %v6350 = vpop.f32.mrb[0].mxu0
      %v6351 = vadd.f32 0.0, %v6350
      %v6352 = vpop.f32.mrb[0].mxu0
      %6353 = vmatprep.mubr.f32.mxu0 0.0
      %6354 = vmatmul.mubr.f32.gmra.mrb[0].mxu0 %v6186
      %v6355 = vpop.f32.mrb[0].mxu0
      %v6356 = vadd.f32 0.0, %v6355
      %v6357 = vpop.f32.mrb[0].mxu0
      %6358 = vmatprep.mubr.f32.mxu0 0.0
      %6359 = vmatmul.mubr.f32.gmra.mrb[0].mxu0 %v6189
      %v6360 = vpop.f32.mrb[0].mxu0
      %v6361 = vadd.f32 0.0, %v6360
      %v6362 = vpop.f32.mrb[0].mxu0
      %6363 = vmatprep.mubr.f32.mxu0 0.0
      %6364 = vmatmul.mubr.f32.gmra.mrb[0].mxu0 %v6192
      %v6365 = vpop.f32.mrb[0].mxu0
      %v6366 = vadd.f32 0.0, %v6365
      %v6367 = vpop.f32.mrb[0].mxu0
      %6368 = vmatprep.mubr.f32.mxu0 0.0
      %6369 = vmatmul.mubr.f32.gmra.mrb[0].mxu0 %v6195
      %v6370 = vpop.f32.mrb[0].mxu0
      %v6371 = vadd.f32 0.0, %v6370
      %v6372 = vpop.f32.mrb[0].mxu0
      %6373 = vmatprep.mubr.f32.mxu0 0.0
      %6374 = vmatmul.mubr.f32.gmra.mrb[0].mxu0 %v6198
      %v6375 = vpop.f32.mrb[0].mxu0
      %v6376 = vadd.f32 0.0, %v6375
      %v6377 = vpop.f32.mrb[0].mxu0
      %6378 = vmatprep.mubr.f32.mxu0 0.0
      %6379 = vmatmul.mubr.f32.gmra.mrb[0].mxu0 %v6201
      %v6380 = vpop.f32.mrb[0].mxu0
      %v6381 = vadd.f32 0.0, %v6380
      %v6382 = vpop.f32.mrb[0].mxu0
      %6383 = vmatprep.mubr.f32.mxu0 0.0
      %6384 = vmatmul.mubr.f32.gmra.mrb[0].mxu0 %v6204
      %v6385 = vpop.f32.mrb[0].mxu0
      %v6386 = vadd.f32 0.0, %v6385
      %v6387 = vpop.f32.mrb[0].mxu0
      %6388 = vmatprep.mubr.f32.mxu0 0.0
      %6389 = vmatmul.mubr.f32.gmra.mrb[0].mxu0 %v6207
      %v6390 = vpop.f32.mrb[0].mxu0
      %v6391 = vadd.f32 0.0, %v6390
      %v6392 = vpop.f32.mrb[0].mxu0
      %6393 = vmatprep.mubr.f32.mxu0 0.0
      %6394 = vmatmul.mubr.f32.gmra.mrb[0].mxu0 %v6210
      %v6395 = vpop.f32.mrb[0].mxu0
      %v6396 = vadd.f32 0.0, %v6395
      %v6397 = vpop.f32.mrb[0].mxu0
      %6398 = vmatprep.mubr.f32.mxu0 0.0
      %6399 = vmatmul.mubr.f32.gmra.mrb[0].mxu0 %v6213
      %v6400 = vpop.f32.mrb[0].mxu0
      %v6401 = vadd.f32 0.0, %v6400
      %v6402 = vpop.f32.mrb[0].mxu0
      %6403 = vmatprep.mubr.f32.mxu0 0.0
      %6404 = vmatmul.mubr.f32.gmra.mrb[0].mxu0 %v6216
      %v6405 = vpop.f32.mrb[0].mxu0
      %v6406 = vadd.f32 0.0, %v6405
      %v6407 = vpop.f32.mrb[0].mxu0
      %6408 = vmatprep.mubr.f32.mxu0 0.0
      %6409 = vmatmul.mubr.f32.gmra.mrb[0].mxu0 %v6219
      %v6410 = vpop.f32.mrb[0].mxu0
      %v6411 = vadd.f32 0.0, %v6410
      %v6412 = vpop.f32.mrb[0].mxu0
      %6413 = vmatprep.mubr.f32.mxu0 0.0
      %6414 = vmatmul.mubr.f32.gmra.mrb[0].mxu0 %v6222
      %v6415 = vpop.f32.mrb[0].mxu0
      %v6416 = vadd.f32 0.0, %v6415
      %v6417 = vpop.f32.mrb[0].mxu0
      %6418 = vmatprep.mubr.f32.mxu0 0.0
      %6419 = vmatmul.mubr.f32.gmra.mrb[0].mxu0 %v6225
      %v6420 = vpop.f32.mrb[0].mxu0
      %v6421 = vadd.f32 0.0, %v6420
      %v6422 = vpop.f32.mrb[0].mxu0
      %6423 = vmatprep.mubr.f32.mxu0 0.0
      %6424 = vmatmul.mubr.f32.gmra.mrb[0].mxu0 %v6228
      %v6425 = vpop.f32.mrb[0].mxu0
      %v6426 = vadd.f32 0.0, %v6425
      %v6427 = vpop.f32.mrb[0].mxu0
      %6428 = vmatprep.mubr.f32.mxu0 0.0
      %6429 = vmatmul.mubr.f32.gmra.mrb[0].mxu0 %v6231
      %v6430 = vpop.f32.mrb[0].mxu0
      %v6431 = vadd.f32 0.0, %v6430
      %v6432 = vpop.f32.mrb[0].mxu0
      %6433 = vmatprep.mubr.f32.mxu0 0.0
      %6434 = vmatmul.mubr.f32.gmra.mrb[0].mxu0 %v6234
      %v6435 = vpop.f32.mrb[0].mxu0
      %v6436 = vadd.f32 0.0, %v6435
      %v6437 = vpop.f32.mrb[0].mxu0
      %6438 = vmatprep.mubr.f32.mxu0 0.0
      %6439 = vmatmul.mubr.f32.gmra.mrb[0].mxu0 %v6237
      %v6440 = vpop.f32.mrb[0].mxu0
      %v6441 = vadd.f32 0.0, %v6440
      %v6442 = vpop.f32.mrb[0].mxu0
      %6443 = vmatprep.mubr.f32.mxu0 0.0
      %6444 = vmatmul.mubr.f32.gmra.mrb[0].mxu0 %v6240
      %v6445 = vpop.f32.mrb[0].mxu0
      %v6446 = vadd.f32 0.0, %v6445
      %v6447 = vpop.f32.mrb[0].mxu0
      %6448 = vmatprep.mubr.f32.mxu0 0.0
      %6449 = vmatmul.mubr.f32.gmra.mrb[0].mxu0 %v6243
      %v6450 = vpop.f32.mrb[0].mxu0
      %v6451 = vadd.f32 0.0, %v6450
      %v6452 = vpop.f32.mrb[0].mxu0
      %6453 = vmatprep.mubr.f32.mxu0 0.0
      %6454 = vmatmul.mubr.f32.gmra.mrb[0].mxu0 %v6246
      %v6455 = vpop.f32.mrb[0].mxu0
      %v6456 = vadd.f32 0.0, %v6455
      %v6457 = vpop.f32.mrb[0].mxu0
      %6458 = vmatprep.mubr.f32.mxu0 0.0
      %6459 = vmatmul.mubr.f32.gmra.mrb[0].mxu0 %v6249
      %v6460 = vpop.f32.mrb[0].mxu0
      %v6461 = vadd.f32 0.0, %v6460
      %v6462 = vpop.f32.mrb[0].mxu0
      %6463 = vmatprep.mubr.f32.mxu0 0.0
      %6464 = vmatmul.mubr.f32.gmra.mrb[0].mxu0 %v6252
      %v6465 = vpop.f32.mrb[0].mxu0
      %v6466 = vadd.f32 0.0, %v6465
      %v6467 = vpop.f32.mrb[0].mxu0
      %6468 = vmatprep.mubr.f32.mxu0 0.0
      %6469 = vmatmul.mubr.f32.gmra.mrb[0].mxu0 %v6255
      %v6470 = vpop.f32.mrb[0].mxu0
      %v6471 = vadd.f32 0.0, %v6470
      %v6472 = vpop.f32.mrb[0].mxu0
      %6473 = vmatprep.mubr.f32.mxu0 0.0
      %6474 = vmatmul.mubr.f32.gmra.mrb[0].mxu0 %v6258
      %v6475 = vpop.f32.mrb[0].mxu0
      %v6476 = vadd.f32 0.0, %v6475
      %v6477 = vpop.f32.mrb[0].mxu0
      %6478 = vmatprep.mubr.f32.mxu0 0.0
      %6479 = vmatmul.mubr.f32.gmra.mrb[0].mxu0 %v6261
      %v6480 = vpop.f32.mrb[0].mxu0
      %v6481 = vadd.f32 0.0, %v6480
      %v6482 = vpop.f32.mrb[0].mxu0
      %6483 = vmatprep.mubr.f32.mxu0 0.0
      %6484 = vmatmul.mubr.f32.gmra.mrb[0].mxu0 %v6264
      %v6485 = vpop.f32.mrb[0].mxu0
      %v6486 = vadd.f32 0.0, %v6485
      %v6487 = vpop.f32.mrb[0].mxu0
      %6488 = vmatprep.mubr.f32.mxu0 0.0
      %6489 = vmatmul.mubr.f32.gmra.mrb[0].mxu0 %v6267
      %v6490 = vpop.f32.mrb[0].mxu0
      %v6491 = vadd.f32 0.0, %v6490
      %v6492 = vpop.f32.mrb[0].mxu0
      %6493 = vdwg.mxu0
      %v6494 = vadd.f32 %v6103, %v6336
      %v6495 = vadd.f32 %v6104, %v6341
      %v6496 = vadd.f32 %v6105, %v6346
      %v6497 = vadd.f32 %v6106, %v6351
      %v6498 = vadd.f32 %v6107, %v6356
      %v6499 = vadd.f32 %v6108, %v6361
      %v6500 = vadd.f32 %v6109, %v6366
      %v6501 = vadd.f32 %v6110, %v6371
      %v6502 = vadd.f32 %v6111, %v6376
      %v6503 = vadd.f32 %v6112, %v6381
      %v6504 = vadd.f32 %v6113, %v6386
      %v6505 = vadd.f32 %v6114, %v6391
      %v6506 = vadd.f32 %v6115, %v6396
      %v6507 = vadd.f32 %v6116, %v6401
      %v6508 = vadd.f32 %v6117, %v6406
      %v6509 = vadd.f32 %v6118, %v6411
      %v6510 = vadd.f32 %v6119, %v6416
      %v6511 = vadd.f32 %v6120, %v6421
      %v6512 = vadd.f32 %v6121, %v6426
      %v6513 = vadd.f32 %v6122, %v6431
      %v6514 = vadd.f32 %v6123, %v6436
      %v6515 = vadd.f32 %v6124, %v6441
      %v6516 = vadd.f32 %v6125, %v6446
      %v6517 = vadd.f32 %v6126, %v6451
      %v6518 = vadd.f32 %v6127, %v6456
      %v6519 = vadd.f32 %v6128, %v6461
      %v6520 = vadd.f32 %v6129, %v6466
      %v6521 = vadd.f32 %v6130, %v6471
      %v6522 = vadd.f32 %v6131, %v6476
      %v6523 = vadd.f32 %v6132, %v6481
      %v6524 = vadd.f32 %v6133, %v6486
      %v6525 = vadd.f32 %v6134, %v6491
      %v6526 = vld [vmem:[%s6135 + $0x1] sm:$0xff]
      %v6527 = vld [vmem:[%s6135 + $0x9] sm:$0xff]
      %v6528 = vld [vmem:[%s6135 + $0x19] sm:$0xff]
      %v6529 = vld [vmem:[%s6135 + $0x21] sm:$0xff]
      %v6530 = vld [vmem:[%s6135 + $0x31] sm:$0xff]
      %v6531 = vld [vmem:[%s6135 + $0x39] sm:$0xff]
      %v6532 = vld [vmem:[%s6135 + $0x49] sm:$0xff]
      %v6533 = vld [vmem:[%s6135 + $0x51] sm:$0xff]
      %v6534 = vld [vmem:[%s6135 + $0x61] sm:$0xff]
      %v6535 = vld [vmem:[%s6135 + $0x69] sm:$0xff]
      %v6536 = vld [vmem:[%s6135 + $0x79] sm:$0xff]
      %v6537 = vld [vmem:[%s6135 + $0x81] sm:$0xff]
      %v6538 = vld [vmem:[%s6135 + $0x91] sm:$0xff]
      %v6539 = vld [vmem:[%s6135 + $0x99] sm:$0xff]
      %v6540 = vld [vmem:[%s6135 + $0xa9] sm:$0xff]
      %v6541 = vld [vmem:[%s6135 + $0xb1] sm:$0xff]
      %v6542 = vld [vmem:[%s6135 + $0xc1] sm:$0xff]
      %v6543 = vld [vmem:[%s6135 + $0xc9] sm:$0xff]
      %v6544 = vld [vmem:[%s6135 + $0xd9] sm:$0xff]
      %v6545 = vld [vmem:[%s6135 + $0xe1] sm:$0xff]
      %v6546 = vld [vmem:[%s6135 + $0xf1] sm:$0xff]
      %v6547 = vld [vmem:[%s6135 + $0xf9] sm:$0xff]
      %v6548 = vld [vmem:[%s6135 + $0x109] sm:$0xff]
      %v6549 = vld [vmem:[%s6135 + $0x111] sm:$0xff]
      %v6550 = vld [vmem:[%s6135 + $0x121] sm:$0xff]
      %v6551 = vld [vmem:[%s6135 + $0x129] sm:$0xff]
      %v6552 = vld [vmem:[%s6135 + $0x139] sm:$0xff]
      %v6553 = vld [vmem:[%s6135 + $0x141] sm:$0xff]
      %v6554 = vld [vmem:[%s6135 + $0x151] sm:$0xff]
      %v6555 = vld [vmem:[%s6135 + $0x159] sm:$0xff]
      %v6556 = vld [vmem:[%s6135 + $0x169] sm:$0xff]
      %v6557 = vld [vmem:[%s6135 + $0x171] sm:$0xff]
      %s6558 = scalar_lea.vmem %s3, 224
      %v6559 = vld [vmem:[%s6558] sm:$0xff]
      %v6560 = vld [vmem:[%s6558 + $0x8] sm:$0xff]
      %v6561 = vld [vmem:[%s6558 + $0x10] sm:$0xff]
      %v6562 = vld [vmem:[%s6558 + $0x18] sm:$0xff]
      %v6564 = vsel %vm3771, %v6526, 0
      %v6567 = vsel %vm3771, %v6527, 0
      %v6570 = vsel %vm3771, %v6528, 0
      %v6573 = vsel %vm3771, %v6529, 0
      %v6576 = vsel %vm3771, %v6530, 0
      %v6579 = vsel %vm3771, %v6531, 0
      %v6582 = vsel %vm3771, %v6532, 0
      %v6585 = vsel %vm3771, %v6533, 0
      %v6588 = vsel %vm3771, %v6534, 0
      %v6591 = vsel %vm3771, %v6535, 0
      %v6594 = vsel %vm3771, %v6536, 0
      %v6597 = vsel %vm3771, %v6537, 0
      %v6600 = vsel %vm3771, %v6538, 0
      %v6603 = vsel %vm3771, %v6539, 0
      %v6606 = vsel %vm3771, %v6540, 0
      %v6609 = vsel %vm3771, %v6541, 0
      %v6612 = vsel %vm3771, %v6542, 0
      %v6615 = vsel %vm3771, %v6543, 0
      %v6618 = vsel %vm3771, %v6544, 0
      %v6621 = vsel %vm3771, %v6545, 0
      %v6624 = vsel %vm3771, %v6546, 0
      %v6627 = vsel %vm3771, %v6547, 0
      %v6630 = vsel %vm3771, %v6548, 0
      %v6633 = vsel %vm3771, %v6549, 0
      %v6636 = vsel %vm3771, %v6550, 0
      %v6639 = vsel %vm3771, %v6551, 0
      %v6642 = vsel %vm3771, %v6552, 0
      %v6645 = vsel %vm3771, %v6553, 0
      %v6648 = vsel %vm3771, %v6554, 0
      %v6651 = vsel %vm3771, %v6555, 0
      %v6654 = vsel %vm3771, %v6556, 0
      %v6657 = vsel %vm3771, %v6557, 0
      %6659 = vmatprep.subr.mxu0 0.0
      %6660 = vmatpush1.msra.mxu0 %v6559
      %6661 = vmatprep.subr.mxu0 0.0
      %6662 = vmatpush1.msra.mxu0 %v6560
      %6663 = vmatprep.subr.mxu0 0.0
      %6664 = vmatpush1.msra.mxu0 %v6561
      %6665 = vmatprep.subr.mxu0 0.0
      %6666 = vmatpush1.msra.mxu0 %v6562
      %6667 = vmatprep.subr.mxu0 0.0
      %6668 = vmatpush1.msra.mxu0 0.0
      %6669 = vmatprep.subr.mxu0 0.0
      %6670 = vmatpush1.msra.mxu0 0.0
      %6671 = vmatprep.subr.mxu0 0.0
      %6672 = vmatpush1.msra.mxu0 0.0
      %6673 = vmatprep.subr.mxu0 0.0
      %6674 = vmatpush1.msra.mxu0 0.0
      %6675 = vmatprep.subr.mxu0 0.0
      %6676 = vmatpush1.msra.mxu0 0.0
      %6677 = vmatprep.subr.mxu0 0.0
      %6678 = vmatpush1.msra.mxu0 0.0
      %6679 = vmatprep.subr.mxu0 0.0
      %6680 = vmatpush1.msra.mxu0 0.0
      %6681 = vmatprep.subr.mxu0 0.0
      %6682 = vmatpush1.msra.mxu0 0.0
      %6683 = vmatprep.subr.mxu0 0.0
      %6684 = vmatpush1.msra.mxu0 0.0
      %6685 = vmatprep.subr.mxu0 0.0
      %6686 = vmatpush1.msra.mxu0 0.0
      %6687 = vmatprep.subr.mxu0 0.0
      %6688 = vmatpush1.msra.mxu0 0.0
      %6689 = vmatprep.subr.mxu0 0.0
      %6690 = vmatpush1.msra.mxu0 0.0
      %6691 = vmatprep.subr.mxu0 0.0
      %6692 = vmatpush1.msra.mxu0 0.0
      %6693 = vmatprep.subr.mxu0 0.0
      %6694 = vmatpush1.msra.mxu0 0.0
      %6695 = vmatprep.subr.mxu0 0.0
      %6696 = vmatpush1.msra.mxu0 0.0
      %6697 = vmatprep.subr.mxu0 0.0
      %6698 = vmatpush1.msra.mxu0 0.0
      %6699 = vmatprep.subr.mxu0 0.0
      %6700 = vmatpush1.msra.mxu0 0.0
      %6701 = vmatprep.subr.mxu0 0.0
      %6702 = vmatpush1.msra.mxu0 0.0
      %6703 = vmatprep.subr.mxu0 0.0
      %6704 = vmatpush1.msra.mxu0 0.0
      %6705 = vmatprep.subr.mxu0 0.0
      %6706 = vmatpush1.msra.mxu0 0.0
      %6707 = vmatprep.subr.mxu0 0.0
      %6708 = vmatpush1.msra.mxu0 0.0
      %6709 = vmatprep.subr.mxu0 0.0
      %6710 = vmatpush1.msra.mxu0 0.0
      %6711 = vmatprep.subr.mxu0 0.0
      %6712 = vmatpush1.msra.mxu0 0.0
      %6713 = vmatprep.subr.mxu0 0.0
      %6714 = vmatpush1.msra.mxu0 0.0
      %6715 = vmatprep.subr.mxu0 0.0
      %6716 = vmatpush1.msra.mxu0 0.0
      %6717 = vmatprep.subr.mxu0 0.0
      %6718 = vmatpush1.msra.mxu0 0.0
      %6719 = vmatprep.subr.mxu0 0.0
      %6720 = vmatpush1.msra.mxu0 0.0
      %6721 = vmatprep.subr.mxu0 0.0
      %6722 = vmatpush1.msra.mxu0 0.0
      %6723 = vmatprep.mubr.f32.mxu0 0.0
      %6724 = vmatmul.mubr.f32.gmra.mrb[0].mxu0 %v6564
      %v6725 = vpop.f32.mrb[0].mxu0
      %v6726 = vadd.f32 0.0, %v6725
      %v6727 = vpop.f32.mrb[0].mxu0
      %6728 = vmatprep.mubr.f32.mxu0 0.0
      %6729 = vmatmul.mubr.f32.gmra.mrb[0].mxu0 %v6567
      %v6730 = vpop.f32.mrb[0].mxu0
      %v6731 = vadd.f32 0.0, %v6730
      %v6732 = vpop.f32.mrb[0].mxu0
      %6733 = vmatprep.mubr.f32.mxu0 0.0
      %6734 = vmatmul.mubr.f32.gmra.mrb[0].mxu0 %v6570
      %v6735 = vpop.f32.mrb[0].mxu0
      %v6736 = vadd.f32 0.0, %v6735
      %v6737 = vpop.f32.mrb[0].mxu0
      %6738 = vmatprep.mubr.f32.mxu0 0.0
      %6739 = vmatmul.mubr.f32.gmra.mrb[0].mxu0 %v6573
      %v6740 = vpop.f32.mrb[0].mxu0
      %v6741 = vadd.f32 0.0, %v6740
      %v6742 = vpop.f32.mrb[0].mxu0
      %6743 = vmatprep.mubr.f32.mxu0 0.0
      %6744 = vmatmul.mubr.f32.gmra.mrb[0].mxu0 %v6576
      %v6745 = vpop.f32.mrb[0].mxu0
      %v6746 = vadd.f32 0.0, %v6745
      %v6747 = vpop.f32.mrb[0].mxu0
      %6748 = vmatprep.mubr.f32.mxu0 0.0
      %6749 = vmatmul.mubr.f32.gmra.mrb[0].mxu0 %v6579
      %v6750 = vpop.f32.mrb[0].mxu0
      %v6751 = vadd.f32 0.0, %v6750
      %v6752 = vpop.f32.mrb[0].mxu0
      %6753 = vmatprep.mubr.f32.mxu0 0.0
      %6754 = vmatmul.mubr.f32.gmra.mrb[0].mxu0 %v6582
      %v6755 = vpop.f32.mrb[0].mxu0
      %v6756 = vadd.f32 0.0, %v6755
      %v6757 = vpop.f32.mrb[0].mxu0
      %6758 = vmatprep.mubr.f32.mxu0 0.0
      %6759 = vmatmul.mubr.f32.gmra.mrb[0].mxu0 %v6585
      %v6760 = vpop.f32.mrb[0].mxu0
      %v6761 = vadd.f32 0.0, %v6760
      %v6762 = vpop.f32.mrb[0].mxu0
      %6763 = vmatprep.mubr.f32.mxu0 0.0
      %6764 = vmatmul.mubr.f32.gmra.mrb[0].mxu0 %v6588
      %v6765 = vpop.f32.mrb[0].mxu0
      %v6766 = vadd.f32 0.0, %v6765
      %v6767 = vpop.f32.mrb[0].mxu0
      %6768 = vmatprep.mubr.f32.mxu0 0.0
      %6769 = vmatmul.mubr.f32.gmra.mrb[0].mxu0 %v6591
      %v6770 = vpop.f32.mrb[0].mxu0
      %v6771 = vadd.f32 0.0, %v6770
      %v6772 = vpop.f32.mrb[0].mxu0
      %6773 = vmatprep.mubr.f32.mxu0 0.0
      %6774 = vmatmul.mubr.f32.gmra.mrb[0].mxu0 %v6594
      %v6775 = vpop.f32.mrb[0].mxu0
      %v6776 = vadd.f32 0.0, %v6775
      %v6777 = vpop.f32.mrb[0].mxu0
      %6778 = vmatprep.mubr.f32.mxu0 0.0
      %6779 = vmatmul.mubr.f32.gmra.mrb[0].mxu0 %v6597
      %v6780 = vpop.f32.mrb[0].mxu0
      %v6781 = vadd.f32 0.0, %v6780
      %v6782 = vpop.f32.mrb[0].mxu0
      %6783 = vmatprep.mubr.f32.mxu0 0.0
      %6784 = vmatmul.mubr.f32.gmra.mrb[0].mxu0 %v6600
      %v6785 = vpop.f32.mrb[0].mxu0
      %v6786 = vadd.f32 0.0, %v6785
      %v6787 = vpop.f32.mrb[0].mxu0
      %6788 = vmatprep.mubr.f32.mxu0 0.0
      %6789 = vmatmul.mubr.f32.gmra.mrb[0].mxu0 %v6603
      %v6790 = vpop.f32.mrb[0].mxu0
      %v6791 = vadd.f32 0.0, %v6790
      %v6792 = vpop.f32.mrb[0].mxu0
      %6793 = vmatprep.mubr.f32.mxu0 0.0
      %6794 = vmatmul.mubr.f32.gmra.mrb[0].mxu0 %v6606
      %v6795 = vpop.f32.mrb[0].mxu0
      %v6796 = vadd.f32 0.0, %v6795
      %v6797 = vpop.f32.mrb[0].mxu0
      %6798 = vmatprep.mubr.f32.mxu0 0.0
      %6799 = vmatmul.mubr.f32.gmra.mrb[0].mxu0 %v6609
      %v6800 = vpop.f32.mrb[0].mxu0
      %v6801 = vadd.f32 0.0, %v6800
      %v6802 = vpop.f32.mrb[0].mxu0
      %6803 = vmatprep.mubr.f32.mxu0 0.0
      %6804 = vmatmul.mubr.f32.gmra.mrb[0].mxu0 %v6612
      %v6805 = vpop.f32.mrb[0].mxu0
      %v6806 = vadd.f32 0.0, %v6805
      %v6807 = vpop.f32.mrb[0].mxu0
      %6808 = vmatprep.mubr.f32.mxu0 0.0
      %6809 = vmatmul.mubr.f32.gmra.mrb[0].mxu0 %v6615
      %v6810 = vpop.f32.mrb[0].mxu0
      %v6811 = vadd.f32 0.0, %v6810
      %v6812 = vpop.f32.mrb[0].mxu0
      %6813 = vmatprep.mubr.f32.mxu0 0.0
      %6814 = vmatmul.mubr.f32.gmra.mrb[0].mxu0 %v6618
      %v6815 = vpop.f32.mrb[0].mxu0
      %v6816 = vadd.f32 0.0, %v6815
      %v6817 = vpop.f32.mrb[0].mxu0
      %6818 = vmatprep.mubr.f32.mxu0 0.0
      %6819 = vmatmul.mubr.f32.gmra.mrb[0].mxu0 %v6621
      %v6820 = vpop.f32.mrb[0].mxu0
      %v6821 = vadd.f32 0.0, %v6820
      %v6822 = vpop.f32.mrb[0].mxu0
      %6823 = vmatprep.mubr.f32.mxu0 0.0
      %6824 = vmatmul.mubr.f32.gmra.mrb[0].mxu0 %v6624
      %v6825 = vpop.f32.mrb[0].mxu0
      %v6826 = vadd.f32 0.0, %v6825
      %v6827 = vpop.f32.mrb[0].mxu0
      %6828 = vmatprep.mubr.f32.mxu0 0.0
      %6829 = vmatmul.mubr.f32.gmra.mrb[0].mxu0 %v6627
      %v6830 = vpop.f32.mrb[0].mxu0
      %v6831 = vadd.f32 0.0, %v6830
      %v6832 = vpop.f32.mrb[0].mxu0
      %6833 = vmatprep.mubr.f32.mxu0 0.0
      %6834 = vmatmul.mubr.f32.gmra.mrb[0].mxu0 %v6630
      %v6835 = vpop.f32.mrb[0].mxu0
      %v6836 = vadd.f32 0.0, %v6835
      %v6837 = vpop.f32.mrb[0].mxu0
      %6838 = vmatprep.mubr.f32.mxu0 0.0
      %6839 = vmatmul.mubr.f32.gmra.mrb[0].mxu0 %v6633
      %v6840 = vpop.f32.mrb[0].mxu0
      %v6841 = vadd.f32 0.0, %v6840
      %v6842 = vpop.f32.mrb[0].mxu0
      %6843 = vmatprep.mubr.f32.mxu0 0.0
      %6844 = vmatmul.mubr.f32.gmra.mrb[0].mxu0 %v6636
      %v6845 = vpop.f32.mrb[0].mxu0
      %v6846 = vadd.f32 0.0, %v6845
      %v6847 = vpop.f32.mrb[0].mxu0
      %6848 = vmatprep.mubr.f32.mxu0 0.0
      %6849 = vmatmul.mubr.f32.gmra.mrb[0].mxu0 %v6639
      %v6850 = vpop.f32.mrb[0].mxu0
      %v6851 = vadd.f32 0.0, %v6850
      %v6852 = vpop.f32.mrb[0].mxu0
      %6853 = vmatprep.mubr.f32.mxu0 0.0
      %6854 = vmatmul.mubr.f32.gmra.mrb[0].mxu0 %v6642
      %v6855 = vpop.f32.mrb[0].mxu0
      %v6856 = vadd.f32 0.0, %v6855
      %v6857 = vpop.f32.mrb[0].mxu0
      %6858 = vmatprep.mubr.f32.mxu0 0.0
      %6859 = vmatmul.mubr.f32.gmra.mrb[0].mxu0 %v6645
      %v6860 = vpop.f32.mrb[0].mxu0
      %v6861 = vadd.f32 0.0, %v6860
      %v6862 = vpop.f32.mrb[0].mxu0
      %6863 = vmatprep.mubr.f32.mxu0 0.0
      %6864 = vmatmul.mubr.f32.gmra.mrb[0].mxu0 %v6648
      %v6865 = vpop.f32.mrb[0].mxu0
      %v6866 = vadd.f32 0.0, %v6865
      %v6867 = vpop.f32.mrb[0].mxu0
      %6868 = vmatprep.mubr.f32.mxu0 0.0
      %6869 = vmatmul.mubr.f32.gmra.mrb[0].mxu0 %v6651
      %v6870 = vpop.f32.mrb[0].mxu0
      %v6871 = vadd.f32 0.0, %v6870
      %v6872 = vpop.f32.mrb[0].mxu0
      %6873 = vmatprep.mubr.f32.mxu0 0.0
      %6874 = vmatmul.mubr.f32.gmra.mrb[0].mxu0 %v6654
      %v6875 = vpop.f32.mrb[0].mxu0
      %v6876 = vadd.f32 0.0, %v6875
      %v6877 = vpop.f32.mrb[0].mxu0
      %6878 = vmatprep.mubr.f32.mxu0 0.0
      %6879 = vmatmul.mubr.f32.gmra.mrb[0].mxu0 %v6657
      %v6880 = vpop.f32.mrb[0].mxu0
      %v6881 = vadd.f32 0.0, %v6880
      %v6882 = vpop.f32.mrb[0].mxu0
      %6883 = vdwg.mxu0
      %v6884 = vadd.f32 %v6494, %v6726
      %v6885 = vadd.f32 %v6495, %v6731
      %v6886 = vadd.f32 %v6496, %v6736
      %v6887 = vadd.f32 %v6497, %v6741
      %v6888 = vadd.f32 %v6498, %v6746
      %v6889 = vadd.f32 %v6499, %v6751
      %v6890 = vadd.f32 %v6500, %v6756
      %v6891 = vadd.f32 %v6501, %v6761
      %v6892 = vadd.f32 %v6502, %v6766
      %v6893 = vadd.f32 %v6503, %v6771
      %v6894 = vadd.f32 %v6504, %v6776
      %v6895 = vadd.f32 %v6505, %v6781
      %v6896 = vadd.f32 %v6506, %v6786
      %v6897 = vadd.f32 %v6507, %v6791
      %v6898 = vadd.f32 %v6508, %v6796
      %v6899 = vadd.f32 %v6509, %v6801
      %v6900 = vadd.f32 %v6510, %v6806
      %v6901 = vadd.f32 %v6511, %v6811
      %v6902 = vadd.f32 %v6512, %v6816
      %v6903 = vadd.f32 %v6513, %v6821
      %v6904 = vadd.f32 %v6514, %v6826
      %v6905 = vadd.f32 %v6515, %v6831
      %v6906 = vadd.f32 %v6516, %v6836
      %v6907 = vadd.f32 %v6517, %v6841
      %v6908 = vadd.f32 %v6518, %v6846
      %v6909 = vadd.f32 %v6519, %v6851
      %v6910 = vadd.f32 %v6520, %v6856
      %v6911 = vadd.f32 %v6521, %v6861
      %v6912 = vadd.f32 %v6522, %v6866
      %v6913 = vadd.f32 %v6523, %v6871
      %v6914 = vadd.f32 %v6524, %v6876
      %v6915 = vadd.f32 %v6525, %v6881
      %v6916 = vld [vmem:[%s6135 + $0x2] sm:$0xff]
      %v6917 = vld [vmem:[%s6135 + $0xa] sm:$0xff]
      %v6918 = vld [vmem:[%s6135 + $0x1a] sm:$0xff]
      %v6919 = vld [vmem:[%s6135 + $0x22] sm:$0xff]
      %v6920 = vld [vmem:[%s6135 + $0x32] sm:$0xff]
      %v6921 = vld [vmem:[%s6135 + $0x3a] sm:$0xff]
      %v6922 = vld [vmem:[%s6135 + $0x4a] sm:$0xff]
      %v6923 = vld [vmem:[%s6135 + $0x52] sm:$0xff]
      %v6924 = vld [vmem:[%s6135 + $0x62] sm:$0xff]
      %v6925 = vld [vmem:[%s6135 + $0x6a] sm:$0xff]
      %v6926 = vld [vmem:[%s6135 + $0x7a] sm:$0xff]
      %v6927 = vld [vmem:[%s6135 + $0x82] sm:$0xff]
      %v6928 = vld [vmem:[%s6135 + $0x92] sm:$0xff]
      %v6929 = vld [vmem:[%s6135 + $0x9a] sm:$0xff]
      %v6930 = vld [vmem:[%s6135 + $0xaa] sm:$0xff]
      %v6931 = vld [vmem:[%s6135 + $0xb2] sm:$0xff]
      %v6932 = vld [vmem:[%s6135 + $0xc2] sm:$0xff]
      %v6933 = vld [vmem:[%s6135 + $0xca] sm:$0xff]
      %v6934 = vld [vmem:[%s6135 + $0xda] sm:$0xff]
      %v6935 = vld [vmem:[%s6135 + $0xe2] sm:$0xff]
      %v6936 = vld [vmem:[%s6135 + $0xf2] sm:$0xff]
      %v6937 = vld [vmem:[%s6135 + $0xfa] sm:$0xff]
      %v6938 = vld [vmem:[%s6135 + $0x10a] sm:$0xff]
      %v6939 = vld [vmem:[%s6135 + $0x112] sm:$0xff]
      %v6940 = vld [vmem:[%s6135 + $0x122] sm:$0xff]
      %v6941 = vld [vmem:[%s6135 + $0x12a] sm:$0xff]
      %v6942 = vld [vmem:[%s6135 + $0x13a] sm:$0xff]
      %v6943 = vld [vmem:[%s6135 + $0x142] sm:$0xff]
      %v6944 = vld [vmem:[%s6135 + $0x152] sm:$0xff]
      %v6945 = vld [vmem:[%s6135 + $0x15a] sm:$0xff]
      %v6946 = vld [vmem:[%s6135 + $0x16a] sm:$0xff]
      %v6947 = vld [vmem:[%s6135 + $0x172] sm:$0xff]
      %s6948 = scalar_lea.vmem %s3, 256
      %v6949 = vld [vmem:[%s6948] sm:$0xff]
      %v6950 = vld [vmem:[%s6948 + $0x8] sm:$0xff]
      %v6951 = vld [vmem:[%s6948 + $0x10] sm:$0xff]
      %v6952 = vld [vmem:[%s6948 + $0x18] sm:$0xff]
      %v6954 = vsel %vm3771, %v6916, 0
      %v6957 = vsel %vm3771, %v6917, 0
      %v6960 = vsel %vm3771, %v6918, 0
      %v6963 = vsel %vm3771, %v6919, 0
      %v6966 = vsel %vm3771, %v6920, 0
      %v6969 = vsel %vm3771, %v6921, 0
      %v6972 = vsel %vm3771, %v6922, 0
      %v6975 = vsel %vm3771, %v6923, 0
      %v6978 = vsel %vm3771, %v6924, 0
      %v6981 = vsel %vm3771, %v6925, 0
      %v6984 = vsel %vm3771, %v6926, 0
      %v6987 = vsel %vm3771, %v6927, 0
      %v6990 = vsel %vm3771, %v6928, 0
      %v6993 = vsel %vm3771, %v6929, 0
      %v6996 = vsel %vm3771, %v6930, 0
      %v6999 = vsel %vm3771, %v6931, 0
      %v7002 = vsel %vm3771, %v6932, 0
      %v7005 = vsel %vm3771, %v6933, 0
      %v7008 = vsel %vm3771, %v6934, 0
      %v7011 = vsel %vm3771, %v6935, 0
      %v7014 = vsel %vm3771, %v6936, 0
      %v7017 = vsel %vm3771, %v6937, 0
      %v7020 = vsel %vm3771, %v6938, 0
      %v7023 = vsel %vm3771, %v6939, 0
      %v7026 = vsel %vm3771, %v6940, 0
      %v7029 = vsel %vm3771, %v6941, 0
      %v7032 = vsel %vm3771, %v6942, 0
      %v7035 = vsel %vm3771, %v6943, 0
      %v7038 = vsel %vm3771, %v6944, 0
      %v7041 = vsel %vm3771, %v6945, 0
      %v7044 = vsel %vm3771, %v6946, 0
      %v7047 = vsel %vm3771, %v6947, 0
      %7049 = vmatprep.subr.mxu0 0.0
      %7050 = vmatpush1.msra.mxu0 %v6949
      %7051 = vmatprep.subr.mxu0 0.0
      %7052 = vmatpush1.msra.mxu0 %v6950
      %7053 = vmatprep.subr.mxu0 0.0
      %7054 = vmatpush1.msra.mxu0 %v6951
      %7055 = vmatprep.subr.mxu0 0.0
      %7056 = vmatpush1.msra.mxu0 %v6952
      %7057 = vmatprep.subr.mxu0 0.0
      %7058 = vmatpush1.msra.mxu0 0.0
      %7059 = vmatprep.subr.mxu0 0.0
      %7060 = vmatpush1.msra.mxu0 0.0
      %7061 = vmatprep.subr.mxu0 0.0
      %7062 = vmatpush1.msra.mxu0 0.0
      %7063 = vmatprep.subr.mxu0 0.0
      %7064 = vmatpush1.msra.mxu0 0.0
      %7065 = vmatprep.subr.mxu0 0.0
      %7066 = vmatpush1.msra.mxu0 0.0
      %7067 = vmatprep.subr.mxu0 0.0
      %7068 = vmatpush1.msra.mxu0 0.0
      %7069 = vmatprep.subr.mxu0 0.0
      %7070 = vmatpush1.msra.mxu0 0.0
      %7071 = vmatprep.subr.mxu0 0.0
      %7072 = vmatpush1.msra.mxu0 0.0
      %7073 = vmatprep.subr.mxu0 0.0
      %7074 = vmatpush1.msra.mxu0 0.0
      %7075 = vmatprep.subr.mxu0 0.0
      %7076 = vmatpush1.msra.mxu0 0.0
      %7077 = vmatprep.subr.mxu0 0.0
      %7078 = vmatpush1.msra.mxu0 0.0
      %7079 = vmatprep.subr.mxu0 0.0
      %7080 = vmatpush1.msra.mxu0 0.0
      %7081 = vmatprep.subr.mxu0 0.0
      %7082 = vmatpush1.msra.mxu0 0.0
      %7083 = vmatprep.subr.mxu0 0.0
      %7084 = vmatpush1.msra.mxu0 0.0
      %7085 = vmatprep.subr.mxu0 0.0
      %7086 = vmatpush1.msra.mxu0 0.0
      %7087 = vmatprep.subr.mxu0 0.0
      %7088 = vmatpush1.msra.mxu0 0.0
      %7089 = vmatprep.subr.mxu0 0.0
      %7090 = vmatpush1.msra.mxu0 0.0
      %7091 = vmatprep.subr.mxu0 0.0
      %7092 = vmatpush1.msra.mxu0 0.0
      %7093 = vmatprep.subr.mxu0 0.0
      %7094 = vmatpush1.msra.mxu0 0.0
      %7095 = vmatprep.subr.mxu0 0.0
      %7096 = vmatpush1.msra.mxu0 0.0
      %7097 = vmatprep.subr.mxu0 0.0
      %7098 = vmatpush1.msra.mxu0 0.0
      %7099 = vmatprep.subr.mxu0 0.0
      %7100 = vmatpush1.msra.mxu0 0.0
      %7101 = vmatprep.subr.mxu0 0.0
      %7102 = vmatpush1.msra.mxu0 0.0
      %7103 = vmatprep.subr.mxu0 0.0
      %7104 = vmatpush1.msra.mxu0 0.0
      %7105 = vmatprep.subr.mxu0 0.0
      %7106 = vmatpush1.msra.mxu0 0.0
      %7107 = vmatprep.subr.mxu0 0.0
      %7108 = vmatpush1.msra.mxu0 0.0
      %7109 = vmatprep.subr.mxu0 0.0
      %7110 = vmatpush1.msra.mxu0 0.0
      %7111 = vmatprep.subr.mxu0 0.0
      %7112 = vmatpush1.msra.mxu0 0.0
      %7113 = vmatprep.mubr.f32.mxu0 0.0
      %7114 = vmatmul.mubr.f32.gmra.mrb[0].mxu0 %v6954
      %v7115 = vpop.f32.mrb[0].mxu0
      %v7116 = vadd.f32 0.0, %v7115
      %v7117 = vpop.f32.mrb[0].mxu0
      %7118 = vmatprep.mubr.f32.mxu0 0.0
      %7119 = vmatmul.mubr.f32.gmra.mrb[0].mxu0 %v6957
      %v7120 = vpop.f32.mrb[0].mxu0
      %v7121 = vadd.f32 0.0, %v7120
      %v7122 = vpop.f32.mrb[0].mxu0
      %7123 = vmatprep.mubr.f32.mxu0 0.0
      %7124 = vmatmul.mubr.f32.gmra.mrb[0].mxu0 %v6960
      %v7125 = vpop.f32.mrb[0].mxu0
      %v7126 = vadd.f32 0.0, %v7125
      %v7127 = vpop.f32.mrb[0].mxu0
      %7128 = vmatprep.mubr.f32.mxu0 0.0
      %7129 = vmatmul.mubr.f32.gmra.mrb[0].mxu0 %v6963
      %v7130 = vpop.f32.mrb[0].mxu0
      %v7131 = vadd.f32 0.0, %v7130
      %v7132 = vpop.f32.mrb[0].mxu0
      %7133 = vmatprep.mubr.f32.mxu0 0.0
      %7134 = vmatmul.mubr.f32.gmra.mrb[0].mxu0 %v6966
      %v7135 = vpop.f32.mrb[0].mxu0
      %v7136 = vadd.f32 0.0, %v7135
      %v7137 = vpop.f32.mrb[0].mxu0
      %7138 = vmatprep.mubr.f32.mxu0 0.0
      %7139 = vmatmul.mubr.f32.gmra.mrb[0].mxu0 %v6969
      %v7140 = vpop.f32.mrb[0].mxu0
      %v7141 = vadd.f32 0.0, %v7140
      %v7142 = vpop.f32.mrb[0].mxu0
      %7143 = vmatprep.mubr.f32.mxu0 0.0
      %7144 = vmatmul.mubr.f32.gmra.mrb[0].mxu0 %v6972
      %v7145 = vpop.f32.mrb[0].mxu0
      %v7146 = vadd.f32 0.0, %v7145
      %v7147 = vpop.f32.mrb[0].mxu0
      %7148 = vmatprep.mubr.f32.mxu0 0.0
      %7149 = vmatmul.mubr.f32.gmra.mrb[0].mxu0 %v6975
      %v7150 = vpop.f32.mrb[0].mxu0
      %v7151 = vadd.f32 0.0, %v7150
      %v7152 = vpop.f32.mrb[0].mxu0
      %7153 = vmatprep.mubr.f32.mxu0 0.0
      %7154 = vmatmul.mubr.f32.gmra.mrb[0].mxu0 %v6978
      %v7155 = vpop.f32.mrb[0].mxu0
      %v7156 = vadd.f32 0.0, %v7155
      %v7157 = vpop.f32.mrb[0].mxu0
      %7158 = vmatprep.mubr.f32.mxu0 0.0
      %7159 = vmatmul.mubr.f32.gmra.mrb[0].mxu0 %v6981
      %v7160 = vpop.f32.mrb[0].mxu0
      %v7161 = vadd.f32 0.0, %v7160
      %v7162 = vpop.f32.mrb[0].mxu0
      %7163 = vmatprep.mubr.f32.mxu0 0.0
      %7164 = vmatmul.mubr.f32.gmra.mrb[0].mxu0 %v6984
      %v7165 = vpop.f32.mrb[0].mxu0
      %v7166 = vadd.f32 0.0, %v7165
      %v7167 = vpop.f32.mrb[0].mxu0
      %7168 = vmatprep.mubr.f32.mxu0 0.0
      %7169 = vmatmul.mubr.f32.gmra.mrb[0].mxu0 %v6987
      %v7170 = vpop.f32.mrb[0].mxu0
      %v7171 = vadd.f32 0.0, %v7170
      %v7172 = vpop.f32.mrb[0].mxu0
      %7173 = vmatprep.mubr.f32.mxu0 0.0
      %7174 = vmatmul.mubr.f32.gmra.mrb[0].mxu0 %v6990
      %v7175 = vpop.f32.mrb[0].mxu0
      %v7176 = vadd.f32 0.0, %v7175
      %v7177 = vpop.f32.mrb[0].mxu0
      %7178 = vmatprep.mubr.f32.mxu0 0.0
      %7179 = vmatmul.mubr.f32.gmra.mrb[0].mxu0 %v6993
      %v7180 = vpop.f32.mrb[0].mxu0
      %v7181 = vadd.f32 0.0, %v7180
      %v7182 = vpop.f32.mrb[0].mxu0
      %7183 = vmatprep.mubr.f32.mxu0 0.0
      %7184 = vmatmul.mubr.f32.gmra.mrb[0].mxu0 %v6996
      %v7185 = vpop.f32.mrb[0].mxu0
      %v7186 = vadd.f32 0.0, %v7185
      %v7187 = vpop.f32.mrb[0].mxu0
      %7188 = vmatprep.mubr.f32.mxu0 0.0
      %7189 = vmatmul.mubr.f32.gmra.mrb[0].mxu0 %v6999
      %v7190 = vpop.f32.mrb[0].mxu0
      %v7191 = vadd.f32 0.0, %v7190
      %v7192 = vpop.f32.mrb[0].mxu0
      %7193 = vmatprep.mubr.f32.mxu0 0.0
      %7194 = vmatmul.mubr.f32.gmra.mrb[0].mxu0 %v7002
      %v7195 = vpop.f32.mrb[0].mxu0
      %v7196 = vadd.f32 0.0, %v7195
      %v7197 = vpop.f32.mrb[0].mxu0
      %7198 = vmatprep.mubr.f32.mxu0 0.0
      %7199 = vmatmul.mubr.f32.gmra.mrb[0].mxu0 %v7005
      %v7200 = vpop.f32.mrb[0].mxu0
      %v7201 = vadd.f32 0.0, %v7200
      %v7202 = vpop.f32.mrb[0].mxu0
      %7203 = vmatprep.mubr.f32.mxu0 0.0
      %7204 = vmatmul.mubr.f32.gmra.mrb[0].mxu0 %v7008
      %v7205 = vpop.f32.mrb[0].mxu0
      %v7206 = vadd.f32 0.0, %v7205
      %v7207 = vpop.f32.mrb[0].mxu0
      %7208 = vmatprep.mubr.f32.mxu0 0.0
      %7209 = vmatmul.mubr.f32.gmra.mrb[0].mxu0 %v7011
      %v7210 = vpop.f32.mrb[0].mxu0
      %v7211 = vadd.f32 0.0, %v7210
      %v7212 = vpop.f32.mrb[0].mxu0
      %7213 = vmatprep.mubr.f32.mxu0 0.0
      %7214 = vmatmul.mubr.f32.gmra.mrb[0].mxu0 %v7014
      %v7215 = vpop.f32.mrb[0].mxu0
      %v7216 = vadd.f32 0.0, %v7215
      %v7217 = vpop.f32.mrb[0].mxu0
      %7218 = vmatprep.mubr.f32.mxu0 0.0
      %7219 = vmatmul.mubr.f32.gmra.mrb[0].mxu0 %v7017
      %v7220 = vpop.f32.mrb[0].mxu0
      %v7221 = vadd.f32 0.0, %v7220
      %v7222 = vpop.f32.mrb[0].mxu0
      %7223 = vmatprep.mubr.f32.mxu0 0.0
      %7224 = vmatmul.mubr.f32.gmra.mrb[0].mxu0 %v7020
      %v7225 = vpop.f32.mrb[0].mxu0
      %v7226 = vadd.f32 0.0, %v7225
      %v7227 = vpop.f32.mrb[0].mxu0
      %7228 = vmatprep.mubr.f32.mxu0 0.0
      %7229 = vmatmul.mubr.f32.gmra.mrb[0].mxu0 %v7023
      %v7230 = vpop.f32.mrb[0].mxu0
      %v7231 = vadd.f32 0.0, %v7230
      %v7232 = vpop.f32.mrb[0].mxu0
      %7233 = vmatprep.mubr.f32.mxu0 0.0
      %7234 = vmatmul.mubr.f32.gmra.mrb[0].mxu0 %v7026
      %v7235 = vpop.f32.mrb[0].mxu0
      %v7236 = vadd.f32 0.0, %v7235
      %v7237 = vpop.f32.mrb[0].mxu0
      %7238 = vmatprep.mubr.f32.mxu0 0.0
      %7239 = vmatmul.mubr.f32.gmra.mrb[0].mxu0 %v7029
      %v7240 = vpop.f32.mrb[0].mxu0
      %v7241 = vadd.f32 0.0, %v7240
      %v7242 = vpop.f32.mrb[0].mxu0
      %7243 = vmatprep.mubr.f32.mxu0 0.0
      %7244 = vmatmul.mubr.f32.gmra.mrb[0].mxu0 %v7032
      %v7245 = vpop.f32.mrb[0].mxu0
      %v7246 = vadd.f32 0.0, %v7245
      %v7247 = vpop.f32.mrb[0].mxu0
      %7248 = vmatprep.mubr.f32.mxu0 0.0
      %7249 = vmatmul.mubr.f32.gmra.mrb[0].mxu0 %v7035
      %v7250 = vpop.f32.mrb[0].mxu0
      %v7251 = vadd.f32 0.0, %v7250
      %v7252 = vpop.f32.mrb[0].mxu0
      %7253 = vmatprep.mubr.f32.mxu0 0.0
      %7254 = vmatmul.mubr.f32.gmra.mrb[0].mxu0 %v7038
      %v7255 = vpop.f32.mrb[0].mxu0
      %v7256 = vadd.f32 0.0, %v7255
      %v7257 = vpop.f32.mrb[0].mxu0
      %7258 = vmatprep.mubr.f32.mxu0 0.0
      %7259 = vmatmul.mubr.f32.gmra.mrb[0].mxu0 %v7041
      %v7260 = vpop.f32.mrb[0].mxu0
      %v7261 = vadd.f32 0.0, %v7260
      %v7262 = vpop.f32.mrb[0].mxu0
      %7263 = vmatprep.mubr.f32.mxu0 0.0
      %7264 = vmatmul.mubr.f32.gmra.mrb[0].mxu0 %v7044
      %v7265 = vpop.f32.mrb[0].mxu0
      %v7266 = vadd.f32 0.0, %v7265
      %v7267 = vpop.f32.mrb[0].mxu0
      %7268 = vmatprep.mubr.f32.mxu0 0.0
      %7269 = vmatmul.mubr.f32.gmra.mrb[0].mxu0 %v7047
      %v7270 = vpop.f32.mrb[0].mxu0
      %v7271 = vadd.f32 0.0, %v7270
      %v7272 = vpop.f32.mrb[0].mxu0
      %7273 = vdwg.mxu0
      %v7274 = vadd.f32 %v6884, %v7116
      %v7275 = vadd.f32 %v6885, %v7121
      %v7276 = vadd.f32 %v6886, %v7126
      %v7277 = vadd.f32 %v6887, %v7131
      %v7278 = vadd.f32 %v6888, %v7136
      %v7279 = vadd.f32 %v6889, %v7141
      %v7280 = vadd.f32 %v6890, %v7146
      %v7281 = vadd.f32 %v6891, %v7151
      %v7282 = vadd.f32 %v6892, %v7156
      %v7283 = vadd.f32 %v6893, %v7161
      %v7284 = vadd.f32 %v6894, %v7166
      %v7285 = vadd.f32 %v6895, %v7171
      %v7286 = vadd.f32 %v6896, %v7176
      %v7287 = vadd.f32 %v6897, %v7181
      %v7288 = vadd.f32 %v6898, %v7186
      %v7289 = vadd.f32 %v6899, %v7191
      %v7290 = vadd.f32 %v6900, %v7196
      %v7291 = vadd.f32 %v6901, %v7201
      %v7292 = vadd.f32 %v6902, %v7206
      %v7293 = vadd.f32 %v6903, %v7211
      %v7294 = vadd.f32 %v6904, %v7216
      %v7295 = vadd.f32 %v6905, %v7221
      %v7296 = vadd.f32 %v6906, %v7226
      %v7297 = vadd.f32 %v6907, %v7231
      %v7298 = vadd.f32 %v6908, %v7236
      %v7299 = vadd.f32 %v6909, %v7241
      %v7300 = vadd.f32 %v6910, %v7246
      %v7301 = vadd.f32 %v6911, %v7251
      %v7302 = vadd.f32 %v6912, %v7256
      %v7303 = vadd.f32 %v6913, %v7261
      %v7304 = vadd.f32 %v6914, %v7266
      %v7305 = vadd.f32 %v6915, %v7271
      %v7306 = vld [vmem:[%s4] sm:$0x1]
      %v7308 = vlaneseq
      %v7309 = vshrl.u32 %v7308, 7
      %v7310 = vsub.s32 0, %v7309
      %v7311 = vrot.slane %v7306, %v7310
      %v7313 = vadd.f32 %v7274, %v7311
      %v7314 = vadd.f32 %v7275, %v7311
      %v7315 = vadd.f32 %v7276, %v7311
      %v7316 = vadd.f32 %v7277, %v7311
      %v7317 = vadd.f32 %v7278, %v7311
      %v7318 = vadd.f32 %v7279, %v7311
      %v7319 = vadd.f32 %v7280, %v7311
      %v7320 = vadd.f32 %v7281, %v7311
      %v7321 = vadd.f32 %v7282, %v7311
      %v7322 = vadd.f32 %v7283, %v7311
      %v7323 = vadd.f32 %v7284, %v7311
      %v7324 = vadd.f32 %v7285, %v7311
      %v7325 = vadd.f32 %v7286, %v7311
      %v7326 = vadd.f32 %v7287, %v7311
      %v7327 = vadd.f32 %v7288, %v7311
      %v7328 = vadd.f32 %v7289, %v7311
      %v7329 = vadd.f32 %v7290, %v7311
      %v7330 = vadd.f32 %v7291, %v7311
      %v7331 = vadd.f32 %v7292, %v7311
      %v7332 = vadd.f32 %v7293, %v7311
      %v7333 = vadd.f32 %v7294, %v7311
      %v7334 = vadd.f32 %v7295, %v7311
      %v7335 = vadd.f32 %v7296, %v7311
      %v7336 = vadd.f32 %v7297, %v7311
      %v7337 = vadd.f32 %v7298, %v7311
      %v7338 = vadd.f32 %v7299, %v7311
      %v7339 = vadd.f32 %v7300, %v7311
      %v7340 = vadd.f32 %v7301, %v7311
      %v7341 = vadd.f32 %v7302, %v7311
      %v7342 = vadd.f32 %v7303, %v7311
      %v7343 = vadd.f32 %v7304, %v7311
      %v7344 = vadd.f32 %v7305, %v7311
      %v7345 = vmax.f32 %v7313, 0.0
      %v7346 = vmax.f32 %v7314, 0.0
      %v7347 = vmax.f32 %v7315, 0.0
      %v7348 = vmax.f32 %v7316, 0.0
      %v7349 = vmax.f32 %v7317, 0.0
      %v7350 = vmax.f32 %v7318, 0.0
      %v7351 = vmax.f32 %v7319, 0.0
      %v7352 = vmax.f32 %v7320, 0.0
      %v7353 = vmax.f32 %v7321, 0.0
      %v7354 = vmax.f32 %v7322, 0.0
      %v7355 = vmax.f32 %v7323, 0.0
      %v7356 = vmax.f32 %v7324, 0.0
      %v7357 = vmax.f32 %v7325, 0.0
      %v7358 = vmax.f32 %v7326, 0.0
      %v7359 = vmax.f32 %v7327, 0.0
      %v7360 = vmax.f32 %v7328, 0.0
      %v7361 = vmax.f32 %v7329, 0.0
      %v7362 = vmax.f32 %v7330, 0.0
      %v7363 = vmax.f32 %v7331, 0.0
      %v7364 = vmax.f32 %v7332, 0.0
      %v7365 = vmax.f32 %v7333, 0.0
      %v7366 = vmax.f32 %v7334, 0.0
      %v7367 = vmax.f32 %v7335, 0.0
      %v7368 = vmax.f32 %v7336, 0.0
      %v7369 = vmax.f32 %v7337, 0.0
      %v7370 = vmax.f32 %v7338, 0.0
      %v7371 = vmax.f32 %v7339, 0.0
      %v7372 = vmax.f32 %v7340, 0.0
      %v7373 = vmax.f32 %v7341, 0.0
      %v7374 = vmax.f32 %v7342, 0.0
      %v7375 = vmax.f32 %v7343, 0.0
      %v7376 = vmax.f32 %v7344, 0.0
      %7377 = vst.msk [vmem:[#allocation3] sm:$0xff] %vm3771, 0.0
      %7378 = vst.msk [vmem:[#allocation3 + $0x8] sm:$0xff] %vm3771, 0.0
      %7379 = vst.msk [vmem:[#allocation3 + $0x10] sm:$0x3] %vm3774, 0.0
      %7380 = vst.msk [vmem:[#allocation3 + $0x18] sm:$0xff] %vm3771, 0.0
      %7381 = vst.msk [vmem:[#allocation3 + $0x20] sm:$0xff] %vm3771, 0.0
      %7382 = vst.msk [vmem:[#allocation3 + $0x28] sm:$0x3] %vm3774, 0.0
      %7383 = vst.msk [vmem:[#allocation3 + $0x30] sm:$0xff] %vm3771, 0.0
      %7384 = vst.msk [vmem:[#allocation3 + $0x38] sm:$0xff] %vm3771, 0.0
      %7385 = vst.msk [vmem:[#allocation3 + $0x40] sm:$0x3] %vm3774, 0.0
      %7386 = vst.msk [vmem:[#allocation3 + $0x48] sm:$0xff] %vm3771, 0.0
      %7387 = vst.msk [vmem:[#allocation3 + $0x50] sm:$0xff] %vm3771, 0.0
      %7388 = vst.msk [vmem:[#allocation3 + $0x58] sm:$0x3] %vm3774, 0.0
      %7389 = vst.msk [vmem:[#allocation3 + $0x60] sm:$0xff] %vm3771, 0.0
      %7390 = vst.msk [vmem:[#allocation3 + $0x68] sm:$0xff] %vm3771, 0.0
      %7391 = vst.msk [vmem:[#allocation3 + $0x70] sm:$0x3] %vm3774, 0.0
      %7392 = vst.msk [vmem:[#allocation3 + $0x78] sm:$0xff] %vm3771, 0.0
      %7393 = vst.msk [vmem:[#allocation3 + $0x80] sm:$0xff] %vm3771, 0.0
      %7394 = vst.msk [vmem:[#allocation3 + $0x88] sm:$0x3] %vm3774, 0.0
      %7395 = vst.msk [vmem:[#allocation3 + $0x90] sm:$0xff] %vm3771, 0.0
      %7396 = vst.msk [vmem:[#allocation3 + $0x98] sm:$0xff] %vm3771, 0.0
      %7397 = vst.msk [vmem:[#allocation3 + $0xa0] sm:$0x3] %vm3774, 0.0
      %7398 = vst.msk [vmem:[#allocation3 + $0xa8] sm:$0xff] %vm3771, 0.0
      %7399 = vst.msk [vmem:[#allocation3 + $0xb0] sm:$0xff] %vm3771, 0.0
      %7400 = vst.msk [vmem:[#allocation3 + $0xb8] sm:$0x3] %vm3774, 0.0
      %7401 = vst.msk [vmem:[#allocation3 + $0xc0] sm:$0xff] %vm3771, 0.0
      %7402 = vst.msk [vmem:[#allocation3 + $0xc8] sm:$0xff] %vm3771, 0.0
      %7403 = vst.msk [vmem:[#allocation3 + $0xd0] sm:$0x3] %vm3774, 0.0
      %7404 = vst.msk [vmem:[#allocation3 + $0xd8] sm:$0xff] %vm3771, 0.0
      %7405 = vst.msk [vmem:[#allocation3 + $0xe0] sm:$0xff] %vm3771, 0.0
      %7406 = vst.msk [vmem:[#allocation3 + $0xe8] sm:$0x3] %vm3774, 0.0
      %7407 = vst.msk [vmem:[#allocation3 + $0xf0] sm:$0xff] %vm3771, 0.0
      %7408 = vst.msk [vmem:[#allocation3 + $0xf8] sm:$0xff] %vm3771, 0.0
      %7409 = vst.msk [vmem:[#allocation3 + $0x100] sm:$0x3] %vm3774, 0.0
      %7410 = vst.msk [vmem:[#allocation3 + $0x108] sm:$0xff] %vm3771, 0.0
      %7411 = vst.msk [vmem:[#allocation3 + $0x110] sm:$0xff] %vm3771, 0.0
      %7412 = vst.msk [vmem:[#allocation3 + $0x118] sm:$0x3] %vm3774, 0.0
      %7413 = vst.msk [vmem:[#allocation3 + $0x120] sm:$0xff] %vm3771, 0.0
      %7414 = vst.msk [vmem:[#allocation3 + $0x128] sm:$0xff] %vm3771, 0.0
      %7415 = vst.msk [vmem:[#allocation3 + $0x130] sm:$0x3] %vm3774, 0.0
      %7416 = vst.msk [vmem:[#allocation3 + $0x138] sm:$0xff] %vm3771, 0.0
      %7417 = vst.msk [vmem:[#allocation3 + $0x140] sm:$0xff] %vm3771, 0.0
      %7418 = vst.msk [vmem:[#allocation3 + $0x148] sm:$0x3] %vm3774, 0.0
      %7419 = vst.msk [vmem:[#allocation3 + $0x150] sm:$0xff] %vm3771, 0.0
      %7420 = vst.msk [vmem:[#allocation3 + $0x158] sm:$0xff] %vm3771, 0.0
      %7421 = vst.msk [vmem:[#allocation3 + $0x160] sm:$0x3] %vm3774, 0.0
      %7422 = vst.msk [vmem:[#allocation3 + $0x168] sm:$0xff] %vm3771, 0.0
      %7423 = vst.msk [vmem:[#allocation3 + $0x170] sm:$0xff] %vm3771, 0.0
      %7424 = vst.msk [vmem:[#allocation3 + $0x178] sm:$0x3] %vm3774, 0.0
      %7425 = vst.msk [vmem:[#allocation3 + $0x180] sm:$0xff] %vm3771, 0.0
      %7426 = vst.msk [vmem:[#allocation3 + $0x188] sm:$0xff] %vm3771, 0.0
      %7427 = vst.msk [vmem:[#allocation3 + $0x190] sm:$0x3] %vm3774, 0.0
      %7428 = vst.msk [vmem:[#allocation3 + $0x198] sm:$0xff] %vm3771, 0.0
      %7429 = vst.msk [vmem:[#allocation3 + $0x1a0] sm:$0xff] %vm3771, 0.0
      %7430 = vst.msk [vmem:[#allocation3 + $0x1a8] sm:$0x3] %vm3774, 0.0
      %s7431 = scalar_lea.vmem [#allocation3], 24
      %7432 = vst.msk [vmem:[%s7431 + $0x1] sm:$0xff] %vm3771, %v7345
      %7433 = vst.msk [vmem:[%s7431 + $0x9] sm:$0xff] %vm3771, %v7346
      %7434 = vst.msk [vmem:[%s7431 + $0x19] sm:$0xff] %vm3771, %v7347
      %7435 = vst.msk [vmem:[%s7431 + $0x21] sm:$0xff] %vm3771, %v7348
      %7436 = vst.msk [vmem:[%s7431 + $0x31] sm:$0xff] %vm3771, %v7349
      %7437 = vst.msk [vmem:[%s7431 + $0x39] sm:$0xff] %vm3771, %v7350
      %7438 = vst.msk [vmem:[%s7431 + $0x49] sm:$0xff] %vm3771, %v7351
      %7439 = vst.msk [vmem:[%s7431 + $0x51] sm:$0xff] %vm3771, %v7352
      %7440 = vst.msk [vmem:[%s7431 + $0x61] sm:$0xff] %vm3771, %v7353
      %7441 = vst.msk [vmem:[%s7431 + $0x69] sm:$0xff] %vm3771, %v7354
      %7442 = vst.msk [vmem:[%s7431 + $0x79] sm:$0xff] %vm3771, %v7355
      %7443 = vst.msk [vmem:[%s7431 + $0x81] sm:$0xff] %vm3771, %v7356
      %7444 = vst.msk [vmem:[%s7431 + $0x91] sm:$0xff] %vm3771, %v7357
      %7445 = vst.msk [vmem:[%s7431 + $0x99] sm:$0xff] %vm3771, %v7358
      %7446 = vst.msk [vmem:[%s7431 + $0xa9] sm:$0xff] %vm3771, %v7359
      %7447 = vst.msk [vmem:[%s7431 + $0xb1] sm:$0xff] %vm3771, %v7360
      %7448 = vst.msk [vmem:[%s7431 + $0xc1] sm:$0xff] %vm3771, %v7361
      %7449 = vst.msk [vmem:[%s7431 + $0xc9] sm:$0xff] %vm3771, %v7362
      %7450 = vst.msk [vmem:[%s7431 + $0xd9] sm:$0xff] %vm3771, %v7363
      %7451 = vst.msk [vmem:[%s7431 + $0xe1] sm:$0xff] %vm3771, %v7364
      %7452 = vst.msk [vmem:[%s7431 + $0xf1] sm:$0xff] %vm3771, %v7365
      %7453 = vst.msk [vmem:[%s7431 + $0xf9] sm:$0xff] %vm3771, %v7366
      %7454 = vst.msk [vmem:[%s7431 + $0x109] sm:$0xff] %vm3771, %v7367
      %7455 = vst.msk [vmem:[%s7431 + $0x111] sm:$0xff] %vm3771, %v7368
      %7456 = vst.msk [vmem:[%s7431 + $0x121] sm:$0xff] %vm3771, %v7369
      %7457 = vst.msk [vmem:[%s7431 + $0x129] sm:$0xff] %vm3771, %v7370
      %7458 = vst.msk [vmem:[%s7431 + $0x139] sm:$0xff] %vm3771, %v7371
      %7459 = vst.msk [vmem:[%s7431 + $0x141] sm:$0xff] %vm3771, %v7372
      %7460 = vst.msk [vmem:[%s7431 + $0x151] sm:$0xff] %vm3771, %v7373
      %7461 = vst.msk [vmem:[%s7431 + $0x159] sm:$0xff] %vm3771, %v7374
      %7462 = vst.msk [vmem:[%s7431 + $0x169] sm:$0xff] %vm3771, %v7375
      %7463 = vst.msk [vmem:[%s7431 + $0x171] sm:$0xff] %vm3771, %v7376
      %v7464 = vld [vmem:[#allocation3] sm:$0xff]
      %v7465 = vld [vmem:[#allocation3 + $0x8] sm:$0xff]
      %v7466 = vld [vmem:[#allocation3 + $0x18] sm:$0xff]
      %v7467 = vld [vmem:[#allocation3 + $0x20] sm:$0xff]
      %v7468 = vld [vmem:[#allocation3 + $0x30] sm:$0xff]
      %v7469 = vld [vmem:[#allocation3 + $0x38] sm:$0xff]
      %v7470 = vld [vmem:[#allocation3 + $0x48] sm:$0xff]
      %v7471 = vld [vmem:[#allocation3 + $0x50] sm:$0xff]
      %v7472 = vld [vmem:[#allocation3 + $0x60] sm:$0xff]
      %v7473 = vld [vmem:[#allocation3 + $0x68] sm:$0xff]
      %v7474 = vld [vmem:[#allocation3 + $0x78] sm:$0xff]
      %v7475 = vld [vmem:[#allocation3 + $0x80] sm:$0xff]
      %v7476 = vld [vmem:[#allocation3 + $0x90] sm:$0xff]
      %v7477 = vld [vmem:[#allocation3 + $0x98] sm:$0xff]
      %v7478 = vld [vmem:[#allocation3 + $0xa8] sm:$0xff]
      %v7479 = vld [vmem:[#allocation3 + $0xb0] sm:$0xff]
      %v7480 = vld [vmem:[#allocation3 + $0xc0] sm:$0xff]
      %v7481 = vld [vmem:[#allocation3 + $0xc8] sm:$0xff]
      %v7482 = vld [vmem:[#allocation3 + $0xd8] sm:$0xff]
      %v7483 = vld [vmem:[#allocation3 + $0xe0] sm:$0xff]
      %v7484 = vld [vmem:[#allocation3 + $0xf0] sm:$0xff]
      %v7485 = vld [vmem:[#allocation3 + $0xf8] sm:$0xff]
      %v7486 = vld [vmem:[#allocation3 + $0x108] sm:$0xff]
      %v7487 = vld [vmem:[#allocation3 + $0x110] sm:$0xff]
      %v7488 = vld [vmem:[#allocation3 + $0x120] sm:$0xff]
      %v7489 = vld [vmem:[#allocation3 + $0x128] sm:$0xff]
      %v7490 = vld [vmem:[#allocation3 + $0x138] sm:$0xff]
      %v7491 = vld [vmem:[#allocation3 + $0x140] sm:$0xff]
      %v7492 = vld [vmem:[#allocation3 + $0x150] sm:$0xff]
      %v7493 = vld [vmem:[#allocation3 + $0x158] sm:$0xff]
      %v7494 = vld [vmem:[#allocation3 + $0x168] sm:$0xff]
      %v7495 = vld [vmem:[#allocation3 + $0x170] sm:$0xff]
      %v7496 = vld [vmem:[%s5] sm:$0xff]
      %v7497 = vld [vmem:[%s5 + $0x8] sm:$0xff]
      %v7498 = vld [vmem:[%s5 + $0x10] sm:$0xff]
      %v7499 = vld [vmem:[%s5 + $0x18] sm:$0xff]
      %v7500 = vld [vmem:[#allocation3 + $0x1] sm:$0xff]
      %v7501 = vld [vmem:[#allocation3 + $0x9] sm:$0xff]
      %v7502 = vld [vmem:[#allocation3 + $0x19] sm:$0xff]
      %v7503 = vld [vmem:[#allocation3 + $0x21] sm:$0xff]
      %v7504 = vld [vmem:[#allocation3 + $0x31] sm:$0xff]
      %v7505 = vld [vmem:[#allocation3 + $0x39] sm:$0xff]
      %v7506 = vld [vmem:[#allocation3 + $0x49] sm:$0xff]
      %v7507 = vld [vmem:[#allocation3 + $0x51] sm:$0xff]
      %v7508 = vld [vmem:[#allocation3 + $0x61] sm:$0xff]
      %v7509 = vld [vmem:[#allocation3 + $0x69] sm:$0xff]
      %v7510 = vld [vmem:[#allocation3 + $0x79] sm:$0xff]
      %v7511 = vld [vmem:[#allocation3 + $0x81] sm:$0xff]
      %v7512 = vld [vmem:[#allocation3 + $0x91] sm:$0xff]
      %v7513 = vld [vmem:[#allocation3 + $0x99] sm:$0xff]
      %v7514 = vld [vmem:[#allocation3 + $0xa9] sm:$0xff]
      %v7515 = vld [vmem:[#allocation3 + $0xb1] sm:$0xff]
      %v7516 = vld [vmem:[#allocation3 + $0xc1] sm:$0xff]
      %v7517 = vld [vmem:[#allocation3 + $0xc9] sm:$0xff]
      %v7518 = vld [vmem:[#allocation3 + $0xd9] sm:$0xff]
      %v7519 = vld [vmem:[#allocation3 + $0xe1] sm:$0xff]
      %v7520 = vld [vmem:[#allocation3 + $0xf1] sm:$0xff]
      %v7521 = vld [vmem:[#allocation3 + $0xf9] sm:$0xff]
      %v7522 = vld [vmem:[#allocation3 + $0x109] sm:$0xff]
      %v7523 = vld [vmem:[#allocation3 + $0x111] sm:$0xff]
      %v7524 = vld [vmem:[#allocation3 + $0x121] sm:$0xff]
      %v7525 = vld [vmem:[#allocation3 + $0x129] sm:$0xff]
      %v7526 = vld [vmem:[#allocation3 + $0x139] sm:$0xff]
      %v7527 = vld [vmem:[#allocation3 + $0x141] sm:$0xff]
      %v7528 = vld [vmem:[#allocation3 + $0x151] sm:$0xff]
      %v7529 = vld [vmem:[#allocation3 + $0x159] sm:$0xff]
      %v7530 = vld [vmem:[#allocation3 + $0x169] sm:$0xff]
      %v7531 = vld [vmem:[#allocation3 + $0x171] sm:$0xff]
      %s7532 = scalar_lea.vmem %s5, 32
      %v7533 = vld [vmem:[%s7532] sm:$0xff]
      %v7534 = vld [vmem:[%s7532 + $0x8] sm:$0xff]
      %v7535 = vld [vmem:[%s7532 + $0x10] sm:$0xff]
      %v7536 = vld [vmem:[%s7532 + $0x18] sm:$0xff]
      %v7538 = vsel %vm3771, %v7500, 0
      %v7541 = vsel %vm3771, %v7501, 0
      %v7544 = vsel %vm3771, %v7502, 0
      %v7547 = vsel %vm3771, %v7503, 0
      %v7550 = vsel %vm3771, %v7504, 0
      %v7553 = vsel %vm3771, %v7505, 0
      %v7556 = vsel %vm3771, %v7506, 0
      %v7559 = vsel %vm3771, %v7507, 0
      %v7562 = vsel %vm3771, %v7508, 0
      %v7565 = vsel %vm3771, %v7509, 0
      %v7568 = vsel %vm3771, %v7510, 0
      %v7571 = vsel %vm3771, %v7511, 0
      %v7574 = vsel %vm3771, %v7512, 0
      %v7577 = vsel %vm3771, %v7513, 0
      %v7580 = vsel %vm3771, %v7514, 0
      %v7583 = vsel %vm3771, %v7515, 0
      %v7586 = vsel %vm3771, %v7516, 0
      %v7589 = vsel %vm3771, %v7517, 0
      %v7592 = vsel %vm3771, %v7518, 0
      %v7595 = vsel %vm3771, %v7519, 0
      %v7598 = vsel %vm3771, %v7520, 0
      %v7601 = vsel %vm3771, %v7521, 0
      %v7604 = vsel %vm3771, %v7522, 0
      %v7607 = vsel %vm3771, %v7523, 0
      %v7610 = vsel %vm3771, %v7524, 0
      %v7613 = vsel %vm3771, %v7525, 0
      %v7616 = vsel %vm3771, %v7526, 0
      %v7619 = vsel %vm3771, %v7527, 0
      %v7622 = vsel %vm3771, %v7528, 0
      %v7625 = vsel %vm3771, %v7529, 0
      %v7628 = vsel %vm3771, %v7530, 0
      %v7631 = vsel %vm3771, %v7531, 0
      %7633 = vmatprep.subr.mxu0 0.0
      %7634 = vmatpush1.msra.mxu0 %v7533
      %7635 = vmatprep.subr.mxu0 0.0
      %7636 = vmatpush1.msra.mxu0 %v7534
      %7637 = vmatprep.subr.mxu0 0.0
      %7638 = vmatpush1.msra.mxu0 %v7535
      %7639 = vmatprep.subr.mxu0 0.0
      %7640 = vmatpush1.msra.mxu0 %v7536
      %7641 = vmatprep.subr.mxu0 0.0
      %7642 = vmatpush1.msra.mxu0 0.0
      %7643 = vmatprep.subr.mxu0 0.0
      %7644 = vmatpush1.msra.mxu0 0.0
      %7645 = vmatprep.subr.mxu0 0.0
      %7646 = vmatpush1.msra.mxu0 0.0
      %7647 = vmatprep.subr.mxu0 0.0
      %7648 = vmatpush1.msra.mxu0 0.0
      %7649 = vmatprep.subr.mxu0 0.0
      %7650 = vmatpush1.msra.mxu0 0.0
      %7651 = vmatprep.subr.mxu0 0.0
      %7652 = vmatpush1.msra.mxu0 0.0
      %7653 = vmatprep.subr.mxu0 0.0
      %7654 = vmatpush1.msra.mxu0 0.0
      %7655 = vmatprep.subr.mxu0 0.0
      %7656 = vmatpush1.msra.mxu0 0.0
      %7657 = vmatprep.subr.mxu0 0.0
      %7658 = vmatpush1.msra.mxu0 0.0
      %7659 = vmatprep.subr.mxu0 0.0
      %7660 = vmatpush1.msra.mxu0 0.0
      %7661 = vmatprep.subr.mxu0 0.0
      %7662 = vmatpush1.msra.mxu0 0.0
      %7663 = vmatprep.subr.mxu0 0.0
      %7664 = vmatpush1.msra.mxu0 0.0
      %7665 = vmatprep.subr.mxu0 0.0
      %7666 = vmatpush1.msra.mxu0 0.0
      %7667 = vmatprep.subr.mxu0 0.0
      %7668 = vmatpush1.msra.mxu0 0.0
      %7669 = vmatprep.subr.mxu0 0.0
      %7670 = vmatpush1.msra.mxu0 0.0
      %7671 = vmatprep.subr.mxu0 0.0
      %7672 = vmatpush1.msra.mxu0 0.0
      %7673 = vmatprep.subr.mxu0 0.0
      %7674 = vmatpush1.msra.mxu0 0.0
      %7675 = vmatprep.subr.mxu0 0.0
      %7676 = vmatpush1.msra.mxu0 0.0
      %7677 = vmatprep.subr.mxu0 0.0
      %7678 = vmatpush1.msra.mxu0 0.0
      %7679 = vmatprep.subr.mxu0 0.0
      %7680 = vmatpush1.msra.mxu0 0.0
      %7681 = vmatprep.subr.mxu0 0.0
      %7682 = vmatpush1.msra.mxu0 0.0
      %7683 = vmatprep.subr.mxu0 0.0
      %7684 = vmatpush1.msra.mxu0 0.0
      %7685 = vmatprep.subr.mxu0 0.0
      %7686 = vmatpush1.msra.mxu0 0.0
      %7687 = vmatprep.subr.mxu0 0.0
      %7688 = vmatpush1.msra.mxu0 0.0
      %7689 = vmatprep.subr.mxu0 0.0
      %7690 = vmatpush1.msra.mxu0 0.0
      %7691 = vmatprep.subr.mxu0 0.0
      %7692 = vmatpush1.msra.mxu0 0.0
      %7693 = vmatprep.subr.mxu0 0.0
      %7694 = vmatpush1.msra.mxu0 0.0
      %7695 = vmatprep.subr.mxu0 0.0
      %7696 = vmatpush1.msra.mxu0 0.0
      %7697 = vmatprep.mubr.f32.mxu0 0.0
      %7698 = vmatmul.mubr.f32.gmra.mrb[0].mxu0 %v7538
      %v7699 = vpop.f32.mrb[0].mxu0
      %v7700 = vadd.f32 0.0, %v7699
      %v7701 = vpop.f32.mrb[0].mxu0
      %7702 = vmatprep.mubr.f32.mxu0 0.0
      %7703 = vmatmul.mubr.f32.gmra.mrb[0].mxu0 %v7541
      %v7704 = vpop.f32.mrb[0].mxu0
      %v7705 = vadd.f32 0.0, %v7704
      %v7706 = vpop.f32.mrb[0].mxu0
      %7707 = vmatprep.mubr.f32.mxu0 0.0
      %7708 = vmatmul.mubr.f32.gmra.mrb[0].mxu0 %v7544
      %v7709 = vpop.f32.mrb[0].mxu0
      %v7710 = vadd.f32 0.0, %v7709
      %v7711 = vpop.f32.mrb[0].mxu0
      %7712 = vmatprep.mubr.f32.mxu0 0.0
      %7713 = vmatmul.mubr.f32.gmra.mrb[0].mxu0 %v7547
      %v7714 = vpop.f32.mrb[0].mxu0
      %v7715 = vadd.f32 0.0, %v7714
      %v7716 = vpop.f32.mrb[0].mxu0
      %7717 = vmatprep.mubr.f32.mxu0 0.0
      %7718 = vmatmul.mubr.f32.gmra.mrb[0].mxu0 %v7550
      %v7719 = vpop.f32.mrb[0].mxu0
      %v7720 = vadd.f32 0.0, %v7719
      %v7721 = vpop.f32.mrb[0].mxu0
      %7722 = vmatprep.mubr.f32.mxu0 0.0
      %7723 = vmatmul.mubr.f32.gmra.mrb[0].mxu0 %v7553
      %v7724 = vpop.f32.mrb[0].mxu0
      %v7725 = vadd.f32 0.0, %v7724
      %v7726 = vpop.f32.mrb[0].mxu0
      %7727 = vmatprep.mubr.f32.mxu0 0.0
      %7728 = vmatmul.mubr.f32.gmra.mrb[0].mxu0 %v7556
      %v7729 = vpop.f32.mrb[0].mxu0
      %v7730 = vadd.f32 0.0, %v7729
      %v7731 = vpop.f32.mrb[0].mxu0
      %7732 = vmatprep.mubr.f32.mxu0 0.0
      %7733 = vmatmul.mubr.f32.gmra.mrb[0].mxu0 %v7559
      %v7734 = vpop.f32.mrb[0].mxu0
      %v7735 = vadd.f32 0.0, %v7734
      %v7736 = vpop.f32.mrb[0].mxu0
      %7737 = vmatprep.mubr.f32.mxu0 0.0
      %7738 = vmatmul.mubr.f32.gmra.mrb[0].mxu0 %v7562
      %v7739 = vpop.f32.mrb[0].mxu0
      %v7740 = vadd.f32 0.0, %v7739
      %v7741 = vpop.f32.mrb[0].mxu0
      %7742 = vmatprep.mubr.f32.mxu0 0.0
      %7743 = vmatmul.mubr.f32.gmra.mrb[0].mxu0 %v7565
      %v7744 = vpop.f32.mrb[0].mxu0
      %v7745 = vadd.f32 0.0, %v7744
      %v7746 = vpop.f32.mrb[0].mxu0
      %7747 = vmatprep.mubr.f32.mxu0 0.0
      %7748 = vmatmul.mubr.f32.gmra.mrb[0].mxu0 %v7568
      %v7749 = vpop.f32.mrb[0].mxu0
      %v7750 = vadd.f32 0.0, %v7749
      %v7751 = vpop.f32.mrb[0].mxu0
      %7752 = vmatprep.mubr.f32.mxu0 0.0
      %7753 = vmatmul.mubr.f32.gmra.mrb[0].mxu0 %v7571
      %v7754 = vpop.f32.mrb[0].mxu0
      %v7755 = vadd.f32 0.0, %v7754
      %v7756 = vpop.f32.mrb[0].mxu0
      %7757 = vmatprep.mubr.f32.mxu0 0.0
      %7758 = vmatmul.mubr.f32.gmra.mrb[0].mxu0 %v7574
      %v7759 = vpop.f32.mrb[0].mxu0
      %v7760 = vadd.f32 0.0, %v7759
      %v7761 = vpop.f32.mrb[0].mxu0
      %7762 = vmatprep.mubr.f32.mxu0 0.0
      %7763 = vmatmul.mubr.f32.gmra.mrb[0].mxu0 %v7577
      %v7764 = vpop.f32.mrb[0].mxu0
      %v7765 = vadd.f32 0.0, %v7764
      %v7766 = vpop.f32.mrb[0].mxu0
      %7767 = vmatprep.mubr.f32.mxu0 0.0
      %7768 = vmatmul.mubr.f32.gmra.mrb[0].mxu0 %v7580
      %v7769 = vpop.f32.mrb[0].mxu0
      %v7770 = vadd.f32 0.0, %v7769
      %v7771 = vpop.f32.mrb[0].mxu0
      %7772 = vmatprep.mubr.f32.mxu0 0.0
      %7773 = vmatmul.mubr.f32.gmra.mrb[0].mxu0 %v7583
      %v7774 = vpop.f32.mrb[0].mxu0
      %v7775 = vadd.f32 0.0, %v7774
      %v7776 = vpop.f32.mrb[0].mxu0
      %7777 = vmatprep.mubr.f32.mxu0 0.0
      %7778 = vmatmul.mubr.f32.gmra.mrb[0].mxu0 %v7586
      %v7779 = vpop.f32.mrb[0].mxu0
      %v7780 = vadd.f32 0.0, %v7779
      %v7781 = vpop.f32.mrb[0].mxu0
      %7782 = vmatprep.mubr.f32.mxu0 0.0
      %7783 = vmatmul.mubr.f32.gmra.mrb[0].mxu0 %v7589
      %v7784 = vpop.f32.mrb[0].mxu0
      %v7785 = vadd.f32 0.0, %v7784
      %v7786 = vpop.f32.mrb[0].mxu0
      %7787 = vmatprep.mubr.f32.mxu0 0.0
      %7788 = vmatmul.mubr.f32.gmra.mrb[0].mxu0 %v7592
      %v7789 = vpop.f32.mrb[0].mxu0
      %v7790 = vadd.f32 0.0, %v7789
      %v7791 = vpop.f32.mrb[0].mxu0
      %7792 = vmatprep.mubr.f32.mxu0 0.0
      %7793 = vmatmul.mubr.f32.gmra.mrb[0].mxu0 %v7595
      %v7794 = vpop.f32.mrb[0].mxu0
      %v7795 = vadd.f32 0.0, %v7794
      %v7796 = vpop.f32.mrb[0].mxu0
      %7797 = vmatprep.mubr.f32.mxu0 0.0
      %7798 = vmatmul.mubr.f32.gmra.mrb[0].mxu0 %v7598
      %v7799 = vpop.f32.mrb[0].mxu0
      %v7800 = vadd.f32 0.0, %v7799
      %v7801 = vpop.f32.mrb[0].mxu0
      %7802 = vmatprep.mubr.f32.mxu0 0.0
      %7803 = vmatmul.mubr.f32.gmra.mrb[0].mxu0 %v7601
      %v7804 = vpop.f32.mrb[0].mxu0
      %v7805 = vadd.f32 0.0, %v7804
      %v7806 = vpop.f32.mrb[0].mxu0
      %7807 = vmatprep.mubr.f32.mxu0 0.0
      %7808 = vmatmul.mubr.f32.gmra.mrb[0].mxu0 %v7604
      %v7809 = vpop.f32.mrb[0].mxu0
      %v7810 = vadd.f32 0.0, %v7809
      %v7811 = vpop.f32.mrb[0].mxu0
      %7812 = vmatprep.mubr.f32.mxu0 0.0
      %7813 = vmatmul.mubr.f32.gmra.mrb[0].mxu0 %v7607
      %v7814 = vpop.f32.mrb[0].mxu0
      %v7815 = vadd.f32 0.0, %v7814
      %v7816 = vpop.f32.mrb[0].mxu0
      %7817 = vmatprep.mubr.f32.mxu0 0.0
      %7818 = vmatmul.mubr.f32.gmra.mrb[0].mxu0 %v7610
      %v7819 = vpop.f32.mrb[0].mxu0
      %v7820 = vadd.f32 0.0, %v7819
      %v7821 = vpop.f32.mrb[0].mxu0
      %7822 = vmatprep.mubr.f32.mxu0 0.0
      %7823 = vmatmul.mubr.f32.gmra.mrb[0].mxu0 %v7613
      %v7824 = vpop.f32.mrb[0].mxu0
      %v7825 = vadd.f32 0.0, %v7824
      %v7826 = vpop.f32.mrb[0].mxu0
      %7827 = vmatprep.mubr.f32.mxu0 0.0
      %7828 = vmatmul.mubr.f32.gmra.mrb[0].mxu0 %v7616
      %v7829 = vpop.f32.mrb[0].mxu0
      %v7830 = vadd.f32 0.0, %v7829
      %v7831 = vpop.f32.mrb[0].mxu0
      %7832 = vmatprep.mubr.f32.mxu0 0.0
      %7833 = vmatmul.mubr.f32.gmra.mrb[0].mxu0 %v7619
      %v7834 = vpop.f32.mrb[0].mxu0
      %v7835 = vadd.f32 0.0, %v7834
      %v7836 = vpop.f32.mrb[0].mxu0
      %7837 = vmatprep.mubr.f32.mxu0 0.0
      %7838 = vmatmul.mubr.f32.gmra.mrb[0].mxu0 %v7622
      %v7839 = vpop.f32.mrb[0].mxu0
      %v7840 = vadd.f32 0.0, %v7839
      %v7841 = vpop.f32.mrb[0].mxu0
      %7842 = vmatprep.mubr.f32.mxu0 0.0
      %7843 = vmatmul.mubr.f32.gmra.mrb[0].mxu0 %v7625
      %v7844 = vpop.f32.mrb[0].mxu0
      %v7845 = vadd.f32 0.0, %v7844
      %v7846 = vpop.f32.mrb[0].mxu0
      %7847 = vmatprep.mubr.f32.mxu0 0.0
      %7848 = vmatmul.mubr.f32.gmra.mrb[0].mxu0 %v7628
      %v7849 = vpop.f32.mrb[0].mxu0
      %v7850 = vadd.f32 0.0, %v7849
      %v7851 = vpop.f32.mrb[0].mxu0
      %7852 = vmatprep.mubr.f32.mxu0 0.0
      %7853 = vmatmul.mubr.f32.gmra.mrb[0].mxu0 %v7631
      %v7854 = vpop.f32.mrb[0].mxu0
      %v7855 = vadd.f32 0.0, %v7854
      %v7856 = vpop.f32.mrb[0].mxu0
      %7857 = vdwg.mxu0
      %v7859 = vsel %vm3771, %v7464, 0
      %v7862 = vsel %vm3771, %v7465, 0
      %v7865 = vsel %vm3771, %v7466, 0
      %v7868 = vsel %vm3771, %v7467, 0
      %v7871 = vsel %vm3771, %v7468, 0
      %v7874 = vsel %vm3771, %v7469, 0
      %v7877 = vsel %vm3771, %v7470, 0
      %v7880 = vsel %vm3771, %v7471, 0
      %v7883 = vsel %vm3771, %v7472, 0
      %v7886 = vsel %vm3771, %v7473, 0
      %v7889 = vsel %vm3771, %v7474, 0
      %v7892 = vsel %vm3771, %v7475, 0
      %v7895 = vsel %vm3771, %v7476, 0
      %v7898 = vsel %vm3771, %v7477, 0
      %v7901 = vsel %vm3771, %v7478, 0
      %v7904 = vsel %vm3771, %v7479, 0
      %v7907 = vsel %vm3771, %v7480, 0
      %v7910 = vsel %vm3771, %v7481, 0
      %v7913 = vsel %vm3771, %v7482, 0
      %v7916 = vsel %vm3771, %v7483, 0
      %v7919 = vsel %vm3771, %v7484, 0
      %v7922 = vsel %vm3771, %v7485, 0
      %v7925 = vsel %vm3771, %v7486, 0
      %v7928 = vsel %vm3771, %v7487, 0
      %v7931 = vsel %vm3771, %v7488, 0
      %v7934 = vsel %vm3771, %v7489, 0
      %v7937 = vsel %vm3771, %v7490, 0
      %v7940 = vsel %vm3771, %v7491, 0
      %v7943 = vsel %vm3771, %v7492, 0
      %v7946 = vsel %vm3771, %v7493, 0
      %v7949 = vsel %vm3771, %v7494, 0
      %v7952 = vsel %vm3771, %v7495, 0
      %7954 = vmatprep.subr.mxu0 0.0
      %7955 = vmatpush1.msra.mxu0 %v7496
      %7956 = vmatprep.subr.mxu0 0.0
      %7957 = vmatpush1.msra.mxu0 %v7497
      %7958 = vmatprep.subr.mxu0 0.0
      %7959 = vmatpush1.msra.mxu0 %v7498
      %7960 = vmatprep.subr.mxu0 0.0
      %7961 = vmatpush1.msra.mxu0 %v7499
      %7962 = vmatprep.subr.mxu0 0.0
      %7963 = vmatpush1.msra.mxu0 0.0
      %7964 = vmatprep.subr.mxu0 0.0
      %7965 = vmatpush1.msra.mxu0 0.0
      %7966 = vmatprep.subr.mxu0 0.0
      %7967 = vmatpush1.msra.mxu0 0.0
      %7968 = vmatprep.subr.mxu0 0.0
      %7969 = vmatpush1.msra.mxu0 0.0
      %7970 = vmatprep.subr.mxu0 0.0
      %7971 = vmatpush1.msra.mxu0 0.0
      %7972 = vmatprep.subr.mxu0 0.0
      %7973 = vmatpush1.msra.mxu0 0.0
      %7974 = vmatprep.subr.mxu0 0.0
      %7975 = vmatpush1.msra.mxu0 0.0
      %7976 = vmatprep.subr.mxu0 0.0
      %7977 = vmatpush1.msra.mxu0 0.0
      %7978 = vmatprep.subr.mxu0 0.0
      %7979 = vmatpush1.msra.mxu0 0.0
      %7980 = vmatprep.subr.mxu0 0.0
      %7981 = vmatpush1.msra.mxu0 0.0
      %7982 = vmatprep.subr.mxu0 0.0
      %7983 = vmatpush1.msra.mxu0 0.0
      %7984 = vmatprep.subr.mxu0 0.0
      %7985 = vmatpush1.msra.mxu0 0.0
      %7986 = vmatprep.subr.mxu0 0.0
      %7987 = vmatpush1.msra.mxu0 0.0
      %7988 = vmatprep.subr.mxu0 0.0
      %7989 = vmatpush1.msra.mxu0 0.0
      %7990 = vmatprep.subr.mxu0 0.0
      %7991 = vmatpush1.msra.mxu0 0.0
      %7992 = vmatprep.subr.mxu0 0.0
      %7993 = vmatpush1.msra.mxu0 0.0
      %7994 = vmatprep.subr.mxu0 0.0
      %7995 = vmatpush1.msra.mxu0 0.0
      %7996 = vmatprep.subr.mxu0 0.0
      %7997 = vmatpush1.msra.mxu0 0.0
      %7998 = vmatprep.subr.mxu0 0.0
      %7999 = vmatpush1.msra.mxu0 0.0
      %8000 = vmatprep.subr.mxu0 0.0
      %8001 = vmatpush1.msra.mxu0 0.0
      %8002 = vmatprep.subr.mxu0 0.0
      %8003 = vmatpush1.msra.mxu0 0.0
      %8004 = vmatprep.subr.mxu0 0.0
      %8005 = vmatpush1.msra.mxu0 0.0
      %8006 = vmatprep.subr.mxu0 0.0
      %8007 = vmatpush1.msra.mxu0 0.0
      %8008 = vmatprep.subr.mxu0 0.0
      %8009 = vmatpush1.msra.mxu0 0.0
      %8010 = vmatprep.subr.mxu0 0.0
      %8011 = vmatpush1.msra.mxu0 0.0
      %8012 = vmatprep.subr.mxu0 0.0
      %8013 = vmatpush1.msra.mxu0 0.0
      %8014 = vmatprep.subr.mxu0 0.0
      %8015 = vmatpush1.msra.mxu0 0.0
      %8016 = vmatprep.subr.mxu0 0.0
      %8017 = vmatpush1.msra.mxu0 0.0
      %8018 = vmatprep.mubr.f32.mxu0 0.0
      %8019 = vmatmul.mubr.f32.gmra.mrb[0].mxu0 %v7859
      %v8020 = vpop.f32.mrb[0].mxu0
      %v8021 = vadd.f32 %v7700, %v8020
      %v8022 = vpop.f32.mrb[0].mxu0
      %8023 = vmatprep.mubr.f32.mxu0 0.0
      %8024 = vmatmul.mubr.f32.gmra.mrb[0].mxu0 %v7862
      %v8025 = vpop.f32.mrb[0].mxu0
      %v8026 = vadd.f32 %v7705, %v8025
      %v8027 = vpop.f32.mrb[0].mxu0
      %8028 = vmatprep.mubr.f32.mxu0 0.0
      %8029 = vmatmul.mubr.f32.gmra.mrb[0].mxu0 %v7865
      %v8030 = vpop.f32.mrb[0].mxu0
      %v8031 = vadd.f32 %v7710, %v8030
      %v8032 = vpop.f32.mrb[0].mxu0
      %8033 = vmatprep.mubr.f32.mxu0 0.0
      %8034 = vmatmul.mubr.f32.gmra.mrb[0].mxu0 %v7868
      %v8035 = vpop.f32.mrb[0].mxu0
      %v8036 = vadd.f32 %v7715, %v8035
      %v8037 = vpop.f32.mrb[0].mxu0
      %8038 = vmatprep.mubr.f32.mxu0 0.0
      %8039 = vmatmul.mubr.f32.gmra.mrb[0].mxu0 %v7871
      %v8040 = vpop.f32.mrb[0].mxu0
      %v8041 = vadd.f32 %v7720, %v8040
      %v8042 = vpop.f32.mrb[0].mxu0
      %8043 = vmatprep.mubr.f32.mxu0 0.0
      %8044 = vmatmul.mubr.f32.gmra.mrb[0].mxu0 %v7874
      %v8045 = vpop.f32.mrb[0].mxu0
      %v8046 = vadd.f32 %v7725, %v8045
      %v8047 = vpop.f32.mrb[0].mxu0
      %8048 = vmatprep.mubr.f32.mxu0 0.0
      %8049 = vmatmul.mubr.f32.gmra.mrb[0].mxu0 %v7877
      %v8050 = vpop.f32.mrb[0].mxu0
      %v8051 = vadd.f32 %v7730, %v8050
      %v8052 = vpop.f32.mrb[0].mxu0
      %8053 = vmatprep.mubr.f32.mxu0 0.0
      %8054 = vmatmul.mubr.f32.gmra.mrb[0].mxu0 %v7880
      %v8055 = vpop.f32.mrb[0].mxu0
      %v8056 = vadd.f32 %v7735, %v8055
      %v8057 = vpop.f32.mrb[0].mxu0
      %8058 = vmatprep.mubr.f32.mxu0 0.0
      %8059 = vmatmul.mubr.f32.gmra.mrb[0].mxu0 %v7883
      %v8060 = vpop.f32.mrb[0].mxu0
      %v8061 = vadd.f32 %v7740, %v8060
      %v8062 = vpop.f32.mrb[0].mxu0
      %8063 = vmatprep.mubr.f32.mxu0 0.0
      %8064 = vmatmul.mubr.f32.gmra.mrb[0].mxu0 %v7886
      %v8065 = vpop.f32.mrb[0].mxu0
      %v8066 = vadd.f32 %v7745, %v8065
      %v8067 = vpop.f32.mrb[0].mxu0
      %8068 = vmatprep.mubr.f32.mxu0 0.0
      %8069 = vmatmul.mubr.f32.gmra.mrb[0].mxu0 %v7889
      %v8070 = vpop.f32.mrb[0].mxu0
      %v8071 = vadd.f32 %v7750, %v8070
      %v8072 = vpop.f32.mrb[0].mxu0
      %8073 = vmatprep.mubr.f32.mxu0 0.0
      %8074 = vmatmul.mubr.f32.gmra.mrb[0].mxu0 %v7892
      %v8075 = vpop.f32.mrb[0].mxu0
      %v8076 = vadd.f32 %v7755, %v8075
      %v8077 = vpop.f32.mrb[0].mxu0
      %8078 = vmatprep.mubr.f32.mxu0 0.0
      %8079 = vmatmul.mubr.f32.gmra.mrb[0].mxu0 %v7895
      %v8080 = vpop.f32.mrb[0].mxu0
      %v8081 = vadd.f32 %v7760, %v8080
      %v8082 = vpop.f32.mrb[0].mxu0
      %8083 = vmatprep.mubr.f32.mxu0 0.0
      %8084 = vmatmul.mubr.f32.gmra.mrb[0].mxu0 %v7898
      %v8085 = vpop.f32.mrb[0].mxu0
      %v8086 = vadd.f32 %v7765, %v8085
      %v8087 = vpop.f32.mrb[0].mxu0
      %8088 = vmatprep.mubr.f32.mxu0 0.0
      %8089 = vmatmul.mubr.f32.gmra.mrb[0].mxu0 %v7901
      %v8090 = vpop.f32.mrb[0].mxu0
      %v8091 = vadd.f32 %v7770, %v8090
      %v8092 = vpop.f32.mrb[0].mxu0
      %8093 = vmatprep.mubr.f32.mxu0 0.0
      %8094 = vmatmul.mubr.f32.gmra.mrb[0].mxu0 %v7904
      %v8095 = vpop.f32.mrb[0].mxu0
      %v8096 = vadd.f32 %v7775, %v8095
      %v8097 = vpop.f32.mrb[0].mxu0
      %8098 = vmatprep.mubr.f32.mxu0 0.0
      %8099 = vmatmul.mubr.f32.gmra.mrb[0].mxu0 %v7907
      %v8100 = vpop.f32.mrb[0].mxu0
      %v8101 = vadd.f32 %v7780, %v8100
      %v8102 = vpop.f32.mrb[0].mxu0
      %8103 = vmatprep.mubr.f32.mxu0 0.0
      %8104 = vmatmul.mubr.f32.gmra.mrb[0].mxu0 %v7910
      %v8105 = vpop.f32.mrb[0].mxu0
      %v8106 = vadd.f32 %v7785, %v8105
      %v8107 = vpop.f32.mrb[0].mxu0
      %8108 = vmatprep.mubr.f32.mxu0 0.0
      %8109 = vmatmul.mubr.f32.gmra.mrb[0].mxu0 %v7913
      %v8110 = vpop.f32.mrb[0].mxu0
      %v8111 = vadd.f32 %v7790, %v8110
      %v8112 = vpop.f32.mrb[0].mxu0
      %8113 = vmatprep.mubr.f32.mxu0 0.0
      %8114 = vmatmul.mubr.f32.gmra.mrb[0].mxu0 %v7916
      %v8115 = vpop.f32.mrb[0].mxu0
      %v8116 = vadd.f32 %v7795, %v8115
      %v8117 = vpop.f32.mrb[0].mxu0
      %8118 = vmatprep.mubr.f32.mxu0 0.0
      %8119 = vmatmul.mubr.f32.gmra.mrb[0].mxu0 %v7919
      %v8120 = vpop.f32.mrb[0].mxu0
      %v8121 = vadd.f32 %v7800, %v8120
      %v8122 = vpop.f32.mrb[0].mxu0
      %8123 = vmatprep.mubr.f32.mxu0 0.0
      %8124 = vmatmul.mubr.f32.gmra.mrb[0].mxu0 %v7922
      %v8125 = vpop.f32.mrb[0].mxu0
      %v8126 = vadd.f32 %v7805, %v8125
      %v8127 = vpop.f32.mrb[0].mxu0
      %8128 = vmatprep.mubr.f32.mxu0 0.0
      %8129 = vmatmul.mubr.f32.gmra.mrb[0].mxu0 %v7925
      %v8130 = vpop.f32.mrb[0].mxu0
      %v8131 = vadd.f32 %v7810, %v8130
      %v8132 = vpop.f32.mrb[0].mxu0
      %8133 = vmatprep.mubr.f32.mxu0 0.0
      %8134 = vmatmul.mubr.f32.gmra.mrb[0].mxu0 %v7928
      %v8135 = vpop.f32.mrb[0].mxu0
      %v8136 = vadd.f32 %v7815, %v8135
      %v8137 = vpop.f32.mrb[0].mxu0
      %8138 = vmatprep.mubr.f32.mxu0 0.0
      %8139 = vmatmul.mubr.f32.gmra.mrb[0].mxu0 %v7931
      %v8140 = vpop.f32.mrb[0].mxu0
      %v8141 = vadd.f32 %v7820, %v8140
      %v8142 = vpop.f32.mrb[0].mxu0
      %8143 = vmatprep.mubr.f32.mxu0 0.0
      %8144 = vmatmul.mubr.f32.gmra.mrb[0].mxu0 %v7934
      %v8145 = vpop.f32.mrb[0].mxu0
      %v8146 = vadd.f32 %v7825, %v8145
      %v8147 = vpop.f32.mrb[0].mxu0
      %8148 = vmatprep.mubr.f32.mxu0 0.0
      %8149 = vmatmul.mubr.f32.gmra.mrb[0].mxu0 %v7937
      %v8150 = vpop.f32.mrb[0].mxu0
      %v8151 = vadd.f32 %v7830, %v8150
      %v8152 = vpop.f32.mrb[0].mxu0
      %8153 = vmatprep.mubr.f32.mxu0 0.0
      %8154 = vmatmul.mubr.f32.gmra.mrb[0].mxu0 %v7940
      %v8155 = vpop.f32.mrb[0].mxu0
      %v8156 = vadd.f32 %v7835, %v8155
      %v8157 = vpop.f32.mrb[0].mxu0
      %8158 = vmatprep.mubr.f32.mxu0 0.0
      %8159 = vmatmul.mubr.f32.gmra.mrb[0].mxu0 %v7943
      %v8160 = vpop.f32.mrb[0].mxu0
      %v8161 = vadd.f32 %v7840, %v8160
      %v8162 = vpop.f32.mrb[0].mxu0
      %8163 = vmatprep.mubr.f32.mxu0 0.0
      %8164 = vmatmul.mubr.f32.gmra.mrb[0].mxu0 %v7946
      %v8165 = vpop.f32.mrb[0].mxu0
      %v8166 = vadd.f32 %v7845, %v8165
      %v8167 = vpop.f32.mrb[0].mxu0
      %8168 = vmatprep.mubr.f32.mxu0 0.0
      %8169 = vmatmul.mubr.f32.gmra.mrb[0].mxu0 %v7949
      %v8170 = vpop.f32.mrb[0].mxu0
      %v8171 = vadd.f32 %v7850, %v8170
      %v8172 = vpop.f32.mrb[0].mxu0
      %8173 = vmatprep.mubr.f32.mxu0 0.0
      %8174 = vmatmul.mubr.f32.gmra.mrb[0].mxu0 %v7952
      %v8175 = vpop.f32.mrb[0].mxu0
      %v8176 = vadd.f32 %v7855, %v8175
      %v8177 = vpop.f32.mrb[0].mxu0
      %8178 = vdwg.mxu0
      %v8179 = vld [vmem:[#allocation3 + $0x2] sm:$0xff]
      %v8180 = vld [vmem:[#allocation3 + $0xa] sm:$0xff]
      %v8181 = vld [vmem:[#allocation3 + $0x1a] sm:$0xff]
      %v8182 = vld [vmem:[#allocation3 + $0x22] sm:$0xff]
      %v8183 = vld [vmem:[#allocation3 + $0x32] sm:$0xff]
      %v8184 = vld [vmem:[#allocation3 + $0x3a] sm:$0xff]
      %v8185 = vld [vmem:[#allocation3 + $0x4a] sm:$0xff]
      %v8186 = vld [vmem:[#allocation3 + $0x52] sm:$0xff]
      %v8187 = vld [vmem:[#allocation3 + $0x62] sm:$0xff]
      %v8188 = vld [vmem:[#allocation3 + $0x6a] sm:$0xff]
      %v8189 = vld [vmem:[#allocation3 + $0x7a] sm:$0xff]
      %v8190 = vld [vmem:[#allocation3 + $0x82] sm:$0xff]
      %v8191 = vld [vmem:[#allocation3 + $0x92] sm:$0xff]
      %v8192 = vld [vmem:[#allocation3 + $0x9a] sm:$0xff]
      %v8193 = vld [vmem:[#allocation3 + $0xaa] sm:$0xff]
      %v8194 = vld [vmem:[#allocation3 + $0xb2] sm:$0xff]
      %v8195 = vld [vmem:[#allocation3 + $0xc2] sm:$0xff]
      %v8196 = vld [vmem:[#allocation3 + $0xca] sm:$0xff]
      %v8197 = vld [vmem:[#allocation3 + $0xda] sm:$0xff]
      %v8198 = vld [vmem:[#allocation3 + $0xe2] sm:$0xff]
      %v8199 = vld [vmem:[#allocation3 + $0xf2] sm:$0xff]
      %v8200 = vld [vmem:[#allocation3 + $0xfa] sm:$0xff]
      %v8201 = vld [vmem:[#allocation3 + $0x10a] sm:$0xff]
      %v8202 = vld [vmem:[#allocation3 + $0x112] sm:$0xff]
      %v8203 = vld [vmem:[#allocation3 + $0x122] sm:$0xff]
      %v8204 = vld [vmem:[#allocation3 + $0x12a] sm:$0xff]
      %v8205 = vld [vmem:[#allocation3 + $0x13a] sm:$0xff]
      %v8206 = vld [vmem:[#allocation3 + $0x142] sm:$0xff]
      %v8207 = vld [vmem:[#allocation3 + $0x152] sm:$0xff]
      %v8208 = vld [vmem:[#allocation3 + $0x15a] sm:$0xff]
      %v8209 = vld [vmem:[#allocation3 + $0x16a] sm:$0xff]
      %v8210 = vld [vmem:[#allocation3 + $0x172] sm:$0xff]
      %s8211 = scalar_lea.vmem %s5, 64
      %v8212 = vld [vmem:[%s8211] sm:$0xff]
      %v8213 = vld [vmem:[%s8211 + $0x8] sm:$0xff]
      %v8214 = vld [vmem:[%s8211 + $0x10] sm:$0xff]
      %v8215 = vld [vmem:[%s8211 + $0x18] sm:$0xff]
      %v8217 = vsel %vm3771, %v8179, 0
      %v8220 = vsel %vm3771, %v8180, 0
      %v8223 = vsel %vm3771, %v8181, 0
      %v8226 = vsel %vm3771, %v8182, 0
      %v8229 = vsel %vm3771, %v8183, 0
      %v8232 = vsel %vm3771, %v8184, 0
      %v8235 = vsel %vm3771, %v8185, 0
      %v8238 = vsel %vm3771, %v8186, 0
      %v8241 = vsel %vm3771, %v8187, 0
      %v8244 = vsel %vm3771, %v8188, 0
      %v8247 = vsel %vm3771, %v8189, 0
      %v8250 = vsel %vm3771, %v8190, 0
      %v8253 = vsel %vm3771, %v8191, 0
      %v8256 = vsel %vm3771, %v8192, 0
      %v8259 = vsel %vm3771, %v8193, 0
      %v8262 = vsel %vm3771, %v8194, 0
      %v8265 = vsel %vm3771, %v8195, 0
      %v8268 = vsel %vm3771, %v8196, 0
      %v8271 = vsel %vm3771, %v8197, 0
      %v8274 = vsel %vm3771, %v8198, 0
      %v8277 = vsel %vm3771, %v8199, 0
      %v8280 = vsel %vm3771, %v8200, 0
      %v8283 = vsel %vm3771, %v8201, 0
      %v8286 = vsel %vm3771, %v8202, 0
      %v8289 = vsel %vm3771, %v8203, 0
      %v8292 = vsel %vm3771, %v8204, 0
      %v8295 = vsel %vm3771, %v8205, 0
      %v8298 = vsel %vm3771, %v8206, 0
      %v8301 = vsel %vm3771, %v8207, 0
      %v8304 = vsel %vm3771, %v8208, 0
      %v8307 = vsel %vm3771, %v8209, 0
      %v8310 = vsel %vm3771, %v8210, 0
      %8312 = vmatprep.subr.mxu0 0.0
      %8313 = vmatpush1.msra.mxu0 %v8212
      %8314 = vmatprep.subr.mxu0 0.0
      %8315 = vmatpush1.msra.mxu0 %v8213
      %8316 = vmatprep.subr.mxu0 0.0
      %8317 = vmatpush1.msra.mxu0 %v8214
      %8318 = vmatprep.subr.mxu0 0.0
      %8319 = vmatpush1.msra.mxu0 %v8215
      %8320 = vmatprep.subr.mxu0 0.0
      %8321 = vmatpush1.msra.mxu0 0.0
      %8322 = vmatprep.subr.mxu0 0.0
      %8323 = vmatpush1.msra.mxu0 0.0
      %8324 = vmatprep.subr.mxu0 0.0
      %8325 = vmatpush1.msra.mxu0 0.0
      %8326 = vmatprep.subr.mxu0 0.0
      %8327 = vmatpush1.msra.mxu0 0.0
      %8328 = vmatprep.subr.mxu0 0.0
      %8329 = vmatpush1.msra.mxu0 0.0
      %8330 = vmatprep.subr.mxu0 0.0
      %8331 = vmatpush1.msra.mxu0 0.0
      %8332 = vmatprep.subr.mxu0 0.0
      %8333 = vmatpush1.msra.mxu0 0.0
      %8334 = vmatprep.subr.mxu0 0.0
      %8335 = vmatpush1.msra.mxu0 0.0
      %8336 = vmatprep.subr.mxu0 0.0
      %8337 = vmatpush1.msra.mxu0 0.0
      %8338 = vmatprep.subr.mxu0 0.0
      %8339 = vmatpush1.msra.mxu0 0.0
      %8340 = vmatprep.subr.mxu0 0.0
      %8341 = vmatpush1.msra.mxu0 0.0
      %8342 = vmatprep.subr.mxu0 0.0
      %8343 = vmatpush1.msra.mxu0 0.0
      %8344 = vmatprep.subr.mxu0 0.0
      %8345 = vmatpush1.msra.mxu0 0.0
      %8346 = vmatprep.subr.mxu0 0.0
      %8347 = vmatpush1.msra.mxu0 0.0
      %8348 = vmatprep.subr.mxu0 0.0
      %8349 = vmatpush1.msra.mxu0 0.0
      %8350 = vmatprep.subr.mxu0 0.0
      %8351 = vmatpush1.msra.mxu0 0.0
      %8352 = vmatprep.subr.mxu0 0.0
      %8353 = vmatpush1.msra.mxu0 0.0
      %8354 = vmatprep.subr.mxu0 0.0
      %8355 = vmatpush1.msra.mxu0 0.0
      %8356 = vmatprep.subr.mxu0 0.0
      %8357 = vmatpush1.msra.mxu0 0.0
      %8358 = vmatprep.subr.mxu0 0.0
      %8359 = vmatpush1.msra.mxu0 0.0
      %8360 = vmatprep.subr.mxu0 0.0
      %8361 = vmatpush1.msra.mxu0 0.0
      %8362 = vmatprep.subr.mxu0 0.0
      %8363 = vmatpush1.msra.mxu0 0.0
      %8364 = vmatprep.subr.mxu0 0.0
      %8365 = vmatpush1.msra.mxu0 0.0
      %8366 = vmatprep.subr.mxu0 0.0
      %8367 = vmatpush1.msra.mxu0 0.0
      %8368 = vmatprep.subr.mxu0 0.0
      %8369 = vmatpush1.msra.mxu0 0.0
      %8370 = vmatprep.subr.mxu0 0.0
      %8371 = vmatpush1.msra.mxu0 0.0
      %8372 = vmatprep.subr.mxu0 0.0
      %8373 = vmatpush1.msra.mxu0 0.0
      %8374 = vmatprep.subr.mxu0 0.0
      %8375 = vmatpush1.msra.mxu0 0.0
      %8376 = vmatprep.mubr.f32.mxu0 0.0
      %8377 = vmatmul.mubr.f32.gmra.mrb[0].mxu0 %v8217
      %v8378 = vpop.f32.mrb[0].mxu0
      %v8379 = vadd.f32 0.0, %v8378
      %v8380 = vpop.f32.mrb[0].mxu0
      %8381 = vmatprep.mubr.f32.mxu0 0.0
      %8382 = vmatmul.mubr.f32.gmra.mrb[0].mxu0 %v8220
      %v8383 = vpop.f32.mrb[0].mxu0
      %v8384 = vadd.f32 0.0, %v8383
      %v8385 = vpop.f32.mrb[0].mxu0
      %8386 = vmatprep.mubr.f32.mxu0 0.0
      %8387 = vmatmul.mubr.f32.gmra.mrb[0].mxu0 %v8223
      %v8388 = vpop.f32.mrb[0].mxu0
      %v8389 = vadd.f32 0.0, %v8388
      %v8390 = vpop.f32.mrb[0].mxu0
      %8391 = vmatprep.mubr.f32.mxu0 0.0
      %8392 = vmatmul.mubr.f32.gmra.mrb[0].mxu0 %v8226
      %v8393 = vpop.f32.mrb[0].mxu0
      %v8394 = vadd.f32 0.0, %v8393
      %v8395 = vpop.f32.mrb[0].mxu0
      %8396 = vmatprep.mubr.f32.mxu0 0.0
      %8397 = vmatmul.mubr.f32.gmra.mrb[0].mxu0 %v8229
      %v8398 = vpop.f32.mrb[0].mxu0
      %v8399 = vadd.f32 0.0, %v8398
      %v8400 = vpop.f32.mrb[0].mxu0
      %8401 = vmatprep.mubr.f32.mxu0 0.0
      %8402 = vmatmul.mubr.f32.gmra.mrb[0].mxu0 %v8232
      %v8403 = vpop.f32.mrb[0].mxu0
      %v8404 = vadd.f32 0.0, %v8403
      %v8405 = vpop.f32.mrb[0].mxu0
      %8406 = vmatprep.mubr.f32.mxu0 0.0
      %8407 = vmatmul.mubr.f32.gmra.mrb[0].mxu0 %v8235
      %v8408 = vpop.f32.mrb[0].mxu0
      %v8409 = vadd.f32 0.0, %v8408
      %v8410 = vpop.f32.mrb[0].mxu0
      %8411 = vmatprep.mubr.f32.mxu0 0.0
      %8412 = vmatmul.mubr.f32.gmra.mrb[0].mxu0 %v8238
      %v8413 = vpop.f32.mrb[0].mxu0
      %v8414 = vadd.f32 0.0, %v8413
      %v8415 = vpop.f32.mrb[0].mxu0
      %8416 = vmatprep.mubr.f32.mxu0 0.0
      %8417 = vmatmul.mubr.f32.gmra.mrb[0].mxu0 %v8241
      %v8418 = vpop.f32.mrb[0].mxu0
      %v8419 = vadd.f32 0.0, %v8418
      %v8420 = vpop.f32.mrb[0].mxu0
      %8421 = vmatprep.mubr.f32.mxu0 0.0
      %8422 = vmatmul.mubr.f32.gmra.mrb[0].mxu0 %v8244
      %v8423 = vpop.f32.mrb[0].mxu0
      %v8424 = vadd.f32 0.0, %v8423
      %v8425 = vpop.f32.mrb[0].mxu0
      %8426 = vmatprep.mubr.f32.mxu0 0.0
      %8427 = vmatmul.mubr.f32.gmra.mrb[0].mxu0 %v8247
      %v8428 = vpop.f32.mrb[0].mxu0
      %v8429 = vadd.f32 0.0, %v8428
      %v8430 = vpop.f32.mrb[0].mxu0
      %8431 = vmatprep.mubr.f32.mxu0 0.0
      %8432 = vmatmul.mubr.f32.gmra.mrb[0].mxu0 %v8250
      %v8433 = vpop.f32.mrb[0].mxu0
      %v8434 = vadd.f32 0.0, %v8433
      %v8435 = vpop.f32.mrb[0].mxu0
      %8436 = vmatprep.mubr.f32.mxu0 0.0
      %8437 = vmatmul.mubr.f32.gmra.mrb[0].mxu0 %v8253
      %v8438 = vpop.f32.mrb[0].mxu0
      %v8439 = vadd.f32 0.0, %v8438
      %v8440 = vpop.f32.mrb[0].mxu0
      %8441 = vmatprep.mubr.f32.mxu0 0.0
      %8442 = vmatmul.mubr.f32.gmra.mrb[0].mxu0 %v8256
      %v8443 = vpop.f32.mrb[0].mxu0
      %v8444 = vadd.f32 0.0, %v8443
      %v8445 = vpop.f32.mrb[0].mxu0
      %8446 = vmatprep.mubr.f32.mxu0 0.0
      %8447 = vmatmul.mubr.f32.gmra.mrb[0].mxu0 %v8259
      %v8448 = vpop.f32.mrb[0].mxu0
      %v8449 = vadd.f32 0.0, %v8448
      %v8450 = vpop.f32.mrb[0].mxu0
      %8451 = vmatprep.mubr.f32.mxu0 0.0
      %8452 = vmatmul.mubr.f32.gmra.mrb[0].mxu0 %v8262
      %v8453 = vpop.f32.mrb[0].mxu0
      %v8454 = vadd.f32 0.0, %v8453
      %v8455 = vpop.f32.mrb[0].mxu0
      %8456 = vmatprep.mubr.f32.mxu0 0.0
      %8457 = vmatmul.mubr.f32.gmra.mrb[0].mxu0 %v8265
      %v8458 = vpop.f32.mrb[0].mxu0
      %v8459 = vadd.f32 0.0, %v8458
      %v8460 = vpop.f32.mrb[0].mxu0
      %8461 = vmatprep.mubr.f32.mxu0 0.0
      %8462 = vmatmul.mubr.f32.gmra.mrb[0].mxu0 %v8268
      %v8463 = vpop.f32.mrb[0].mxu0
      %v8464 = vadd.f32 0.0, %v8463
      %v8465 = vpop.f32.mrb[0].mxu0
      %8466 = vmatprep.mubr.f32.mxu0 0.0
      %8467 = vmatmul.mubr.f32.gmra.mrb[0].mxu0 %v8271
      %v8468 = vpop.f32.mrb[0].mxu0
      %v8469 = vadd.f32 0.0, %v8468
      %v8470 = vpop.f32.mrb[0].mxu0
      %8471 = vmatprep.mubr.f32.mxu0 0.0
      %8472 = vmatmul.mubr.f32.gmra.mrb[0].mxu0 %v8274
      %v8473 = vpop.f32.mrb[0].mxu0
      %v8474 = vadd.f32 0.0, %v8473
      %v8475 = vpop.f32.mrb[0].mxu0
      %8476 = vmatprep.mubr.f32.mxu0 0.0
      %8477 = vmatmul.mubr.f32.gmra.mrb[0].mxu0 %v8277
      %v8478 = vpop.f32.mrb[0].mxu0
      %v8479 = vadd.f32 0.0, %v8478
      %v8480 = vpop.f32.mrb[0].mxu0
      %8481 = vmatprep.mubr.f32.mxu0 0.0
      %8482 = vmatmul.mubr.f32.gmra.mrb[0].mxu0 %v8280
      %v8483 = vpop.f32.mrb[0].mxu0
      %v8484 = vadd.f32 0.0, %v8483
      %v8485 = vpop.f32.mrb[0].mxu0
      %8486 = vmatprep.mubr.f32.mxu0 0.0
      %8487 = vmatmul.mubr.f32.gmra.mrb[0].mxu0 %v8283
      %v8488 = vpop.f32.mrb[0].mxu0
      %v8489 = vadd.f32 0.0, %v8488
      %v8490 = vpop.f32.mrb[0].mxu0
      %8491 = vmatprep.mubr.f32.mxu0 0.0
      %8492 = vmatmul.mubr.f32.gmra.mrb[0].mxu0 %v8286
      %v8493 = vpop.f32.mrb[0].mxu0
      %v8494 = vadd.f32 0.0, %v8493
      %v8495 = vpop.f32.mrb[0].mxu0
      %8496 = vmatprep.mubr.f32.mxu0 0.0
      %8497 = vmatmul.mubr.f32.gmra.mrb[0].mxu0 %v8289
      %v8498 = vpop.f32.mrb[0].mxu0
      %v8499 = vadd.f32 0.0, %v8498
      %v8500 = vpop.f32.mrb[0].mxu0
      %8501 = vmatprep.mubr.f32.mxu0 0.0
      %8502 = vmatmul.mubr.f32.gmra.mrb[0].mxu0 %v8292
      %v8503 = vpop.f32.mrb[0].mxu0
      %v8504 = vadd.f32 0.0, %v8503
      %v8505 = vpop.f32.mrb[0].mxu0
      %8506 = vmatprep.mubr.f32.mxu0 0.0
      %8507 = vmatmul.mubr.f32.gmra.mrb[0].mxu0 %v8295
      %v8508 = vpop.f32.mrb[0].mxu0
      %v8509 = vadd.f32 0.0, %v8508
      %v8510 = vpop.f32.mrb[0].mxu0
      %8511 = vmatprep.mubr.f32.mxu0 0.0
      %8512 = vmatmul.mubr.f32.gmra.mrb[0].mxu0 %v8298
      %v8513 = vpop.f32.mrb[0].mxu0
      %v8514 = vadd.f32 0.0, %v8513
      %v8515 = vpop.f32.mrb[0].mxu0
      %8516 = vmatprep.mubr.f32.mxu0 0.0
      %8517 = vmatmul.mubr.f32.gmra.mrb[0].mxu0 %v8301
      %v8518 = vpop.f32.mrb[0].mxu0
      %v8519 = vadd.f32 0.0, %v8518
      %v8520 = vpop.f32.mrb[0].mxu0
      %8521 = vmatprep.mubr.f32.mxu0 0.0
      %8522 = vmatmul.mubr.f32.gmra.mrb[0].mxu0 %v8304
      %v8523 = vpop.f32.mrb[0].mxu0
      %v8524 = vadd.f32 0.0, %v8523
      %v8525 = vpop.f32.mrb[0].mxu0
      %8526 = vmatprep.mubr.f32.mxu0 0.0
      %8527 = vmatmul.mubr.f32.gmra.mrb[0].mxu0 %v8307
      %v8528 = vpop.f32.mrb[0].mxu0
      %v8529 = vadd.f32 0.0, %v8528
      %v8530 = vpop.f32.mrb[0].mxu0
      %8531 = vmatprep.mubr.f32.mxu0 0.0
      %8532 = vmatmul.mubr.f32.gmra.mrb[0].mxu0 %v8310
      %v8533 = vpop.f32.mrb[0].mxu0
      %v8534 = vadd.f32 0.0, %v8533
      %v8535 = vpop.f32.mrb[0].mxu0
      %8536 = vdwg.mxu0
      %v8537 = vadd.f32 %v8021, %v8379
      %v8538 = vadd.f32 %v8026, %v8384
      %v8539 = vadd.f32 %v8031, %v8389
      %v8540 = vadd.f32 %v8036, %v8394
      %v8541 = vadd.f32 %v8041, %v8399
      %v8542 = vadd.f32 %v8046, %v8404
      %v8543 = vadd.f32 %v8051, %v8409
      %v8544 = vadd.f32 %v8056, %v8414
      %v8545 = vadd.f32 %v8061, %v8419
      %v8546 = vadd.f32 %v8066, %v8424
      %v8547 = vadd.f32 %v8071, %v8429
      %v8548 = vadd.f32 %v8076, %v8434
      %v8549 = vadd.f32 %v8081, %v8439
      %v8550 = vadd.f32 %v8086, %v8444
      %v8551 = vadd.f32 %v8091, %v8449
      %v8552 = vadd.f32 %v8096, %v8454
      %v8553 = vadd.f32 %v8101, %v8459
      %v8554 = vadd.f32 %v8106, %v8464
      %v8555 = vadd.f32 %v8111, %v8469
      %v8556 = vadd.f32 %v8116, %v8474
      %v8557 = vadd.f32 %v8121, %v8479
      %v8558 = vadd.f32 %v8126, %v8484
      %v8559 = vadd.f32 %v8131, %v8489
      %v8560 = vadd.f32 %v8136, %v8494
      %v8561 = vadd.f32 %v8141, %v8499
      %v8562 = vadd.f32 %v8146, %v8504
      %v8563 = vadd.f32 %v8151, %v8509
      %v8564 = vadd.f32 %v8156, %v8514
      %v8565 = vadd.f32 %v8161, %v8519
      %v8566 = vadd.f32 %v8166, %v8524
      %v8567 = vadd.f32 %v8171, %v8529
      %v8568 = vadd.f32 %v8176, %v8534
      %v8569 = vld [vmem:[%s7431] sm:$0xff]
      %v8570 = vld [vmem:[%s7431 + $0x8] sm:$0xff]
      %v8571 = vld [vmem:[%s7431 + $0x18] sm:$0xff]
      %v8572 = vld [vmem:[%s7431 + $0x20] sm:$0xff]
      %v8573 = vld [vmem:[%s7431 + $0x30] sm:$0xff]
      %v8574 = vld [vmem:[%s7431 + $0x38] sm:$0xff]
      %v8575 = vld [vmem:[%s7431 + $0x48] sm:$0xff]
      %v8576 = vld [vmem:[%s7431 + $0x50] sm:$0xff]
      %v8577 = vld [vmem:[%s7431 + $0x60] sm:$0xff]
      %v8578 = vld [vmem:[%s7431 + $0x68] sm:$0xff]
      %v8579 = vld [vmem:[%s7431 + $0x78] sm:$0xff]
      %v8580 = vld [vmem:[%s7431 + $0x80] sm:$0xff]
      %v8581 = vld [vmem:[%s7431 + $0x90] sm:$0xff]
      %v8582 = vld [vmem:[%s7431 + $0x98] sm:$0xff]
      %v8583 = vld [vmem:[%s7431 + $0xa8] sm:$0xff]
      %v8584 = vld [vmem:[%s7431 + $0xb0] sm:$0xff]
      %v8585 = vld [vmem:[%s7431 + $0xc0] sm:$0xff]
      %v8586 = vld [vmem:[%s7431 + $0xc8] sm:$0xff]
      %v8587 = vld [vmem:[%s7431 + $0xd8] sm:$0xff]
      %v8588 = vld [vmem:[%s7431 + $0xe0] sm:$0xff]
      %v8589 = vld [vmem:[%s7431 + $0xf0] sm:$0xff]
      %v8590 = vld [vmem:[%s7431 + $0xf8] sm:$0xff]
      %v8591 = vld [vmem:[%s7431 + $0x108] sm:$0xff]
      %v8592 = vld [vmem:[%s7431 + $0x110] sm:$0xff]
      %v8593 = vld [vmem:[%s7431 + $0x120] sm:$0xff]
      %v8594 = vld [vmem:[%s7431 + $0x128] sm:$0xff]
      %v8595 = vld [vmem:[%s7431 + $0x138] sm:$0xff]
      %v8596 = vld [vmem:[%s7431 + $0x140] sm:$0xff]
      %v8597 = vld [vmem:[%s7431 + $0x150] sm:$0xff]
      %v8598 = vld [vmem:[%s7431 + $0x158] sm:$0xff]
      %v8599 = vld [vmem:[%s7431 + $0x168] sm:$0xff]
      %v8600 = vld [vmem:[%s7431 + $0x170] sm:$0xff]
      %s8601 = scalar_lea.vmem %s5, 96
      %v8602 = vld [vmem:[%s8601] sm:$0xff]
      %v8603 = vld [vmem:[%s8601 + $0x8] sm:$0xff]
      %v8604 = vld [vmem:[%s8601 + $0x10] sm:$0xff]
      %v8605 = vld [vmem:[%s8601 + $0x18] sm:$0xff]
      %v8607 = vsel %vm3771, %v8569, 0
      %v8610 = vsel %vm3771, %v8570, 0
      %v8613 = vsel %vm3771, %v8571, 0
      %v8616 = vsel %vm3771, %v8572, 0
      %v8619 = vsel %vm3771, %v8573, 0
      %v8622 = vsel %vm3771, %v8574, 0
      %v8625 = vsel %vm3771, %v8575, 0
      %v8628 = vsel %vm3771, %v8576, 0
      %v8631 = vsel %vm3771, %v8577, 0
      %v8634 = vsel %vm3771, %v8578, 0
      %v8637 = vsel %vm3771, %v8579, 0
      %v8640 = vsel %vm3771, %v8580, 0
      %v8643 = vsel %vm3771, %v8581, 0
      %v8646 = vsel %vm3771, %v8582, 0
      %v8649 = vsel %vm3771, %v8583, 0
      %v8652 = vsel %vm3771, %v8584, 0
      %v8655 = vsel %vm3771, %v8585, 0
      %v8658 = vsel %vm3771, %v8586, 0
      %v8661 = vsel %vm3771, %v8587, 0
      %v8664 = vsel %vm3771, %v8588, 0
      %v8667 = vsel %vm3771, %v8589, 0
      %v8670 = vsel %vm3771, %v8590, 0
      %v8673 = vsel %vm3771, %v8591, 0
      %v8676 = vsel %vm3771, %v8592, 0
      %v8679 = vsel %vm3771, %v8593, 0
      %v8682 = vsel %vm3771, %v8594, 0
      %v8685 = vsel %vm3771, %v8595, 0
      %v8688 = vsel %vm3771, %v8596, 0
      %v8691 = vsel %vm3771, %v8597, 0
      %v8694 = vsel %vm3771, %v8598, 0
      %v8697 = vsel %vm3771, %v8599, 0
      %v8700 = vsel %vm3771, %v8600, 0
      %8702 = vmatprep.subr.mxu0 0.0
      %8703 = vmatpush1.msra.mxu0 %v8602
      %8704 = vmatprep.subr.mxu0 0.0
      %8705 = vmatpush1.msra.mxu0 %v8603
      %8706 = vmatprep.subr.mxu0 0.0
      %8707 = vmatpush1.msra.mxu0 %v8604
      %8708 = vmatprep.subr.mxu0 0.0
      %8709 = vmatpush1.msra.mxu0 %v8605
      %8710 = vmatprep.subr.mxu0 0.0
      %8711 = vmatpush1.msra.mxu0 0.0
      %8712 = vmatprep.subr.mxu0 0.0
      %8713 = vmatpush1.msra.mxu0 0.0
      %8714 = vmatprep.subr.mxu0 0.0
      %8715 = vmatpush1.msra.mxu0 0.0
      %8716 = vmatprep.subr.mxu0 0.0
      %8717 = vmatpush1.msra.mxu0 0.0
      %8718 = vmatprep.subr.mxu0 0.0
      %8719 = vmatpush1.msra.mxu0 0.0
      %8720 = vmatprep.subr.mxu0 0.0
      %8721 = vmatpush1.msra.mxu0 0.0
      %8722 = vmatprep.subr.mxu0 0.0
      %8723 = vmatpush1.msra.mxu0 0.0
      %8724 = vmatprep.subr.mxu0 0.0
      %8725 = vmatpush1.msra.mxu0 0.0
      %8726 = vmatprep.subr.mxu0 0.0
      %8727 = vmatpush1.msra.mxu0 0.0
      %8728 = vmatprep.subr.mxu0 0.0
      %8729 = vmatpush1.msra.mxu0 0.0
      %8730 = vmatprep.subr.mxu0 0.0
      %8731 = vmatpush1.msra.mxu0 0.0
      %8732 = vmatprep.subr.mxu0 0.0
      %8733 = vmatpush1.msra.mxu0 0.0
      %8734 = vmatprep.subr.mxu0 0.0
      %8735 = vmatpush1.msra.mxu0 0.0
      %8736 = vmatprep.subr.mxu0 0.0
      %8737 = vmatpush1.msra.mxu0 0.0
      %8738 = vmatprep.subr.mxu0 0.0
      %8739 = vmatpush1.msra.mxu0 0.0
      %8740 = vmatprep.subr.mxu0 0.0
      %8741 = vmatpush1.msra.mxu0 0.0
      %8742 = vmatprep.subr.mxu0 0.0
      %8743 = vmatpush1.msra.mxu0 0.0
      %8744 = vmatprep.subr.mxu0 0.0
      %8745 = vmatpush1.msra.mxu0 0.0
      %8746 = vmatprep.subr.mxu0 0.0
      %8747 = vmatpush1.msra.mxu0 0.0
      %8748 = vmatprep.subr.mxu0 0.0
      %8749 = vmatpush1.msra.mxu0 0.0
      %8750 = vmatprep.subr.mxu0 0.0
      %8751 = vmatpush1.msra.mxu0 0.0
      %8752 = vmatprep.subr.mxu0 0.0
      %8753 = vmatpush1.msra.mxu0 0.0
      %8754 = vmatprep.subr.mxu0 0.0
      %8755 = vmatpush1.msra.mxu0 0.0
      %8756 = vmatprep.subr.mxu0 0.0
      %8757 = vmatpush1.msra.mxu0 0.0
      %8758 = vmatprep.subr.mxu0 0.0
      %8759 = vmatpush1.msra.mxu0 0.0
      %8760 = vmatprep.subr.mxu0 0.0
      %8761 = vmatpush1.msra.mxu0 0.0
      %8762 = vmatprep.subr.mxu0 0.0
      %8763 = vmatpush1.msra.mxu0 0.0
      %8764 = vmatprep.subr.mxu0 0.0
      %8765 = vmatpush1.msra.mxu0 0.0
      %8766 = vmatprep.mubr.f32.mxu0 0.0
      %8767 = vmatmul.mubr.f32.gmra.mrb[0].mxu0 %v8607
      %v8768 = vpop.f32.mrb[0].mxu0
      %v8769 = vadd.f32 0.0, %v8768
      %v8770 = vpop.f32.mrb[0].mxu0
      %8771 = vmatprep.mubr.f32.mxu0 0.0
      %8772 = vmatmul.mubr.f32.gmra.mrb[0].mxu0 %v8610
      %v8773 = vpop.f32.mrb[0].mxu0
      %v8774 = vadd.f32 0.0, %v8773
      %v8775 = vpop.f32.mrb[0].mxu0
      %8776 = vmatprep.mubr.f32.mxu0 0.0
      %8777 = vmatmul.mubr.f32.gmra.mrb[0].mxu0 %v8613
      %v8778 = vpop.f32.mrb[0].mxu0
      %v8779 = vadd.f32 0.0, %v8778
      %v8780 = vpop.f32.mrb[0].mxu0
      %8781 = vmatprep.mubr.f32.mxu0 0.0
      %8782 = vmatmul.mubr.f32.gmra.mrb[0].mxu0 %v8616
      %v8783 = vpop.f32.mrb[0].mxu0
      %v8784 = vadd.f32 0.0, %v8783
      %v8785 = vpop.f32.mrb[0].mxu0
      %8786 = vmatprep.mubr.f32.mxu0 0.0
      %8787 = vmatmul.mubr.f32.gmra.mrb[0].mxu0 %v8619
      %v8788 = vpop.f32.mrb[0].mxu0
      %v8789 = vadd.f32 0.0, %v8788
      %v8790 = vpop.f32.mrb[0].mxu0
      %8791 = vmatprep.mubr.f32.mxu0 0.0
      %8792 = vmatmul.mubr.f32.gmra.mrb[0].mxu0 %v8622
      %v8793 = vpop.f32.mrb[0].mxu0
      %v8794 = vadd.f32 0.0, %v8793
      %v8795 = vpop.f32.mrb[0].mxu0
      %8796 = vmatprep.mubr.f32.mxu0 0.0
      %8797 = vmatmul.mubr.f32.gmra.mrb[0].mxu0 %v8625
      %v8798 = vpop.f32.mrb[0].mxu0
      %v8799 = vadd.f32 0.0, %v8798
      %v8800 = vpop.f32.mrb[0].mxu0
      %8801 = vmatprep.mubr.f32.mxu0 0.0
      %8802 = vmatmul.mubr.f32.gmra.mrb[0].mxu0 %v8628
      %v8803 = vpop.f32.mrb[0].mxu0
      %v8804 = vadd.f32 0.0, %v8803
      %v8805 = vpop.f32.mrb[0].mxu0
      %8806 = vmatprep.mubr.f32.mxu0 0.0
      %8807 = vmatmul.mubr.f32.gmra.mrb[0].mxu0 %v8631
      %v8808 = vpop.f32.mrb[0].mxu0
      %v8809 = vadd.f32 0.0, %v8808
      %v8810 = vpop.f32.mrb[0].mxu0
      %8811 = vmatprep.mubr.f32.mxu0 0.0
      %8812 = vmatmul.mubr.f32.gmra.mrb[0].mxu0 %v8634
      %v8813 = vpop.f32.mrb[0].mxu0
      %v8814 = vadd.f32 0.0, %v8813
      %v8815 = vpop.f32.mrb[0].mxu0
      %8816 = vmatprep.mubr.f32.mxu0 0.0
      %8817 = vmatmul.mubr.f32.gmra.mrb[0].mxu0 %v8637
      %v8818 = vpop.f32.mrb[0].mxu0
      %v8819 = vadd.f32 0.0, %v8818
      %v8820 = vpop.f32.mrb[0].mxu0
      %8821 = vmatprep.mubr.f32.mxu0 0.0
      %8822 = vmatmul.mubr.f32.gmra.mrb[0].mxu0 %v8640
      %v8823 = vpop.f32.mrb[0].mxu0
      %v8824 = vadd.f32 0.0, %v8823
      %v8825 = vpop.f32.mrb[0].mxu0
      %8826 = vmatprep.mubr.f32.mxu0 0.0
      %8827 = vmatmul.mubr.f32.gmra.mrb[0].mxu0 %v8643
      %v8828 = vpop.f32.mrb[0].mxu0
      %v8829 = vadd.f32 0.0, %v8828
      %v8830 = vpop.f32.mrb[0].mxu0
      %8831 = vmatprep.mubr.f32.mxu0 0.0
      %8832 = vmatmul.mubr.f32.gmra.mrb[0].mxu0 %v8646
      %v8833 = vpop.f32.mrb[0].mxu0
      %v8834 = vadd.f32 0.0, %v8833
      %v8835 = vpop.f32.mrb[0].mxu0
      %8836 = vmatprep.mubr.f32.mxu0 0.0
      %8837 = vmatmul.mubr.f32.gmra.mrb[0].mxu0 %v8649
      %v8838 = vpop.f32.mrb[0].mxu0
      %v8839 = vadd.f32 0.0, %v8838
      %v8840 = vpop.f32.mrb[0].mxu0
      %8841 = vmatprep.mubr.f32.mxu0 0.0
      %8842 = vmatmul.mubr.f32.gmra.mrb[0].mxu0 %v8652
      %v8843 = vpop.f32.mrb[0].mxu0
      %v8844 = vadd.f32 0.0, %v8843
      %v8845 = vpop.f32.mrb[0].mxu0
      %8846 = vmatprep.mubr.f32.mxu0 0.0
      %8847 = vmatmul.mubr.f32.gmra.mrb[0].mxu0 %v8655
      %v8848 = vpop.f32.mrb[0].mxu0
      %v8849 = vadd.f32 0.0, %v8848
      %v8850 = vpop.f32.mrb[0].mxu0
      %8851 = vmatprep.mubr.f32.mxu0 0.0
      %8852 = vmatmul.mubr.f32.gmra.mrb[0].mxu0 %v8658
      %v8853 = vpop.f32.mrb[0].mxu0
      %v8854 = vadd.f32 0.0, %v8853
      %v8855 = vpop.f32.mrb[0].mxu0
      %8856 = vmatprep.mubr.f32.mxu0 0.0
      %8857 = vmatmul.mubr.f32.gmra.mrb[0].mxu0 %v8661
      %v8858 = vpop.f32.mrb[0].mxu0
      %v8859 = vadd.f32 0.0, %v8858
      %v8860 = vpop.f32.mrb[0].mxu0
      %8861 = vmatprep.mubr.f32.mxu0 0.0
      %8862 = vmatmul.mubr.f32.gmra.mrb[0].mxu0 %v8664
      %v8863 = vpop.f32.mrb[0].mxu0
      %v8864 = vadd.f32 0.0, %v8863
      %v8865 = vpop.f32.mrb[0].mxu0
      %8866 = vmatprep.mubr.f32.mxu0 0.0
      %8867 = vmatmul.mubr.f32.gmra.mrb[0].mxu0 %v8667
      %v8868 = vpop.f32.mrb[0].mxu0
      %v8869 = vadd.f32 0.0, %v8868
      %v8870 = vpop.f32.mrb[0].mxu0
      %8871 = vmatprep.mubr.f32.mxu0 0.0
      %8872 = vmatmul.mubr.f32.gmra.mrb[0].mxu0 %v8670
      %v8873 = vpop.f32.mrb[0].mxu0
      %v8874 = vadd.f32 0.0, %v8873
      %v8875 = vpop.f32.mrb[0].mxu0
      %8876 = vmatprep.mubr.f32.mxu0 0.0
      %8877 = vmatmul.mubr.f32.gmra.mrb[0].mxu0 %v8673
      %v8878 = vpop.f32.mrb[0].mxu0
      %v8879 = vadd.f32 0.0, %v8878
      %v8880 = vpop.f32.mrb[0].mxu0
      %8881 = vmatprep.mubr.f32.mxu0 0.0
      %8882 = vmatmul.mubr.f32.gmra.mrb[0].mxu0 %v8676
      %v8883 = vpop.f32.mrb[0].mxu0
      %v8884 = vadd.f32 0.0, %v8883
      %v8885 = vpop.f32.mrb[0].mxu0
      %8886 = vmatprep.mubr.f32.mxu0 0.0
      %8887 = vmatmul.mubr.f32.gmra.mrb[0].mxu0 %v8679
      %v8888 = vpop.f32.mrb[0].mxu0
      %v8889 = vadd.f32 0.0, %v8888
      %v8890 = vpop.f32.mrb[0].mxu0
      %8891 = vmatprep.mubr.f32.mxu0 0.0
      %8892 = vmatmul.mubr.f32.gmra.mrb[0].mxu0 %v8682
      %v8893 = vpop.f32.mrb[0].mxu0
      %v8894 = vadd.f32 0.0, %v8893
      %v8895 = vpop.f32.mrb[0].mxu0
      %8896 = vmatprep.mubr.f32.mxu0 0.0
      %8897 = vmatmul.mubr.f32.gmra.mrb[0].mxu0 %v8685
      %v8898 = vpop.f32.mrb[0].mxu0
      %v8899 = vadd.f32 0.0, %v8898
      %v8900 = vpop.f32.mrb[0].mxu0
      %8901 = vmatprep.mubr.f32.mxu0 0.0
      %8902 = vmatmul.mubr.f32.gmra.mrb[0].mxu0 %v8688
      %v8903 = vpop.f32.mrb[0].mxu0
      %v8904 = vadd.f32 0.0, %v8903
      %v8905 = vpop.f32.mrb[0].mxu0
      %8906 = vmatprep.mubr.f32.mxu0 0.0
      %8907 = vmatmul.mubr.f32.gmra.mrb[0].mxu0 %v8691
      %v8908 = vpop.f32.mrb[0].mxu0
      %v8909 = vadd.f32 0.0, %v8908
      %v8910 = vpop.f32.mrb[0].mxu0
      %8911 = vmatprep.mubr.f32.mxu0 0.0
      %8912 = vmatmul.mubr.f32.gmra.mrb[0].mxu0 %v8694
      %v8913 = vpop.f32.mrb[0].mxu0
      %v8914 = vadd.f32 0.0, %v8913
      %v8915 = vpop.f32.mrb[0].mxu0
      %8916 = vmatprep.mubr.f32.mxu0 0.0
      %8917 = vmatmul.mubr.f32.gmra.mrb[0].mxu0 %v8697
      %v8918 = vpop.f32.mrb[0].mxu0
      %v8919 = vadd.f32 0.0, %v8918
      %v8920 = vpop.f32.mrb[0].mxu0
      %8921 = vmatprep.mubr.f32.mxu0 0.0
      %8922 = vmatmul.mubr.f32.gmra.mrb[0].mxu0 %v8700
      %v8923 = vpop.f32.mrb[0].mxu0
      %v8924 = vadd.f32 0.0, %v8923
      %v8925 = vpop.f32.mrb[0].mxu0
      %8926 = vdwg.mxu0
      %v8927 = vadd.f32 %v8537, %v8769
      %v8928 = vadd.f32 %v8538, %v8774
      %v8929 = vadd.f32 %v8539, %v8779
      %v8930 = vadd.f32 %v8540, %v8784
      %v8931 = vadd.f32 %v8541, %v8789
      %v8932 = vadd.f32 %v8542, %v8794
      %v8933 = vadd.f32 %v8543, %v8799
      %v8934 = vadd.f32 %v8544, %v8804
      %v8935 = vadd.f32 %v8545, %v8809
      %v8936 = vadd.f32 %v8546, %v8814
      %v8937 = vadd.f32 %v8547, %v8819
      %v8938 = vadd.f32 %v8548, %v8824
      %v8939 = vadd.f32 %v8549, %v8829
      %v8940 = vadd.f32 %v8550, %v8834
      %v8941 = vadd.f32 %v8551, %v8839
      %v8942 = vadd.f32 %v8552, %v8844
      %v8943 = vadd.f32 %v8553, %v8849
      %v8944 = vadd.f32 %v8554, %v8854
      %v8945 = vadd.f32 %v8555, %v8859
      %v8946 = vadd.f32 %v8556, %v8864
      %v8947 = vadd.f32 %v8557, %v8869
      %v8948 = vadd.f32 %v8558, %v8874
      %v8949 = vadd.f32 %v8559, %v8879
      %v8950 = vadd.f32 %v8560, %v8884
      %v8951 = vadd.f32 %v8561, %v8889
      %v8952 = vadd.f32 %v8562, %v8894
      %v8953 = vadd.f32 %v8563, %v8899
      %v8954 = vadd.f32 %v8564, %v8904
      %v8955 = vadd.f32 %v8565, %v8909
      %v8956 = vadd.f32 %v8566, %v8914
      %v8957 = vadd.f32 %v8567, %v8919
      %v8958 = vadd.f32 %v8568, %v8924
      %v8959 = vld [vmem:[%s7431 + $0x1] sm:$0xff]
      %v8960 = vld [vmem:[%s7431 + $0x9] sm:$0xff]
      %v8961 = vld [vmem:[%s7431 + $0x19] sm:$0xff]
      %v8962 = vld [vmem:[%s7431 + $0x21] sm:$0xff]
      %v8963 = vld [vmem:[%s7431 + $0x31] sm:$0xff]
      %v8964 = vld [vmem:[%s7431 + $0x39] sm:$0xff]
      %v8965 = vld [vmem:[%s7431 + $0x49] sm:$0xff]
      %v8966 = vld [vmem:[%s7431 + $0x51] sm:$0xff]
      %v8967 = vld [vmem:[%s7431 + $0x61] sm:$0xff]
      %v8968 = vld [vmem:[%s7431 + $0x69] sm:$0xff]
      %v8969 = vld [vmem:[%s7431 + $0x79] sm:$0xff]
      %v8970 = vld [vmem:[%s7431 + $0x81] sm:$0xff]
      %v8971 = vld [vmem:[%s7431 + $0x91] sm:$0xff]
      %v8972 = vld [vmem:[%s7431 + $0x99] sm:$0xff]
      %v8973 = vld [vmem:[%s7431 + $0xa9] sm:$0xff]
      %v8974 = vld [vmem:[%s7431 + $0xb1] sm:$0xff]
      %v8975 = vld [vmem:[%s7431 + $0xc1] sm:$0xff]
      %v8976 = vld [vmem:[%s7431 + $0xc9] sm:$0xff]
      %v8977 = vld [vmem:[%s7431 + $0xd9] sm:$0xff]
      %v8978 = vld [vmem:[%s7431 + $0xe1] sm:$0xff]
      %v8979 = vld [vmem:[%s7431 + $0xf1] sm:$0xff]
      %v8980 = vld [vmem:[%s7431 + $0xf9] sm:$0xff]
      %v8981 = vld [vmem:[%s7431 + $0x109] sm:$0xff]
      %v8982 = vld [vmem:[%s7431 + $0x111] sm:$0xff]
      %v8983 = vld [vmem:[%s7431 + $0x121] sm:$0xff]
      %v8984 = vld [vmem:[%s7431 + $0x129] sm:$0xff]
      %v8985 = vld [vmem:[%s7431 + $0x139] sm:$0xff]
      %v8986 = vld [vmem:[%s7431 + $0x141] sm:$0xff]
      %v8987 = vld [vmem:[%s7431 + $0x151] sm:$0xff]
      %v8988 = vld [vmem:[%s7431 + $0x159] sm:$0xff]
      %v8989 = vld [vmem:[%s7431 + $0x169] sm:$0xff]
      %v8990 = vld [vmem:[%s7431 + $0x171] sm:$0xff]
      %s8991 = scalar_lea.vmem %s5, 128
      %v8992 = vld [vmem:[%s8991] sm:$0xff]
      %v8993 = vld [vmem:[%s8991 + $0x8] sm:$0xff]
      %v8994 = vld [vmem:[%s8991 + $0x10] sm:$0xff]
      %v8995 = vld [vmem:[%s8991 + $0x18] sm:$0xff]
      %v8997 = vsel %vm3771, %v8959, 0
      %v9000 = vsel %vm3771, %v8960, 0
      %v9003 = vsel %vm3771, %v8961, 0
      %v9006 = vsel %vm3771, %v8962, 0
      %v9009 = vsel %vm3771, %v8963, 0
      %v9012 = vsel %vm3771, %v8964, 0
      %v9015 = vsel %vm3771, %v8965, 0
      %v9018 = vsel %vm3771, %v8966, 0
      %v9021 = vsel %vm3771, %v8967, 0
      %v9024 = vsel %vm3771, %v8968, 0
      %v9027 = vsel %vm3771, %v8969, 0
      %v9030 = vsel %vm3771, %v8970, 0
      %v9033 = vsel %vm3771, %v8971, 0
      %v9036 = vsel %vm3771, %v8972, 0
      %v9039 = vsel %vm3771, %v8973, 0
      %v9042 = vsel %vm3771, %v8974, 0
      %v9045 = vsel %vm3771, %v8975, 0
      %v9048 = vsel %vm3771, %v8976, 0
      %v9051 = vsel %vm3771, %v8977, 0
      %v9054 = vsel %vm3771, %v8978, 0
      %v9057 = vsel %vm3771, %v8979, 0
      %v9060 = vsel %vm3771, %v8980, 0
      %v9063 = vsel %vm3771, %v8981, 0
      %v9066 = vsel %vm3771, %v8982, 0
      %v9069 = vsel %vm3771, %v8983, 0
      %v9072 = vsel %vm3771, %v8984, 0
      %v9075 = vsel %vm3771, %v8985, 0
      %v9078 = vsel %vm3771, %v8986, 0
      %v9081 = vsel %vm3771, %v8987, 0
      %v9084 = vsel %vm3771, %v8988, 0
      %v9087 = vsel %vm3771, %v8989, 0
      %v9090 = vsel %vm3771, %v8990, 0
      %9092 = vmatprep.subr.mxu0 0.0
      %9093 = vmatpush1.msra.mxu0 %v8992
      %9094 = vmatprep.subr.mxu0 0.0
      %9095 = vmatpush1.msra.mxu0 %v8993
      %9096 = vmatprep.subr.mxu0 0.0
      %9097 = vmatpush1.msra.mxu0 %v8994
      %9098 = vmatprep.subr.mxu0 0.0
      %9099 = vmatpush1.msra.mxu0 %v8995
      %9100 = vmatprep.subr.mxu0 0.0
      %9101 = vmatpush1.msra.mxu0 0.0
      %9102 = vmatprep.subr.mxu0 0.0
      %9103 = vmatpush1.msra.mxu0 0.0
      %9104 = vmatprep.subr.mxu0 0.0
      %9105 = vmatpush1.msra.mxu0 0.0
      %9106 = vmatprep.subr.mxu0 0.0
      %9107 = vmatpush1.msra.mxu0 0.0
      %9108 = vmatprep.subr.mxu0 0.0
      %9109 = vmatpush1.msra.mxu0 0.0
      %9110 = vmatprep.subr.mxu0 0.0
      %9111 = vmatpush1.msra.mxu0 0.0
      %9112 = vmatprep.subr.mxu0 0.0
      %9113 = vmatpush1.msra.mxu0 0.0
      %9114 = vmatprep.subr.mxu0 0.0
      %9115 = vmatpush1.msra.mxu0 0.0
      %9116 = vmatprep.subr.mxu0 0.0
      %9117 = vmatpush1.msra.mxu0 0.0
      %9118 = vmatprep.subr.mxu0 0.0
      %9119 = vmatpush1.msra.mxu0 0.0
      %9120 = vmatprep.subr.mxu0 0.0
      %9121 = vmatpush1.msra.mxu0 0.0
      %9122 = vmatprep.subr.mxu0 0.0
      %9123 = vmatpush1.msra.mxu0 0.0
      %9124 = vmatprep.subr.mxu0 0.0
      %9125 = vmatpush1.msra.mxu0 0.0
      %9126 = vmatprep.subr.mxu0 0.0
      %9127 = vmatpush1.msra.mxu0 0.0
      %9128 = vmatprep.subr.mxu0 0.0
      %9129 = vmatpush1.msra.mxu0 0.0
      %9130 = vmatprep.subr.mxu0 0.0
      %9131 = vmatpush1.msra.mxu0 0.0
      %9132 = vmatprep.subr.mxu0 0.0
      %9133 = vmatpush1.msra.mxu0 0.0
      %9134 = vmatprep.subr.mxu0 0.0
      %9135 = vmatpush1.msra.mxu0 0.0
      %9136 = vmatprep.subr.mxu0 0.0
      %9137 = vmatpush1.msra.mxu0 0.0
      %9138 = vmatprep.subr.mxu0 0.0
      %9139 = vmatpush1.msra.mxu0 0.0
      %9140 = vmatprep.subr.mxu0 0.0
      %9141 = vmatpush1.msra.mxu0 0.0
      %9142 = vmatprep.subr.mxu0 0.0
      %9143 = vmatpush1.msra.mxu0 0.0
      %9144 = vmatprep.subr.mxu0 0.0
      %9145 = vmatpush1.msra.mxu0 0.0
      %9146 = vmatprep.subr.mxu0 0.0
      %9147 = vmatpush1.msra.mxu0 0.0
      %9148 = vmatprep.subr.mxu0 0.0
      %9149 = vmatpush1.msra.mxu0 0.0
      %9150 = vmatprep.subr.mxu0 0.0
      %9151 = vmatpush1.msra.mxu0 0.0
      %9152 = vmatprep.subr.mxu0 0.0
      %9153 = vmatpush1.msra.mxu0 0.0
      %9154 = vmatprep.subr.mxu0 0.0
      %9155 = vmatpush1.msra.mxu0 0.0
      %9156 = vmatprep.mubr.f32.mxu0 0.0
      %9157 = vmatmul.mubr.f32.gmra.mrb[0].mxu0 %v8997
      %v9158 = vpop.f32.mrb[0].mxu0
      %v9159 = vadd.f32 0.0, %v9158
      %v9160 = vpop.f32.mrb[0].mxu0
      %9161 = vmatprep.mubr.f32.mxu0 0.0
      %9162 = vmatmul.mubr.f32.gmra.mrb[0].mxu0 %v9000
      %v9163 = vpop.f32.mrb[0].mxu0
      %v9164 = vadd.f32 0.0, %v9163
      %v9165 = vpop.f32.mrb[0].mxu0
      %9166 = vmatprep.mubr.f32.mxu0 0.0
      %9167 = vmatmul.mubr.f32.gmra.mrb[0].mxu0 %v9003
      %v9168 = vpop.f32.mrb[0].mxu0
      %v9169 = vadd.f32 0.0, %v9168
      %v9170 = vpop.f32.mrb[0].mxu0
      %9171 = vmatprep.mubr.f32.mxu0 0.0
      %9172 = vmatmul.mubr.f32.gmra.mrb[0].mxu0 %v9006
      %v9173 = vpop.f32.mrb[0].mxu0
      %v9174 = vadd.f32 0.0, %v9173
      %v9175 = vpop.f32.mrb[0].mxu0
      %9176 = vmatprep.mubr.f32.mxu0 0.0
      %9177 = vmatmul.mubr.f32.gmra.mrb[0].mxu0 %v9009
      %v9178 = vpop.f32.mrb[0].mxu0
      %v9179 = vadd.f32 0.0, %v9178
      %v9180 = vpop.f32.mrb[0].mxu0
      %9181 = vmatprep.mubr.f32.mxu0 0.0
      %9182 = vmatmul.mubr.f32.gmra.mrb[0].mxu0 %v9012
      %v9183 = vpop.f32.mrb[0].mxu0
      %v9184 = vadd.f32 0.0, %v9183
      %v9185 = vpop.f32.mrb[0].mxu0
      %9186 = vmatprep.mubr.f32.mxu0 0.0
      %9187 = vmatmul.mubr.f32.gmra.mrb[0].mxu0 %v9015
      %v9188 = vpop.f32.mrb[0].mxu0
      %v9189 = vadd.f32 0.0, %v9188
      %v9190 = vpop.f32.mrb[0].mxu0
      %9191 = vmatprep.mubr.f32.mxu0 0.0
      %9192 = vmatmul.mubr.f32.gmra.mrb[0].mxu0 %v9018
      %v9193 = vpop.f32.mrb[0].mxu0
      %v9194 = vadd.f32 0.0, %v9193
      %v9195 = vpop.f32.mrb[0].mxu0
      %9196 = vmatprep.mubr.f32.mxu0 0.0
      %9197 = vmatmul.mubr.f32.gmra.mrb[0].mxu0 %v9021
      %v9198 = vpop.f32.mrb[0].mxu0
      %v9199 = vadd.f32 0.0, %v9198
      %v9200 = vpop.f32.mrb[0].mxu0
      %9201 = vmatprep.mubr.f32.mxu0 0.0
      %9202 = vmatmul.mubr.f32.gmra.mrb[0].mxu0 %v9024
      %v9203 = vpop.f32.mrb[0].mxu0
      %v9204 = vadd.f32 0.0, %v9203
      %v9205 = vpop.f32.mrb[0].mxu0
      %9206 = vmatprep.mubr.f32.mxu0 0.0
      %9207 = vmatmul.mubr.f32.gmra.mrb[0].mxu0 %v9027
      %v9208 = vpop.f32.mrb[0].mxu0
      %v9209 = vadd.f32 0.0, %v9208
      %v9210 = vpop.f32.mrb[0].mxu0
      %9211 = vmatprep.mubr.f32.mxu0 0.0
      %9212 = vmatmul.mubr.f32.gmra.mrb[0].mxu0 %v9030
      %v9213 = vpop.f32.mrb[0].mxu0
      %v9214 = vadd.f32 0.0, %v9213
      %v9215 = vpop.f32.mrb[0].mxu0
      %9216 = vmatprep.mubr.f32.mxu0 0.0
      %9217 = vmatmul.mubr.f32.gmra.mrb[0].mxu0 %v9033
      %v9218 = vpop.f32.mrb[0].mxu0
      %v9219 = vadd.f32 0.0, %v9218
      %v9220 = vpop.f32.mrb[0].mxu0
      %9221 = vmatprep.mubr.f32.mxu0 0.0
      %9222 = vmatmul.mubr.f32.gmra.mrb[0].mxu0 %v9036
      %v9223 = vpop.f32.mrb[0].mxu0
      %v9224 = vadd.f32 0.0, %v9223
      %v9225 = vpop.f32.mrb[0].mxu0
      %9226 = vmatprep.mubr.f32.mxu0 0.0
      %9227 = vmatmul.mubr.f32.gmra.mrb[0].mxu0 %v9039
      %v9228 = vpop.f32.mrb[0].mxu0
      %v9229 = vadd.f32 0.0, %v9228
      %v9230 = vpop.f32.mrb[0].mxu0
      %9231 = vmatprep.mubr.f32.mxu0 0.0
      %9232 = vmatmul.mubr.f32.gmra.mrb[0].mxu0 %v9042
      %v9233 = vpop.f32.mrb[0].mxu0
      %v9234 = vadd.f32 0.0, %v9233
      %v9235 = vpop.f32.mrb[0].mxu0
      %9236 = vmatprep.mubr.f32.mxu0 0.0
      %9237 = vmatmul.mubr.f32.gmra.mrb[0].mxu0 %v9045
      %v9238 = vpop.f32.mrb[0].mxu0
      %v9239 = vadd.f32 0.0, %v9238
      %v9240 = vpop.f32.mrb[0].mxu0
      %9241 = vmatprep.mubr.f32.mxu0 0.0
      %9242 = vmatmul.mubr.f32.gmra.mrb[0].mxu0 %v9048
      %v9243 = vpop.f32.mrb[0].mxu0
      %v9244 = vadd.f32 0.0, %v9243
      %v9245 = vpop.f32.mrb[0].mxu0
      %9246 = vmatprep.mubr.f32.mxu0 0.0
      %9247 = vmatmul.mubr.f32.gmra.mrb[0].mxu0 %v9051
      %v9248 = vpop.f32.mrb[0].mxu0
      %v9249 = vadd.f32 0.0, %v9248
      %v9250 = vpop.f32.mrb[0].mxu0
      %9251 = vmatprep.mubr.f32.mxu0 0.0
      %9252 = vmatmul.mubr.f32.gmra.mrb[0].mxu0 %v9054
      %v9253 = vpop.f32.mrb[0].mxu0
      %v9254 = vadd.f32 0.0, %v9253
      %v9255 = vpop.f32.mrb[0].mxu0
      %9256 = vmatprep.mubr.f32.mxu0 0.0
      %9257 = vmatmul.mubr.f32.gmra.mrb[0].mxu0 %v9057
      %v9258 = vpop.f32.mrb[0].mxu0
      %v9259 = vadd.f32 0.0, %v9258
      %v9260 = vpop.f32.mrb[0].mxu0
      %9261 = vmatprep.mubr.f32.mxu0 0.0
      %9262 = vmatmul.mubr.f32.gmra.mrb[0].mxu0 %v9060
      %v9263 = vpop.f32.mrb[0].mxu0
      %v9264 = vadd.f32 0.0, %v9263
      %v9265 = vpop.f32.mrb[0].mxu0
      %9266 = vmatprep.mubr.f32.mxu0 0.0
      %9267 = vmatmul.mubr.f32.gmra.mrb[0].mxu0 %v9063
      %v9268 = vpop.f32.mrb[0].mxu0
      %v9269 = vadd.f32 0.0, %v9268
      %v9270 = vpop.f32.mrb[0].mxu0
      %9271 = vmatprep.mubr.f32.mxu0 0.0
      %9272 = vmatmul.mubr.f32.gmra.mrb[0].mxu0 %v9066
      %v9273 = vpop.f32.mrb[0].mxu0
      %v9274 = vadd.f32 0.0, %v9273
      %v9275 = vpop.f32.mrb[0].mxu0
      %9276 = vmatprep.mubr.f32.mxu0 0.0
      %9277 = vmatmul.mubr.f32.gmra.mrb[0].mxu0 %v9069
      %v9278 = vpop.f32.mrb[0].mxu0
      %v9279 = vadd.f32 0.0, %v9278
      %v9280 = vpop.f32.mrb[0].mxu0
      %9281 = vmatprep.mubr.f32.mxu0 0.0
      %9282 = vmatmul.mubr.f32.gmra.mrb[0].mxu0 %v9072
      %v9283 = vpop.f32.mrb[0].mxu0
      %v9284 = vadd.f32 0.0, %v9283
      %v9285 = vpop.f32.mrb[0].mxu0
      %9286 = vmatprep.mubr.f32.mxu0 0.0
      %9287 = vmatmul.mubr.f32.gmra.mrb[0].mxu0 %v9075
      %v9288 = vpop.f32.mrb[0].mxu0
      %v9289 = vadd.f32 0.0, %v9288
      %v9290 = vpop.f32.mrb[0].mxu0
      %9291 = vmatprep.mubr.f32.mxu0 0.0
      %9292 = vmatmul.mubr.f32.gmra.mrb[0].mxu0 %v9078
      %v9293 = vpop.f32.mrb[0].mxu0
      %v9294 = vadd.f32 0.0, %v9293
      %v9295 = vpop.f32.mrb[0].mxu0
      %9296 = vmatprep.mubr.f32.mxu0 0.0
      %9297 = vmatmul.mubr.f32.gmra.mrb[0].mxu0 %v9081
      %v9298 = vpop.f32.mrb[0].mxu0
      %v9299 = vadd.f32 0.0, %v9298
      %v9300 = vpop.f32.mrb[0].mxu0
      %9301 = vmatprep.mubr.f32.mxu0 0.0
      %9302 = vmatmul.mubr.f32.gmra.mrb[0].mxu0 %v9084
      %v9303 = vpop.f32.mrb[0].mxu0
      %v9304 = vadd.f32 0.0, %v9303
      %v9305 = vpop.f32.mrb[0].mxu0
      %9306 = vmatprep.mubr.f32.mxu0 0.0
      %9307 = vmatmul.mubr.f32.gmra.mrb[0].mxu0 %v9087
      %v9308 = vpop.f32.mrb[0].mxu0
      %v9309 = vadd.f32 0.0, %v9308
      %v9310 = vpop.f32.mrb[0].mxu0
      %9311 = vmatprep.mubr.f32.mxu0 0.0
      %9312 = vmatmul.mubr.f32.gmra.mrb[0].mxu0 %v9090
      %v9313 = vpop.f32.mrb[0].mxu0
      %v9314 = vadd.f32 0.0, %v9313
      %v9315 = vpop.f32.mrb[0].mxu0
      %9316 = vdwg.mxu0
      %v9317 = vadd.f32 %v8927, %v9159
      %v9318 = vadd.f32 %v8928, %v9164
      %v9319 = vadd.f32 %v8929, %v9169
      %v9320 = vadd.f32 %v8930, %v9174
      %v9321 = vadd.f32 %v8931, %v9179
      %v9322 = vadd.f32 %v8932, %v9184
      %v9323 = vadd.f32 %v8933, %v9189
      %v9324 = vadd.f32 %v8934, %v9194
      %v9325 = vadd.f32 %v8935, %v9199
      %v9326 = vadd.f32 %v8936, %v9204
      %v9327 = vadd.f32 %v8937, %v9209
      %v9328 = vadd.f32 %v8938, %v9214
      %v9329 = vadd.f32 %v8939, %v9219
      %v9330 = vadd.f32 %v8940, %v9224
      %v9331 = vadd.f32 %v8941, %v9229
      %v9332 = vadd.f32 %v8942, %v9234
      %v9333 = vadd.f32 %v8943, %v9239
      %v9334 = vadd.f32 %v8944, %v9244
      %v9335 = vadd.f32 %v8945, %v9249
      %v9336 = vadd.f32 %v8946, %v9254
      %v9337 = vadd.f32 %v8947, %v9259
      %v9338 = vadd.f32 %v8948, %v9264
      %v9339 = vadd.f32 %v8949, %v9269
      %v9340 = vadd.f32 %v8950, %v9274
      %v9341 = vadd.f32 %v8951, %v9279
      %v9342 = vadd.f32 %v8952, %v9284
      %v9343 = vadd.f32 %v8953, %v9289
      %v9344 = vadd.f32 %v8954, %v9294
      %v9345 = vadd.f32 %v8955, %v9299
      %v9346 = vadd.f32 %v8956, %v9304
      %v9347 = vadd.f32 %v8957, %v9309
      %v9348 = vadd.f32 %v8958, %v9314
      %v9349 = vld [vmem:[%s7431 + $0x2] sm:$0xff]
      %v9350 = vld [vmem:[%s7431 + $0xa] sm:$0xff]
      %v9351 = vld [vmem:[%s7431 + $0x1a] sm:$0xff]
      %v9352 = vld [vmem:[%s7431 + $0x22] sm:$0xff]
      %v9353 = vld [vmem:[%s7431 + $0x32] sm:$0xff]
      %v9354 = vld [vmem:[%s7431 + $0x3a] sm:$0xff]
      %v9355 = vld [vmem:[%s7431 + $0x4a] sm:$0xff]
      %v9356 = vld [vmem:[%s7431 + $0x52] sm:$0xff]
      %v9357 = vld [vmem:[%s7431 + $0x62] sm:$0xff]
      %v9358 = vld [vmem:[%s7431 + $0x6a] sm:$0xff]
      %v9359 = vld [vmem:[%s7431 + $0x7a] sm:$0xff]
      %v9360 = vld [vmem:[%s7431 + $0x82] sm:$0xff]
      %v9361 = vld [vmem:[%s7431 + $0x92] sm:$0xff]
      %v9362 = vld [vmem:[%s7431 + $0x9a] sm:$0xff]
      %v9363 = vld [vmem:[%s7431 + $0xaa] sm:$0xff]
      %v9364 = vld [vmem:[%s7431 + $0xb2] sm:$0xff]
      %v9365 = vld [vmem:[%s7431 + $0xc2] sm:$0xff]
      %v9366 = vld [vmem:[%s7431 + $0xca] sm:$0xff]
      %v9367 = vld [vmem:[%s7431 + $0xda] sm:$0xff]
      %v9368 = vld [vmem:[%s7431 + $0xe2] sm:$0xff]
      %v9369 = vld [vmem:[%s7431 + $0xf2] sm:$0xff]
      %v9370 = vld [vmem:[%s7431 + $0xfa] sm:$0xff]
      %v9371 = vld [vmem:[%s7431 + $0x10a] sm:$0xff]
      %v9372 = vld [vmem:[%s7431 + $0x112] sm:$0xff]
      %v9373 = vld [vmem:[%s7431 + $0x122] sm:$0xff]
      %v9374 = vld [vmem:[%s7431 + $0x12a] sm:$0xff]
      %v9375 = vld [vmem:[%s7431 + $0x13a] sm:$0xff]
      %v9376 = vld [vmem:[%s7431 + $0x142] sm:$0xff]
      %v9377 = vld [vmem:[%s7431 + $0x152] sm:$0xff]
      %v9378 = vld [vmem:[%s7431 + $0x15a] sm:$0xff]
      %v9379 = vld [vmem:[%s7431 + $0x16a] sm:$0xff]
      %v9380 = vld [vmem:[%s7431 + $0x172] sm:$0xff]
      %s9381 = scalar_lea.vmem %s5, 160
      %v9382 = vld [vmem:[%s9381] sm:$0xff]
      %v9383 = vld [vmem:[%s9381 + $0x8] sm:$0xff]
      %v9384 = vld [vmem:[%s9381 + $0x10] sm:$0xff]
      %v9385 = vld [vmem:[%s9381 + $0x18] sm:$0xff]
      %v9387 = vsel %vm3771, %v9349, 0
      %v9390 = vsel %vm3771, %v9350, 0
      %v9393 = vsel %vm3771, %v9351, 0
      %v9396 = vsel %vm3771, %v9352, 0
      %v9399 = vsel %vm3771, %v9353, 0
      %v9402 = vsel %vm3771, %v9354, 0
      %v9405 = vsel %vm3771, %v9355, 0
      %v9408 = vsel %vm3771, %v9356, 0
      %v9411 = vsel %vm3771, %v9357, 0
      %v9414 = vsel %vm3771, %v9358, 0
      %v9417 = vsel %vm3771, %v9359, 0
      %v9420 = vsel %vm3771, %v9360, 0
      %v9423 = vsel %vm3771, %v9361, 0
      %v9426 = vsel %vm3771, %v9362, 0
      %v9429 = vsel %vm3771, %v9363, 0
      %v9432 = vsel %vm3771, %v9364, 0
      %v9435 = vsel %vm3771, %v9365, 0
      %v9438 = vsel %vm3771, %v9366, 0
      %v9441 = vsel %vm3771, %v9367, 0
      %v9444 = vsel %vm3771, %v9368, 0
      %v9447 = vsel %vm3771, %v9369, 0
      %v9450 = vsel %vm3771, %v9370, 0
      %v9453 = vsel %vm3771, %v9371, 0
      %v9456 = vsel %vm3771, %v9372, 0
      %v9459 = vsel %vm3771, %v9373, 0
      %v9462 = vsel %vm3771, %v9374, 0
      %v9465 = vsel %vm3771, %v9375, 0
      %v9468 = vsel %vm3771, %v9376, 0
      %v9471 = vsel %vm3771, %v9377, 0
      %v9474 = vsel %vm3771, %v9378, 0
      %v9477 = vsel %vm3771, %v9379, 0
      %v9480 = vsel %vm3771, %v9380, 0
      %9482 = vmatprep.subr.mxu0 0.0
      %9483 = vmatpush1.msra.mxu0 %v9382
      %9484 = vmatprep.subr.mxu0 0.0
      %9485 = vmatpush1.msra.mxu0 %v9383
      %9486 = vmatprep.subr.mxu0 0.0
      %9487 = vmatpush1.msra.mxu0 %v9384
      %9488 = vmatprep.subr.mxu0 0.0
      %9489 = vmatpush1.msra.mxu0 %v9385
      %9490 = vmatprep.subr.mxu0 0.0
      %9491 = vmatpush1.msra.mxu0 0.0
      %9492 = vmatprep.subr.mxu0 0.0
      %9493 = vmatpush1.msra.mxu0 0.0
      %9494 = vmatprep.subr.mxu0 0.0
      %9495 = vmatpush1.msra.mxu0 0.0
      %9496 = vmatprep.subr.mxu0 0.0
      %9497 = vmatpush1.msra.mxu0 0.0
      %9498 = vmatprep.subr.mxu0 0.0
      %9499 = vmatpush1.msra.mxu0 0.0
      %9500 = vmatprep.subr.mxu0 0.0
      %9501 = vmatpush1.msra.mxu0 0.0
      %9502 = vmatprep.subr.mxu0 0.0
      %9503 = vmatpush1.msra.mxu0 0.0
      %9504 = vmatprep.subr.mxu0 0.0
      %9505 = vmatpush1.msra.mxu0 0.0
      %9506 = vmatprep.subr.mxu0 0.0
      %9507 = vmatpush1.msra.mxu0 0.0
      %9508 = vmatprep.subr.mxu0 0.0
      %9509 = vmatpush1.msra.mxu0 0.0
      %9510 = vmatprep.subr.mxu0 0.0
      %9511 = vmatpush1.msra.mxu0 0.0
      %9512 = vmatprep.subr.mxu0 0.0
      %9513 = vmatpush1.msra.mxu0 0.0
      %9514 = vmatprep.subr.mxu0 0.0
      %9515 = vmatpush1.msra.mxu0 0.0
      %9516 = vmatprep.subr.mxu0 0.0
      %9517 = vmatpush1.msra.mxu0 0.0
      %9518 = vmatprep.subr.mxu0 0.0
      %9519 = vmatpush1.msra.mxu0 0.0
      %9520 = vmatprep.subr.mxu0 0.0
      %9521 = vmatpush1.msra.mxu0 0.0
      %9522 = vmatprep.subr.mxu0 0.0
      %9523 = vmatpush1.msra.mxu0 0.0
      %9524 = vmatprep.subr.mxu0 0.0
      %9525 = vmatpush1.msra.mxu0 0.0
      %9526 = vmatprep.subr.mxu0 0.0
      %9527 = vmatpush1.msra.mxu0 0.0
      %9528 = vmatprep.subr.mxu0 0.0
      %9529 = vmatpush1.msra.mxu0 0.0
      %9530 = vmatprep.subr.mxu0 0.0
      %9531 = vmatpush1.msra.mxu0 0.0
      %9532 = vmatprep.subr.mxu0 0.0
      %9533 = vmatpush1.msra.mxu0 0.0
      %9534 = vmatprep.subr.mxu0 0.0
      %9535 = vmatpush1.msra.mxu0 0.0
      %9536 = vmatprep.subr.mxu0 0.0
      %9537 = vmatpush1.msra.mxu0 0.0
      %9538 = vmatprep.subr.mxu0 0.0
      %9539 = vmatpush1.msra.mxu0 0.0
      %9540 = vmatprep.subr.mxu0 0.0
      %9541 = vmatpush1.msra.mxu0 0.0
      %9542 = vmatprep.subr.mxu0 0.0
      %9543 = vmatpush1.msra.mxu0 0.0
      %9544 = vmatprep.subr.mxu0 0.0
      %9545 = vmatpush1.msra.mxu0 0.0
      %9546 = vmatprep.mubr.f32.mxu0 0.0
      %9547 = vmatmul.mubr.f32.gmra.mrb[0].mxu0 %v9387
      %v9548 = vpop.f32.mrb[0].mxu0
      %v9549 = vadd.f32 0.0, %v9548
      %v9550 = vpop.f32.mrb[0].mxu0
      %9551 = vmatprep.mubr.f32.mxu0 0.0
      %9552 = vmatmul.mubr.f32.gmra.mrb[0].mxu0 %v9390
      %v9553 = vpop.f32.mrb[0].mxu0
      %v9554 = vadd.f32 0.0, %v9553
      %v9555 = vpop.f32.mrb[0].mxu0
      %9556 = vmatprep.mubr.f32.mxu0 0.0
      %9557 = vmatmul.mubr.f32.gmra.mrb[0].mxu0 %v9393
      %v9558 = vpop.f32.mrb[0].mxu0
      %v9559 = vadd.f32 0.0, %v9558
      %v9560 = vpop.f32.mrb[0].mxu0
      %9561 = vmatprep.mubr.f32.mxu0 0.0
      %9562 = vmatmul.mubr.f32.gmra.mrb[0].mxu0 %v9396
      %v9563 = vpop.f32.mrb[0].mxu0
      %v9564 = vadd.f32 0.0, %v9563
      %v9565 = vpop.f32.mrb[0].mxu0
      %9566 = vmatprep.mubr.f32.mxu0 0.0
      %9567 = vmatmul.mubr.f32.gmra.mrb[0].mxu0 %v9399
      %v9568 = vpop.f32.mrb[0].mxu0
      %v9569 = vadd.f32 0.0, %v9568
      %v9570 = vpop.f32.mrb[0].mxu0
      %9571 = vmatprep.mubr.f32.mxu0 0.0
      %9572 = vmatmul.mubr.f32.gmra.mrb[0].mxu0 %v9402
      %v9573 = vpop.f32.mrb[0].mxu0
      %v9574 = vadd.f32 0.0, %v9573
      %v9575 = vpop.f32.mrb[0].mxu0
      %9576 = vmatprep.mubr.f32.mxu0 0.0
      %9577 = vmatmul.mubr.f32.gmra.mrb[0].mxu0 %v9405
      %v9578 = vpop.f32.mrb[0].mxu0
      %v9579 = vadd.f32 0.0, %v9578
      %v9580 = vpop.f32.mrb[0].mxu0
      %9581 = vmatprep.mubr.f32.mxu0 0.0
      %9582 = vmatmul.mubr.f32.gmra.mrb[0].mxu0 %v9408
      %v9583 = vpop.f32.mrb[0].mxu0
      %v9584 = vadd.f32 0.0, %v9583
      %v9585 = vpop.f32.mrb[0].mxu0
      %9586 = vmatprep.mubr.f32.mxu0 0.0
      %9587 = vmatmul.mubr.f32.gmra.mrb[0].mxu0 %v9411
      %v9588 = vpop.f32.mrb[0].mxu0
      %v9589 = vadd.f32 0.0, %v9588
      %v9590 = vpop.f32.mrb[0].mxu0
      %9591 = vmatprep.mubr.f32.mxu0 0.0
      %9592 = vmatmul.mubr.f32.gmra.mrb[0].mxu0 %v9414
      %v9593 = vpop.f32.mrb[0].mxu0
      %v9594 = vadd.f32 0.0, %v9593
      %v9595 = vpop.f32.mrb[0].mxu0
      %9596 = vmatprep.mubr.f32.mxu0 0.0
      %9597 = vmatmul.mubr.f32.gmra.mrb[0].mxu0 %v9417
      %v9598 = vpop.f32.mrb[0].mxu0
      %v9599 = vadd.f32 0.0, %v9598
      %v9600 = vpop.f32.mrb[0].mxu0
      %9601 = vmatprep.mubr.f32.mxu0 0.0
      %9602 = vmatmul.mubr.f32.gmra.mrb[0].mxu0 %v9420
      %v9603 = vpop.f32.mrb[0].mxu0
      %v9604 = vadd.f32 0.0, %v9603
      %v9605 = vpop.f32.mrb[0].mxu0
      %9606 = vmatprep.mubr.f32.mxu0 0.0
      %9607 = vmatmul.mubr.f32.gmra.mrb[0].mxu0 %v9423
      %v9608 = vpop.f32.mrb[0].mxu0
      %v9609 = vadd.f32 0.0, %v9608
      %v9610 = vpop.f32.mrb[0].mxu0
      %9611 = vmatprep.mubr.f32.mxu0 0.0
      %9612 = vmatmul.mubr.f32.gmra.mrb[0].mxu0 %v9426
      %v9613 = vpop.f32.mrb[0].mxu0
      %v9614 = vadd.f32 0.0, %v9613
      %v9615 = vpop.f32.mrb[0].mxu0
      %9616 = vmatprep.mubr.f32.mxu0 0.0
      %9617 = vmatmul.mubr.f32.gmra.mrb[0].mxu0 %v9429
      %v9618 = vpop.f32.mrb[0].mxu0
      %v9619 = vadd.f32 0.0, %v9618
      %v9620 = vpop.f32.mrb[0].mxu0
      %9621 = vmatprep.mubr.f32.mxu0 0.0
      %9622 = vmatmul.mubr.f32.gmra.mrb[0].mxu0 %v9432
      %v9623 = vpop.f32.mrb[0].mxu0
      %v9624 = vadd.f32 0.0, %v9623
      %v9625 = vpop.f32.mrb[0].mxu0
      %9626 = vmatprep.mubr.f32.mxu0 0.0
      %9627 = vmatmul.mubr.f32.gmra.mrb[0].mxu0 %v9435
      %v9628 = vpop.f32.mrb[0].mxu0
      %v9629 = vadd.f32 0.0, %v9628
      %v9630 = vpop.f32.mrb[0].mxu0
      %9631 = vmatprep.mubr.f32.mxu0 0.0
      %9632 = vmatmul.mubr.f32.gmra.mrb[0].mxu0 %v9438
      %v9633 = vpop.f32.mrb[0].mxu0
      %v9634 = vadd.f32 0.0, %v9633
      %v9635 = vpop.f32.mrb[0].mxu0
      %9636 = vmatprep.mubr.f32.mxu0 0.0
      %9637 = vmatmul.mubr.f32.gmra.mrb[0].mxu0 %v9441
      %v9638 = vpop.f32.mrb[0].mxu0
      %v9639 = vadd.f32 0.0, %v9638
      %v9640 = vpop.f32.mrb[0].mxu0
      %9641 = vmatprep.mubr.f32.mxu0 0.0
      %9642 = vmatmul.mubr.f32.gmra.mrb[0].mxu0 %v9444
      %v9643 = vpop.f32.mrb[0].mxu0
      %v9644 = vadd.f32 0.0, %v9643
      %v9645 = vpop.f32.mrb[0].mxu0
      %9646 = vmatprep.mubr.f32.mxu0 0.0
      %9647 = vmatmul.mubr.f32.gmra.mrb[0].mxu0 %v9447
      %v9648 = vpop.f32.mrb[0].mxu0
      %v9649 = vadd.f32 0.0, %v9648
      %v9650 = vpop.f32.mrb[0].mxu0
      %9651 = vmatprep.mubr.f32.mxu0 0.0
      %9652 = vmatmul.mubr.f32.gmra.mrb[0].mxu0 %v9450
      %v9653 = vpop.f32.mrb[0].mxu0
      %v9654 = vadd.f32 0.0, %v9653
      %v9655 = vpop.f32.mrb[0].mxu0
      %9656 = vmatprep.mubr.f32.mxu0 0.0
      %9657 = vmatmul.mubr.f32.gmra.mrb[0].mxu0 %v9453
      %v9658 = vpop.f32.mrb[0].mxu0
      %v9659 = vadd.f32 0.0, %v9658
      %v9660 = vpop.f32.mrb[0].mxu0
      %9661 = vmatprep.mubr.f32.mxu0 0.0
      %9662 = vmatmul.mubr.f32.gmra.mrb[0].mxu0 %v9456
      %v9663 = vpop.f32.mrb[0].mxu0
      %v9664 = vadd.f32 0.0, %v9663
      %v9665 = vpop.f32.mrb[0].mxu0
      %9666 = vmatprep.mubr.f32.mxu0 0.0
      %9667 = vmatmul.mubr.f32.gmra.mrb[0].mxu0 %v9459
      %v9668 = vpop.f32.mrb[0].mxu0
      %v9669 = vadd.f32 0.0, %v9668
      %v9670 = vpop.f32.mrb[0].mxu0
      %9671 = vmatprep.mubr.f32.mxu0 0.0
      %9672 = vmatmul.mubr.f32.gmra.mrb[0].mxu0 %v9462
      %v9673 = vpop.f32.mrb[0].mxu0
      %v9674 = vadd.f32 0.0, %v9673
      %v9675 = vpop.f32.mrb[0].mxu0
      %9676 = vmatprep.mubr.f32.mxu0 0.0
      %9677 = vmatmul.mubr.f32.gmra.mrb[0].mxu0 %v9465
      %v9678 = vpop.f32.mrb[0].mxu0
      %v9679 = vadd.f32 0.0, %v9678
      %v9680 = vpop.f32.mrb[0].mxu0
      %9681 = vmatprep.mubr.f32.mxu0 0.0
      %9682 = vmatmul.mubr.f32.gmra.mrb[0].mxu0 %v9468
      %v9683 = vpop.f32.mrb[0].mxu0
      %v9684 = vadd.f32 0.0, %v9683
      %v9685 = vpop.f32.mrb[0].mxu0
      %9686 = vmatprep.mubr.f32.mxu0 0.0
      %9687 = vmatmul.mubr.f32.gmra.mrb[0].mxu0 %v9471
      %v9688 = vpop.f32.mrb[0].mxu0
      %v9689 = vadd.f32 0.0, %v9688
      %v9690 = vpop.f32.mrb[0].mxu0
      %9691 = vmatprep.mubr.f32.mxu0 0.0
      %9692 = vmatmul.mubr.f32.gmra.mrb[0].mxu0 %v9474
      %v9693 = vpop.f32.mrb[0].mxu0
      %v9694 = vadd.f32 0.0, %v9693
      %v9695 = vpop.f32.mrb[0].mxu0
      %9696 = vmatprep.mubr.f32.mxu0 0.0
      %9697 = vmatmul.mubr.f32.gmra.mrb[0].mxu0 %v9477
      %v9698 = vpop.f32.mrb[0].mxu0
      %v9699 = vadd.f32 0.0, %v9698
      %v9700 = vpop.f32.mrb[0].mxu0
      %9701 = vmatprep.mubr.f32.mxu0 0.0
      %9702 = vmatmul.mubr.f32.gmra.mrb[0].mxu0 %v9480
      %v9703 = vpop.f32.mrb[0].mxu0
      %v9704 = vadd.f32 0.0, %v9703
      %v9705 = vpop.f32.mrb[0].mxu0
      %9706 = vdwg.mxu0
      %v9707 = vadd.f32 %v9317, %v9549
      %v9708 = vadd.f32 %v9318, %v9554
      %v9709 = vadd.f32 %v9319, %v9559
      %v9710 = vadd.f32 %v9320, %v9564
      %v9711 = vadd.f32 %v9321, %v9569
      %v9712 = vadd.f32 %v9322, %v9574
      %v9713 = vadd.f32 %v9323, %v9579
      %v9714 = vadd.f32 %v9324, %v9584
      %v9715 = vadd.f32 %v9325, %v9589
      %v9716 = vadd.f32 %v9326, %v9594
      %v9717 = vadd.f32 %v9327, %v9599
      %v9718 = vadd.f32 %v9328, %v9604
      %v9719 = vadd.f32 %v9329, %v9609
      %v9720 = vadd.f32 %v9330, %v9614
      %v9721 = vadd.f32 %v9331, %v9619
      %v9722 = vadd.f32 %v9332, %v9624
      %v9723 = vadd.f32 %v9333, %v9629
      %v9724 = vadd.f32 %v9334, %v9634
      %v9725 = vadd.f32 %v9335, %v9639
      %v9726 = vadd.f32 %v9336, %v9644
      %v9727 = vadd.f32 %v9337, %v9649
      %v9728 = vadd.f32 %v9338, %v9654
      %v9729 = vadd.f32 %v9339, %v9659
      %v9730 = vadd.f32 %v9340, %v9664
      %v9731 = vadd.f32 %v9341, %v9669
      %v9732 = vadd.f32 %v9342, %v9674
      %v9733 = vadd.f32 %v9343, %v9679
      %v9734 = vadd.f32 %v9344, %v9684
      %v9735 = vadd.f32 %v9345, %v9689
      %v9736 = vadd.f32 %v9346, %v9694
      %v9737 = vadd.f32 %v9347, %v9699
      %v9738 = vadd.f32 %v9348, %v9704
      %s9739 = scalar_lea.vmem [#allocation3], 48
      %v9740 = vld [vmem:[%s9739] sm:$0xff]
      %v9741 = vld [vmem:[%s9739 + $0x8] sm:$0xff]
      %v9742 = vld [vmem:[%s9739 + $0x18] sm:$0xff]
      %v9743 = vld [vmem:[%s9739 + $0x20] sm:$0xff]
      %v9744 = vld [vmem:[%s9739 + $0x30] sm:$0xff]
      %v9745 = vld [vmem:[%s9739 + $0x38] sm:$0xff]
      %v9746 = vld [vmem:[%s9739 + $0x48] sm:$0xff]
      %v9747 = vld [vmem:[%s9739 + $0x50] sm:$0xff]
      %v9748 = vld [vmem:[%s9739 + $0x60] sm:$0xff]
      %v9749 = vld [vmem:[%s9739 + $0x68] sm:$0xff]
      %v9750 = vld [vmem:[%s9739 + $0x78] sm:$0xff]
      %v9751 = vld [vmem:[%s9739 + $0x80] sm:$0xff]
      %v9752 = vld [vmem:[%s9739 + $0x90] sm:$0xff]
      %v9753 = vld [vmem:[%s9739 + $0x98] sm:$0xff]
      %v9754 = vld [vmem:[%s9739 + $0xa8] sm:$0xff]
      %v9755 = vld [vmem:[%s9739 + $0xb0] sm:$0xff]
      %v9756 = vld [vmem:[%s9739 + $0xc0] sm:$0xff]
      %v9757 = vld [vmem:[%s9739 + $0xc8] sm:$0xff]
      %v9758 = vld [vmem:[%s9739 + $0xd8] sm:$0xff]
      %v9759 = vld [vmem:[%s9739 + $0xe0] sm:$0xff]
      %v9760 = vld [vmem:[%s9739 + $0xf0] sm:$0xff]
      %v9761 = vld [vmem:[%s9739 + $0xf8] sm:$0xff]
      %v9762 = vld [vmem:[%s9739 + $0x108] sm:$0xff]
      %v9763 = vld [vmem:[%s9739 + $0x110] sm:$0xff]
      %v9764 = vld [vmem:[%s9739 + $0x120] sm:$0xff]
      %v9765 = vld [vmem:[%s9739 + $0x128] sm:$0xff]
      %v9766 = vld [vmem:[%s9739 + $0x138] sm:$0xff]
      %v9767 = vld [vmem:[%s9739 + $0x140] sm:$0xff]
      %v9768 = vld [vmem:[%s9739 + $0x150] sm:$0xff]
      %v9769 = vld [vmem:[%s9739 + $0x158] sm:$0xff]
      %v9770 = vld [vmem:[%s9739 + $0x168] sm:$0xff]
      %v9771 = vld [vmem:[%s9739 + $0x170] sm:$0xff]
      %s9772 = scalar_lea.vmem %s5, 192
      %v9773 = vld [vmem:[%s9772] sm:$0xff]
      %v9774 = vld [vmem:[%s9772 + $0x8] sm:$0xff]
      %v9775 = vld [vmem:[%s9772 + $0x10] sm:$0xff]
      %v9776 = vld [vmem:[%s9772 + $0x18] sm:$0xff]
      %v9778 = vsel %vm3771, %v9740, 0
      %v9781 = vsel %vm3771, %v9741, 0
      %v9784 = vsel %vm3771, %v9742, 0
      %v9787 = vsel %vm3771, %v9743, 0
      %v9790 = vsel %vm3771, %v9744, 0
      %v9793 = vsel %vm3771, %v9745, 0
      %v9796 = vsel %vm3771, %v9746, 0
      %v9799 = vsel %vm3771, %v9747, 0
      %v9802 = vsel %vm3771, %v9748, 0
      %v9805 = vsel %vm3771, %v9749, 0
      %v9808 = vsel %vm3771, %v9750, 0
      %v9811 = vsel %vm3771, %v9751, 0
      %v9814 = vsel %vm3771, %v9752, 0
      %v9817 = vsel %vm3771, %v9753, 0
      %v9820 = vsel %vm3771, %v9754, 0
      %v9823 = vsel %vm3771, %v9755, 0
      %v9826 = vsel %vm3771, %v9756, 0
      %v9829 = vsel %vm3771, %v9757, 0
      %v9832 = vsel %vm3771, %v9758, 0
      %v9835 = vsel %vm3771, %v9759, 0
      %v9838 = vsel %vm3771, %v9760, 0
      %v9841 = vsel %vm3771, %v9761, 0
      %v9844 = vsel %vm3771, %v9762, 0
      %v9847 = vsel %vm3771, %v9763, 0
      %v9850 = vsel %vm3771, %v9764, 0
      %v9853 = vsel %vm3771, %v9765, 0
      %v9856 = vsel %vm3771, %v9766, 0
      %v9859 = vsel %vm3771, %v9767, 0
      %v9862 = vsel %vm3771, %v9768, 0
      %v9865 = vsel %vm3771, %v9769, 0
      %v9868 = vsel %vm3771, %v9770, 0
      %v9871 = vsel %vm3771, %v9771, 0
      %9873 = vmatprep.subr.mxu0 0.0
      %9874 = vmatpush1.msra.mxu0 %v9773
      %9875 = vmatprep.subr.mxu0 0.0
      %9876 = vmatpush1.msra.mxu0 %v9774
      %9877 = vmatprep.subr.mxu0 0.0
      %9878 = vmatpush1.msra.mxu0 %v9775
      %9879 = vmatprep.subr.mxu0 0.0
      %9880 = vmatpush1.msra.mxu0 %v9776
      %9881 = vmatprep.subr.mxu0 0.0
      %9882 = vmatpush1.msra.mxu0 0.0
      %9883 = vmatprep.subr.mxu0 0.0
      %9884 = vmatpush1.msra.mxu0 0.0
      %9885 = vmatprep.subr.mxu0 0.0
      %9886 = vmatpush1.msra.mxu0 0.0
      %9887 = vmatprep.subr.mxu0 0.0
      %9888 = vmatpush1.msra.mxu0 0.0
      %9889 = vmatprep.subr.mxu0 0.0
      %9890 = vmatpush1.msra.mxu0 0.0
      %9891 = vmatprep.subr.mxu0 0.0
      %9892 = vmatpush1.msra.mxu0 0.0
      %9893 = vmatprep.subr.mxu0 0.0
      %9894 = vmatpush1.msra.mxu0 0.0
      %9895 = vmatprep.subr.mxu0 0.0
      %9896 = vmatpush1.msra.mxu0 0.0
      %9897 = vmatprep.subr.mxu0 0.0
      %9898 = vmatpush1.msra.mxu0 0.0
      %9899 = vmatprep.subr.mxu0 0.0
      %9900 = vmatpush1.msra.mxu0 0.0
      %9901 = vmatprep.subr.mxu0 0.0
      %9902 = vmatpush1.msra.mxu0 0.0
      %9903 = vmatprep.subr.mxu0 0.0
      %9904 = vmatpush1.msra.mxu0 0.0
      %9905 = vmatprep.subr.mxu0 0.0
      %9906 = vmatpush1.msra.mxu0 0.0
      %9907 = vmatprep.subr.mxu0 0.0
      %9908 = vmatpush1.msra.mxu0 0.0
      %9909 = vmatprep.subr.mxu0 0.0
      %9910 = vmatpush1.msra.mxu0 0.0
      %9911 = vmatprep.subr.mxu0 0.0
      %9912 = vmatpush1.msra.mxu0 0.0
      %9913 = vmatprep.subr.mxu0 0.0
      %9914 = vmatpush1.msra.mxu0 0.0
      %9915 = vmatprep.subr.mxu0 0.0
      %9916 = vmatpush1.msra.mxu0 0.0
      %9917 = vmatprep.subr.mxu0 0.0
      %9918 = vmatpush1.msra.mxu0 0.0
      %9919 = vmatprep.subr.mxu0 0.0
      %9920 = vmatpush1.msra.mxu0 0.0
      %9921 = vmatprep.subr.mxu0 0.0
      %9922 = vmatpush1.msra.mxu0 0.0
      %9923 = vmatprep.subr.mxu0 0.0
      %9924 = vmatpush1.msra.mxu0 0.0
      %9925 = vmatprep.subr.mxu0 0.0
      %9926 = vmatpush1.msra.mxu0 0.0
      %9927 = vmatprep.subr.mxu0 0.0
      %9928 = vmatpush1.msra.mxu0 0.0
      %9929 = vmatprep.subr.mxu0 0.0
      %9930 = vmatpush1.msra.mxu0 0.0
      %9931 = vmatprep.subr.mxu0 0.0
      %9932 = vmatpush1.msra.mxu0 0.0
      %9933 = vmatprep.subr.mxu0 0.0
      %9934 = vmatpush1.msra.mxu0 0.0
      %9935 = vmatprep.subr.mxu0 0.0
      %9936 = vmatpush1.msra.mxu0 0.0
      %9937 = vmatprep.mubr.f32.mxu0 0.0
      %9938 = vmatmul.mubr.f32.gmra.mrb[0].mxu0 %v9778
      %v9939 = vpop.f32.mrb[0].mxu0
      %v9940 = vadd.f32 0.0, %v9939
      %v9941 = vpop.f32.mrb[0].mxu0
      %9942 = vmatprep.mubr.f32.mxu0 0.0
      %9943 = vmatmul.mubr.f32.gmra.mrb[0].mxu0 %v9781
      %v9944 = vpop.f32.mrb[0].mxu0
      %v9945 = vadd.f32 0.0, %v9944
      %v9946 = vpop.f32.mrb[0].mxu0
      %9947 = vmatprep.mubr.f32.mxu0 0.0
      %9948 = vmatmul.mubr.f32.gmra.mrb[0].mxu0 %v9784
      %v9949 = vpop.f32.mrb[0].mxu0
      %v9950 = vadd.f32 0.0, %v9949
      %v9951 = vpop.f32.mrb[0].mxu0
      %9952 = vmatprep.mubr.f32.mxu0 0.0
      %9953 = vmatmul.mubr.f32.gmra.mrb[0].mxu0 %v9787
      %v9954 = vpop.f32.mrb[0].mxu0
      %v9955 = vadd.f32 0.0, %v9954
      %v9956 = vpop.f32.mrb[0].mxu0
      %9957 = vmatprep.mubr.f32.mxu0 0.0
      %9958 = vmatmul.mubr.f32.gmra.mrb[0].mxu0 %v9790
      %v9959 = vpop.f32.mrb[0].mxu0
      %v9960 = vadd.f32 0.0, %v9959
      %v9961 = vpop.f32.mrb[0].mxu0
      %9962 = vmatprep.mubr.f32.mxu0 0.0
      %9963 = vmatmul.mubr.f32.gmra.mrb[0].mxu0 %v9793
      %v9964 = vpop.f32.mrb[0].mxu0
      %v9965 = vadd.f32 0.0, %v9964
      %v9966 = vpop.f32.mrb[0].mxu0
      %9967 = vmatprep.mubr.f32.mxu0 0.0
      %9968 = vmatmul.mubr.f32.gmra.mrb[0].mxu0 %v9796
      %v9969 = vpop.f32.mrb[0].mxu0
      %v9970 = vadd.f32 0.0, %v9969
      %v9971 = vpop.f32.mrb[0].mxu0
      %9972 = vmatprep.mubr.f32.mxu0 0.0
      %9973 = vmatmul.mubr.f32.gmra.mrb[0].mxu0 %v9799
      %v9974 = vpop.f32.mrb[0].mxu0
      %v9975 = vadd.f32 0.0, %v9974
      %v9976 = vpop.f32.mrb[0].mxu0
      %9977 = vmatprep.mubr.f32.mxu0 0.0
      %9978 = vmatmul.mubr.f32.gmra.mrb[0].mxu0 %v9802
      %v9979 = vpop.f32.mrb[0].mxu0
      %v9980 = vadd.f32 0.0, %v9979
      %v9981 = vpop.f32.mrb[0].mxu0
      %9982 = vmatprep.mubr.f32.mxu0 0.0
      %9983 = vmatmul.mubr.f32.gmra.mrb[0].mxu0 %v9805
      %v9984 = vpop.f32.mrb[0].mxu0
      %v9985 = vadd.f32 0.0, %v9984
      %v9986 = vpop.f32.mrb[0].mxu0
      %9987 = vmatprep.mubr.f32.mxu0 0.0
      %9988 = vmatmul.mubr.f32.gmra.mrb[0].mxu0 %v9808
      %v9989 = vpop.f32.mrb[0].mxu0
      %v9990 = vadd.f32 0.0, %v9989
      %v9991 = vpop.f32.mrb[0].mxu0
      %9992 = vmatprep.mubr.f32.mxu0 0.0
      %9993 = vmatmul.mubr.f32.gmra.mrb[0].mxu0 %v9811
      %v9994 = vpop.f32.mrb[0].mxu0
      %v9995 = vadd.f32 0.0, %v9994
      %v9996 = vpop.f32.mrb[0].mxu0
      %9997 = vmatprep.mubr.f32.mxu0 0.0
      %9998 = vmatmul.mubr.f32.gmra.mrb[0].mxu0 %v9814
      %v9999 = vpop.f32.mrb[0].mxu0
      %v10000 = vadd.f32 0.0, %v9999
      %v10001 = vpop.f32.mrb[0].mxu0
      %10002 = vmatprep.mubr.f32.mxu0 0.0
      %10003 = vmatmul.mubr.f32.gmra.mrb[0].mxu0 %v9817
      %v10004 = vpop.f32.mrb[0].mxu0
      %v10005 = vadd.f32 0.0, %v10004
      %v10006 = vpop.f32.mrb[0].mxu0
      %10007 = vmatprep.mubr.f32.mxu0 0.0
      %10008 = vmatmul.mubr.f32.gmra.mrb[0].mxu0 %v9820
      %v10009 = vpop.f32.mrb[0].mxu0
      %v10010 = vadd.f32 0.0, %v10009
      %v10011 = vpop.f32.mrb[0].mxu0
      %10012 = vmatprep.mubr.f32.mxu0 0.0
      %10013 = vmatmul.mubr.f32.gmra.mrb[0].mxu0 %v9823
      %v10014 = vpop.f32.mrb[0].mxu0
      %v10015 = vadd.f32 0.0, %v10014
      %v10016 = vpop.f32.mrb[0].mxu0
      %10017 = vmatprep.mubr.f32.mxu0 0.0
      %10018 = vmatmul.mubr.f32.gmra.mrb[0].mxu0 %v9826
      %v10019 = vpop.f32.mrb[0].mxu0
      %v10020 = vadd.f32 0.0, %v10019
      %v10021 = vpop.f32.mrb[0].mxu0
      %10022 = vmatprep.mubr.f32.mxu0 0.0
      %10023 = vmatmul.mubr.f32.gmra.mrb[0].mxu0 %v9829
      %v10024 = vpop.f32.mrb[0].mxu0
      %v10025 = vadd.f32 0.0, %v10024
      %v10026 = vpop.f32.mrb[0].mxu0
      %10027 = vmatprep.mubr.f32.mxu0 0.0
      %10028 = vmatmul.mubr.f32.gmra.mrb[0].mxu0 %v9832
      %v10029 = vpop.f32.mrb[0].mxu0
      %v10030 = vadd.f32 0.0, %v10029
      %v10031 = vpop.f32.mrb[0].mxu0
      %10032 = vmatprep.mubr.f32.mxu0 0.0
      %10033 = vmatmul.mubr.f32.gmra.mrb[0].mxu0 %v9835
      %v10034 = vpop.f32.mrb[0].mxu0
      %v10035 = vadd.f32 0.0, %v10034
      %v10036 = vpop.f32.mrb[0].mxu0
      %10037 = vmatprep.mubr.f32.mxu0 0.0
      %10038 = vmatmul.mubr.f32.gmra.mrb[0].mxu0 %v9838
      %v10039 = vpop.f32.mrb[0].mxu0
      %v10040 = vadd.f32 0.0, %v10039
      %v10041 = vpop.f32.mrb[0].mxu0
      %10042 = vmatprep.mubr.f32.mxu0 0.0
      %10043 = vmatmul.mubr.f32.gmra.mrb[0].mxu0 %v9841
      %v10044 = vpop.f32.mrb[0].mxu0
      %v10045 = vadd.f32 0.0, %v10044
      %v10046 = vpop.f32.mrb[0].mxu0
      %10047 = vmatprep.mubr.f32.mxu0 0.0
      %10048 = vmatmul.mubr.f32.gmra.mrb[0].mxu0 %v9844
      %v10049 = vpop.f32.mrb[0].mxu0
      %v10050 = vadd.f32 0.0, %v10049
      %v10051 = vpop.f32.mrb[0].mxu0
      %10052 = vmatprep.mubr.f32.mxu0 0.0
      %10053 = vmatmul.mubr.f32.gmra.mrb[0].mxu0 %v9847
      %v10054 = vpop.f32.mrb[0].mxu0
      %v10055 = vadd.f32 0.0, %v10054
      %v10056 = vpop.f32.mrb[0].mxu0
      %10057 = vmatprep.mubr.f32.mxu0 0.0
      %10058 = vmatmul.mubr.f32.gmra.mrb[0].mxu0 %v9850
      %v10059 = vpop.f32.mrb[0].mxu0
      %v10060 = vadd.f32 0.0, %v10059
      %v10061 = vpop.f32.mrb[0].mxu0
      %10062 = vmatprep.mubr.f32.mxu0 0.0
      %10063 = vmatmul.mubr.f32.gmra.mrb[0].mxu0 %v9853
      %v10064 = vpop.f32.mrb[0].mxu0
      %v10065 = vadd.f32 0.0, %v10064
      %v10066 = vpop.f32.mrb[0].mxu0
      %10067 = vmatprep.mubr.f32.mxu0 0.0
      %10068 = vmatmul.mubr.f32.gmra.mrb[0].mxu0 %v9856
      %v10069 = vpop.f32.mrb[0].mxu0
      %v10070 = vadd.f32 0.0, %v10069
      %v10071 = vpop.f32.mrb[0].mxu0
      %10072 = vmatprep.mubr.f32.mxu0 0.0
      %10073 = vmatmul.mubr.f32.gmra.mrb[0].mxu0 %v9859
      %v10074 = vpop.f32.mrb[0].mxu0
      %v10075 = vadd.f32 0.0, %v10074
      %v10076 = vpop.f32.mrb[0].mxu0
      %10077 = vmatprep.mubr.f32.mxu0 0.0
      %10078 = vmatmul.mubr.f32.gmra.mrb[0].mxu0 %v9862
      %v10079 = vpop.f32.mrb[0].mxu0
      %v10080 = vadd.f32 0.0, %v10079
      %v10081 = vpop.f32.mrb[0].mxu0
      %10082 = vmatprep.mubr.f32.mxu0 0.0
      %10083 = vmatmul.mubr.f32.gmra.mrb[0].mxu0 %v9865
      %v10084 = vpop.f32.mrb[0].mxu0
      %v10085 = vadd.f32 0.0, %v10084
      %v10086 = vpop.f32.mrb[0].mxu0
      %10087 = vmatprep.mubr.f32.mxu0 0.0
      %10088 = vmatmul.mubr.f32.gmra.mrb[0].mxu0 %v9868
      %v10089 = vpop.f32.mrb[0].mxu0
      %v10090 = vadd.f32 0.0, %v10089
      %v10091 = vpop.f32.mrb[0].mxu0
      %10092 = vmatprep.mubr.f32.mxu0 0.0
      %10093 = vmatmul.mubr.f32.gmra.mrb[0].mxu0 %v9871
      %v10094 = vpop.f32.mrb[0].mxu0
      %v10095 = vadd.f32 0.0, %v10094
      %v10096 = vpop.f32.mrb[0].mxu0
      %10097 = vdwg.mxu0
      %v10098 = vadd.f32 %v9707, %v9940
      %v10099 = vadd.f32 %v9708, %v9945
      %v10100 = vadd.f32 %v9709, %v9950
      %v10101 = vadd.f32 %v9710, %v9955
      %v10102 = vadd.f32 %v9711, %v9960
      %v10103 = vadd.f32 %v9712, %v9965
      %v10104 = vadd.f32 %v9713, %v9970
      %v10105 = vadd.f32 %v9714, %v9975
      %v10106 = vadd.f32 %v9715, %v9980
      %v10107 = vadd.f32 %v9716, %v9985
      %v10108 = vadd.f32 %v9717, %v9990
      %v10109 = vadd.f32 %v9718, %v9995
      %v10110 = vadd.f32 %v9719, %v10000
      %v10111 = vadd.f32 %v9720, %v10005
      %v10112 = vadd.f32 %v9721, %v10010
      %v10113 = vadd.f32 %v9722, %v10015
      %v10114 = vadd.f32 %v9723, %v10020
      %v10115 = vadd.f32 %v9724, %v10025
      %v10116 = vadd.f32 %v9725, %v10030
      %v10117 = vadd.f32 %v9726, %v10035
      %v10118 = vadd.f32 %v9727, %v10040
      %v10119 = vadd.f32 %v9728, %v10045
      %v10120 = vadd.f32 %v9729, %v10050
      %v10121 = vadd.f32 %v9730, %v10055
      %v10122 = vadd.f32 %v9731, %v10060
      %v10123 = vadd.f32 %v9732, %v10065
      %v10124 = vadd.f32 %v9733, %v10070
      %v10125 = vadd.f32 %v9734, %v10075
      %v10126 = vadd.f32 %v9735, %v10080
      %v10127 = vadd.f32 %v9736, %v10085
      %v10128 = vadd.f32 %v9737, %v10090
      %v10129 = vadd.f32 %v9738, %v10095
      %v10130 = vld [vmem:[%s9739 + $0x1] sm:$0xff]
      %v10131 = vld [vmem:[%s9739 + $0x9] sm:$0xff]
      %v10132 = vld [vmem:[%s9739 + $0x19] sm:$0xff]
      %v10133 = vld [vmem:[%s9739 + $0x21] sm:$0xff]
      %v10134 = vld [vmem:[%s9739 + $0x31] sm:$0xff]
      %v10135 = vld [vmem:[%s9739 + $0x39] sm:$0xff]
      %v10136 = vld [vmem:[%s9739 + $0x49] sm:$0xff]
      %v10137 = vld [vmem:[%s9739 + $0x51] sm:$0xff]
      %v10138 = vld [vmem:[%s9739 + $0x61] sm:$0xff]
      %v10139 = vld [vmem:[%s9739 + $0x69] sm:$0xff]
      %v10140 = vld [vmem:[%s9739 + $0x79] sm:$0xff]
      %v10141 = vld [vmem:[%s9739 + $0x81] sm:$0xff]
      %v10142 = vld [vmem:[%s9739 + $0x91] sm:$0xff]
      %v10143 = vld [vmem:[%s9739 + $0x99] sm:$0xff]
      %v10144 = vld [vmem:[%s9739 + $0xa9] sm:$0xff]
      %v10145 = vld [vmem:[%s9739 + $0xb1] sm:$0xff]
      %v10146 = vld [vmem:[%s9739 + $0xc1] sm:$0xff]
      %v10147 = vld [vmem:[%s9739 + $0xc9] sm:$0xff]
      %v10148 = vld [vmem:[%s9739 + $0xd9] sm:$0xff]
      %v10149 = vld [vmem:[%s9739 + $0xe1] sm:$0xff]
      %v10150 = vld [vmem:[%s9739 + $0xf1] sm:$0xff]
      %v10151 = vld [vmem:[%s9739 + $0xf9] sm:$0xff]
      %v10152 = vld [vmem:[%s9739 + $0x109] sm:$0xff]
      %v10153 = vld [vmem:[%s9739 + $0x111] sm:$0xff]
      %v10154 = vld [vmem:[%s9739 + $0x121] sm:$0xff]
      %v10155 = vld [vmem:[%s9739 + $0x129] sm:$0xff]
      %v10156 = vld [vmem:[%s9739 + $0x139] sm:$0xff]
      %v10157 = vld [vmem:[%s9739 + $0x141] sm:$0xff]
      %v10158 = vld [vmem:[%s9739 + $0x151] sm:$0xff]
      %v10159 = vld [vmem:[%s9739 + $0x159] sm:$0xff]
      %v10160 = vld [vmem:[%s9739 + $0x169] sm:$0xff]
      %v10161 = vld [vmem:[%s9739 + $0x171] sm:$0xff]
      %s10162 = scalar_lea.vmem %s5, 224
      %v10163 = vld [vmem:[%s10162] sm:$0xff]
      %v10164 = vld [vmem:[%s10162 + $0x8] sm:$0xff]
      %v10165 = vld [vmem:[%s10162 + $0x10] sm:$0xff]
      %v10166 = vld [vmem:[%s10162 + $0x18] sm:$0xff]
      %v10168 = vsel %vm3771, %v10130, 0
      %v10171 = vsel %vm3771, %v10131, 0
      %v10174 = vsel %vm3771, %v10132, 0
      %v10177 = vsel %vm3771, %v10133, 0
      %v10180 = vsel %vm3771, %v10134, 0
      %v10183 = vsel %vm3771, %v10135, 0
      %v10186 = vsel %vm3771, %v10136, 0
      %v10189 = vsel %vm3771, %v10137, 0
      %v10192 = vsel %vm3771, %v10138, 0
      %v10195 = vsel %vm3771, %v10139, 0
      %v10198 = vsel %vm3771, %v10140, 0
      %v10201 = vsel %vm3771, %v10141, 0
      %v10204 = vsel %vm3771, %v10142, 0
      %v10207 = vsel %vm3771, %v10143, 0
      %v10210 = vsel %vm3771, %v10144, 0
      %v10213 = vsel %vm3771, %v10145, 0
      %v10216 = vsel %vm3771, %v10146, 0
      %v10219 = vsel %vm3771, %v10147, 0
      %v10222 = vsel %vm3771, %v10148, 0
      %v10225 = vsel %vm3771, %v10149, 0
      %v10228 = vsel %vm3771, %v10150, 0
      %v10231 = vsel %vm3771, %v10151, 0
      %v10234 = vsel %vm3771, %v10152, 0
      %v10237 = vsel %vm3771, %v10153, 0
      %v10240 = vsel %vm3771, %v10154, 0
      %v10243 = vsel %vm3771, %v10155, 0
      %v10246 = vsel %vm3771, %v10156, 0
      %v10249 = vsel %vm3771, %v10157, 0
      %v10252 = vsel %vm3771, %v10158, 0
      %v10255 = vsel %vm3771, %v10159, 0
      %v10258 = vsel %vm3771, %v10160, 0
      %v10261 = vsel %vm3771, %v10161, 0
      %10263 = vmatprep.subr.mxu0 0.0
      %10264 = vmatpush1.msra.mxu0 %v10163
      %10265 = vmatprep.subr.mxu0 0.0
      %10266 = vmatpush1.msra.mxu0 %v10164
      %10267 = vmatprep.subr.mxu0 0.0
      %10268 = vmatpush1.msra.mxu0 %v10165
      %10269 = vmatprep.subr.mxu0 0.0
      %10270 = vmatpush1.msra.mxu0 %v10166
      %10271 = vmatprep.subr.mxu0 0.0
      %10272 = vmatpush1.msra.mxu0 0.0
      %10273 = vmatprep.subr.mxu0 0.0
      %10274 = vmatpush1.msra.mxu0 0.0
      %10275 = vmatprep.subr.mxu0 0.0
      %10276 = vmatpush1.msra.mxu0 0.0
      %10277 = vmatprep.subr.mxu0 0.0
      %10278 = vmatpush1.msra.mxu0 0.0
      %10279 = vmatprep.subr.mxu0 0.0
      %10280 = vmatpush1.msra.mxu0 0.0
      %10281 = vmatprep.subr.mxu0 0.0
      %10282 = vmatpush1.msra.mxu0 0.0
      %10283 = vmatprep.subr.mxu0 0.0
      %10284 = vmatpush1.msra.mxu0 0.0
      %10285 = vmatprep.subr.mxu0 0.0
      %10286 = vmatpush1.msra.mxu0 0.0
      %10287 = vmatprep.subr.mxu0 0.0
      %10288 = vmatpush1.msra.mxu0 0.0
      %10289 = vmatprep.subr.mxu0 0.0
      %10290 = vmatpush1.msra.mxu0 0.0
      %10291 = vmatprep.subr.mxu0 0.0
      %10292 = vmatpush1.msra.mxu0 0.0
      %10293 = vmatprep.subr.mxu0 0.0
      %10294 = vmatpush1.msra.mxu0 0.0
      %10295 = vmatprep.subr.mxu0 0.0
      %10296 = vmatpush1.msra.mxu0 0.0
      %10297 = vmatprep.subr.mxu0 0.0
      %10298 = vmatpush1.msra.mxu0 0.0
      %10299 = vmatprep.subr.mxu0 0.0
      %10300 = vmatpush1.msra.mxu0 0.0
      %10301 = vmatprep.subr.mxu0 0.0
      %10302 = vmatpush1.msra.mxu0 0.0
      %10303 = vmatprep.subr.mxu0 0.0
      %10304 = vmatpush1.msra.mxu0 0.0
      %10305 = vmatprep.subr.mxu0 0.0
      %10306 = vmatpush1.msra.mxu0 0.0
      %10307 = vmatprep.subr.mxu0 0.0
      %10308 = vmatpush1.msra.mxu0 0.0
      %10309 = vmatprep.subr.mxu0 0.0
      %10310 = vmatpush1.msra.mxu0 0.0
      %10311 = vmatprep.subr.mxu0 0.0
      %10312 = vmatpush1.msra.mxu0 0.0
      %10313 = vmatprep.subr.mxu0 0.0
      %10314 = vmatpush1.msra.mxu0 0.0
      %10315 = vmatprep.subr.mxu0 0.0
      %10316 = vmatpush1.msra.mxu0 0.0
      %10317 = vmatprep.subr.mxu0 0.0
      %10318 = vmatpush1.msra.mxu0 0.0
      %10319 = vmatprep.subr.mxu0 0.0
      %10320 = vmatpush1.msra.mxu0 0.0
      %10321 = vmatprep.subr.mxu0 0.0
      %10322 = vmatpush1.msra.mxu0 0.0
      %10323 = vmatprep.subr.mxu0 0.0
      %10324 = vmatpush1.msra.mxu0 0.0
      %10325 = vmatprep.subr.mxu0 0.0
      %10326 = vmatpush1.msra.mxu0 0.0
      %10327 = vmatprep.mubr.f32.mxu0 0.0
      %10328 = vmatmul.mubr.f32.gmra.mrb[0].mxu0 %v10168
      %v10329 = vpop.f32.mrb[0].mxu0
      %v10330 = vadd.f32 0.0, %v10329
      %v10331 = vpop.f32.mrb[0].mxu0
      %10332 = vmatprep.mubr.f32.mxu0 0.0
      %10333 = vmatmul.mubr.f32.gmra.mrb[0].mxu0 %v10171
      %v10334 = vpop.f32.mrb[0].mxu0
      %v10335 = vadd.f32 0.0, %v10334
      %v10336 = vpop.f32.mrb[0].mxu0
      %10337 = vmatprep.mubr.f32.mxu0 0.0
      %10338 = vmatmul.mubr.f32.gmra.mrb[0].mxu0 %v10174
      %v10339 = vpop.f32.mrb[0].mxu0
      %v10340 = vadd.f32 0.0, %v10339
      %v10341 = vpop.f32.mrb[0].mxu0
      %10342 = vmatprep.mubr.f32.mxu0 0.0
      %10343 = vmatmul.mubr.f32.gmra.mrb[0].mxu0 %v10177
      %v10344 = vpop.f32.mrb[0].mxu0
      %v10345 = vadd.f32 0.0, %v10344
      %v10346 = vpop.f32.mrb[0].mxu0
      %10347 = vmatprep.mubr.f32.mxu0 0.0
      %10348 = vmatmul.mubr.f32.gmra.mrb[0].mxu0 %v10180
      %v10349 = vpop.f32.mrb[0].mxu0
      %v10350 = vadd.f32 0.0, %v10349
      %v10351 = vpop.f32.mrb[0].mxu0
      %10352 = vmatprep.mubr.f32.mxu0 0.0
      %10353 = vmatmul.mubr.f32.gmra.mrb[0].mxu0 %v10183
      %v10354 = vpop.f32.mrb[0].mxu0
      %v10355 = vadd.f32 0.0, %v10354
      %v10356 = vpop.f32.mrb[0].mxu0
      %10357 = vmatprep.mubr.f32.mxu0 0.0
      %10358 = vmatmul.mubr.f32.gmra.mrb[0].mxu0 %v10186
      %v10359 = vpop.f32.mrb[0].mxu0
      %v10360 = vadd.f32 0.0, %v10359
      %v10361 = vpop.f32.mrb[0].mxu0
      %10362 = vmatprep.mubr.f32.mxu0 0.0
      %10363 = vmatmul.mubr.f32.gmra.mrb[0].mxu0 %v10189
      %v10364 = vpop.f32.mrb[0].mxu0
      %v10365 = vadd.f32 0.0, %v10364
      %v10366 = vpop.f32.mrb[0].mxu0
      %10367 = vmatprep.mubr.f32.mxu0 0.0
      %10368 = vmatmul.mubr.f32.gmra.mrb[0].mxu0 %v10192
      %v10369 = vpop.f32.mrb[0].mxu0
      %v10370 = vadd.f32 0.0, %v10369
      %v10371 = vpop.f32.mrb[0].mxu0
      %10372 = vmatprep.mubr.f32.mxu0 0.0
      %10373 = vmatmul.mubr.f32.gmra.mrb[0].mxu0 %v10195
      %v10374 = vpop.f32.mrb[0].mxu0
      %v10375 = vadd.f32 0.0, %v10374
      %v10376 = vpop.f32.mrb[0].mxu0
      %10377 = vmatprep.mubr.f32.mxu0 0.0
      %10378 = vmatmul.mubr.f32.gmra.mrb[0].mxu0 %v10198
      %v10379 = vpop.f32.mrb[0].mxu0
      %v10380 = vadd.f32 0.0, %v10379
      %v10381 = vpop.f32.mrb[0].mxu0
      %10382 = vmatprep.mubr.f32.mxu0 0.0
      %10383 = vmatmul.mubr.f32.gmra.mrb[0].mxu0 %v10201
      %v10384 = vpop.f32.mrb[0].mxu0
      %v10385 = vadd.f32 0.0, %v10384
      %v10386 = vpop.f32.mrb[0].mxu0
      %10387 = vmatprep.mubr.f32.mxu0 0.0
      %10388 = vmatmul.mubr.f32.gmra.mrb[0].mxu0 %v10204
      %v10389 = vpop.f32.mrb[0].mxu0
      %v10390 = vadd.f32 0.0, %v10389
      %v10391 = vpop.f32.mrb[0].mxu0
      %10392 = vmatprep.mubr.f32.mxu0 0.0
      %10393 = vmatmul.mubr.f32.gmra.mrb[0].mxu0 %v10207
      %v10394 = vpop.f32.mrb[0].mxu0
      %v10395 = vadd.f32 0.0, %v10394
      %v10396 = vpop.f32.mrb[0].mxu0
      %10397 = vmatprep.mubr.f32.mxu0 0.0
      %10398 = vmatmul.mubr.f32.gmra.mrb[0].mxu0 %v10210
      %v10399 = vpop.f32.mrb[0].mxu0
      %v10400 = vadd.f32 0.0, %v10399
      %v10401 = vpop.f32.mrb[0].mxu0
      %10402 = vmatprep.mubr.f32.mxu0 0.0
      %10403 = vmatmul.mubr.f32.gmra.mrb[0].mxu0 %v10213
      %v10404 = vpop.f32.mrb[0].mxu0
      %v10405 = vadd.f32 0.0, %v10404
      %v10406 = vpop.f32.mrb[0].mxu0
      %10407 = vmatprep.mubr.f32.mxu0 0.0
      %10408 = vmatmul.mubr.f32.gmra.mrb[0].mxu0 %v10216
      %v10409 = vpop.f32.mrb[0].mxu0
      %v10410 = vadd.f32 0.0, %v10409
      %v10411 = vpop.f32.mrb[0].mxu0
      %10412 = vmatprep.mubr.f32.mxu0 0.0
      %10413 = vmatmul.mubr.f32.gmra.mrb[0].mxu0 %v10219
      %v10414 = vpop.f32.mrb[0].mxu0
      %v10415 = vadd.f32 0.0, %v10414
      %v10416 = vpop.f32.mrb[0].mxu0
      %10417 = vmatprep.mubr.f32.mxu0 0.0
      %10418 = vmatmul.mubr.f32.gmra.mrb[0].mxu0 %v10222
      %v10419 = vpop.f32.mrb[0].mxu0
      %v10420 = vadd.f32 0.0, %v10419
      %v10421 = vpop.f32.mrb[0].mxu0
      %10422 = vmatprep.mubr.f32.mxu0 0.0
      %10423 = vmatmul.mubr.f32.gmra.mrb[0].mxu0 %v10225
      %v10424 = vpop.f32.mrb[0].mxu0
      %v10425 = vadd.f32 0.0, %v10424
      %v10426 = vpop.f32.mrb[0].mxu0
      %10427 = vmatprep.mubr.f32.mxu0 0.0
      %10428 = vmatmul.mubr.f32.gmra.mrb[0].mxu0 %v10228
      %v10429 = vpop.f32.mrb[0].mxu0
      %v10430 = vadd.f32 0.0, %v10429
      %v10431 = vpop.f32.mrb[0].mxu0
      %10432 = vmatprep.mubr.f32.mxu0 0.0
      %10433 = vmatmul.mubr.f32.gmra.mrb[0].mxu0 %v10231
      %v10434 = vpop.f32.mrb[0].mxu0
      %v10435 = vadd.f32 0.0, %v10434
      %v10436 = vpop.f32.mrb[0].mxu0
      %10437 = vmatprep.mubr.f32.mxu0 0.0
      %10438 = vmatmul.mubr.f32.gmra.mrb[0].mxu0 %v10234
      %v10439 = vpop.f32.mrb[0].mxu0
      %v10440 = vadd.f32 0.0, %v10439
      %v10441 = vpop.f32.mrb[0].mxu0
      %10442 = vmatprep.mubr.f32.mxu0 0.0
      %10443 = vmatmul.mubr.f32.gmra.mrb[0].mxu0 %v10237
      %v10444 = vpop.f32.mrb[0].mxu0
      %v10445 = vadd.f32 0.0, %v10444
      %v10446 = vpop.f32.mrb[0].mxu0
      %10447 = vmatprep.mubr.f32.mxu0 0.0
      %10448 = vmatmul.mubr.f32.gmra.mrb[0].mxu0 %v10240
      %v10449 = vpop.f32.mrb[0].mxu0
      %v10450 = vadd.f32 0.0, %v10449
      %v10451 = vpop.f32.mrb[0].mxu0
      %10452 = vmatprep.mubr.f32.mxu0 0.0
      %10453 = vmatmul.mubr.f32.gmra.mrb[0].mxu0 %v10243
      %v10454 = vpop.f32.mrb[0].mxu0
      %v10455 = vadd.f32 0.0, %v10454
      %v10456 = vpop.f32.mrb[0].mxu0
      %10457 = vmatprep.mubr.f32.mxu0 0.0
      %10458 = vmatmul.mubr.f32.gmra.mrb[0].mxu0 %v10246
      %v10459 = vpop.f32.mrb[0].mxu0
      %v10460 = vadd.f32 0.0, %v10459
      %v10461 = vpop.f32.mrb[0].mxu0
      %10462 = vmatprep.mubr.f32.mxu0 0.0
      %10463 = vmatmul.mubr.f32.gmra.mrb[0].mxu0 %v10249
      %v10464 = vpop.f32.mrb[0].mxu0
      %v10465 = vadd.f32 0.0, %v10464
      %v10466 = vpop.f32.mrb[0].mxu0
      %10467 = vmatprep.mubr.f32.mxu0 0.0
      %10468 = vmatmul.mubr.f32.gmra.mrb[0].mxu0 %v10252
      %v10469 = vpop.f32.mrb[0].mxu0
      %v10470 = vadd.f32 0.0, %v10469
      %v10471 = vpop.f32.mrb[0].mxu0
      %10472 = vmatprep.mubr.f32.mxu0 0.0
      %10473 = vmatmul.mubr.f32.gmra.mrb[0].mxu0 %v10255
      %v10474 = vpop.f32.mrb[0].mxu0
      %v10475 = vadd.f32 0.0, %v10474
      %v10476 = vpop.f32.mrb[0].mxu0
      %10477 = vmatprep.mubr.f32.mxu0 0.0
      %10478 = vmatmul.mubr.f32.gmra.mrb[0].mxu0 %v10258
      %v10479 = vpop.f32.mrb[0].mxu0
      %v10480 = vadd.f32 0.0, %v10479
      %v10481 = vpop.f32.mrb[0].mxu0
      %10482 = vmatprep.mubr.f32.mxu0 0.0
      %10483 = vmatmul.mubr.f32.gmra.mrb[0].mxu0 %v10261
      %v10484 = vpop.f32.mrb[0].mxu0
      %v10485 = vadd.f32 0.0, %v10484
      %v10486 = vpop.f32.mrb[0].mxu0
      %10487 = vdwg.mxu0
      %v10488 = vadd.f32 %v10098, %v10330
      %v10489 = vadd.f32 %v10099, %v10335
      %v10490 = vadd.f32 %v10100, %v10340
      %v10491 = vadd.f32 %v10101, %v10345
      %v10492 = vadd.f32 %v10102, %v10350
      %v10493 = vadd.f32 %v10103, %v10355
      %v10494 = vadd.f32 %v10104, %v10360
      %v10495 = vadd.f32 %v10105, %v10365
      %v10496 = vadd.f32 %v10106, %v10370
      %v10497 = vadd.f32 %v10107, %v10375
      %v10498 = vadd.f32 %v10108, %v10380
      %v10499 = vadd.f32 %v10109, %v10385
      %v10500 = vadd.f32 %v10110, %v10390
      %v10501 = vadd.f32 %v10111, %v10395
      %v10502 = vadd.f32 %v10112, %v10400
      %v10503 = vadd.f32 %v10113, %v10405
      %v10504 = vadd.f32 %v10114, %v10410
      %v10505 = vadd.f32 %v10115, %v10415
      %v10506 = vadd.f32 %v10116, %v10420
      %v10507 = vadd.f32 %v10117, %v10425
      %v10508 = vadd.f32 %v10118, %v10430
      %v10509 = vadd.f32 %v10119, %v10435
      %v10510 = vadd.f32 %v10120, %v10440
      %v10511 = vadd.f32 %v10121, %v10445
      %v10512 = vadd.f32 %v10122, %v10450
      %v10513 = vadd.f32 %v10123, %v10455
      %v10514 = vadd.f32 %v10124, %v10460
      %v10515 = vadd.f32 %v10125, %v10465
      %v10516 = vadd.f32 %v10126, %v10470
      %v10517 = vadd.f32 %v10127, %v10475
      %v10518 = vadd.f32 %v10128, %v10480
      %v10519 = vadd.f32 %v10129, %v10485
      %v10520 = vld [vmem:[%s9739 + $0x2] sm:$0xff]
      %v10521 = vld [vmem:[%s9739 + $0xa] sm:$0xff]
      %v10522 = vld [vmem:[%s9739 + $0x1a] sm:$0xff]
      %v10523 = vld [vmem:[%s9739 + $0x22] sm:$0xff]
      %v10524 = vld [vmem:[%s9739 + $0x32] sm:$0xff]
      %v10525 = vld [vmem:[%s9739 + $0x3a] sm:$0xff]
      %v10526 = vld [vmem:[%s9739 + $0x4a] sm:$0xff]
      %v10527 = vld [vmem:[%s9739 + $0x52] sm:$0xff]
      %v10528 = vld [vmem:[%s9739 + $0x62] sm:$0xff]
      %v10529 = vld [vmem:[%s9739 + $0x6a] sm:$0xff]
      %v10530 = vld [vmem:[%s9739 + $0x7a] sm:$0xff]
      %v10531 = vld [vmem:[%s9739 + $0x82] sm:$0xff]
      %v10532 = vld [vmem:[%s9739 + $0x92] sm:$0xff]
      %v10533 = vld [vmem:[%s9739 + $0x9a] sm:$0xff]
      %v10534 = vld [vmem:[%s9739 + $0xaa] sm:$0xff]
      %v10535 = vld [vmem:[%s9739 + $0xb2] sm:$0xff]
      %v10536 = vld [vmem:[%s9739 + $0xc2] sm:$0xff]
      %v10537 = vld [vmem:[%s9739 + $0xca] sm:$0xff]
      %v10538 = vld [vmem:[%s9739 + $0xda] sm:$0xff]
      %v10539 = vld [vmem:[%s9739 + $0xe2] sm:$0xff]
      %v10540 = vld [vmem:[%s9739 + $0xf2] sm:$0xff]
      %v10541 = vld [vmem:[%s9739 + $0xfa] sm:$0xff]
      %v10542 = vld [vmem:[%s9739 + $0x10a] sm:$0xff]
      %v10543 = vld [vmem:[%s9739 + $0x112] sm:$0xff]
      %v10544 = vld [vmem:[%s9739 + $0x122] sm:$0xff]
      %v10545 = vld [vmem:[%s9739 + $0x12a] sm:$0xff]
      %v10546 = vld [vmem:[%s9739 + $0x13a] sm:$0xff]
      %v10547 = vld [vmem:[%s9739 + $0x142] sm:$0xff]
      %v10548 = vld [vmem:[%s9739 + $0x152] sm:$0xff]
      %v10549 = vld [vmem:[%s9739 + $0x15a] sm:$0xff]
      %v10550 = vld [vmem:[%s9739 + $0x16a] sm:$0xff]
      %v10551 = vld [vmem:[%s9739 + $0x172] sm:$0xff]
      %s10552 = scalar_lea.vmem %s5, 256
      %v10553 = vld [vmem:[%s10552] sm:$0xff]
      %v10554 = vld [vmem:[%s10552 + $0x8] sm:$0xff]
      %v10555 = vld [vmem:[%s10552 + $0x10] sm:$0xff]
      %v10556 = vld [vmem:[%s10552 + $0x18] sm:$0xff]
      %v10558 = vsel %vm3771, %v10520, 0
      %v10561 = vsel %vm3771, %v10521, 0
      %v10564 = vsel %vm3771, %v10522, 0
      %v10567 = vsel %vm3771, %v10523, 0
      %v10570 = vsel %vm3771, %v10524, 0
      %v10573 = vsel %vm3771, %v10525, 0
      %v10576 = vsel %vm3771, %v10526, 0
      %v10579 = vsel %vm3771, %v10527, 0
      %v10582 = vsel %vm3771, %v10528, 0
      %v10585 = vsel %vm3771, %v10529, 0
      %v10588 = vsel %vm3771, %v10530, 0
      %v10591 = vsel %vm3771, %v10531, 0
      %v10594 = vsel %vm3771, %v10532, 0
      %v10597 = vsel %vm3771, %v10533, 0
      %v10600 = vsel %vm3771, %v10534, 0
      %v10603 = vsel %vm3771, %v10535, 0
      %v10606 = vsel %vm3771, %v10536, 0
      %v10609 = vsel %vm3771, %v10537, 0
      %v10612 = vsel %vm3771, %v10538, 0
      %v10615 = vsel %vm3771, %v10539, 0
      %v10618 = vsel %vm3771, %v10540, 0
      %v10621 = vsel %vm3771, %v10541, 0
      %v10624 = vsel %vm3771, %v10542, 0
      %v10627 = vsel %vm3771, %v10543, 0
      %v10630 = vsel %vm3771, %v10544, 0
      %v10633 = vsel %vm3771, %v10545, 0
      %v10636 = vsel %vm3771, %v10546, 0
      %v10639 = vsel %vm3771, %v10547, 0
      %v10642 = vsel %vm3771, %v10548, 0
      %v10645 = vsel %vm3771, %v10549, 0
      %v10648 = vsel %vm3771, %v10550, 0
      %v10651 = vsel %vm3771, %v10551, 0
      %10653 = vmatprep.subr.mxu0 0.0
      %10654 = vmatpush1.msra.mxu0 %v10553
      %10655 = vmatprep.subr.mxu0 0.0
      %10656 = vmatpush1.msra.mxu0 %v10554
      %10657 = vmatprep.subr.mxu0 0.0
      %10658 = vmatpush1.msra.mxu0 %v10555
      %10659 = vmatprep.subr.mxu0 0.0
      %10660 = vmatpush1.msra.mxu0 %v10556
      %10661 = vmatprep.subr.mxu0 0.0
      %10662 = vmatpush1.msra.mxu0 0.0
      %10663 = vmatprep.subr.mxu0 0.0
      %10664 = vmatpush1.msra.mxu0 0.0
      %10665 = vmatprep.subr.mxu0 0.0
      %10666 = vmatpush1.msra.mxu0 0.0
      %10667 = vmatprep.subr.mxu0 0.0
      %10668 = vmatpush1.msra.mxu0 0.0
      %10669 = vmatprep.subr.mxu0 0.0
      %10670 = vmatpush1.msra.mxu0 0.0
      %10671 = vmatprep.subr.mxu0 0.0
      %10672 = vmatpush1.msra.mxu0 0.0
      %10673 = vmatprep.subr.mxu0 0.0
      %10674 = vmatpush1.msra.mxu0 0.0
      %10675 = vmatprep.subr.mxu0 0.0
      %10676 = vmatpush1.msra.mxu0 0.0
      %10677 = vmatprep.subr.mxu0 0.0
      %10678 = vmatpush1.msra.mxu0 0.0
      %10679 = vmatprep.subr.mxu0 0.0
      %10680 = vmatpush1.msra.mxu0 0.0
      %10681 = vmatprep.subr.mxu0 0.0
      %10682 = vmatpush1.msra.mxu0 0.0
      %10683 = vmatprep.subr.mxu0 0.0
      %10684 = vmatpush1.msra.mxu0 0.0
      %10685 = vmatprep.subr.mxu0 0.0
      %10686 = vmatpush1.msra.mxu0 0.0
      %10687 = vmatprep.subr.mxu0 0.0
      %10688 = vmatpush1.msra.mxu0 0.0
      %10689 = vmatprep.subr.mxu0 0.0
      %10690 = vmatpush1.msra.mxu0 0.0
      %10691 = vmatprep.subr.mxu0 0.0
      %10692 = vmatpush1.msra.mxu0 0.0
      %10693 = vmatprep.subr.mxu0 0.0
      %10694 = vmatpush1.msra.mxu0 0.0
      %10695 = vmatprep.subr.mxu0 0.0
      %10696 = vmatpush1.msra.mxu0 0.0
      %10697 = vmatprep.subr.mxu0 0.0
      %10698 = vmatpush1.msra.mxu0 0.0
      %10699 = vmatprep.subr.mxu0 0.0
      %10700 = vmatpush1.msra.mxu0 0.0
      %10701 = vmatprep.subr.mxu0 0.0
      %10702 = vmatpush1.msra.mxu0 0.0
      %10703 = vmatprep.subr.mxu0 0.0
      %10704 = vmatpush1.msra.mxu0 0.0
      %10705 = vmatprep.subr.mxu0 0.0
      %10706 = vmatpush1.msra.mxu0 0.0
      %10707 = vmatprep.subr.mxu0 0.0
      %10708 = vmatpush1.msra.mxu0 0.0
      %10709 = vmatprep.subr.mxu0 0.0
      %10710 = vmatpush1.msra.mxu0 0.0
      %10711 = vmatprep.subr.mxu0 0.0
      %10712 = vmatpush1.msra.mxu0 0.0
      %10713 = vmatprep.subr.mxu0 0.0
      %10714 = vmatpush1.msra.mxu0 0.0
      %10715 = vmatprep.subr.mxu0 0.0
      %10716 = vmatpush1.msra.mxu0 0.0
      %10717 = vmatprep.mubr.f32.mxu0 0.0
      %10718 = vmatmul.mubr.f32.gmra.mrb[0].mxu0 %v10558
      %v10719 = vpop.f32.mrb[0].mxu0
      %v10720 = vadd.f32 0.0, %v10719
      %v10721 = vpop.f32.mrb[0].mxu0
      %10722 = vmatprep.mubr.f32.mxu0 0.0
      %10723 = vmatmul.mubr.f32.gmra.mrb[0].mxu0 %v10561
      %v10724 = vpop.f32.mrb[0].mxu0
      %v10725 = vadd.f32 0.0, %v10724
      %v10726 = vpop.f32.mrb[0].mxu0
      %10727 = vmatprep.mubr.f32.mxu0 0.0
      %10728 = vmatmul.mubr.f32.gmra.mrb[0].mxu0 %v10564
      %v10729 = vpop.f32.mrb[0].mxu0
      %v10730 = vadd.f32 0.0, %v10729
      %v10731 = vpop.f32.mrb[0].mxu0
      %10732 = vmatprep.mubr.f32.mxu0 0.0
      %10733 = vmatmul.mubr.f32.gmra.mrb[0].mxu0 %v10567
      %v10734 = vpop.f32.mrb[0].mxu0
      %v10735 = vadd.f32 0.0, %v10734
      %v10736 = vpop.f32.mrb[0].mxu0
      %10737 = vmatprep.mubr.f32.mxu0 0.0
      %10738 = vmatmul.mubr.f32.gmra.mrb[0].mxu0 %v10570
      %v10739 = vpop.f32.mrb[0].mxu0
      %v10740 = vadd.f32 0.0, %v10739
      %v10741 = vpop.f32.mrb[0].mxu0
      %10742 = vmatprep.mubr.f32.mxu0 0.0
      %10743 = vmatmul.mubr.f32.gmra.mrb[0].mxu0 %v10573
      %v10744 = vpop.f32.mrb[0].mxu0
      %v10745 = vadd.f32 0.0, %v10744
      %v10746 = vpop.f32.mrb[0].mxu0
      %10747 = vmatprep.mubr.f32.mxu0 0.0
      %10748 = vmatmul.mubr.f32.gmra.mrb[0].mxu0 %v10576
      %v10749 = vpop.f32.mrb[0].mxu0
      %v10750 = vadd.f32 0.0, %v10749
      %v10751 = vpop.f32.mrb[0].mxu0
      %10752 = vmatprep.mubr.f32.mxu0 0.0
      %10753 = vmatmul.mubr.f32.gmra.mrb[0].mxu0 %v10579
      %v10754 = vpop.f32.mrb[0].mxu0
      %v10755 = vadd.f32 0.0, %v10754
      %v10756 = vpop.f32.mrb[0].mxu0
      %10757 = vmatprep.mubr.f32.mxu0 0.0
      %10758 = vmatmul.mubr.f32.gmra.mrb[0].mxu0 %v10582
      %v10759 = vpop.f32.mrb[0].mxu0
      %v10760 = vadd.f32 0.0, %v10759
      %v10761 = vpop.f32.mrb[0].mxu0
      %10762 = vmatprep.mubr.f32.mxu0 0.0
      %10763 = vmatmul.mubr.f32.gmra.mrb[0].mxu0 %v10585
      %v10764 = vpop.f32.mrb[0].mxu0
      %v10765 = vadd.f32 0.0, %v10764
      %v10766 = vpop.f32.mrb[0].mxu0
      %10767 = vmatprep.mubr.f32.mxu0 0.0
      %10768 = vmatmul.mubr.f32.gmra.mrb[0].mxu0 %v10588
      %v10769 = vpop.f32.mrb[0].mxu0
      %v10770 = vadd.f32 0.0, %v10769
      %v10771 = vpop.f32.mrb[0].mxu0
      %10772 = vmatprep.mubr.f32.mxu0 0.0
      %10773 = vmatmul.mubr.f32.gmra.mrb[0].mxu0 %v10591
      %v10774 = vpop.f32.mrb[0].mxu0
      %v10775 = vadd.f32 0.0, %v10774
      %v10776 = vpop.f32.mrb[0].mxu0
      %10777 = vmatprep.mubr.f32.mxu0 0.0
      %10778 = vmatmul.mubr.f32.gmra.mrb[0].mxu0 %v10594
      %v10779 = vpop.f32.mrb[0].mxu0
      %v10780 = vadd.f32 0.0, %v10779
      %v10781 = vpop.f32.mrb[0].mxu0
      %10782 = vmatprep.mubr.f32.mxu0 0.0
      %10783 = vmatmul.mubr.f32.gmra.mrb[0].mxu0 %v10597
      %v10784 = vpop.f32.mrb[0].mxu0
      %v10785 = vadd.f32 0.0, %v10784
      %v10786 = vpop.f32.mrb[0].mxu0
      %10787 = vmatprep.mubr.f32.mxu0 0.0
      %10788 = vmatmul.mubr.f32.gmra.mrb[0].mxu0 %v10600
      %v10789 = vpop.f32.mrb[0].mxu0
      %v10790 = vadd.f32 0.0, %v10789
      %v10791 = vpop.f32.mrb[0].mxu0
      %10792 = vmatprep.mubr.f32.mxu0 0.0
      %10793 = vmatmul.mubr.f32.gmra.mrb[0].mxu0 %v10603
      %v10794 = vpop.f32.mrb[0].mxu0
      %v10795 = vadd.f32 0.0, %v10794
      %v10796 = vpop.f32.mrb[0].mxu0
      %10797 = vmatprep.mubr.f32.mxu0 0.0
      %10798 = vmatmul.mubr.f32.gmra.mrb[0].mxu0 %v10606
      %v10799 = vpop.f32.mrb[0].mxu0
      %v10800 = vadd.f32 0.0, %v10799
      %v10801 = vpop.f32.mrb[0].mxu0
      %10802 = vmatprep.mubr.f32.mxu0 0.0
      %10803 = vmatmul.mubr.f32.gmra.mrb[0].mxu0 %v10609
      %v10804 = vpop.f32.mrb[0].mxu0
      %v10805 = vadd.f32 0.0, %v10804
      %v10806 = vpop.f32.mrb[0].mxu0
      %10807 = vmatprep.mubr.f32.mxu0 0.0
      %10808 = vmatmul.mubr.f32.gmra.mrb[0].mxu0 %v10612
      %v10809 = vpop.f32.mrb[0].mxu0
      %v10810 = vadd.f32 0.0, %v10809
      %v10811 = vpop.f32.mrb[0].mxu0
      %10812 = vmatprep.mubr.f32.mxu0 0.0
      %10813 = vmatmul.mubr.f32.gmra.mrb[0].mxu0 %v10615
      %v10814 = vpop.f32.mrb[0].mxu0
      %v10815 = vadd.f32 0.0, %v10814
      %v10816 = vpop.f32.mrb[0].mxu0
      %10817 = vmatprep.mubr.f32.mxu0 0.0
      %10818 = vmatmul.mubr.f32.gmra.mrb[0].mxu0 %v10618
      %v10819 = vpop.f32.mrb[0].mxu0
      %v10820 = vadd.f32 0.0, %v10819
      %v10821 = vpop.f32.mrb[0].mxu0
      %10822 = vmatprep.mubr.f32.mxu0 0.0
      %10823 = vmatmul.mubr.f32.gmra.mrb[0].mxu0 %v10621
      %v10824 = vpop.f32.mrb[0].mxu0
      %v10825 = vadd.f32 0.0, %v10824
      %v10826 = vpop.f32.mrb[0].mxu0
      %10827 = vmatprep.mubr.f32.mxu0 0.0
      %10828 = vmatmul.mubr.f32.gmra.mrb[0].mxu0 %v10624
      %v10829 = vpop.f32.mrb[0].mxu0
      %v10830 = vadd.f32 0.0, %v10829
      %v10831 = vpop.f32.mrb[0].mxu0
      %10832 = vmatprep.mubr.f32.mxu0 0.0
      %10833 = vmatmul.mubr.f32.gmra.mrb[0].mxu0 %v10627
      %v10834 = vpop.f32.mrb[0].mxu0
      %v10835 = vadd.f32 0.0, %v10834
      %v10836 = vpop.f32.mrb[0].mxu0
      %10837 = vmatprep.mubr.f32.mxu0 0.0
      %10838 = vmatmul.mubr.f32.gmra.mrb[0].mxu0 %v10630
      %v10839 = vpop.f32.mrb[0].mxu0
      %v10840 = vadd.f32 0.0, %v10839
      %v10841 = vpop.f32.mrb[0].mxu0
      %10842 = vmatprep.mubr.f32.mxu0 0.0
      %10843 = vmatmul.mubr.f32.gmra.mrb[0].mxu0 %v10633
      %v10844 = vpop.f32.mrb[0].mxu0
      %v10845 = vadd.f32 0.0, %v10844
      %v10846 = vpop.f32.mrb[0].mxu0
      %10847 = vmatprep.mubr.f32.mxu0 0.0
      %10848 = vmatmul.mubr.f32.gmra.mrb[0].mxu0 %v10636
      %v10849 = vpop.f32.mrb[0].mxu0
      %v10850 = vadd.f32 0.0, %v10849
      %v10851 = vpop.f32.mrb[0].mxu0
      %10852 = vmatprep.mubr.f32.mxu0 0.0
      %10853 = vmatmul.mubr.f32.gmra.mrb[0].mxu0 %v10639
      %v10854 = vpop.f32.mrb[0].mxu0
      %v10855 = vadd.f32 0.0, %v10854
      %v10856 = vpop.f32.mrb[0].mxu0
      %10857 = vmatprep.mubr.f32.mxu0 0.0
      %10858 = vmatmul.mubr.f32.gmra.mrb[0].mxu0 %v10642
      %v10859 = vpop.f32.mrb[0].mxu0
      %v10860 = vadd.f32 0.0, %v10859
      %v10861 = vpop.f32.mrb[0].mxu0
      %10862 = vmatprep.mubr.f32.mxu0 0.0
      %10863 = vmatmul.mubr.f32.gmra.mrb[0].mxu0 %v10645
      %v10864 = vpop.f32.mrb[0].mxu0
      %v10865 = vadd.f32 0.0, %v10864
      %v10866 = vpop.f32.mrb[0].mxu0
      %10867 = vmatprep.mubr.f32.mxu0 0.0
      %10868 = vmatmul.mubr.f32.gmra.mrb[0].mxu0 %v10648
      %v10869 = vpop.f32.mrb[0].mxu0
      %v10870 = vadd.f32 0.0, %v10869
      %v10871 = vpop.f32.mrb[0].mxu0
      %10872 = vmatprep.mubr.f32.mxu0 0.0
      %10873 = vmatmul.mubr.f32.gmra.mrb[0].mxu0 %v10651
      %v10874 = vpop.f32.mrb[0].mxu0
      %v10875 = vadd.f32 0.0, %v10874
      %v10876 = vpop.f32.mrb[0].mxu0
      %10877 = vdwg.mxu0
      %v10878 = vadd.f32 %v10488, %v10720
      %v10879 = vadd.f32 %v10489, %v10725
      %v10880 = vadd.f32 %v10490, %v10730
      %v10881 = vadd.f32 %v10491, %v10735
      %v10882 = vadd.f32 %v10492, %v10740
      %v10883 = vadd.f32 %v10493, %v10745
      %v10884 = vadd.f32 %v10494, %v10750
      %v10885 = vadd.f32 %v10495, %v10755
      %v10886 = vadd.f32 %v10496, %v10760
      %v10887 = vadd.f32 %v10497, %v10765
      %v10888 = vadd.f32 %v10498, %v10770
      %v10889 = vadd.f32 %v10499, %v10775
      %v10890 = vadd.f32 %v10500, %v10780
      %v10891 = vadd.f32 %v10501, %v10785
      %v10892 = vadd.f32 %v10502, %v10790
      %v10893 = vadd.f32 %v10503, %v10795
      %v10894 = vadd.f32 %v10504, %v10800
      %v10895 = vadd.f32 %v10505, %v10805
      %v10896 = vadd.f32 %v10506, %v10810
      %v10897 = vadd.f32 %v10507, %v10815
      %v10898 = vadd.f32 %v10508, %v10820
      %v10899 = vadd.f32 %v10509, %v10825
      %v10900 = vadd.f32 %v10510, %v10830
      %v10901 = vadd.f32 %v10511, %v10835
      %v10902 = vadd.f32 %v10512, %v10840
      %v10903 = vadd.f32 %v10513, %v10845
      %v10904 = vadd.f32 %v10514, %v10850
      %v10905 = vadd.f32 %v10515, %v10855
      %v10906 = vadd.f32 %v10516, %v10860
      %v10907 = vadd.f32 %v10517, %v10865
      %v10908 = vadd.f32 %v10518, %v10870
      %v10909 = vadd.f32 %v10519, %v10875
      %v10910 = vld [vmem:[%s6] sm:$0x1]
      %v10912 = vlaneseq
      %v10913 = vshrl.u32 %v10912, 7
      %v10914 = vsub.s32 0, %v10913
      %v10915 = vrot.slane %v10910, %v10914
      %v10917 = vadd.f32 %v10878, %v10915
      %v10918 = vadd.f32 %v10879, %v10915
      %v10919 = vadd.f32 %v10880, %v10915
      %v10920 = vadd.f32 %v10881, %v10915
      %v10921 = vadd.f32 %v10882, %v10915
      %v10922 = vadd.f32 %v10883, %v10915
      %v10923 = vadd.f32 %v10884, %v10915
      %v10924 = vadd.f32 %v10885, %v10915
      %v10925 = vadd.f32 %v10886, %v10915
      %v10926 = vadd.f32 %v10887, %v10915
      %v10927 = vadd.f32 %v10888, %v10915
      %v10928 = vadd.f32 %v10889, %v10915
      %v10929 = vadd.f32 %v10890, %v10915
      %v10930 = vadd.f32 %v10891, %v10915
      %v10931 = vadd.f32 %v10892, %v10915
      %v10932 = vadd.f32 %v10893, %v10915
      %v10933 = vadd.f32 %v10894, %v10915
      %v10934 = vadd.f32 %v10895, %v10915
      %v10935 = vadd.f32 %v10896, %v10915
      %v10936 = vadd.f32 %v10897, %v10915
      %v10937 = vadd.f32 %v10898, %v10915
      %v10938 = vadd.f32 %v10899, %v10915
      %v10939 = vadd.f32 %v10900, %v10915
      %v10940 = vadd.f32 %v10901, %v10915
      %v10941 = vadd.f32 %v10902, %v10915
      %v10942 = vadd.f32 %v10903, %v10915
      %v10943 = vadd.f32 %v10904, %v10915
      %v10944 = vadd.f32 %v10905, %v10915
      %v10945 = vadd.f32 %v10906, %v10915
      %v10946 = vadd.f32 %v10907, %v10915
      %v10947 = vadd.f32 %v10908, %v10915
      %v10948 = vadd.f32 %v10909, %v10915
      %10949 = vst.msk [vmem:[%s278] sm:$0xff] %vm346, %v10917
      %10950 = vst.msk [vmem:[%s278 + $0x8] sm:$0xff] %vm346, %v10918
      %10951 = vst.msk [vmem:[%s278 + $0x10] sm:$0xff] %vm346, %v10919
      %10952 = vst.msk [vmem:[%s278 + $0x18] sm:$0xff] %vm346, %v10920
      %10953 = vst.msk [vmem:[%s278 + $0x20] sm:$0xff] %vm346, %v10921
      %10954 = vst.msk [vmem:[%s278 + $0x28] sm:$0xff] %vm346, %v10922
      %10955 = vst.msk [vmem:[%s278 + $0x30] sm:$0xff] %vm346, %v10923
      %10956 = vst.msk [vmem:[%s278 + $0x38] sm:$0xff] %vm346, %v10924
      %10957 = vst.msk [vmem:[%s278 + $0x40] sm:$0xff] %vm346, %v10925
      %10958 = vst.msk [vmem:[%s278 + $0x48] sm:$0xff] %vm346, %v10926
      %10959 = vst.msk [vmem:[%s278 + $0x50] sm:$0xff] %vm346, %v10927
      %10960 = vst.msk [vmem:[%s278 + $0x58] sm:$0xff] %vm346, %v10928
      %10961 = vst.msk [vmem:[%s278 + $0x60] sm:$0xff] %vm346, %v10929
      %10962 = vst.msk [vmem:[%s278 + $0x68] sm:$0xff] %vm346, %v10930
      %10963 = vst.msk [vmem:[%s278 + $0x70] sm:$0xff] %vm346, %v10931
      %10964 = vst.msk [vmem:[%s278 + $0x78] sm:$0xff] %vm346, %v10932
      %10965 = vst.msk [vmem:[%s278 + $0x80] sm:$0xff] %vm346, %v10933
      %10966 = vst.msk [vmem:[%s278 + $0x88] sm:$0xff] %vm346, %v10934
      %10967 = vst.msk [vmem:[%s278 + $0x90] sm:$0xff] %vm346, %v10935
      %10968 = vst.msk [vmem:[%s278 + $0x98] sm:$0xff] %vm346, %v10936
      %10969 = vst.msk [vmem:[%s278 + $0xa0] sm:$0xff] %vm346, %v10937
      %10970 = vst.msk [vmem:[%s278 + $0xa8] sm:$0xff] %vm346, %v10938
      %10971 = vst.msk [vmem:[%s278 + $0xb0] sm:$0xff] %vm346, %v10939
      %10972 = vst.msk [vmem:[%s278 + $0xb8] sm:$0xff] %vm346, %v10940
      %10973 = vst.msk [vmem:[%s278 + $0xc0] sm:$0xff] %vm346, %v10941
      %10974 = vst.msk [vmem:[%s278 + $0xc8] sm:$0xff] %vm346, %v10942
      %10975 = vst.msk [vmem:[%s278 + $0xd0] sm:$0xff] %vm346, %v10943
      %10976 = vst.msk [vmem:[%s278 + $0xd8] sm:$0xff] %vm346, %v10944
      %10977 = vst.msk [vmem:[%s278 + $0xe0] sm:$0xff] %vm346, %v10945
      %10978 = vst.msk [vmem:[%s278 + $0xe8] sm:$0xff] %vm346, %v10946
      %10979 = vst.msk [vmem:[%s278 + $0xf0] sm:$0xff] %vm346, %v10947
      %10980 = vst.msk [vmem:[%s278 + $0xf8] sm:$0xff] %vm346, %v10948
      %p10981 = scmp.lt.s32.totalorder %s18, 1
      %s10982 = scalar_select %p10981, %s18, 1
      %s10983 = smul.addr %s10982, 32
      %s10984 = smul.addr %s10983, 8
      %s10985 = scalar_lea.vmem %s7, %s10984
      // Predicated region
      $region49: #{tpu_custom_call.1} parent=47 // pred_check
        %p10986 = pneg %p188
      $region50: #{tpu_custom_call.1} parent=47 // pred_check_branch
        %10988 = sbr.rel (%p10986) target = $region52
      $region51: #{tpu_custom_call.1} parent=47 // pred_region
        _
      $region52: #{tpu_custom_call.1} parent=47 // pred_fallthru
        _
    $region48: #{tpu_custom_call.1} parent=5 // pred_fallthru
      _
    %p10989 = scmp.le.s32.totalorder 2, %s13
    // Predicated region
    $region53: #{tpu_custom_call.1} parent=5 // pred_check
      %p10990 = pneg %p10989
    $region54: #{tpu_custom_call.1} parent=5 // pred_check_branch
      %10992 = sbr.rel (%p10990) target = $region56
    $region55: #{tpu_custom_call.1} parent=5 // pred_region
      %s10993 = ssub.s32 %s13, 2
      // Predicated region
      $region57: #{tpu_custom_call.1} parent=55 // pred_check
        %p10994 = pneg %p194
      $region58: #{tpu_custom_call.1} parent=55 // pred_check_branch
        %10996 = sbr.rel (%p10994) target = $region60
      $region59: #{tpu_custom_call.1} parent=55 // pred_region
        %p10997 = scmp.lt.s32.totalorder %s19, 1
        %s10998 = scalar_select %p10997, %s19, 1
        %s10999 = smul.addr %s10998, 32
        %s11000 = smul.addr %s10999, 8
        %s11001 = scalar_lea.vmem %s7, %s11000
      $region60: #{tpu_custom_call.1} parent=55 // pred_fallthru
        _
    $region56: #{tpu_custom_call.1} parent=5 // pred_fallthru
      _
  $region6: #{tpu_custom_call.1} parent=0 // loop_footer
    %s17 = sadd.s32 1, %s13
  $region7: #{tpu_custom_call.1} parent=0 // loop_footer_branch
    %12 = sbr.rel target = $region3
  $region8: #{tpu_custom_call.1} parent=0 // loop_exit
    _

</llo_original>
